<compile_context>
chip_gen: v7x
topology: tpu7x:2x2x1
jax: 0.10.0
libtpu: 0.0.40
codegen_flags: <defaults>
</compile_context>

<pallas_src>
import numpy as np
import jax
import jax.numpy as jnp
from jax import lax
from jax.experimental import pallas as pl
from jax.experimental.pallas import tpu as pltpu

EPS = 1e-5
DOT_DTYPE = jnp.bfloat16          # MXU input dtype (accumulation stays float32)


# ----------------------- kernel 1: conv1 (+bias+lrelu) ----------------------
def _conv1_kernel(a_ref, w_ref, b_ref, o_ref):
    # (TM, 16) @ (16, 64) on the MXU with f32 accumulation; bias + leaky_relu fused.
    y = jnp.dot(a_ref[...], w_ref[...], preferred_element_type=jnp.float32)
    y = y + b_ref[...]
    y = jnp.where(y >= 0.0, y, 0.2 * y)
    o_ref[...] = y.astype(o_ref.dtype)


def conv1_matmul(a, w, bias, *, tm):
    m, k = a.shape
    n = w.shape[1]
    assert m % tm == 0
    flops = 2 * m * k * n + 2 * m * n
    bytes_accessed = (a.size * a.dtype.itemsize + w.size * w.dtype.itemsize
                      + bias.size * bias.dtype.itemsize + m * n * 2)
    return pl.pallas_call(
        _conv1_kernel,
        out_shape=jax.ShapeDtypeStruct((m, n), DOT_DTYPE),
        grid=(m // tm,),
        in_specs=[
            pl.BlockSpec((tm, k), lambda i: (i, 0)),
            pl.BlockSpec((k, n), lambda i: (0, 0)),
            pl.BlockSpec((1, n), lambda i: (0, 0)),
        ],
        out_specs=pl.BlockSpec((tm, n), lambda i: (i, 0)),
        compiler_params=pltpu.CompilerParams(dimension_semantics=("parallel",)),
        cost_estimate=pl.CostEstimate(flops=int(flops), transcendentals=0,
                                      bytes_accessed=int(bytes_accessed)),
    )(a, w, bias)


# --------- kernel 2: conv2 + BN + lrelu + fc + sigmoid (batch-tiled) ---------
def _conv2_bn_fc_kernel(h1_ref, w2_ref, scale_ref, shift_ref, wfc_ref, bfc_ref, o_ref):
    h1 = h1_ref[...]                                     # (TB, 4, 9, 9, 64) bf16 phases
    tb = h1.shape[0]

    # In-kernel im2col: 16 contiguous, tile-aligned slices of the phase-decomposed
    # activation (phase index = (kh%2)*2 + kw%2, shift = (kh//2, kw//2)).
    taps = []
    for kh in range(4):
        for kw in range(4):
            ph = (kh % 2) * 2 + (kw % 2)
            sh, sw = kh // 2, kw // 2
            taps.append(h1[:, ph, sh:sh + 8, sw:sw + 8, :])       # (TB, 8, 8, 64)
    a = jnp.concatenate(taps, axis=-1).reshape(tb * 64, 16 * 64)  # (TB*64, 1024)

    # conv2 as a single lane-dense (TB*64, 1024) @ (1024, 128) MXU matmul (f32 acc);
    # the 8x8 output grid contains 7x7 valid positions, the rest are masked below.
    y = jnp.dot(a, w2_ref[...], preferred_element_type=jnp.float32)
    y = y * scale_ref[...] + shift_ref[...]              # folded BatchNorm (+ conv bias)
    y = jnp.where(y >= 0.0, y, 0.2 * y)                  # leaky_relu(0.2)

    # Fused fc(6272 -> 1) + sigmoid epilogue as a VPU multiply + XLU reduce:
    # wfc_ref is (h,w,c)-major and zero at the invalid 8x8 slots, so no flatten
    # transpose, no lane-sparse N=1 MXU matmul, and no h2 HBM round-trip.
    prod = y.reshape(tb, 64, 128) * wfc_ref[...]
    logits = jnp.sum(jnp.sum(prod, axis=2), axis=1, keepdims=True) + bfc_ref[...]
    o_ref[...] = 1.0 / (1.0 + jnp.exp(-logits))


def conv2_bn_fc(h1_ph, w2, scale, shift, wfc, bfc, *, tb):
    n_pad = h1_ph.shape[0]
    assert n_pad % tb == 0
    m = n_pad * 64
    flops = 2 * m * 1024 * 128 + 5 * m * 128
    bytes_accessed = (h1_ph.size * h1_ph.dtype.itemsize + w2.size * w2.dtype.itemsize
                      + (scale.size + shift.size + wfc.size + bfc.size) * 4 + n_pad * 4)
    return pl.pallas_call(
        _conv2_bn_fc_kernel,
        out_shape=jax.ShapeDtypeStruct((n_pad, 1), jnp.float32),
        grid=(n_pad // tb,),
        in_specs=[
            pl.BlockSpec((tb, 4, 9, 9, 64), lambda i: (i, 0, 0, 0, 0)),
            pl.BlockSpec((16 * 64, 128), lambda i: (0, 0)),
            pl.BlockSpec((1, 128), lambda i: (0, 0)),
            pl.BlockSpec((1, 128), lambda i: (0, 0)),
            pl.BlockSpec((64, 128), lambda i: (0, 0)),
            pl.BlockSpec((1, 1), lambda i: (0, 0)),
        ],
        out_specs=pl.BlockSpec((tb, 1), lambda i: (i, 0)),
        compiler_params=pltpu.CompilerParams(dimension_semantics=("parallel",)),
        cost_estimate=pl.CostEstimate(flops=int(flops), transcendentals=int(n_pad),
                                      bytes_accessed=int(bytes_accessed)),
    )(h1_ph, w2, scale, shift, wfc, bfc)


# ------------------------------- glue (JAX) ---------------------------------
def _im2col(x_nhwc, k, s, p):
    """Extract conv patches; flattened ordering matches PyTorch (cin, kh, kw)."""
    x = jnp.pad(x_nhwc, ((0, 0), (p, p), (p, p), (0, 0)))
    n, hp, wp, c = x.shape
    ho = (hp - k) // s + 1
    wo = (wp - k) // s + 1
    cols = []
    for i in range(k):
        for j in range(k):
            cols.append(x[:, i:i + s * ho:s, j:j + s * wo:s, :])   # (n, ho, wo, c)
    patches = jnp.stack(cols, axis=-1)                             # (n, ho, wo, c, k*k)
    return patches.reshape(n, ho, wo, c * k * k), ho, wo


def init_params(key):
    ks = jax.random.split(key, 5)
    return dict(
        w1=0.1 * jax.random.normal(ks[0], (64, 1, 4, 4), jnp.float32),     # conv1 OIHW
        b1=0.1 * jax.random.normal(ks[1], (64,), jnp.float32),
        w2=0.05 * jax.random.normal(ks[2], (128, 64, 4, 4), jnp.float32),  # conv2 OIHW
        b2=0.05 * jax.random.normal(ks[3], (128,), jnp.float32),
        wfc=0.02 * jax.random.normal(ks[4], (128 * 7 * 7, 1), jnp.float32),
        bfc=jnp.zeros((1,), jnp.float32),
        gamma=jnp.ones((128,), jnp.float32),   # BatchNorm2d defaults
        beta=jnp.zeros((128,), jnp.float32),
        rmean=jnp.zeros((128,), jnp.float32),
        rvar=jnp.ones((128,), jnp.float32),
    )


def d_mnist_forward(x, p):
    x = x.reshape(-1, 1, 28, 28).astype(jnp.float32)     # x.view(-1, 1, 28, 28)
    n = x.shape[0]
    # Batch tile: multiple of 8, sized so kernel 2 fits comfortably in scoped VMEM
    # on every generation (v5e 16 MiB default .. v7x 32 MiB).
    tb = 16 if n >= 16 else 8
    n_pad = -(-n // tb) * tb
    x_nhwc = jnp.transpose(x, (0, 2, 3, 1))
    if n_pad != n:
        x_nhwc = jnp.pad(x_nhwc, ((0, n_pad - n), (0, 0), (0, 0), (0, 0)))

    # ---- conv1 + leaky_relu (dropout = identity in eval mode) ----
    patches1, ho1, wo1 = _im2col(x_nhwc, 4, 2, 1)                  # 28 -> 14  (cin=1)
    a1 = patches1.reshape(n_pad * ho1 * wo1, 16).astype(DOT_DTYPE)
    w1m = p["w1"].reshape(64, 16).T.astype(DOT_DTYPE)
    h1 = conv1_matmul(a1, w1m, p["b1"].reshape(1, 64), tm=tb * ho1 * wo1)
    h1 = h1.reshape(n_pad, ho1, wo1, 64)                           # NHWC, bf16

    # ---- phase-decompose zero-padded h1 (stride-2 phases, padded to 9x9) so the
    #      conv2 kernel does its im2col from contiguous tile-aligned slices; the 4x
    #      im2col patch expansion never hits HBM.
    h1_pad = jnp.pad(h1, ((0, 0), (1, 3), (1, 3), (0, 0)))         # 14 -> 18
    h1_ph = h1_pad.reshape(n_pad, 9, 2, 9, 2, 64).transpose(0, 2, 4, 1, 3, 5)
    h1_ph = h1_ph.reshape(n_pad, 4, 9, 9, 64)                      # [n, ph*2+pw, h, w, c]

    # ---- conv2 weight in (kh, kw, cin) x cout order; BN (eval) folded to scale/shift
    w2m = jnp.transpose(p["w2"], (2, 3, 1, 0)).reshape(16 * 64, 128).astype(DOT_DTYPE)
    inv_std = 1.0 / jnp.sqrt(p["rvar"] + EPS)
    scale2 = (p["gamma"] * inv_std).reshape(1, 128)
    shift2 = ((p["b2"] - p["rmean"]) * p["gamma"] * inv_std + p["beta"]).reshape(1, 128)

    # ---- fc weight: (c,h,w)-major -> (h,w,c)-major, zero-padded to the 8x8 grid so
    #      the invalid conv slots are masked; flatten transpose of h2 is eliminated.
    wfc_hwc = p["wfc"].reshape(128, 7, 7).transpose(1, 2, 0)       # (7, 7, 128)
    wfc_hwc = jnp.pad(wfc_hwc, ((0, 1), (0, 1), (0, 0))).reshape(64, 128)
    bfc = p["bfc"].reshape(1, 1)

    y = conv2_bn_fc(h1_ph, w2m, scale2, shift2, wfc_hwc, bfc, tb=tb)   # (n_pad, 1)
    return y[:n]


# ---------------------------- pure-JAX reference -----------------------------
def ref_forward(x, p):
    x = x.reshape(-1, 1, 28, 28).astype(jnp.float32)
    h = lax.conv_general_dilated(x, p["w1"], (2, 2), ((1, 1), (1, 1)),
                                 dimension_numbers=("NCHW", "OIHW", "NCHW"),
                                 precision=lax.Precision.HIGHEST)
    h = h + p["b1"][None, :, None, None]
    h = jnp.where(h >= 0, h, 0.2 * h)
    h = lax.conv_general_dilated(h, p["w2"], (2, 2), ((1, 1), (1, 1)),
                                 dimension_numbers=("NCHW", "OIHW", "NCHW"),
                                 precision=lax.Precision.HIGHEST)
    h = h + p["b2"][None, :, None, None]
    h = (h - p["rmean"][None, :, None, None]) / jnp.sqrt(p["rvar"][None, :, None, None] + EPS)
    h = h * p["gamma"][None, :, None, None] + p["beta"][None, :, None, None]
    h = jnp.where(h >= 0, h, 0.2 * h)
    flat = h.reshape(h.shape[0], -1)
    logits = jnp.dot(flat, p["wfc"], precision=lax.Precision.HIGHEST) + p["bfc"]
    return 1.0 / (1.0 + jnp.exp(-logits))


if __name__ == "__main__":
    key = jax.random.PRNGKey(0)
    kx, kp = jax.random.split(key)
    params = init_params(kp)
    x = jax.random.normal(kx, (2, 1, 28, 28), jnp.float32)   # batch=2 MNIST images

    fwd = jax.jit(d_mnist_forward)
    out = jax.block_until_ready(fwd(x, params))
    assert out.shape == (2, 1), out.shape

    ref = jax.block_until_ready(ref_forward(x, params))
    max_err = float(np.max(np.abs(np.asarray(out) - np.asarray(ref))))
    # bf16 MXU inputs with f32 accumulation vs a pure-f32 reference: allow 2e-3 on the
    # post-sigmoid outputs (observed error is typically a few 1e-4).
    assert max_err < 2e-3, f"mismatch vs reference: {max_err}"
    print("KERNEL_OK")
</pallas_src>

<mosaic_0001>
module attributes {stable_mosaic.version = 11 : i64} {
  func.func @_conv1_kernel(%arg0: i32, %arg1: memref<1568x16xbf16, #tpu.memory_space<vmem>>, %arg2: memref<16x64xbf16, #tpu.memory_space<vmem>>, %arg3: memref<1x64xf32, #tpu.memory_space<vmem>>, %arg4: memref<1568x64xbf16, #tpu.memory_space<vmem>>) attributes {dimension_semantics = [#tpu.dimension_semantics<parallel>], iteration_bounds = array<i64: 1>, scalar_prefetch = 0 : i64, scratch_operands = 0 : i64, tpu.core_type = #tpu.core_type<tc>, window_params = [{transform_indices = @transform_0, window_bounds = array<i64: 1568, 16>}, {pipeline_mode = #tpu.pipeline_mode<synchronous>, transform_indices = @transform_1, window_bounds = array<i64: 16, 64>}, {pipeline_mode = #tpu.pipeline_mode<synchronous>, transform_indices = @transform_2, window_bounds = array<i64: 1, 64>}, {transform_indices = @transform_3, window_bounds = array<i64: 1568, 64>}]} {
    %c0 = arith.constant 0 : index
    %c0_0 = arith.constant 0 : index
    %0 = vector.load %arg1[%c0, %c0_0] : memref<1568x16xbf16, #tpu.memory_space<vmem>>, vector<1568x16xbf16>
    %c0_1 = arith.constant 0 : index
    %c0_2 = arith.constant 0 : index
    %1 = vector.load %arg2[%c0_1, %c0_2] : memref<16x64xbf16, #tpu.memory_space<vmem>>, vector<16x64xbf16>
    %cst = arith.constant dense<0.000000e+00> : vector<1568x64xf32>
    %2 = tpu.matmul %0, %1, %cst {dimension_numbers = #tpu.dot_dimension_numbers<[1], [0], [0], [1], [0, 0, 1, 1], [], []>} : vector<1568x16xbf16>, vector<16x64xbf16>, vector<1568x64xf32> -> vector<1568x64xf32>
    %c0_3 = arith.constant 0 : index
    %c0_4 = arith.constant 0 : index
    %3 = vector.load %arg3[%c0_3, %c0_4] : memref<1x64xf32, #tpu.memory_space<vmem>>, vector<1x64xf32>
    %4 = vector.broadcast %3 : vector<1x64xf32> to vector<1568x64xf32>
    %5 = arith.addf %2, %4 : vector<1568x64xf32>
    %cst_5 = arith.constant 0.000000e+00 : f32
    %6 = vector.broadcast %cst_5 : f32 to vector<1568x64xf32>
    %7 = arith.cmpf oge, %5, %6 : vector<1568x64xf32>
    %cst_6 = arith.constant 2.000000e-01 : f32
    %8 = vector.broadcast %cst_6 : f32 to vector<1568x64xf32>
    %9 = arith.mulf %8, %5 : vector<1568x64xf32>
    %10 = arith.select %7, %5, %9 : vector<1568x64xi1>, vector<1568x64xf32>
    %11 = arith.truncf %10 : vector<1568x64xf32> to vector<1568x64xbf16>
    %c0_7 = arith.constant 0 : index
    %c0_8 = arith.constant 0 : index
    %12 = vector.load %arg4[%c0_7, %c0_8] : memref<1568x64xbf16, #tpu.memory_space<vmem>>, vector<1568x64xbf16>
    tpu.vector_store %arg4[%c0_7, %c0_8], %11 {strides = array<i32>} : memref<1568x64xbf16, #tpu.memory_space<vmem>>, vector<1568x64xbf16>,
    return
  }
  func.func @transform_0(%arg0: i32) -> (i32, i32) {
    %c0_i32 = arith.constant 0 : i32
    %c0_i32_0 = arith.constant 0 : i32
    return %arg0, %c0_i32 : i32, i32
  }
  func.func @transform_1(%arg0: i32) -> (i32, i32) {
    %c0_i32 = arith.constant 0 : i32
    %c0_i32_0 = arith.constant 0 : i32
    %c0_i32_1 = arith.constant 0 : i32
    return %c0_i32, %c0_i32_0 : i32, i32
  }
  func.func @transform_2(%arg0: i32) -> (i32, i32) {
    %c0_i32 = arith.constant 0 : i32
    %c0_i32_0 = arith.constant 0 : i32
    %c0_i32_1 = arith.constant 0 : i32
    return %c0_i32, %c0_i32_0 : i32, i32
  }
  func.func @transform_3(%arg0: i32) -> (i32, i32) {
    %c0_i32 = arith.constant 0 : i32
    %c0_i32_0 = arith.constant 0 : i32
    return %arg0, %c0_i32 : i32, i32
  }
}

module attributes {stable_mosaic.version = 11 : i64} {
  func.func @_conv2_bn_fc_kernel(%arg0: i32, %arg1: memref<8x4x9x9x64xbf16, #tpu.memory_space<vmem>>, %arg2: memref<1024x128xbf16, #tpu.memory_space<vmem>>, %arg3: memref<1x128xf32, #tpu.memory_space<vmem>>, %arg4: memref<1x128xf32, #tpu.memory_space<vmem>>, %arg5: memref<64x128xf32, #tpu.memory_space<vmem>>, %arg6: memref<1x1xf32, #tpu.memory_space<vmem>>, %arg7: memref<8x1xf32, #tpu.memory_space<vmem>>) attributes {dimension_semantics = [#tpu.dimension_semantics<parallel>], iteration_bounds = array<i64: 1>, scalar_prefetch = 0 : i64, scratch_operands = 0 : i64, tpu.core_type = #tpu.core_type<tc>, window_params = [{transform_indices = @transform_0, window_bounds = array<i64: 8, 4, 9, 9, 64>}, {pipeline_mode = #tpu.pipeline_mode<synchronous>, transform_indices = @transform_1, window_bounds = array<i64: 1024, 128>}, {pipeline_mode = #tpu.pipeline_mode<synchronous>, transform_indices = @transform_2, window_bounds = array<i64: 1, 128>}, {pipeline_mode = #tpu.pipeline_mode<synchronous>, transform_indices = @transform_3, window_bounds = array<i64: 1, 128>}, {pipeline_mode = #tpu.pipeline_mode<synchronous>, transform_indices = @transform_4, window_bounds = array<i64: 64, 128>}, {pipeline_mode = #tpu.pipeline_mode<synchronous>, transform_indices = @transform_5, window_bounds = array<i64: 1, 1>}, {transform_indices = @transform_6, window_bounds = array<i64: 8, 1>}]} {
    %c0 = arith.constant 0 : index
    %c0_0 = arith.constant 0 : index
    %c0_1 = arith.constant 0 : index
    %c0_2 = arith.constant 0 : index
    %c0_3 = arith.constant 0 : index
    %0 = vector.load %arg1[%c0, %c0_0, %c0_1, %c0_2, %c0_3] : memref<8x4x9x9x64xbf16, #tpu.memory_space<vmem>>, vector<8x4x9x9x64xbf16>
    %1 = vector.extract_strided_slice %0 {offsets = [0, 0, 0, 0, 0], sizes = [8, 1, 8, 8, 64], strides = [1, 1, 1, 1, 1]} : vector<8x4x9x9x64xbf16> to vector<8x1x8x8x64xbf16>
    %2 = vector.shape_cast %1 : vector<8x1x8x8x64xbf16> to vector<8x8x8x64xbf16>
    %3 = vector.extract_strided_slice %0 {offsets = [0, 1, 0, 0, 0], sizes = [8, 1, 8, 8, 64], strides = [1, 1, 1, 1, 1]} : vector<8x4x9x9x64xbf16> to vector<8x1x8x8x64xbf16>
    %4 = vector.shape_cast %3 : vector<8x1x8x8x64xbf16> to vector<8x8x8x64xbf16>
    %5 = vector.extract_strided_slice %0 {offsets = [0, 0, 0, 1, 0], sizes = [8, 1, 8, 8, 64], strides = [1, 1, 1, 1, 1]} : vector<8x4x9x9x64xbf16> to vector<8x1x8x8x64xbf16>
    %6 = vector.shape_cast %5 : vector<8x1x8x8x64xbf16> to vector<8x8x8x64xbf16>
    %7 = vector.extract_strided_slice %0 {offsets = [0, 1, 0, 1, 0], sizes = [8, 1, 8, 8, 64], strides = [1, 1, 1, 1, 1]} : vector<8x4x9x9x64xbf16> to vector<8x1x8x8x64xbf16>
    %8 = vector.shape_cast %7 : vector<8x1x8x8x64xbf16> to vector<8x8x8x64xbf16>
    %9 = vector.extract_strided_slice %0 {offsets = [0, 2, 0, 0, 0], sizes = [8, 1, 8, 8, 64], strides = [1, 1, 1, 1, 1]} : vector<8x4x9x9x64xbf16> to vector<8x1x8x8x64xbf16>
    %10 = vector.shape_cast %9 : vector<8x1x8x8x64xbf16> to vector<8x8x8x64xbf16>
    %11 = vector.extract_strided_slice %0 {offsets = [0, 3, 0, 0, 0], sizes = [8, 1, 8, 8, 64], strides = [1, 1, 1, 1, 1]} : vector<8x4x9x9x64xbf16> to vector<8x1x8x8x64xbf16>
    %12 = vector.shape_cast %11 : vector<8x1x8x8x64xbf16> to vector<8x8x8x64xbf16>
    %13 = vector.extract_strided_slice %0 {offsets = [0, 2, 0, 1, 0], sizes = [8, 1, 8, 8, 64], strides = [1, 1, 1, 1, 1]} : vector<8x4x9x9x64xbf16> to vector<8x1x8x8x64xbf16>
    %14 = vector.shape_cast %13 : vector<8x1x8x8x64xbf16> to vector<8x8x8x64xbf16>
    %15 = vector.extract_strided_slice %0 {offsets = [0, 3, 0, 1, 0], sizes = [8, 1, 8, 8, 64], strides = [1, 1, 1, 1, 1]} : vector<8x4x9x9x64xbf16> to vector<8x1x8x8x64xbf16>
    %16 = vector.shape_cast %15 : vector<8x1x8x8x64xbf16> to vector<8x8x8x64xbf16>
    %17 = vector.extract_strided_slice %0 {offsets = [0, 0, 1, 0, 0], sizes = [8, 1, 8, 8, 64], strides = [1, 1, 1, 1, 1]} : vector<8x4x9x9x64xbf16> to vector<8x1x8x8x64xbf16>
    %18 = vector.shape_cast %17 : vector<8x1x8x8x64xbf16> to vector<8x8x8x64xbf16>
    %19 = vector.extract_strided_slice %0 {offsets = [0, 1, 1, 0, 0], sizes = [8, 1, 8, 8, 64], strides = [1, 1, 1, 1, 1]} : vector<8x4x9x9x64xbf16> to vector<8x1x8x8x64xbf16>
    %20 = vector.shape_cast %19 : vector<8x1x8x8x64xbf16> to vector<8x8x8x64xbf16>
    %21 = vector.extract_strided_slice %0 {offsets = [0, 0, 1, 1, 0], sizes = [8, 1, 8, 8, 64], strides = [1, 1, 1, 1, 1]} : vector<8x4x9x9x64xbf16> to vector<8x1x8x8x64xbf16>
    %22 = vector.shape_cast %21 : vector<8x1x8x8x64xbf16> to vector<8x8x8x64xbf16>
    %23 = vector.extract_strided_slice %0 {offsets = [0, 1, 1, 1, 0], sizes = [8, 1, 8, 8, 64], strides = [1, 1, 1, 1, 1]} : vector<8x4x9x9x64xbf16> to vector<8x1x8x8x64xbf16>
    %24 = vector.shape_cast %23 : vector<8x1x8x8x64xbf16> to vector<8x8x8x64xbf16>
    %25 = vector.extract_strided_slice %0 {offsets = [0, 2, 1, 0, 0], sizes = [8, 1, 8, 8, 64], strides = [1, 1, 1, 1, 1]} : vector<8x4x9x9x64xbf16> to vector<8x1x8x8x64xbf16>
    %26 = vector.shape_cast %25 : vector<8x1x8x8x64xbf16> to vector<8x8x8x64xbf16>
    %27 = vector.extract_strided_slice %0 {offsets = [0, 3, 1, 0, 0], sizes = [8, 1, 8, 8, 64], strides = [1, 1, 1, 1, 1]} : vector<8x4x9x9x64xbf16> to vector<8x1x8x8x64xbf16>
    %28 = vector.shape_cast %27 : vector<8x1x8x8x64xbf16> to vector<8x8x8x64xbf16>
    %29 = vector.extract_strided_slice %0 {offsets = [0, 2, 1, 1, 0], sizes = [8, 1, 8, 8, 64], strides = [1, 1, 1, 1, 1]} : vector<8x4x9x9x64xbf16> to vector<8x1x8x8x64xbf16>
    %30 = vector.shape_cast %29 : vector<8x1x8x8x64xbf16> to vector<8x8x8x64xbf16>
    %31 = vector.extract_strided_slice %0 {offsets = [0, 3, 1, 1, 0], sizes = [8, 1, 8, 8, 64], strides = [1, 1, 1, 1, 1]} : vector<8x4x9x9x64xbf16> to vector<8x1x8x8x64xbf16>
    %32 = vector.shape_cast %31 : vector<8x1x8x8x64xbf16> to vector<8x8x8x64xbf16>
    %33 = tpu.concatenate %2, %4, %6, %8, %10, %12, %14, %16, %18, %20, %22, %24, %26, %28, %30, %32 in 3 : vector<8x8x8x64xbf16>, vector<8x8x8x64xbf16>, vector<8x8x8x64xbf16>, vector<8x8x8x64xbf16>, vector<8x8x8x64xbf16>, vector<8x8x8x64xbf16>, vector<8x8x8x64xbf16>, vector<8x8x8x64xbf16>, vector<8x8x8x64xbf16>, vector<8x8x8x64xbf16>, vector<8x8x8x64xbf16>, vector<8x8x8x64xbf16>, vector<8x8x8x64xbf16>, vector<8x8x8x64xbf16>, vector<8x8x8x64xbf16>, vector<8x8x8x64xbf16> -> vector<8x8x8x1024xbf16>
    %34 = vector.shape_cast %33 : vector<8x8x8x1024xbf16> to vector<512x1024xbf16>
    %c0_4 = arith.constant 0 : index
    %c0_5 = arith.constant 0 : index
    %35 = vector.load %arg2[%c0_4, %c0_5] : memref<1024x128xbf16, #tpu.memory_space<vmem>>, vector<1024x128xbf16>
    %cst = arith.constant dense<0.000000e+00> : vector<512x128xf32>
    %36 = tpu.matmul %34, %35, %cst {dimension_numbers = #tpu.dot_dimension_numbers<[1], [0], [0], [1], [0, 0, 1, 1], [], []>} : vector<512x1024xbf16>, vector<1024x128xbf16>, vector<512x128xf32> -> vector<512x128xf32>
    %c0_6 = arith.constant 0 : index
    %c0_7 = arith.constant 0 : index
    %37 = vector.load %arg3[%c0_6, %c0_7] : memref<1x128xf32, #tpu.memory_space<vmem>>, vector<1x128xf32>
    %38 = vector.broadcast %37 : vector<1x128xf32> to vector<512x128xf32>
    %39 = arith.mulf %36, %38 : vector<512x128xf32>
    %c0_8 = arith.constant 0 : index
    %c0_9 = arith.constant 0 : index
    %40 = vector.load %arg4[%c0_8, %c0_9] : memref<1x128xf32, #tpu.memory_space<vmem>>, vector<1x128xf32>
    %41 = vector.broadcast %40 : vector<1x128xf32> to vector<512x128xf32>
    %42 = arith.addf %39, %41 : vector<512x128xf32>
    %cst_10 = arith.constant 0.000000e+00 : f32
    %43 = vector.broadcast %cst_10 : f32 to vector<512x128xf32>
    %44 = arith.cmpf oge, %42, %43 : vector<512x128xf32>
    %cst_11 = arith.constant 2.000000e-01 : f32
    %45 = vector.broadcast %cst_11 : f32 to vector<512x128xf32>
    %46 = arith.mulf %45, %42 : vector<512x128xf32>
    %47 = arith.select %44, %42, %46 : vector<512x128xi1>, vector<512x128xf32>
    %48 = vector.shape_cast %47 : vector<512x128xf32> to vector<8x64x128xf32>
    %c0_12 = arith.constant 0 : index
    %c0_13 = arith.constant 0 : index
    %49 = vector.load %arg5[%c0_12, %c0_13] : memref<64x128xf32, #tpu.memory_space<vmem>>, vector<64x128xf32>
    %50 = vector.shape_cast %49 : vector<64x128xf32> to vector<1x64x128xf32>
    %51 = vector.broadcast %50 : vector<1x64x128xf32> to vector<8x64x128xf32>
    %52 = arith.mulf %48, %51 : vector<8x64x128xf32>
    %cst_14 = arith.constant dense<0.000000e+00> : vector<8x64xf32>
    %53 = vector.multi_reduction <add>, %52, %cst_14 [2] : vector<8x64x128xf32> to vector<8x64xf32>
    %cst_15 = arith.constant dense<0.000000e+00> : vector<8xf32>
    %54 = vector.multi_reduction <add>, %53, %cst_15 [1] : vector<8x64xf32> to vector<8xf32>
    %55 = vector.shape_cast %54 : vector<8xf32> to vector<8x1xf32>
    %c0_16 = arith.constant 0 : index
    %c0_17 = arith.constant 0 : index
    %56 = vector.load %arg6[%c0_16, %c0_17] : memref<1x1xf32, #tpu.memory_space<vmem>>, vector<1x1xf32>
    %57 = vector.broadcast %56 : vector<1x1xf32> to vector<8x1xf32>
    %58 = arith.addf %55, %57 : vector<8x1xf32>
    %cst_18 = arith.constant 0.000000e+00 : f32
    %59 = vector.broadcast %cst_18 : f32 to vector<8x1xf32>
    %60 = arith.subf %59, %58 : vector<8x1xf32>
    %61 = math.exp %60 : vector<8x1xf32>
    %cst_19 = arith.constant 1.000000e+00 : f32
    %62 = vector.broadcast %cst_19 : f32 to vector<8x1xf32>
    %63 = arith.addf %62, %61 : vector<8x1xf32>
    %cst_20 = arith.constant 1.000000e+00 : f32
    %64 = vector.broadcast %cst_20 : f32 to vector<8x1xf32>
    %65 = arith.divf %64, %63 : vector<8x1xf32>
    %c0_21 = arith.constant 0 : index
    %c0_22 = arith.constant 0 : index
    %66 = vector.load %arg7[%c0_21, %c0_22] : memref<8x1xf32, #tpu.memory_space<vmem>>, vector<8x1xf32>
    tpu.vector_store %arg7[%c0_21, %c0_22], %65 {strides = array<i32>} : memref<8x1xf32, #tpu.memory_space<vmem>>, vector<8x1xf32>,
    return
  }
  func.func @transform_0(%arg0: i32) -> (i32, i32, i32, i32, i32) {
    %c0_i32 = arith.constant 0 : i32
    %c0_i32_0 = arith.constant 0 : i32
    %c0_i32_1 = arith.constant 0 : i32
    %c0_i32_2 = arith.constant 0 : i32
    %c0_i32_3 = arith.constant 0 : i32
    return %arg0, %c0_i32, %c0_i32_0, %c0_i32_1, %c0_i32_2 : i32, i32, i32, i32, i32
  }
  func.func @transform_1(%arg0: i32) -> (i32, i32) {
    %c0_i32 = arith.constant 0 : i32
    %c0_i32_0 = arith.constant 0 : i32
    %c0_i32_1 = arith.constant 0 : i32
    return %c0_i32, %c0_i32_0 : i32, i32
  }
  func.func @transform_2(%arg0: i32) -> (i32, i32) {
    %c0_i32 = arith.constant 0 : i32
    %c0_i32_0 = arith.constant 0 : i32
    %c0_i32_1 = arith.constant 0 : i32
    return %c0_i32, %c0_i32_0 : i32, i32
  }
  func.func @transform_3(%arg0: i32) -> (i32, i32) {
    %c0_i32 = arith.constant 0 : i32
    %c0_i32_0 = arith.constant 0 : i32
    %c0_i32_1 = arith.constant 0 : i32
    return %c0_i32, %c0_i32_0 : i32, i32
  }
  func.func @transform_4(%arg0: i32) -> (i32, i32) {
    %c0_i32 = arith.constant 0 : i32
    %c0_i32_0 = arith.constant 0 : i32
    %c0_i32_1 = arith.constant 0 : i32
    return %c0_i32, %c0_i32_0 : i32, i32
  }
  func.func @transform_5(%arg0: i32) -> (i32, i32) {
    %c0_i32 = arith.constant 0 : i32
    %c0_i32_0 = arith.constant 0 : i32
    %c0_i32_1 = arith.constant 0 : i32
    return %c0_i32, %c0_i32_0 : i32, i32
  }
  func.func @transform_6(%arg0: i32) -> (i32, i32) {
    %c0_i32 = arith.constant 0 : i32
    %c0_i32_0 = arith.constant 0 : i32
    return %arg0, %c0_i32 : i32, i32
  }
}

</mosaic_0001>

<llo_original>
// kernel: d_mnist_forward.2
$region0: #{d_mnist_forward.2}
  #allocation0 [shape = 'u32[]', space=smem, size = 0x4, offset = 0x4, fixed_abs, tag = 'smem constant byte address 0x4 - core index']
  #allocation1 [shape = 'u32[144,128]{1,0:T(1,128)}', space=vmem, size = 0x12000, scoped, tag = 'internal scratch']
  %s0 = inlined_call_operand.vmem [shape: bf16[1568,16], index: 0, kind: input, shape index: {}]
  %s1 = inlined_call_operand.vmem [shape: bf16[16,64], index: 1, kind: input, shape index: {}]
  %s2 = inlined_call_operand.vmem [shape: f32[1,64], index: 2, kind: input, shape index: {}]
  %s3 = inlined_call_operand.vmem [shape: bf16[1568,64], index: 3, kind: output, shape index: {}]
  %s4 = sld [smem:[#allocation0]]
  $region22: #{d_mnist_forward.2} parent=0
    _
  %s6 = ssub.s32 1, %s4
  %s7 = scalar_select 0, %s6, %s4
  // Predicated region
  $region2: #{d_mnist_forward.2} parent=0 // pred_check
    _
  $region3: #{d_mnist_forward.2} parent=0 // pred_check_branch
    %9 = sbr.rel (0) target = $region5
  $region4: #{d_mnist_forward.2} parent=0 // pred_region
    _
  $region5: #{d_mnist_forward.2} parent=0 // pred_fallthru
    _
  // Predicated region
  $region6: #{d_mnist_forward.2} parent=0 // pred_check
    _
  $region7: #{d_mnist_forward.2} parent=0 // pred_check_branch
    %11 = sbr.rel (0) target = $region9
  $region8: #{d_mnist_forward.2} parent=0 // pred_region
    _
  $region9: #{d_mnist_forward.2} parent=0 // pred_fallthru
    _
  // Predicated region
  $region10: #{d_mnist_forward.2} parent=0 // pred_check
    _
  $region11: #{d_mnist_forward.2} parent=0 // pred_check_branch
    %13 = sbr.rel (0) target = $region13
  $region12: #{d_mnist_forward.2} parent=0 // pred_region
    _
  $region13: #{d_mnist_forward.2} parent=0 // pred_fallthru
    _
  %v15 = vld [vmem:[%s0] sm:$0xf]
  %v16 = vld [vmem:[%s0 + $0x4] sm:$0xf]
  %v17 = vld [vmem:[%s0 + $0x8] sm:$0xf]
  %v18 = vld [vmem:[%s0 + $0xc] sm:$0xf]
  %v19 = vld [vmem:[%s0 + $0x10] sm:$0xf]
  %v20 = vld [vmem:[%s0 + $0x14] sm:$0xf]
  %v21 = vld [vmem:[%s0 + $0x18] sm:$0xf]
  %v22 = vld [vmem:[%s0 + $0x1c] sm:$0xf]
  %v23 = vld [vmem:[%s0 + $0x20] sm:$0xf]
  %v24 = vld [vmem:[%s0 + $0x24] sm:$0xf]
  %v25 = vld [vmem:[%s0 + $0x28] sm:$0xf]
  %v26 = vld [vmem:[%s0 + $0x2c] sm:$0xf]
  %v27 = vld [vmem:[%s0 + $0x30] sm:$0xf]
  %v28 = vld [vmem:[%s0 + $0x34] sm:$0xf]
  %v29 = vld [vmem:[%s0 + $0x38] sm:$0xf]
  %v30 = vld [vmem:[%s0 + $0x3c] sm:$0xf]
  %v31 = vld [vmem:[%s0 + $0x40] sm:$0xf]
  %v32 = vld [vmem:[%s0 + $0x44] sm:$0xf]
  %v33 = vld [vmem:[%s0 + $0x48] sm:$0xf]
  %v34 = vld [vmem:[%s0 + $0x4c] sm:$0xf]
  %v35 = vld [vmem:[%s0 + $0x50] sm:$0xf]
  %v36 = vld [vmem:[%s0 + $0x54] sm:$0xf]
  %v37 = vld [vmem:[%s0 + $0x58] sm:$0xf]
  %v38 = vld [vmem:[%s0 + $0x5c] sm:$0xf]
  %v39 = vld [vmem:[%s0 + $0x60] sm:$0xf]
  %v40 = vld [vmem:[%s0 + $0x64] sm:$0xf]
  %v41 = vld [vmem:[%s0 + $0x68] sm:$0xf]
  %v42 = vld [vmem:[%s0 + $0x6c] sm:$0xf]
  %v43 = vld [vmem:[%s0 + $0x70] sm:$0xf]
  %v44 = vld [vmem:[%s0 + $0x74] sm:$0xf]
  %v45 = vld [vmem:[%s0 + $0x78] sm:$0xf]
  %v46 = vld [vmem:[%s0 + $0x7c] sm:$0xf]
  %v47 = vld [vmem:[%s0 + $0x80] sm:$0xf]
  %v48 = vld [vmem:[%s0 + $0x84] sm:$0xf]
  %v49 = vld [vmem:[%s0 + $0x88] sm:$0xf]
  %v50 = vld [vmem:[%s0 + $0x8c] sm:$0xf]
  %v51 = vld [vmem:[%s0 + $0x90] sm:$0xf]
  %v52 = vld [vmem:[%s0 + $0x94] sm:$0xf]
  %v53 = vld [vmem:[%s0 + $0x98] sm:$0xf]
  %v54 = vld [vmem:[%s0 + $0x9c] sm:$0xf]
  %v55 = vld [vmem:[%s0 + $0xa0] sm:$0xf]
  %v56 = vld [vmem:[%s0 + $0xa4] sm:$0xf]
  %v57 = vld [vmem:[%s0 + $0xa8] sm:$0xf]
  %v58 = vld [vmem:[%s0 + $0xac] sm:$0xf]
  %v59 = vld [vmem:[%s0 + $0xb0] sm:$0xf]
  %v60 = vld [vmem:[%s0 + $0xb4] sm:$0xf]
  %v61 = vld [vmem:[%s0 + $0xb8] sm:$0xf]
  %v62 = vld [vmem:[%s0 + $0xbc] sm:$0xf]
  %v63 = vld [vmem:[%s0 + $0xc0] sm:$0xf]
  %v64 = vld [vmem:[%s0 + $0xc4] sm:$0xf]
  %v65 = vld [vmem:[%s0 + $0xc8] sm:$0xf]
  %v66 = vld [vmem:[%s0 + $0xcc] sm:$0xf]
  %v67 = vld [vmem:[%s0 + $0xd0] sm:$0xf]
  %v68 = vld [vmem:[%s0 + $0xd4] sm:$0xf]
  %v69 = vld [vmem:[%s0 + $0xd8] sm:$0xf]
  %v70 = vld [vmem:[%s0 + $0xdc] sm:$0xf]
  %v71 = vld [vmem:[%s0 + $0xe0] sm:$0xf]
  %v72 = vld [vmem:[%s0 + $0xe4] sm:$0xf]
  %v73 = vld [vmem:[%s0 + $0xe8] sm:$0xf]
  %v74 = vld [vmem:[%s0 + $0xec] sm:$0xf]
  %v75 = vld [vmem:[%s0 + $0xf0] sm:$0xf]
  %v76 = vld [vmem:[%s0 + $0xf4] sm:$0xf]
  %v77 = vld [vmem:[%s0 + $0xf8] sm:$0xf]
  %v78 = vld [vmem:[%s0 + $0xfc] sm:$0xf]
  %v79 = vld [vmem:[%s0 + $0x100] sm:$0xf]
  %v80 = vld [vmem:[%s0 + $0x104] sm:$0xf]
  %v81 = vld [vmem:[%s0 + $0x108] sm:$0xf]
  %v82 = vld [vmem:[%s0 + $0x10c] sm:$0xf]
  %v83 = vld [vmem:[%s0 + $0x110] sm:$0xf]
  %v84 = vld [vmem:[%s0 + $0x114] sm:$0xf]
  %v85 = vld [vmem:[%s0 + $0x118] sm:$0xf]
  %v86 = vld [vmem:[%s0 + $0x11c] sm:$0xf]
  %v87 = vld [vmem:[%s0 + $0x120] sm:$0xf]
  %v88 = vld [vmem:[%s0 + $0x124] sm:$0xf]
  %v89 = vld [vmem:[%s0 + $0x128] sm:$0xf]
  %v90 = vld [vmem:[%s0 + $0x12c] sm:$0xf]
  %v91 = vld [vmem:[%s0 + $0x130] sm:$0xf]
  %v92 = vld [vmem:[%s0 + $0x134] sm:$0xf]
  %v93 = vld [vmem:[%s0 + $0x138] sm:$0xf]
  %v94 = vld [vmem:[%s0 + $0x13c] sm:$0xf]
  %v95 = vld [vmem:[%s0 + $0x140] sm:$0xf]
  %v96 = vld [vmem:[%s0 + $0x144] sm:$0xf]
  %v97 = vld [vmem:[%s0 + $0x148] sm:$0xf]
  %v98 = vld [vmem:[%s0 + $0x14c] sm:$0xf]
  %v99 = vld [vmem:[%s0 + $0x150] sm:$0xf]
  %v100 = vld [vmem:[%s0 + $0x154] sm:$0xf]
  %v101 = vld [vmem:[%s0 + $0x158] sm:$0xf]
  %v102 = vld [vmem:[%s0 + $0x15c] sm:$0xf]
  %v103 = vld [vmem:[%s0 + $0x160] sm:$0xf]
  %v104 = vld [vmem:[%s0 + $0x164] sm:$0xf]
  %v105 = vld [vmem:[%s0 + $0x168] sm:$0xf]
  %v106 = vld [vmem:[%s0 + $0x16c] sm:$0xf]
  %v107 = vld [vmem:[%s0 + $0x170] sm:$0xf]
  %v108 = vld [vmem:[%s0 + $0x174] sm:$0xf]
  %v109 = vld [vmem:[%s0 + $0x178] sm:$0xf]
  %v110 = vld [vmem:[%s0 + $0x17c] sm:$0xf]
  %v111 = vld [vmem:[%s0 + $0x180] sm:$0xf]
  %v112 = vld [vmem:[%s0 + $0x184] sm:$0xf]
  %v113 = vld [vmem:[%s0 + $0x188] sm:$0xf]
  %v114 = vld [vmem:[%s0 + $0x18c] sm:$0xf]
  %v115 = vld [vmem:[%s0 + $0x190] sm:$0xf]
  %v116 = vld [vmem:[%s0 + $0x194] sm:$0xf]
  %v117 = vld [vmem:[%s0 + $0x198] sm:$0xf]
  %v118 = vld [vmem:[%s0 + $0x19c] sm:$0xf]
  %v119 = vld [vmem:[%s0 + $0x1a0] sm:$0xf]
  %v120 = vld [vmem:[%s0 + $0x1a4] sm:$0xf]
  %v121 = vld [vmem:[%s0 + $0x1a8] sm:$0xf]
  %v122 = vld [vmem:[%s0 + $0x1ac] sm:$0xf]
  %v123 = vld [vmem:[%s0 + $0x1b0] sm:$0xf]
  %v124 = vld [vmem:[%s0 + $0x1b4] sm:$0xf]
  %v125 = vld [vmem:[%s0 + $0x1b8] sm:$0xf]
  %v126 = vld [vmem:[%s0 + $0x1bc] sm:$0xf]
  %v127 = vld [vmem:[%s0 + $0x1c0] sm:$0xf]
  %v128 = vld [vmem:[%s0 + $0x1c4] sm:$0xf]
  %v129 = vld [vmem:[%s0 + $0x1c8] sm:$0xf]
  %v130 = vld [vmem:[%s0 + $0x1cc] sm:$0xf]
  %v131 = vld [vmem:[%s0 + $0x1d0] sm:$0xf]
  %v132 = vld [vmem:[%s0 + $0x1d4] sm:$0xf]
  %v133 = vld [vmem:[%s0 + $0x1d8] sm:$0xf]
  %v134 = vld [vmem:[%s0 + $0x1dc] sm:$0xf]
  %v135 = vld [vmem:[%s0 + $0x1e0] sm:$0xf]
  %v136 = vld [vmem:[%s0 + $0x1e4] sm:$0xf]
  %v137 = vld [vmem:[%s0 + $0x1e8] sm:$0xf]
  %v138 = vld [vmem:[%s0 + $0x1ec] sm:$0xf]
  %v139 = vld [vmem:[%s0 + $0x1f0] sm:$0xf]
  %v140 = vld [vmem:[%s0 + $0x1f4] sm:$0xf]
  %v141 = vld [vmem:[%s0 + $0x1f8] sm:$0xf]
  %v142 = vld [vmem:[%s0 + $0x1fc] sm:$0xf]
  %v143 = vld [vmem:[%s0 + $0x200] sm:$0xf]
  %v144 = vld [vmem:[%s0 + $0x204] sm:$0xf]
  %v145 = vld [vmem:[%s0 + $0x208] sm:$0xf]
  %v146 = vld [vmem:[%s0 + $0x20c] sm:$0xf]
  %v147 = vld [vmem:[%s0 + $0x210] sm:$0xf]
  %v148 = vld [vmem:[%s0 + $0x214] sm:$0xf]
  %v149 = vld [vmem:[%s0 + $0x218] sm:$0xf]
  %v150 = vld [vmem:[%s0 + $0x21c] sm:$0xf]
  %v151 = vld [vmem:[%s0 + $0x220] sm:$0xf]
  %v152 = vld [vmem:[%s0 + $0x224] sm:$0xf]
  %v153 = vld [vmem:[%s0 + $0x228] sm:$0xf]
  %v154 = vld [vmem:[%s0 + $0x22c] sm:$0xf]
  %v155 = vld [vmem:[%s0 + $0x230] sm:$0xf]
  %v156 = vld [vmem:[%s0 + $0x234] sm:$0xf]
  %v157 = vld [vmem:[%s0 + $0x238] sm:$0xf]
  %v158 = vld [vmem:[%s0 + $0x23c] sm:$0xf]
  %v159 = vld [vmem:[%s0 + $0x240] sm:$0xf]
  %v160 = vld [vmem:[%s0 + $0x244] sm:$0xf]
  %v161 = vld [vmem:[%s0 + $0x248] sm:$0xf]
  %v162 = vld [vmem:[%s0 + $0x24c] sm:$0xf]
  %v163 = vld [vmem:[%s0 + $0x250] sm:$0xf]
  %v164 = vld [vmem:[%s0 + $0x254] sm:$0xf]
  %v165 = vld [vmem:[%s0 + $0x258] sm:$0xf]
  %v166 = vld [vmem:[%s0 + $0x25c] sm:$0xf]
  %v167 = vld [vmem:[%s0 + $0x260] sm:$0xf]
  %v168 = vld [vmem:[%s0 + $0x264] sm:$0xf]
  %v169 = vld [vmem:[%s0 + $0x268] sm:$0xf]
  %v170 = vld [vmem:[%s0 + $0x26c] sm:$0xf]
  %v171 = vld [vmem:[%s0 + $0x270] sm:$0xf]
  %v172 = vld [vmem:[%s0 + $0x274] sm:$0xf]
  %v173 = vld [vmem:[%s0 + $0x278] sm:$0xf]
  %v174 = vld [vmem:[%s0 + $0x27c] sm:$0xf]
  %v175 = vld [vmem:[%s0 + $0x280] sm:$0xf]
  %v176 = vld [vmem:[%s0 + $0x284] sm:$0xf]
  %v177 = vld [vmem:[%s0 + $0x288] sm:$0xf]
  %v178 = vld [vmem:[%s0 + $0x28c] sm:$0xf]
  %v179 = vld [vmem:[%s0 + $0x290] sm:$0xf]
  %v180 = vld [vmem:[%s0 + $0x294] sm:$0xf]
  %v181 = vld [vmem:[%s0 + $0x298] sm:$0xf]
  %v182 = vld [vmem:[%s0 + $0x29c] sm:$0xf]
  %v183 = vld [vmem:[%s0 + $0x2a0] sm:$0xf]
  %v184 = vld [vmem:[%s0 + $0x2a4] sm:$0xf]
  %v185 = vld [vmem:[%s0 + $0x2a8] sm:$0xf]
  %v186 = vld [vmem:[%s0 + $0x2ac] sm:$0xf]
  %v187 = vld [vmem:[%s0 + $0x2b0] sm:$0xf]
  %v188 = vld [vmem:[%s0 + $0x2b4] sm:$0xf]
  %v189 = vld [vmem:[%s0 + $0x2b8] sm:$0xf]
  %v190 = vld [vmem:[%s0 + $0x2bc] sm:$0xf]
  %v191 = vld [vmem:[%s0 + $0x2c0] sm:$0xf]
  %v192 = vld [vmem:[%s0 + $0x2c4] sm:$0xf]
  %v193 = vld [vmem:[%s0 + $0x2c8] sm:$0xf]
  %v194 = vld [vmem:[%s0 + $0x2cc] sm:$0xf]
  %v195 = vld [vmem:[%s0 + $0x2d0] sm:$0xf]
  %v196 = vld [vmem:[%s0 + $0x2d4] sm:$0xf]
  %v197 = vld [vmem:[%s0 + $0x2d8] sm:$0xf]
  %v198 = vld [vmem:[%s0 + $0x2dc] sm:$0xf]
  %v199 = vld [vmem:[%s0 + $0x2e0] sm:$0xf]
  %v200 = vld [vmem:[%s0 + $0x2e4] sm:$0xf]
  %v201 = vld [vmem:[%s0 + $0x2e8] sm:$0xf]
  %v202 = vld [vmem:[%s0 + $0x2ec] sm:$0xf]
  %v203 = vld [vmem:[%s0 + $0x2f0] sm:$0xf]
  %v204 = vld [vmem:[%s0 + $0x2f4] sm:$0xf]
  %v205 = vld [vmem:[%s0 + $0x2f8] sm:$0xf]
  %v206 = vld [vmem:[%s0 + $0x2fc] sm:$0xf]
  %v207 = vld [vmem:[%s0 + $0x300] sm:$0xf]
  %v208 = vld [vmem:[%s0 + $0x304] sm:$0xf]
  %v209 = vld [vmem:[%s0 + $0x308] sm:$0xf]
  %v210 = vld [vmem:[%s0 + $0x30c] sm:$0xf]
  %v211 = vld [vmem:[%s1] sm:$0xf]
  %v212 = vld [vmem:[%s1 + $0x4] sm:$0xf]
  %v213 = vld [vmem:[%s2] sm:$0x1]
  %v215 = vlaneseq
  %v216 = vshrl.u32 %v215, 7
  %v217 = vsub.s32 0, %v216
  %v218 = vrot.slane %v213, %v217
  %v416 = vunpack.c.l.b16 %v15
  %v417 = vunpack.c.l.b16 %v16
  %v418 = vunpack.c.l.b16 %v17
  %v419 = vunpack.c.l.b16 %v18
  %v420 = vunpack.c.l.b16 %v19
  %v421 = vunpack.c.l.b16 %v20
  %v422 = vunpack.c.l.b16 %v21
  %v423 = vunpack.c.l.b16 %v22
  %v424 = vunpack.c.l.b16 %v23
  %v425 = vunpack.c.l.b16 %v24
  %v426 = vunpack.c.l.b16 %v25
  %v427 = vunpack.c.l.b16 %v26
  %v428 = vunpack.c.l.b16 %v27
  %v429 = vunpack.c.l.b16 %v28
  %v430 = vunpack.c.l.b16 %v29
  %v431 = vunpack.c.l.b16 %v30
  %v432 = vunpack.c.l.b16 %v31
  %v433 = vunpack.c.l.b16 %v32
  %v434 = vunpack.c.l.b16 %v33
  %v435 = vunpack.c.l.b16 %v34
  %v436 = vunpack.c.l.b16 %v35
  %v437 = vunpack.c.l.b16 %v36
  %v438 = vunpack.c.l.b16 %v37
  %v439 = vunpack.c.l.b16 %v38
  %v440 = vunpack.c.l.b16 %v39
  %v441 = vunpack.c.l.b16 %v40
  %v442 = vunpack.c.l.b16 %v41
  %v443 = vunpack.c.l.b16 %v42
  %v444 = vunpack.c.l.b16 %v43
  %v445 = vunpack.c.l.b16 %v44
  %v446 = vunpack.c.l.b16 %v45
  %v447 = vunpack.c.l.b16 %v46
  %v448 = vunpack.c.l.b16 %v47
  %v449 = vunpack.c.l.b16 %v48
  %v450 = vunpack.c.l.b16 %v49
  %v451 = vunpack.c.l.b16 %v50
  %v452 = vunpack.c.l.b16 %v51
  %v453 = vunpack.c.l.b16 %v52
  %v454 = vunpack.c.l.b16 %v53
  %v455 = vunpack.c.l.b16 %v54
  %v456 = vunpack.c.l.b16 %v55
  %v457 = vunpack.c.l.b16 %v56
  %v458 = vunpack.c.l.b16 %v57
  %v459 = vunpack.c.l.b16 %v58
  %v460 = vunpack.c.l.b16 %v59
  %v461 = vunpack.c.l.b16 %v60
  %v462 = vunpack.c.l.b16 %v61
  %v463 = vunpack.c.l.b16 %v62
  %v464 = vunpack.c.l.b16 %v63
  %v465 = vunpack.c.l.b16 %v64
  %v466 = vunpack.c.l.b16 %v65
  %v467 = vunpack.c.l.b16 %v66
  %v468 = vunpack.c.l.b16 %v67
  %v469 = vunpack.c.l.b16 %v68
  %v470 = vunpack.c.l.b16 %v69
  %v471 = vunpack.c.l.b16 %v70
  %v472 = vunpack.c.l.b16 %v71
  %v473 = vunpack.c.l.b16 %v72
  %v474 = vunpack.c.l.b16 %v73
  %v475 = vunpack.c.l.b16 %v74
  %v476 = vunpack.c.l.b16 %v75
  %v477 = vunpack.c.l.b16 %v76
  %v478 = vunpack.c.l.b16 %v77
  %v479 = vunpack.c.l.b16 %v78
  %v480 = vunpack.c.l.b16 %v79
  %v481 = vunpack.c.l.b16 %v80
  %v482 = vunpack.c.l.b16 %v81
  %v483 = vunpack.c.l.b16 %v82
  %v484 = vunpack.c.l.b16 %v83
  %v485 = vunpack.c.l.b16 %v84
  %v486 = vunpack.c.l.b16 %v85
  %v487 = vunpack.c.l.b16 %v86
  %v488 = vunpack.c.l.b16 %v87
  %v489 = vunpack.c.l.b16 %v88
  %v490 = vunpack.c.l.b16 %v89
  %v491 = vunpack.c.l.b16 %v90
  %v492 = vunpack.c.l.b16 %v91
  %v493 = vunpack.c.l.b16 %v92
  %v494 = vunpack.c.l.b16 %v93
  %v495 = vunpack.c.l.b16 %v94
  %v496 = vunpack.c.l.b16 %v95
  %v497 = vunpack.c.l.b16 %v96
  %v498 = vunpack.c.l.b16 %v97
  %v499 = vunpack.c.l.b16 %v98
  %v500 = vunpack.c.l.b16 %v99
  %v501 = vunpack.c.l.b16 %v100
  %v502 = vunpack.c.l.b16 %v101
  %v503 = vunpack.c.l.b16 %v102
  %v504 = vunpack.c.l.b16 %v103
  %v505 = vunpack.c.l.b16 %v104
  %v506 = vunpack.c.l.b16 %v105
  %v507 = vunpack.c.l.b16 %v106
  %v508 = vunpack.c.l.b16 %v107
  %v509 = vunpack.c.l.b16 %v108
  %v510 = vunpack.c.l.b16 %v109
  %v511 = vunpack.c.l.b16 %v110
  %v512 = vunpack.c.l.b16 %v111
  %v513 = vunpack.c.l.b16 %v112
  %v514 = vunpack.c.l.b16 %v113
  %v515 = vunpack.c.l.b16 %v114
  %v516 = vunpack.c.l.b16 %v115
  %v517 = vunpack.c.l.b16 %v116
  %v518 = vunpack.c.l.b16 %v117
  %v519 = vunpack.c.l.b16 %v118
  %v520 = vunpack.c.l.b16 %v119
  %v521 = vunpack.c.l.b16 %v120
  %v522 = vunpack.c.l.b16 %v121
  %v523 = vunpack.c.l.b16 %v122
  %v524 = vunpack.c.l.b16 %v123
  %v525 = vunpack.c.l.b16 %v124
  %v526 = vunpack.c.l.b16 %v125
  %v527 = vunpack.c.l.b16 %v126
  %v528 = vunpack.c.l.b16 %v127
  %v529 = vunpack.c.l.b16 %v128
  %v530 = vunpack.c.l.b16 %v129
  %v531 = vunpack.c.l.b16 %v130
  %v532 = vunpack.c.l.b16 %v131
  %v533 = vunpack.c.l.b16 %v132
  %v534 = vunpack.c.l.b16 %v133
  %v535 = vunpack.c.l.b16 %v134
  %v536 = vunpack.c.l.b16 %v135
  %v537 = vunpack.c.l.b16 %v136
  %v538 = vunpack.c.l.b16 %v137
  %v539 = vunpack.c.l.b16 %v138
  %v540 = vunpack.c.l.b16 %v139
  %v541 = vunpack.c.l.b16 %v140
  %v542 = vunpack.c.l.b16 %v141
  %v543 = vunpack.c.l.b16 %v142
  %v544 = vunpack.c.l.b16 %v143
  %v545 = vunpack.c.l.b16 %v144
  %v546 = vunpack.c.l.b16 %v145
  %v547 = vunpack.c.l.b16 %v146
  %v548 = vunpack.c.l.b16 %v147
  %v549 = vunpack.c.l.b16 %v148
  %v550 = vunpack.c.l.b16 %v149
  %v551 = vunpack.c.l.b16 %v150
  %v552 = vunpack.c.l.b16 %v151
  %v553 = vunpack.c.l.b16 %v152
  %v554 = vunpack.c.l.b16 %v153
  %v555 = vunpack.c.l.b16 %v154
  %v556 = vunpack.c.l.b16 %v155
  %v557 = vunpack.c.l.b16 %v156
  %v558 = vunpack.c.l.b16 %v157
  %v559 = vunpack.c.l.b16 %v158
  %v560 = vunpack.c.l.b16 %v159
  %v561 = vunpack.c.l.b16 %v160
  %v562 = vunpack.c.l.b16 %v161
  %v563 = vunpack.c.l.b16 %v162
  %v564 = vunpack.c.l.b16 %v163
  %v565 = vunpack.c.l.b16 %v164
  %v566 = vunpack.c.l.b16 %v165
  %v567 = vunpack.c.l.b16 %v166
  %v568 = vunpack.c.l.b16 %v167
  %v569 = vunpack.c.l.b16 %v168
  %v570 = vunpack.c.l.b16 %v169
  %v571 = vunpack.c.l.b16 %v170
  %v572 = vunpack.c.l.b16 %v171
  %v573 = vunpack.c.l.b16 %v172
  %v574 = vunpack.c.l.b16 %v173
  %v575 = vunpack.c.l.b16 %v174
  %v576 = vunpack.c.l.b16 %v175
  %v577 = vunpack.c.l.b16 %v176
  %v578 = vunpack.c.l.b16 %v177
  %v579 = vunpack.c.l.b16 %v178
  %v580 = vunpack.c.l.b16 %v179
  %v581 = vunpack.c.l.b16 %v180
  %v582 = vunpack.c.l.b16 %v181
  %v583 = vunpack.c.l.b16 %v182
  %v584 = vunpack.c.l.b16 %v183
  %v585 = vunpack.c.l.b16 %v184
  %v586 = vunpack.c.l.b16 %v185
  %v587 = vunpack.c.l.b16 %v186
  %v588 = vunpack.c.l.b16 %v187
  %v589 = vunpack.c.l.b16 %v188
  %v590 = vunpack.c.l.b16 %v189
  %v591 = vunpack.c.l.b16 %v190
  %v592 = vunpack.c.l.b16 %v191
  %v593 = vunpack.c.l.b16 %v192
  %v594 = vunpack.c.l.b16 %v193
  %v595 = vunpack.c.l.b16 %v194
  %v596 = vunpack.c.l.b16 %v195
  %v597 = vunpack.c.l.b16 %v196
  %v598 = vunpack.c.l.b16 %v197
  %v599 = vunpack.c.l.b16 %v198
  %v600 = vunpack.c.l.b16 %v199
  %v601 = vunpack.c.l.b16 %v200
  %v602 = vunpack.c.l.b16 %v201
  %v603 = vunpack.c.l.b16 %v202
  %v604 = vunpack.c.l.b16 %v203
  %v605 = vunpack.c.l.b16 %v204
  %v606 = vunpack.c.l.b16 %v205
  %v607 = vunpack.c.l.b16 %v206
  %v608 = vunpack.c.l.b16 %v207
  %v609 = vunpack.c.l.b16 %v208
  %v610 = vunpack.c.l.b16 %v209
  %v611 = vunpack.c.l.b16 %v210
  %v612 = vpack.c.b16 %v417, %v416
  %v613 = vpack.c.b16 %v419, %v418
  %v614 = vpack.c.b16 %v421, %v420
  %v615 = vpack.c.b16 %v423, %v422
  %v616 = vpack.c.b16 %v425, %v424
  %v617 = vpack.c.b16 %v427, %v426
  %v618 = vpack.c.b16 %v429, %v428
  %v619 = vpack.c.b16 %v431, %v430
  %v620 = vpack.c.b16 %v433, %v432
  %v621 = vpack.c.b16 %v435, %v434
  %v622 = vpack.c.b16 %v437, %v436
  %v623 = vpack.c.b16 %v439, %v438
  %v624 = vpack.c.b16 %v441, %v440
  %v625 = vpack.c.b16 %v443, %v442
  %v626 = vpack.c.b16 %v445, %v444
  %v627 = vpack.c.b16 %v447, %v446
  %v628 = vpack.c.b16 %v449, %v448
  %v629 = vpack.c.b16 %v451, %v450
  %v630 = vpack.c.b16 %v453, %v452
  %v631 = vpack.c.b16 %v455, %v454
  %v632 = vpack.c.b16 %v457, %v456
  %v633 = vpack.c.b16 %v459, %v458
  %v634 = vpack.c.b16 %v461, %v460
  %v635 = vpack.c.b16 %v463, %v462
  %v636 = vpack.c.b16 %v465, %v464
  %v637 = vpack.c.b16 %v467, %v466
  %v638 = vpack.c.b16 %v469, %v468
  %v639 = vpack.c.b16 %v471, %v470
  %v640 = vpack.c.b16 %v473, %v472
  %v641 = vpack.c.b16 %v475, %v474
  %v642 = vpack.c.b16 %v477, %v476
  %v643 = vpack.c.b16 %v479, %v478
  %v644 = vpack.c.b16 %v481, %v480
  %v645 = vpack.c.b16 %v483, %v482
  %v646 = vpack.c.b16 %v485, %v484
  %v647 = vpack.c.b16 %v487, %v486
  %v648 = vpack.c.b16 %v489, %v488
  %v649 = vpack.c.b16 %v491, %v490
  %v650 = vpack.c.b16 %v493, %v492
  %v651 = vpack.c.b16 %v495, %v494
  %v652 = vpack.c.b16 %v497, %v496
  %v653 = vpack.c.b16 %v499, %v498
  %v654 = vpack.c.b16 %v501, %v500
  %v655 = vpack.c.b16 %v503, %v502
  %v656 = vpack.c.b16 %v505, %v504
  %v657 = vpack.c.b16 %v507, %v506
  %v658 = vpack.c.b16 %v509, %v508
  %v659 = vpack.c.b16 %v511, %v510
  %v660 = vpack.c.b16 %v513, %v512
  %v661 = vpack.c.b16 %v515, %v514
  %v662 = vpack.c.b16 %v517, %v516
  %v663 = vpack.c.b16 %v519, %v518
  %v664 = vpack.c.b16 %v521, %v520
  %v665 = vpack.c.b16 %v523, %v522
  %v666 = vpack.c.b16 %v525, %v524
  %v667 = vpack.c.b16 %v527, %v526
  %v668 = vpack.c.b16 %v529, %v528
  %v669 = vpack.c.b16 %v531, %v530
  %v670 = vpack.c.b16 %v533, %v532
  %v671 = vpack.c.b16 %v535, %v534
  %v672 = vpack.c.b16 %v537, %v536
  %v673 = vpack.c.b16 %v539, %v538
  %v674 = vpack.c.b16 %v541, %v540
  %v675 = vpack.c.b16 %v543, %v542
  %v676 = vpack.c.b16 %v545, %v544
  %v677 = vpack.c.b16 %v547, %v546
  %v678 = vpack.c.b16 %v549, %v548
  %v679 = vpack.c.b16 %v551, %v550
  %v680 = vpack.c.b16 %v553, %v552
  %v681 = vpack.c.b16 %v555, %v554
  %v682 = vpack.c.b16 %v557, %v556
  %v683 = vpack.c.b16 %v559, %v558
  %v684 = vpack.c.b16 %v561, %v560
  %v685 = vpack.c.b16 %v563, %v562
  %v686 = vpack.c.b16 %v565, %v564
  %v687 = vpack.c.b16 %v567, %v566
  %v688 = vpack.c.b16 %v569, %v568
  %v689 = vpack.c.b16 %v571, %v570
  %v690 = vpack.c.b16 %v573, %v572
  %v691 = vpack.c.b16 %v575, %v574
  %v692 = vpack.c.b16 %v577, %v576
  %v693 = vpack.c.b16 %v579, %v578
  %v694 = vpack.c.b16 %v581, %v580
  %v695 = vpack.c.b16 %v583, %v582
  %v696 = vpack.c.b16 %v585, %v584
  %v697 = vpack.c.b16 %v587, %v586
  %v698 = vpack.c.b16 %v589, %v588
  %v699 = vpack.c.b16 %v591, %v590
  %v700 = vpack.c.b16 %v593, %v592
  %v701 = vpack.c.b16 %v595, %v594
  %v702 = vpack.c.b16 %v597, %v596
  %v703 = vpack.c.b16 %v599, %v598
  %v704 = vpack.c.b16 %v601, %v600
  %v705 = vpack.c.b16 %v603, %v602
  %v706 = vpack.c.b16 %v605, %v604
  %v707 = vpack.c.b16 %v607, %v606
  %v708 = vpack.c.b16 %v609, %v608
  %v709 = vpack.c.b16 %v611, %v610
  %v712 = vunpack.c.l.b16 %v211
  %v713 = vunpack.c.l.b16 %v212
  %v714 = vpack.c.b16 %v713, %v712
  %vm716 = vcmask 130048
  %v718 = vsel %vm716, %v612, 0
  %v721 = vsel %vm716, %v613, 0
  %v724 = vsel %vm716, %v614, 0
  %v727 = vsel %vm716, %v615, 0
  %v730 = vsel %vm716, %v616, 0
  %v733 = vsel %vm716, %v617, 0
  %v736 = vsel %vm716, %v618, 0
  %v739 = vsel %vm716, %v619, 0
  %v742 = vsel %vm716, %v620, 0
  %v745 = vsel %vm716, %v621, 0
  %v748 = vsel %vm716, %v622, 0
  %v751 = vsel %vm716, %v623, 0
  %v754 = vsel %vm716, %v624, 0
  %v757 = vsel %vm716, %v625, 0
  %v760 = vsel %vm716, %v626, 0
  %v763 = vsel %vm716, %v627, 0
  %v766 = vsel %vm716, %v628, 0
  %v769 = vsel %vm716, %v629, 0
  %v772 = vsel %vm716, %v630, 0
  %v775 = vsel %vm716, %v631, 0
  %v778 = vsel %vm716, %v632, 0
  %v781 = vsel %vm716, %v633, 0
  %v784 = vsel %vm716, %v634, 0
  %v787 = vsel %vm716, %v635, 0
  %v790 = vsel %vm716, %v636, 0
  %v793 = vsel %vm716, %v637, 0
  %v796 = vsel %vm716, %v638, 0
  %v799 = vsel %vm716, %v639, 0
  %v802 = vsel %vm716, %v640, 0
  %v805 = vsel %vm716, %v641, 0
  %v808 = vsel %vm716, %v642, 0
  %v811 = vsel %vm716, %v643, 0
  %v814 = vsel %vm716, %v644, 0
  %v817 = vsel %vm716, %v645, 0
  %v820 = vsel %vm716, %v646, 0
  %v823 = vsel %vm716, %v647, 0
  %v826 = vsel %vm716, %v648, 0
  %v829 = vsel %vm716, %v649, 0
  %v832 = vsel %vm716, %v650, 0
  %v835 = vsel %vm716, %v651, 0
  %v838 = vsel %vm716, %v652, 0
  %v841 = vsel %vm716, %v653, 0
  %v844 = vsel %vm716, %v654, 0
  %v847 = vsel %vm716, %v655, 0
  %v850 = vsel %vm716, %v656, 0
  %v853 = vsel %vm716, %v657, 0
  %v856 = vsel %vm716, %v658, 0
  %v859 = vsel %vm716, %v659, 0
  %v862 = vsel %vm716, %v660, 0
  %v865 = vsel %vm716, %v661, 0
  %v868 = vsel %vm716, %v662, 0
  %v871 = vsel %vm716, %v663, 0
  %v874 = vsel %vm716, %v664, 0
  %v877 = vsel %vm716, %v665, 0
  %v880 = vsel %vm716, %v666, 0
  %v883 = vsel %vm716, %v667, 0
  %v886 = vsel %vm716, %v668, 0
  %v889 = vsel %vm716, %v669, 0
  %v892 = vsel %vm716, %v670, 0
  %v895 = vsel %vm716, %v671, 0
  %v898 = vsel %vm716, %v672, 0
  %v901 = vsel %vm716, %v673, 0
  %v904 = vsel %vm716, %v674, 0
  %v907 = vsel %vm716, %v675, 0
  %v910 = vsel %vm716, %v676, 0
  %v913 = vsel %vm716, %v677, 0
  %v916 = vsel %vm716, %v678, 0
  %v919 = vsel %vm716, %v679, 0
  %v922 = vsel %vm716, %v680, 0
  %v925 = vsel %vm716, %v681, 0
  %v928 = vsel %vm716, %v682, 0
  %v931 = vsel %vm716, %v683, 0
  %v934 = vsel %vm716, %v684, 0
  %v937 = vsel %vm716, %v685, 0
  %v940 = vsel %vm716, %v686, 0
  %v943 = vsel %vm716, %v687, 0
  %v946 = vsel %vm716, %v688, 0
  %v949 = vsel %vm716, %v689, 0
  %v952 = vsel %vm716, %v690, 0
  %v955 = vsel %vm716, %v691, 0
  %v958 = vsel %vm716, %v692, 0
  %v961 = vsel %vm716, %v693, 0
  %v964 = vsel %vm716, %v694, 0
  %v967 = vsel %vm716, %v695, 0
  %v970 = vsel %vm716, %v696, 0
  %v973 = vsel %vm716, %v697, 0
  %v976 = vsel %vm716, %v698, 0
  %v979 = vsel %vm716, %v699, 0
  %v982 = vsel %vm716, %v700, 0
  %v985 = vsel %vm716, %v701, 0
  %v988 = vsel %vm716, %v702, 0
  %v991 = vsel %vm716, %v703, 0
  %v994 = vsel %vm716, %v704, 0
  %v997 = vsel %vm716, %v705, 0
  %v1000 = vsel %vm716, %v706, 0
  %v1003 = vsel %vm716, %v707, 0
  %v1006 = vsel %vm716, %v708, 0
  %v1009 = vsel %vm716, %v709, 0
  %1011 = vmatprep.subr.bf16.mxu0 0
  %1012 = vmatpush1.bf16.msra.mxu0 %v714
  %1013 = vmatprep.subr.bf16.mxu0 0
  %1014 = vmatpush1.bf16.msra.mxu0 0
  %1015 = vmatprep.subr.bf16.mxu0 0
  %1016 = vmatpush1.bf16.msra.mxu0 0
  %1017 = vmatprep.subr.bf16.mxu0 0
  %1018 = vmatpush1.bf16.msra.mxu0 0
  %1019 = vmatprep.subr.bf16.mxu0 0
  %1020 = vmatpush1.bf16.msra.mxu0 0
  %1021 = vmatprep.subr.bf16.mxu0 0
  %1022 = vmatpush1.bf16.msra.mxu0 0
  %1023 = vmatprep.subr.bf16.mxu0 0
  %1024 = vmatpush1.bf16.msra.mxu0 0
  %1025 = vmatprep.subr.bf16.mxu0 0
  %1026 = vmatpush1.bf16.msra.mxu0 0
  %1027 = vmatprep.subr.bf16.mxu0 0
  %1028 = vmatpush1.bf16.msra.mxu0 0
  %1029 = vmatprep.subr.bf16.mxu0 0
  %1030 = vmatpush1.bf16.msra.mxu0 0
  %1031 = vmatprep.subr.bf16.mxu0 0
  %1032 = vmatpush1.bf16.msra.mxu0 0
  %1033 = vmatprep.subr.bf16.mxu0 0
  %1034 = vmatpush1.bf16.msra.mxu0 0
  %1035 = vmatprep.subr.bf16.mxu0 0
  %1036 = vmatpush1.bf16.msra.mxu0 0
  %1037 = vmatprep.subr.bf16.mxu0 0
  %1038 = vmatpush1.bf16.msra.mxu0 0
  %1039 = vmatprep.subr.bf16.mxu0 0
  %1040 = vmatpush1.bf16.msra.mxu0 0
  %1041 = vmatprep.subr.bf16.mxu0 0
  %1042 = vmatpush1.bf16.msra.mxu0 0
  %1043 = vmatprep.mubr.bf16.mxu0 0
  %1044 = vmatmul.mubr.bf16.gmra.mrb[0].mxu0 %v718
  %v1045 = vpop.f32.mrb[0].mxu0
  %v1046 = vadd.f32 %v218, %v1045
  %v1047 = vpop.f32.mrb[0].mxu0
  %v1048 = vpop.f32.mrb[0].mxu0
  %v1049 = vadd.f32 %v218, %v1048
  %v1050 = vpop.f32.mrb[0].mxu0
  %1051 = vmatprep.mubr.bf16.mxu0 0
  %1052 = vmatmul.mubr.bf16.gmra.mrb[0].mxu0 %v721
  %v1053 = vpop.f32.mrb[0].mxu0
  %v1054 = vadd.f32 %v218, %v1053
  %v1055 = vpop.f32.mrb[0].mxu0
  %v1056 = vpop.f32.mrb[0].mxu0
  %v1057 = vadd.f32 %v218, %v1056
  %v1058 = vpop.f32.mrb[0].mxu0
  %1059 = vmatprep.mubr.bf16.mxu0 0
  %1060 = vmatmul.mubr.bf16.gmra.mrb[0].mxu0 %v724
  %v1061 = vpop.f32.mrb[0].mxu0
  %v1062 = vadd.f32 %v218, %v1061
  %v1063 = vpop.f32.mrb[0].mxu0
  %v1064 = vpop.f32.mrb[0].mxu0
  %v1065 = vadd.f32 %v218, %v1064
  %v1066 = vpop.f32.mrb[0].mxu0
  %1067 = vmatprep.mubr.bf16.mxu0 0
  %1068 = vmatmul.mubr.bf16.gmra.mrb[0].mxu0 %v727
  %v1069 = vpop.f32.mrb[0].mxu0
  %v1070 = vadd.f32 %v218, %v1069
  %v1071 = vpop.f32.mrb[0].mxu0
  %v1072 = vpop.f32.mrb[0].mxu0
  %v1073 = vadd.f32 %v218, %v1072
  %v1074 = vpop.f32.mrb[0].mxu0
  %1075 = vmatprep.mubr.bf16.mxu0 0
  %1076 = vmatmul.mubr.bf16.gmra.mrb[0].mxu0 %v730
  %v1077 = vpop.f32.mrb[0].mxu0
  %v1078 = vadd.f32 %v218, %v1077
  %v1079 = vpop.f32.mrb[0].mxu0
  %v1080 = vpop.f32.mrb[0].mxu0
  %v1081 = vadd.f32 %v218, %v1080
  %v1082 = vpop.f32.mrb[0].mxu0
  %1083 = vmatprep.mubr.bf16.mxu0 0
  %1084 = vmatmul.mubr.bf16.gmra.mrb[0].mxu0 %v733
  %v1085 = vpop.f32.mrb[0].mxu0
  %v1086 = vadd.f32 %v218, %v1085
  %v1087 = vpop.f32.mrb[0].mxu0
  %v1088 = vpop.f32.mrb[0].mxu0
  %v1089 = vadd.f32 %v218, %v1088
  %v1090 = vpop.f32.mrb[0].mxu0
  %1091 = vmatprep.mubr.bf16.mxu0 0
  %1092 = vmatmul.mubr.bf16.gmra.mrb[0].mxu0 %v736
  %v1093 = vpop.f32.mrb[0].mxu0
  %v1094 = vadd.f32 %v218, %v1093
  %v1095 = vpop.f32.mrb[0].mxu0
  %v1096 = vpop.f32.mrb[0].mxu0
  %v1097 = vadd.f32 %v218, %v1096
  %v1098 = vpop.f32.mrb[0].mxu0
  %1099 = vmatprep.mubr.bf16.mxu0 0
  %1100 = vmatmul.mubr.bf16.gmra.mrb[0].mxu0 %v739
  %v1101 = vpop.f32.mrb[0].mxu0
  %v1102 = vadd.f32 %v218, %v1101
  %v1103 = vpop.f32.mrb[0].mxu0
  %v1104 = vpop.f32.mrb[0].mxu0
  %v1105 = vadd.f32 %v218, %v1104
  %v1106 = vpop.f32.mrb[0].mxu0
  %1107 = vmatprep.mubr.bf16.mxu0 0
  %1108 = vmatmul.mubr.bf16.gmra.mrb[0].mxu0 %v742
  %v1109 = vpop.f32.mrb[0].mxu0
  %v1110 = vadd.f32 %v218, %v1109
  %v1111 = vpop.f32.mrb[0].mxu0
  %v1112 = vpop.f32.mrb[0].mxu0
  %v1113 = vadd.f32 %v218, %v1112
  %v1114 = vpop.f32.mrb[0].mxu0
  %1115 = vmatprep.mubr.bf16.mxu0 0
  %1116 = vmatmul.mubr.bf16.gmra.mrb[0].mxu0 %v745
  %v1117 = vpop.f32.mrb[0].mxu0
  %v1118 = vadd.f32 %v218, %v1117
  %v1119 = vpop.f32.mrb[0].mxu0
  %v1120 = vpop.f32.mrb[0].mxu0
  %v1121 = vadd.f32 %v218, %v1120
  %v1122 = vpop.f32.mrb[0].mxu0
  %1123 = vmatprep.mubr.bf16.mxu0 0
  %1124 = vmatmul.mubr.bf16.gmra.mrb[0].mxu0 %v748
  %v1125 = vpop.f32.mrb[0].mxu0
  %v1126 = vadd.f32 %v218, %v1125
  %v1127 = vpop.f32.mrb[0].mxu0
  %v1128 = vpop.f32.mrb[0].mxu0
  %v1129 = vadd.f32 %v218, %v1128
  %v1130 = vpop.f32.mrb[0].mxu0
  %1131 = vmatprep.mubr.bf16.mxu0 0
  %1132 = vmatmul.mubr.bf16.gmra.mrb[0].mxu0 %v751
  %v1133 = vpop.f32.mrb[0].mxu0
  %v1134 = vadd.f32 %v218, %v1133
  %v1135 = vpop.f32.mrb[0].mxu0
  %v1136 = vpop.f32.mrb[0].mxu0
  %v1137 = vadd.f32 %v218, %v1136
  %v1138 = vpop.f32.mrb[0].mxu0
  %1139 = vmatprep.mubr.bf16.mxu0 0
  %1140 = vmatmul.mubr.bf16.gmra.mrb[0].mxu0 %v754
  %v1141 = vpop.f32.mrb[0].mxu0
  %v1142 = vadd.f32 %v218, %v1141
  %v1143 = vpop.f32.mrb[0].mxu0
  %v1144 = vpop.f32.mrb[0].mxu0
  %v1145 = vadd.f32 %v218, %v1144
  %v1146 = vpop.f32.mrb[0].mxu0
  %1147 = vmatprep.mubr.bf16.mxu0 0
  %1148 = vmatmul.mubr.bf16.gmra.mrb[0].mxu0 %v757
  %v1149 = vpop.f32.mrb[0].mxu0
  %v1150 = vadd.f32 %v218, %v1149
  %v1151 = vpop.f32.mrb[0].mxu0
  %v1152 = vpop.f32.mrb[0].mxu0
  %v1153 = vadd.f32 %v218, %v1152
  %v1154 = vpop.f32.mrb[0].mxu0
  %1155 = vmatprep.mubr.bf16.mxu0 0
  %1156 = vmatmul.mubr.bf16.gmra.mrb[0].mxu0 %v760
  %v1157 = vpop.f32.mrb[0].mxu0
  %v1158 = vadd.f32 %v218, %v1157
  %v1159 = vpop.f32.mrb[0].mxu0
  %v1160 = vpop.f32.mrb[0].mxu0
  %v1161 = vadd.f32 %v218, %v1160
  %v1162 = vpop.f32.mrb[0].mxu0
  %1163 = vmatprep.mubr.bf16.mxu0 0
  %1164 = vmatmul.mubr.bf16.gmra.mrb[0].mxu0 %v763
  %v1165 = vpop.f32.mrb[0].mxu0
  %v1166 = vadd.f32 %v218, %v1165
  %v1167 = vpop.f32.mrb[0].mxu0
  %v1168 = vpop.f32.mrb[0].mxu0
  %v1169 = vadd.f32 %v218, %v1168
  %v1170 = vpop.f32.mrb[0].mxu0
  %1171 = vmatprep.mubr.bf16.mxu0 0
  %1172 = vmatmul.mubr.bf16.gmra.mrb[0].mxu0 %v766
  %v1173 = vpop.f32.mrb[0].mxu0
  %v1174 = vadd.f32 %v218, %v1173
  %v1175 = vpop.f32.mrb[0].mxu0
  %v1176 = vpop.f32.mrb[0].mxu0
  %v1177 = vadd.f32 %v218, %v1176
  %v1178 = vpop.f32.mrb[0].mxu0
  %1179 = vmatprep.mubr.bf16.mxu0 0
  %1180 = vmatmul.mubr.bf16.gmra.mrb[0].mxu0 %v769
  %v1181 = vpop.f32.mrb[0].mxu0
  %v1182 = vadd.f32 %v218, %v1181
  %v1183 = vpop.f32.mrb[0].mxu0
  %v1184 = vpop.f32.mrb[0].mxu0
  %v1185 = vadd.f32 %v218, %v1184
  %v1186 = vpop.f32.mrb[0].mxu0
  %1187 = vmatprep.mubr.bf16.mxu0 0
  %1188 = vmatmul.mubr.bf16.gmra.mrb[0].mxu0 %v772
  %v1189 = vpop.f32.mrb[0].mxu0
  %v1190 = vadd.f32 %v218, %v1189
  %v1191 = vpop.f32.mrb[0].mxu0
  %v1192 = vpop.f32.mrb[0].mxu0
  %v1193 = vadd.f32 %v218, %v1192
  %v1194 = vpop.f32.mrb[0].mxu0
  %1195 = vmatprep.mubr.bf16.mxu0 0
  %1196 = vmatmul.mubr.bf16.gmra.mrb[0].mxu0 %v775
  %v1197 = vpop.f32.mrb[0].mxu0
  %v1198 = vadd.f32 %v218, %v1197
  %v1199 = vpop.f32.mrb[0].mxu0
  %v1200 = vpop.f32.mrb[0].mxu0
  %v1201 = vadd.f32 %v218, %v1200
  %v1202 = vpop.f32.mrb[0].mxu0
  %1203 = vmatprep.mubr.bf16.mxu0 0
  %1204 = vmatmul.mubr.bf16.gmra.mrb[0].mxu0 %v778
  %v1205 = vpop.f32.mrb[0].mxu0
  %v1206 = vadd.f32 %v218, %v1205
  %v1207 = vpop.f32.mrb[0].mxu0
  %v1208 = vpop.f32.mrb[0].mxu0
  %v1209 = vadd.f32 %v218, %v1208
  %v1210 = vpop.f32.mrb[0].mxu0
  %1211 = vmatprep.mubr.bf16.mxu0 0
  %1212 = vmatmul.mubr.bf16.gmra.mrb[0].mxu0 %v781
  %v1213 = vpop.f32.mrb[0].mxu0
  %v1214 = vadd.f32 %v218, %v1213
  %v1215 = vpop.f32.mrb[0].mxu0
  %v1216 = vpop.f32.mrb[0].mxu0
  %v1217 = vadd.f32 %v218, %v1216
  %v1218 = vpop.f32.mrb[0].mxu0
  %1219 = vmatprep.mubr.bf16.mxu0 0
  %1220 = vmatmul.mubr.bf16.gmra.mrb[0].mxu0 %v784
  %v1221 = vpop.f32.mrb[0].mxu0
  %v1222 = vadd.f32 %v218, %v1221
  %v1223 = vpop.f32.mrb[0].mxu0
  %v1224 = vpop.f32.mrb[0].mxu0
  %v1225 = vadd.f32 %v218, %v1224
  %v1226 = vpop.f32.mrb[0].mxu0
  %1227 = vmatprep.mubr.bf16.mxu0 0
  %1228 = vmatmul.mubr.bf16.gmra.mrb[0].mxu0 %v787
  %v1229 = vpop.f32.mrb[0].mxu0
  %v1230 = vadd.f32 %v218, %v1229
  %v1231 = vpop.f32.mrb[0].mxu0
  %v1232 = vpop.f32.mrb[0].mxu0
  %v1233 = vadd.f32 %v218, %v1232
  %v1234 = vpop.f32.mrb[0].mxu0
  %1235 = vmatprep.mubr.bf16.mxu0 0
  %1236 = vmatmul.mubr.bf16.gmra.mrb[0].mxu0 %v790
  %v1237 = vpop.f32.mrb[0].mxu0
  %v1238 = vadd.f32 %v218, %v1237
  %v1239 = vpop.f32.mrb[0].mxu0
  %v1240 = vpop.f32.mrb[0].mxu0
  %v1241 = vadd.f32 %v218, %v1240
  %v1242 = vpop.f32.mrb[0].mxu0
  %1243 = vmatprep.mubr.bf16.mxu0 0
  %1244 = vmatmul.mubr.bf16.gmra.mrb[0].mxu0 %v793
  %v1245 = vpop.f32.mrb[0].mxu0
  %v1246 = vadd.f32 %v218, %v1245
  %v1247 = vpop.f32.mrb[0].mxu0
  %v1248 = vpop.f32.mrb[0].mxu0
  %v1249 = vadd.f32 %v218, %v1248
  %v1250 = vpop.f32.mrb[0].mxu0
  %1251 = vmatprep.mubr.bf16.mxu0 0
  %1252 = vmatmul.mubr.bf16.gmra.mrb[0].mxu0 %v796
  %v1253 = vpop.f32.mrb[0].mxu0
  %v1254 = vadd.f32 %v218, %v1253
  %v1255 = vpop.f32.mrb[0].mxu0
  %v1256 = vpop.f32.mrb[0].mxu0
  %v1257 = vadd.f32 %v218, %v1256
  %v1258 = vpop.f32.mrb[0].mxu0
  %1259 = vmatprep.mubr.bf16.mxu0 0
  %1260 = vmatmul.mubr.bf16.gmra.mrb[0].mxu0 %v799
  %v1261 = vpop.f32.mrb[0].mxu0
  %v1262 = vadd.f32 %v218, %v1261
  %v1263 = vpop.f32.mrb[0].mxu0
  %v1264 = vpop.f32.mrb[0].mxu0
  %v1265 = vadd.f32 %v218, %v1264
  %v1266 = vpop.f32.mrb[0].mxu0
  %1267 = vmatprep.mubr.bf16.mxu0 0
  %1268 = vmatmul.mubr.bf16.gmra.mrb[0].mxu0 %v802
  %v1269 = vpop.f32.mrb[0].mxu0
  %v1270 = vadd.f32 %v218, %v1269
  %v1271 = vpop.f32.mrb[0].mxu0
  %v1272 = vpop.f32.mrb[0].mxu0
  %v1273 = vadd.f32 %v218, %v1272
  %v1274 = vpop.f32.mrb[0].mxu0
  %1275 = vmatprep.mubr.bf16.mxu0 0
  %1276 = vmatmul.mubr.bf16.gmra.mrb[0].mxu0 %v805
  %v1277 = vpop.f32.mrb[0].mxu0
  %v1278 = vadd.f32 %v218, %v1277
  %v1279 = vpop.f32.mrb[0].mxu0
  %v1280 = vpop.f32.mrb[0].mxu0
  %v1281 = vadd.f32 %v218, %v1280
  %v1282 = vpop.f32.mrb[0].mxu0
  %1283 = vmatprep.mubr.bf16.mxu0 0
  %1284 = vmatmul.mubr.bf16.gmra.mrb[0].mxu0 %v808
  %v1285 = vpop.f32.mrb[0].mxu0
  %v1286 = vadd.f32 %v218, %v1285
  %v1287 = vpop.f32.mrb[0].mxu0
  %v1288 = vpop.f32.mrb[0].mxu0
  %v1289 = vadd.f32 %v218, %v1288
  %v1290 = vpop.f32.mrb[0].mxu0
  %1291 = vmatprep.mubr.bf16.mxu0 0
  %1292 = vmatmul.mubr.bf16.gmra.mrb[0].mxu0 %v811
  %v1293 = vpop.f32.mrb[0].mxu0
  %v1294 = vadd.f32 %v218, %v1293
  %v1295 = vpop.f32.mrb[0].mxu0
  %v1296 = vpop.f32.mrb[0].mxu0
  %v1297 = vadd.f32 %v218, %v1296
  %v1298 = vpop.f32.mrb[0].mxu0
  %1299 = vmatprep.mubr.bf16.mxu0 0
  %1300 = vmatmul.mubr.bf16.gmra.mrb[0].mxu0 %v814
  %v1301 = vpop.f32.mrb[0].mxu0
  %v1302 = vadd.f32 %v218, %v1301
  %v1303 = vpop.f32.mrb[0].mxu0
  %v1304 = vpop.f32.mrb[0].mxu0
  %v1305 = vadd.f32 %v218, %v1304
  %v1306 = vpop.f32.mrb[0].mxu0
  %1307 = vmatprep.mubr.bf16.mxu0 0
  %1308 = vmatmul.mubr.bf16.gmra.mrb[0].mxu0 %v817
  %v1309 = vpop.f32.mrb[0].mxu0
  %v1310 = vadd.f32 %v218, %v1309
  %v1311 = vpop.f32.mrb[0].mxu0
  %v1312 = vpop.f32.mrb[0].mxu0
  %v1313 = vadd.f32 %v218, %v1312
  %v1314 = vpop.f32.mrb[0].mxu0
  %1315 = vmatprep.mubr.bf16.mxu0 0
  %1316 = vmatmul.mubr.bf16.gmra.mrb[0].mxu0 %v820
  %v1317 = vpop.f32.mrb[0].mxu0
  %v1318 = vadd.f32 %v218, %v1317
  %v1319 = vpop.f32.mrb[0].mxu0
  %v1320 = vpop.f32.mrb[0].mxu0
  %v1321 = vadd.f32 %v218, %v1320
  %v1322 = vpop.f32.mrb[0].mxu0
  %1323 = vmatprep.mubr.bf16.mxu0 0
  %1324 = vmatmul.mubr.bf16.gmra.mrb[0].mxu0 %v823
  %v1325 = vpop.f32.mrb[0].mxu0
  %v1326 = vadd.f32 %v218, %v1325
  %v1327 = vpop.f32.mrb[0].mxu0
  %v1328 = vpop.f32.mrb[0].mxu0
  %v1329 = vadd.f32 %v218, %v1328
  %v1330 = vpop.f32.mrb[0].mxu0
  %1331 = vmatprep.mubr.bf16.mxu0 0
  %1332 = vmatmul.mubr.bf16.gmra.mrb[0].mxu0 %v826
  %v1333 = vpop.f32.mrb[0].mxu0
  %v1334 = vadd.f32 %v218, %v1333
  %v1335 = vpop.f32.mrb[0].mxu0
  %v1336 = vpop.f32.mrb[0].mxu0
  %v1337 = vadd.f32 %v218, %v1336
  %v1338 = vpop.f32.mrb[0].mxu0
  %1339 = vmatprep.mubr.bf16.mxu0 0
  %1340 = vmatmul.mubr.bf16.gmra.mrb[0].mxu0 %v829
  %v1341 = vpop.f32.mrb[0].mxu0
  %v1342 = vadd.f32 %v218, %v1341
  %v1343 = vpop.f32.mrb[0].mxu0
  %v1344 = vpop.f32.mrb[0].mxu0
  %v1345 = vadd.f32 %v218, %v1344
  %v1346 = vpop.f32.mrb[0].mxu0
  %1347 = vmatprep.mubr.bf16.mxu0 0
  %1348 = vmatmul.mubr.bf16.gmra.mrb[0].mxu0 %v832
  %v1349 = vpop.f32.mrb[0].mxu0
  %v1350 = vadd.f32 %v218, %v1349
  %v1351 = vpop.f32.mrb[0].mxu0
  %v1352 = vpop.f32.mrb[0].mxu0
  %v1353 = vadd.f32 %v218, %v1352
  %v1354 = vpop.f32.mrb[0].mxu0
  %1355 = vmatprep.mubr.bf16.mxu0 0
  %1356 = vmatmul.mubr.bf16.gmra.mrb[0].mxu0 %v835
  %v1357 = vpop.f32.mrb[0].mxu0
  %v1358 = vadd.f32 %v218, %v1357
  %v1359 = vpop.f32.mrb[0].mxu0
  %v1360 = vpop.f32.mrb[0].mxu0
  %v1361 = vadd.f32 %v218, %v1360
  %v1362 = vpop.f32.mrb[0].mxu0
  %1363 = vmatprep.mubr.bf16.mxu0 0
  %1364 = vmatmul.mubr.bf16.gmra.mrb[0].mxu0 %v838
  %v1365 = vpop.f32.mrb[0].mxu0
  %v1366 = vadd.f32 %v218, %v1365
  %v1367 = vpop.f32.mrb[0].mxu0
  %v1368 = vpop.f32.mrb[0].mxu0
  %v1369 = vadd.f32 %v218, %v1368
  %v1370 = vpop.f32.mrb[0].mxu0
  %1371 = vmatprep.mubr.bf16.mxu0 0
  %1372 = vmatmul.mubr.bf16.gmra.mrb[0].mxu0 %v841
  %v1373 = vpop.f32.mrb[0].mxu0
  %v1374 = vadd.f32 %v218, %v1373
  %v1375 = vpop.f32.mrb[0].mxu0
  %v1376 = vpop.f32.mrb[0].mxu0
  %v1377 = vadd.f32 %v218, %v1376
  %v1378 = vpop.f32.mrb[0].mxu0
  %1379 = vmatprep.mubr.bf16.mxu0 0
  %1380 = vmatmul.mubr.bf16.gmra.mrb[0].mxu0 %v844
  %v1381 = vpop.f32.mrb[0].mxu0
  %v1382 = vadd.f32 %v218, %v1381
  %v1383 = vpop.f32.mrb[0].mxu0
  %v1384 = vpop.f32.mrb[0].mxu0
  %v1385 = vadd.f32 %v218, %v1384
  %v1386 = vpop.f32.mrb[0].mxu0
  %1387 = vmatprep.mubr.bf16.mxu0 0
  %1388 = vmatmul.mubr.bf16.gmra.mrb[0].mxu0 %v847
  %v1389 = vpop.f32.mrb[0].mxu0
  %v1390 = vadd.f32 %v218, %v1389
  %v1391 = vpop.f32.mrb[0].mxu0
  %v1392 = vpop.f32.mrb[0].mxu0
  %v1393 = vadd.f32 %v218, %v1392
  %v1394 = vpop.f32.mrb[0].mxu0
  %1395 = vmatprep.mubr.bf16.mxu0 0
  %1396 = vmatmul.mubr.bf16.gmra.mrb[0].mxu0 %v850
  %v1397 = vpop.f32.mrb[0].mxu0
  %v1398 = vadd.f32 %v218, %v1397
  %v1399 = vpop.f32.mrb[0].mxu0
  %v1400 = vpop.f32.mrb[0].mxu0
  %v1401 = vadd.f32 %v218, %v1400
  %v1402 = vpop.f32.mrb[0].mxu0
  %1403 = vmatprep.mubr.bf16.mxu0 0
  %1404 = vmatmul.mubr.bf16.gmra.mrb[0].mxu0 %v853
  %v1405 = vpop.f32.mrb[0].mxu0
  %v1406 = vadd.f32 %v218, %v1405
  %v1407 = vpop.f32.mrb[0].mxu0
  %v1408 = vpop.f32.mrb[0].mxu0
  %v1409 = vadd.f32 %v218, %v1408
  %v1410 = vpop.f32.mrb[0].mxu0
  %1411 = vmatprep.mubr.bf16.mxu0 0
  %1412 = vmatmul.mubr.bf16.gmra.mrb[0].mxu0 %v856
  %v1413 = vpop.f32.mrb[0].mxu0
  %v1414 = vadd.f32 %v218, %v1413
  %v1415 = vpop.f32.mrb[0].mxu0
  %v1416 = vpop.f32.mrb[0].mxu0
  %v1417 = vadd.f32 %v218, %v1416
  %v1418 = vpop.f32.mrb[0].mxu0
  %1419 = vmatprep.mubr.bf16.mxu0 0
  %1420 = vmatmul.mubr.bf16.gmra.mrb[0].mxu0 %v859
  %v1421 = vpop.f32.mrb[0].mxu0
  %v1422 = vadd.f32 %v218, %v1421
  %v1423 = vpop.f32.mrb[0].mxu0
  %v1424 = vpop.f32.mrb[0].mxu0
  %v1425 = vadd.f32 %v218, %v1424
  %v1426 = vpop.f32.mrb[0].mxu0
  %1427 = vmatprep.mubr.bf16.mxu0 0
  %1428 = vmatmul.mubr.bf16.gmra.mrb[0].mxu0 %v862
  %v1429 = vpop.f32.mrb[0].mxu0
  %v1430 = vadd.f32 %v218, %v1429
  %v1431 = vpop.f32.mrb[0].mxu0
  %v1432 = vpop.f32.mrb[0].mxu0
  %v1433 = vadd.f32 %v218, %v1432
  %v1434 = vpop.f32.mrb[0].mxu0
  %1435 = vmatprep.mubr.bf16.mxu0 0
  %1436 = vmatmul.mubr.bf16.gmra.mrb[0].mxu0 %v865
  %v1437 = vpop.f32.mrb[0].mxu0
  %v1438 = vadd.f32 %v218, %v1437
  %v1439 = vpop.f32.mrb[0].mxu0
  %v1440 = vpop.f32.mrb[0].mxu0
  %v1441 = vadd.f32 %v218, %v1440
  %v1442 = vpop.f32.mrb[0].mxu0
  %1443 = vmatprep.mubr.bf16.mxu0 0
  %1444 = vmatmul.mubr.bf16.gmra.mrb[0].mxu0 %v868
  %v1445 = vpop.f32.mrb[0].mxu0
  %v1446 = vadd.f32 %v218, %v1445
  %v1447 = vpop.f32.mrb[0].mxu0
  %v1448 = vpop.f32.mrb[0].mxu0
  %v1449 = vadd.f32 %v218, %v1448
  %v1450 = vpop.f32.mrb[0].mxu0
  %1451 = vmatprep.mubr.bf16.mxu0 0
  %1452 = vmatmul.mubr.bf16.gmra.mrb[0].mxu0 %v871
  %v1453 = vpop.f32.mrb[0].mxu0
  %v1454 = vadd.f32 %v218, %v1453
  %v1455 = vpop.f32.mrb[0].mxu0
  %v1456 = vpop.f32.mrb[0].mxu0
  %v1457 = vadd.f32 %v218, %v1456
  %v1458 = vpop.f32.mrb[0].mxu0
  %1459 = vmatprep.mubr.bf16.mxu0 0
  %1460 = vmatmul.mubr.bf16.gmra.mrb[0].mxu0 %v874
  %v1461 = vpop.f32.mrb[0].mxu0
  %v1462 = vadd.f32 %v218, %v1461
  %v1463 = vpop.f32.mrb[0].mxu0
  %v1464 = vpop.f32.mrb[0].mxu0
  %v1465 = vadd.f32 %v218, %v1464
  %v1466 = vpop.f32.mrb[0].mxu0
  %1467 = vmatprep.mubr.bf16.mxu0 0
  %1468 = vmatmul.mubr.bf16.gmra.mrb[0].mxu0 %v877
  %v1469 = vpop.f32.mrb[0].mxu0
  %v1470 = vadd.f32 %v218, %v1469
  %v1471 = vpop.f32.mrb[0].mxu0
  %v1472 = vpop.f32.mrb[0].mxu0
  %v1473 = vadd.f32 %v218, %v1472
  %v1474 = vpop.f32.mrb[0].mxu0
  %1475 = vmatprep.mubr.bf16.mxu0 0
  %1476 = vmatmul.mubr.bf16.gmra.mrb[0].mxu0 %v880
  %v1477 = vpop.f32.mrb[0].mxu0
  %v1478 = vadd.f32 %v218, %v1477
  %v1479 = vpop.f32.mrb[0].mxu0
  %v1480 = vpop.f32.mrb[0].mxu0
  %v1481 = vadd.f32 %v218, %v1480
  %v1482 = vpop.f32.mrb[0].mxu0
  %1483 = vmatprep.mubr.bf16.mxu0 0
  %1484 = vmatmul.mubr.bf16.gmra.mrb[0].mxu0 %v883
  %v1485 = vpop.f32.mrb[0].mxu0
  %v1486 = vadd.f32 %v218, %v1485
  %v1487 = vpop.f32.mrb[0].mxu0
  %v1488 = vpop.f32.mrb[0].mxu0
  %v1489 = vadd.f32 %v218, %v1488
  %v1490 = vpop.f32.mrb[0].mxu0
  %1491 = vmatprep.mubr.bf16.mxu0 0
  %1492 = vmatmul.mubr.bf16.gmra.mrb[0].mxu0 %v886
  %v1493 = vpop.f32.mrb[0].mxu0
  %v1494 = vadd.f32 %v218, %v1493
  %v1495 = vpop.f32.mrb[0].mxu0
  %v1496 = vpop.f32.mrb[0].mxu0
  %v1497 = vadd.f32 %v218, %v1496
  %v1498 = vpop.f32.mrb[0].mxu0
  %1499 = vmatprep.mubr.bf16.mxu0 0
  %1500 = vmatmul.mubr.bf16.gmra.mrb[0].mxu0 %v889
  %v1501 = vpop.f32.mrb[0].mxu0
  %v1502 = vadd.f32 %v218, %v1501
  %v1503 = vpop.f32.mrb[0].mxu0
  %v1504 = vpop.f32.mrb[0].mxu0
  %v1505 = vadd.f32 %v218, %v1504
  %v1506 = vpop.f32.mrb[0].mxu0
  %1507 = vmatprep.mubr.bf16.mxu0 0
  %1508 = vmatmul.mubr.bf16.gmra.mrb[0].mxu0 %v892
  %v1509 = vpop.f32.mrb[0].mxu0
  %v1510 = vadd.f32 %v218, %v1509
  %v1511 = vpop.f32.mrb[0].mxu0
  %v1512 = vpop.f32.mrb[0].mxu0
  %v1513 = vadd.f32 %v218, %v1512
  %v1514 = vpop.f32.mrb[0].mxu0
  %1515 = vmatprep.mubr.bf16.mxu0 0
  %1516 = vmatmul.mubr.bf16.gmra.mrb[0].mxu0 %v895
  %v1517 = vpop.f32.mrb[0].mxu0
  %v1518 = vadd.f32 %v218, %v1517
  %v1519 = vpop.f32.mrb[0].mxu0
  %v1520 = vpop.f32.mrb[0].mxu0
  %v1521 = vadd.f32 %v218, %v1520
  %v1522 = vpop.f32.mrb[0].mxu0
  %1523 = vmatprep.mubr.bf16.mxu0 0
  %1524 = vmatmul.mubr.bf16.gmra.mrb[0].mxu0 %v898
  %v1525 = vpop.f32.mrb[0].mxu0
  %v1526 = vadd.f32 %v218, %v1525
  %v1527 = vpop.f32.mrb[0].mxu0
  %v1528 = vpop.f32.mrb[0].mxu0
  %v1529 = vadd.f32 %v218, %v1528
  %v1530 = vpop.f32.mrb[0].mxu0
  %1531 = vmatprep.mubr.bf16.mxu0 0
  %1532 = vmatmul.mubr.bf16.gmra.mrb[0].mxu0 %v901
  %v1533 = vpop.f32.mrb[0].mxu0
  %v1534 = vadd.f32 %v218, %v1533
  %v1535 = vpop.f32.mrb[0].mxu0
  %v1536 = vpop.f32.mrb[0].mxu0
  %v1537 = vadd.f32 %v218, %v1536
  %v1538 = vpop.f32.mrb[0].mxu0
  %1539 = vmatprep.mubr.bf16.mxu0 0
  %1540 = vmatmul.mubr.bf16.gmra.mrb[0].mxu0 %v904
  %v1541 = vpop.f32.mrb[0].mxu0
  %v1542 = vadd.f32 %v218, %v1541
  %v1543 = vpop.f32.mrb[0].mxu0
  %v1544 = vpop.f32.mrb[0].mxu0
  %v1545 = vadd.f32 %v218, %v1544
  %v1546 = vpop.f32.mrb[0].mxu0
  %1547 = vmatprep.mubr.bf16.mxu0 0
  %1548 = vmatmul.mubr.bf16.gmra.mrb[0].mxu0 %v907
  %v1549 = vpop.f32.mrb[0].mxu0
  %v1550 = vadd.f32 %v218, %v1549
  %v1551 = vpop.f32.mrb[0].mxu0
  %v1552 = vpop.f32.mrb[0].mxu0
  %v1553 = vadd.f32 %v218, %v1552
  %v1554 = vpop.f32.mrb[0].mxu0
  %1555 = vmatprep.mubr.bf16.mxu0 0
  %1556 = vmatmul.mubr.bf16.gmra.mrb[0].mxu0 %v910
  %v1557 = vpop.f32.mrb[0].mxu0
  %v1558 = vadd.f32 %v218, %v1557
  %v1559 = vpop.f32.mrb[0].mxu0
  %v1560 = vpop.f32.mrb[0].mxu0
  %v1561 = vadd.f32 %v218, %v1560
  %v1562 = vpop.f32.mrb[0].mxu0
  %1563 = vmatprep.mubr.bf16.mxu0 0
  %1564 = vmatmul.mubr.bf16.gmra.mrb[0].mxu0 %v913
  %v1565 = vpop.f32.mrb[0].mxu0
  %v1566 = vadd.f32 %v218, %v1565
  %v1567 = vpop.f32.mrb[0].mxu0
  %v1568 = vpop.f32.mrb[0].mxu0
  %v1569 = vadd.f32 %v218, %v1568
  %v1570 = vpop.f32.mrb[0].mxu0
  %1571 = vmatprep.mubr.bf16.mxu0 0
  %1572 = vmatmul.mubr.bf16.gmra.mrb[0].mxu0 %v916
  %v1573 = vpop.f32.mrb[0].mxu0
  %v1574 = vadd.f32 %v218, %v1573
  %v1575 = vpop.f32.mrb[0].mxu0
  %v1576 = vpop.f32.mrb[0].mxu0
  %v1577 = vadd.f32 %v218, %v1576
  %v1578 = vpop.f32.mrb[0].mxu0
  %1579 = vmatprep.mubr.bf16.mxu0 0
  %1580 = vmatmul.mubr.bf16.gmra.mrb[0].mxu0 %v919
  %v1581 = vpop.f32.mrb[0].mxu0
  %v1582 = vadd.f32 %v218, %v1581
  %v1583 = vpop.f32.mrb[0].mxu0
  %v1584 = vpop.f32.mrb[0].mxu0
  %v1585 = vadd.f32 %v218, %v1584
  %v1586 = vpop.f32.mrb[0].mxu0
  %1587 = vmatprep.mubr.bf16.mxu0 0
  %1588 = vmatmul.mubr.bf16.gmra.mrb[0].mxu0 %v922
  %v1589 = vpop.f32.mrb[0].mxu0
  %v1590 = vadd.f32 %v218, %v1589
  %v1591 = vpop.f32.mrb[0].mxu0
  %v1592 = vpop.f32.mrb[0].mxu0
  %v1593 = vadd.f32 %v218, %v1592
  %v1594 = vpop.f32.mrb[0].mxu0
  %1595 = vmatprep.mubr.bf16.mxu0 0
  %1596 = vmatmul.mubr.bf16.gmra.mrb[0].mxu0 %v925
  %v1597 = vpop.f32.mrb[0].mxu0
  %v1598 = vadd.f32 %v218, %v1597
  %v1599 = vpop.f32.mrb[0].mxu0
  %v1600 = vpop.f32.mrb[0].mxu0
  %v1601 = vadd.f32 %v218, %v1600
  %v1602 = vpop.f32.mrb[0].mxu0
  %1603 = vmatprep.mubr.bf16.mxu0 0
  %1604 = vmatmul.mubr.bf16.gmra.mrb[0].mxu0 %v928
  %v1605 = vpop.f32.mrb[0].mxu0
  %v1606 = vadd.f32 %v218, %v1605
  %v1607 = vpop.f32.mrb[0].mxu0
  %v1608 = vpop.f32.mrb[0].mxu0
  %v1609 = vadd.f32 %v218, %v1608
  %v1610 = vpop.f32.mrb[0].mxu0
  %1611 = vmatprep.mubr.bf16.mxu0 0
  %1612 = vmatmul.mubr.bf16.gmra.mrb[0].mxu0 %v931
  %v1613 = vpop.f32.mrb[0].mxu0
  %v1614 = vadd.f32 %v218, %v1613
  %v1615 = vpop.f32.mrb[0].mxu0
  %v1616 = vpop.f32.mrb[0].mxu0
  %v1617 = vadd.f32 %v218, %v1616
  %v1618 = vpop.f32.mrb[0].mxu0
  %1619 = vmatprep.mubr.bf16.mxu0 0
  %1620 = vmatmul.mubr.bf16.gmra.mrb[0].mxu0 %v934
  %v1621 = vpop.f32.mrb[0].mxu0
  %v1622 = vadd.f32 %v218, %v1621
  %v1623 = vpop.f32.mrb[0].mxu0
  %v1624 = vpop.f32.mrb[0].mxu0
  %v1625 = vadd.f32 %v218, %v1624
  %v1626 = vpop.f32.mrb[0].mxu0
  %1627 = vmatprep.mubr.bf16.mxu0 0
  %1628 = vmatmul.mubr.bf16.gmra.mrb[0].mxu0 %v937
  %v1629 = vpop.f32.mrb[0].mxu0
  %v1630 = vadd.f32 %v218, %v1629
  %v1631 = vpop.f32.mrb[0].mxu0
  %v1632 = vpop.f32.mrb[0].mxu0
  %v1633 = vadd.f32 %v218, %v1632
  %v1634 = vpop.f32.mrb[0].mxu0
  %1635 = vmatprep.mubr.bf16.mxu0 0
  %1636 = vmatmul.mubr.bf16.gmra.mrb[0].mxu0 %v940
  %v1637 = vpop.f32.mrb[0].mxu0
  %v1638 = vadd.f32 %v218, %v1637
  %v1639 = vpop.f32.mrb[0].mxu0
  %v1640 = vpop.f32.mrb[0].mxu0
  %v1641 = vadd.f32 %v218, %v1640
  %v1642 = vpop.f32.mrb[0].mxu0
  %1643 = vmatprep.mubr.bf16.mxu0 0
  %1644 = vmatmul.mubr.bf16.gmra.mrb[0].mxu0 %v943
  %v1645 = vpop.f32.mrb[0].mxu0
  %v1646 = vadd.f32 %v218, %v1645
  %v1647 = vpop.f32.mrb[0].mxu0
  %v1648 = vpop.f32.mrb[0].mxu0
  %v1649 = vadd.f32 %v218, %v1648
  %v1650 = vpop.f32.mrb[0].mxu0
  %1651 = vmatprep.mubr.bf16.mxu0 0
  %1652 = vmatmul.mubr.bf16.gmra.mrb[0].mxu0 %v946
  %v1653 = vpop.f32.mrb[0].mxu0
  %v1654 = vadd.f32 %v218, %v1653
  %v1655 = vpop.f32.mrb[0].mxu0
  %v1656 = vpop.f32.mrb[0].mxu0
  %v1657 = vadd.f32 %v218, %v1656
  %v1658 = vpop.f32.mrb[0].mxu0
  %1659 = vmatprep.mubr.bf16.mxu0 0
  %1660 = vmatmul.mubr.bf16.gmra.mrb[0].mxu0 %v949
  %v1661 = vpop.f32.mrb[0].mxu0
  %v1662 = vadd.f32 %v218, %v1661
  %v1663 = vpop.f32.mrb[0].mxu0
  %v1664 = vpop.f32.mrb[0].mxu0
  %v1665 = vadd.f32 %v218, %v1664
  %v1666 = vpop.f32.mrb[0].mxu0
  %1667 = vmatprep.mubr.bf16.mxu0 0
  %1668 = vmatmul.mubr.bf16.gmra.mrb[0].mxu0 %v952
  %v1669 = vpop.f32.mrb[0].mxu0
  %v1670 = vadd.f32 %v218, %v1669
  %v1671 = vpop.f32.mrb[0].mxu0
  %v1672 = vpop.f32.mrb[0].mxu0
  %v1673 = vadd.f32 %v218, %v1672
  %v1674 = vpop.f32.mrb[0].mxu0
  %1675 = vmatprep.mubr.bf16.mxu0 0
  %1676 = vmatmul.mubr.bf16.gmra.mrb[0].mxu0 %v955
  %v1677 = vpop.f32.mrb[0].mxu0
  %v1678 = vadd.f32 %v218, %v1677
  %v1679 = vpop.f32.mrb[0].mxu0
  %v1680 = vpop.f32.mrb[0].mxu0
  %v1681 = vadd.f32 %v218, %v1680
  %v1682 = vpop.f32.mrb[0].mxu0
  %1683 = vmatprep.mubr.bf16.mxu0 0
  %1684 = vmatmul.mubr.bf16.gmra.mrb[0].mxu0 %v958
  %v1685 = vpop.f32.mrb[0].mxu0
  %v1686 = vadd.f32 %v218, %v1685
  %v1687 = vpop.f32.mrb[0].mxu0
  %v1688 = vpop.f32.mrb[0].mxu0
  %v1689 = vadd.f32 %v218, %v1688
  %v1690 = vpop.f32.mrb[0].mxu0
  %1691 = vmatprep.mubr.bf16.mxu0 0
  %1692 = vmatmul.mubr.bf16.gmra.mrb[0].mxu0 %v961
  %v1693 = vpop.f32.mrb[0].mxu0
  %v1694 = vadd.f32 %v218, %v1693
  %v1695 = vpop.f32.mrb[0].mxu0
  %v1696 = vpop.f32.mrb[0].mxu0
  %v1697 = vadd.f32 %v218, %v1696
  %v1698 = vpop.f32.mrb[0].mxu0
  %1699 = vmatprep.mubr.bf16.mxu0 0
  %1700 = vmatmul.mubr.bf16.gmra.mrb[0].mxu0 %v964
  %v1701 = vpop.f32.mrb[0].mxu0
  %v1702 = vadd.f32 %v218, %v1701
  %v1703 = vpop.f32.mrb[0].mxu0
  %v1704 = vpop.f32.mrb[0].mxu0
  %v1705 = vadd.f32 %v218, %v1704
  %v1706 = vpop.f32.mrb[0].mxu0
  %1707 = vmatprep.mubr.bf16.mxu0 0
  %1708 = vmatmul.mubr.bf16.gmra.mrb[0].mxu0 %v967
  %v1709 = vpop.f32.mrb[0].mxu0
  %v1710 = vadd.f32 %v218, %v1709
  %v1711 = vpop.f32.mrb[0].mxu0
  %v1712 = vpop.f32.mrb[0].mxu0
  %v1713 = vadd.f32 %v218, %v1712
  %v1714 = vpop.f32.mrb[0].mxu0
  %1715 = vmatprep.mubr.bf16.mxu0 0
  %1716 = vmatmul.mubr.bf16.gmra.mrb[0].mxu0 %v970
  %v1717 = vpop.f32.mrb[0].mxu0
  %v1718 = vadd.f32 %v218, %v1717
  %v1719 = vpop.f32.mrb[0].mxu0
  %v1720 = vpop.f32.mrb[0].mxu0
  %v1721 = vadd.f32 %v218, %v1720
  %v1722 = vpop.f32.mrb[0].mxu0
  %1723 = vmatprep.mubr.bf16.mxu0 0
  %1724 = vmatmul.mubr.bf16.gmra.mrb[0].mxu0 %v973
  %v1725 = vpop.f32.mrb[0].mxu0
  %v1726 = vadd.f32 %v218, %v1725
  %v1727 = vpop.f32.mrb[0].mxu0
  %v1728 = vpop.f32.mrb[0].mxu0
  %v1729 = vadd.f32 %v218, %v1728
  %v1730 = vpop.f32.mrb[0].mxu0
  %1731 = vmatprep.mubr.bf16.mxu0 0
  %1732 = vmatmul.mubr.bf16.gmra.mrb[0].mxu0 %v976
  %v1733 = vpop.f32.mrb[0].mxu0
  %v1734 = vadd.f32 %v218, %v1733
  %v1735 = vpop.f32.mrb[0].mxu0
  %v1736 = vpop.f32.mrb[0].mxu0
  %v1737 = vadd.f32 %v218, %v1736
  %v1738 = vpop.f32.mrb[0].mxu0
  %1739 = vmatprep.mubr.bf16.mxu0 0
  %1740 = vmatmul.mubr.bf16.gmra.mrb[0].mxu0 %v979
  %v1741 = vpop.f32.mrb[0].mxu0
  %v1742 = vadd.f32 %v218, %v1741
  %v1743 = vpop.f32.mrb[0].mxu0
  %v1744 = vpop.f32.mrb[0].mxu0
  %v1745 = vadd.f32 %v218, %v1744
  %v1746 = vpop.f32.mrb[0].mxu0
  %1747 = vmatprep.mubr.bf16.mxu0 0
  %1748 = vmatmul.mubr.bf16.gmra.mrb[0].mxu0 %v982
  %v1749 = vpop.f32.mrb[0].mxu0
  %v1750 = vadd.f32 %v218, %v1749
  %v1751 = vpop.f32.mrb[0].mxu0
  %v1752 = vpop.f32.mrb[0].mxu0
  %v1753 = vadd.f32 %v218, %v1752
  %v1754 = vpop.f32.mrb[0].mxu0
  %1755 = vmatprep.mubr.bf16.mxu0 0
  %1756 = vmatmul.mubr.bf16.gmra.mrb[0].mxu0 %v985
  %v1757 = vpop.f32.mrb[0].mxu0
  %v1758 = vadd.f32 %v218, %v1757
  %v1759 = vpop.f32.mrb[0].mxu0
  %v1760 = vpop.f32.mrb[0].mxu0
  %v1761 = vadd.f32 %v218, %v1760
  %v1762 = vpop.f32.mrb[0].mxu0
  %1763 = vmatprep.mubr.bf16.mxu0 0
  %1764 = vmatmul.mubr.bf16.gmra.mrb[0].mxu0 %v988
  %v1765 = vpop.f32.mrb[0].mxu0
  %v1766 = vadd.f32 %v218, %v1765
  %v1767 = vpop.f32.mrb[0].mxu0
  %v1768 = vpop.f32.mrb[0].mxu0
  %v1769 = vadd.f32 %v218, %v1768
  %v1770 = vpop.f32.mrb[0].mxu0
  %1771 = vmatprep.mubr.bf16.mxu0 0
  %1772 = vmatmul.mubr.bf16.gmra.mrb[0].mxu0 %v991
  %v1773 = vpop.f32.mrb[0].mxu0
  %v1774 = vadd.f32 %v218, %v1773
  %v1775 = vpop.f32.mrb[0].mxu0
  %v1776 = vpop.f32.mrb[0].mxu0
  %v1777 = vadd.f32 %v218, %v1776
  %v1778 = vpop.f32.mrb[0].mxu0
  %1779 = vmatprep.mubr.bf16.mxu0 0
  %1780 = vmatmul.mubr.bf16.gmra.mrb[0].mxu0 %v994
  %v1781 = vpop.f32.mrb[0].mxu0
  %v1782 = vadd.f32 %v218, %v1781
  %v1783 = vpop.f32.mrb[0].mxu0
  %v1784 = vpop.f32.mrb[0].mxu0
  %v1785 = vadd.f32 %v218, %v1784
  %v1786 = vpop.f32.mrb[0].mxu0
  %1787 = vmatprep.mubr.bf16.mxu0 0
  %1788 = vmatmul.mubr.bf16.gmra.mrb[0].mxu0 %v997
  %v1789 = vpop.f32.mrb[0].mxu0
  %v1790 = vadd.f32 %v218, %v1789
  %v1791 = vpop.f32.mrb[0].mxu0
  %v1792 = vpop.f32.mrb[0].mxu0
  %v1793 = vadd.f32 %v218, %v1792
  %v1794 = vpop.f32.mrb[0].mxu0
  %1795 = vmatprep.mubr.bf16.mxu0 0
  %1796 = vmatmul.mubr.bf16.gmra.mrb[0].mxu0 %v1000
  %v1797 = vpop.f32.mrb[0].mxu0
  %v1798 = vadd.f32 %v218, %v1797
  %v1799 = vpop.f32.mrb[0].mxu0
  %v1800 = vpop.f32.mrb[0].mxu0
  %v1801 = vadd.f32 %v218, %v1800
  %v1802 = vpop.f32.mrb[0].mxu0
  %1803 = vmatprep.mubr.bf16.mxu0 0
  %1804 = vmatmul.mubr.bf16.gmra.mrb[0].mxu0 %v1003
  %v1805 = vpop.f32.mrb[0].mxu0
  %v1806 = vadd.f32 %v218, %v1805
  %v1807 = vpop.f32.mrb[0].mxu0
  %v1808 = vpop.f32.mrb[0].mxu0
  %v1809 = vadd.f32 %v218, %v1808
  %v1810 = vpop.f32.mrb[0].mxu0
  %1811 = vmatprep.mubr.bf16.mxu0 0
  %1812 = vmatmul.mubr.bf16.gmra.mrb[0].mxu0 %v1006
  %v1813 = vpop.f32.mrb[0].mxu0
  %v1814 = vadd.f32 %v218, %v1813
  %v1815 = vpop.f32.mrb[0].mxu0
  %v1816 = vpop.f32.mrb[0].mxu0
  %v1817 = vadd.f32 %v218, %v1816
  %v1818 = vpop.f32.mrb[0].mxu0
  %1819 = vmatprep.mubr.bf16.mxu0 0
  %1820 = vmatmul.mubr.bf16.gmra.mrb[0].mxu0 %v1009
  %v1821 = vpop.f32.mrb[0].mxu0
  %v1822 = vadd.f32 %v218, %v1821
  %v1823 = vpop.f32.mrb[0].mxu0
  %v1824 = vpop.f32.mrb[0].mxu0
  %v1825 = vadd.f32 %v218, %v1824
  %v1826 = vpop.f32.mrb[0].mxu0
  %1827 = vdwg.mxu0
  %vm1828 = vcmp.ge.f32.partialorder %v1046, 0.0
  %vm1829 = vcmp.ge.f32.partialorder %v1049, 0.0
  %vm1830 = vcmp.ge.f32.partialorder %v1054, 0.0
  %vm1831 = vcmp.ge.f32.partialorder %v1057, 0.0
  %vm1832 = vcmp.ge.f32.partialorder %v1062, 0.0
  %vm1833 = vcmp.ge.f32.partialorder %v1065, 0.0
  %vm1834 = vcmp.ge.f32.partialorder %v1070, 0.0
  %vm1835 = vcmp.ge.f32.partialorder %v1073, 0.0
  %vm1836 = vcmp.ge.f32.partialorder %v1078, 0.0
  %vm1837 = vcmp.ge.f32.partialorder %v1081, 0.0
  %vm1838 = vcmp.ge.f32.partialorder %v1086, 0.0
  %vm1839 = vcmp.ge.f32.partialorder %v1089, 0.0
  %vm1840 = vcmp.ge.f32.partialorder %v1094, 0.0
  %vm1841 = vcmp.ge.f32.partialorder %v1097, 0.0
  %vm1842 = vcmp.ge.f32.partialorder %v1102, 0.0
  %vm1843 = vcmp.ge.f32.partialorder %v1105, 0.0
  %vm1844 = vcmp.ge.f32.partialorder %v1110, 0.0
  %vm1845 = vcmp.ge.f32.partialorder %v1113, 0.0
  %vm1846 = vcmp.ge.f32.partialorder %v1118, 0.0
  %vm1847 = vcmp.ge.f32.partialorder %v1121, 0.0
  %vm1848 = vcmp.ge.f32.partialorder %v1126, 0.0
  %vm1849 = vcmp.ge.f32.partialorder %v1129, 0.0
  %vm1850 = vcmp.ge.f32.partialorder %v1134, 0.0
  %vm1851 = vcmp.ge.f32.partialorder %v1137, 0.0
  %vm1852 = vcmp.ge.f32.partialorder %v1142, 0.0
  %vm1853 = vcmp.ge.f32.partialorder %v1145, 0.0
  %vm1854 = vcmp.ge.f32.partialorder %v1150, 0.0
  %vm1855 = vcmp.ge.f32.partialorder %v1153, 0.0
  %vm1856 = vcmp.ge.f32.partialorder %v1158, 0.0
  %vm1857 = vcmp.ge.f32.partialorder %v1161, 0.0
  %vm1858 = vcmp.ge.f32.partialorder %v1166, 0.0
  %vm1859 = vcmp.ge.f32.partialorder %v1169, 0.0
  %vm1860 = vcmp.ge.f32.partialorder %v1174, 0.0
  %vm1861 = vcmp.ge.f32.partialorder %v1177, 0.0
  %vm1862 = vcmp.ge.f32.partialorder %v1182, 0.0
  %vm1863 = vcmp.ge.f32.partialorder %v1185, 0.0
  %vm1864 = vcmp.ge.f32.partialorder %v1190, 0.0
  %vm1865 = vcmp.ge.f32.partialorder %v1193, 0.0
  %vm1866 = vcmp.ge.f32.partialorder %v1198, 0.0
  %vm1867 = vcmp.ge.f32.partialorder %v1201, 0.0
  %vm1868 = vcmp.ge.f32.partialorder %v1206, 0.0
  %vm1869 = vcmp.ge.f32.partialorder %v1209, 0.0
  %vm1870 = vcmp.ge.f32.partialorder %v1214, 0.0
  %vm1871 = vcmp.ge.f32.partialorder %v1217, 0.0
  %vm1872 = vcmp.ge.f32.partialorder %v1222, 0.0
  %vm1873 = vcmp.ge.f32.partialorder %v1225, 0.0
  %vm1874 = vcmp.ge.f32.partialorder %v1230, 0.0
  %vm1875 = vcmp.ge.f32.partialorder %v1233, 0.0
  %vm1876 = vcmp.ge.f32.partialorder %v1238, 0.0
  %vm1877 = vcmp.ge.f32.partialorder %v1241, 0.0
  %vm1878 = vcmp.ge.f32.partialorder %v1246, 0.0
  %vm1879 = vcmp.ge.f32.partialorder %v1249, 0.0
  %vm1880 = vcmp.ge.f32.partialorder %v1254, 0.0
  %vm1881 = vcmp.ge.f32.partialorder %v1257, 0.0
  %vm1882 = vcmp.ge.f32.partialorder %v1262, 0.0
  %vm1883 = vcmp.ge.f32.partialorder %v1265, 0.0
  %vm1884 = vcmp.ge.f32.partialorder %v1270, 0.0
  %vm1885 = vcmp.ge.f32.partialorder %v1273, 0.0
  %vm1886 = vcmp.ge.f32.partialorder %v1278, 0.0
  %vm1887 = vcmp.ge.f32.partialorder %v1281, 0.0
  %vm1888 = vcmp.ge.f32.partialorder %v1286, 0.0
  %vm1889 = vcmp.ge.f32.partialorder %v1289, 0.0
  %vm1890 = vcmp.ge.f32.partialorder %v1294, 0.0
  %vm1891 = vcmp.ge.f32.partialorder %v1297, 0.0
  %vm1892 = vcmp.ge.f32.partialorder %v1302, 0.0
  %vm1893 = vcmp.ge.f32.partialorder %v1305, 0.0
  %vm1894 = vcmp.ge.f32.partialorder %v1310, 0.0
  %vm1895 = vcmp.ge.f32.partialorder %v1313, 0.0
  %vm1896 = vcmp.ge.f32.partialorder %v1318, 0.0
  %vm1897 = vcmp.ge.f32.partialorder %v1321, 0.0
  %vm1898 = vcmp.ge.f32.partialorder %v1326, 0.0
  %vm1899 = vcmp.ge.f32.partialorder %v1329, 0.0
  %vm1900 = vcmp.ge.f32.partialorder %v1334, 0.0
  %vm1901 = vcmp.ge.f32.partialorder %v1337, 0.0
  %vm1902 = vcmp.ge.f32.partialorder %v1342, 0.0
  %vm1903 = vcmp.ge.f32.partialorder %v1345, 0.0
  %vm1904 = vcmp.ge.f32.partialorder %v1350, 0.0
  %vm1905 = vcmp.ge.f32.partialorder %v1353, 0.0
  %vm1906 = vcmp.ge.f32.partialorder %v1358, 0.0
  %vm1907 = vcmp.ge.f32.partialorder %v1361, 0.0
  %vm1908 = vcmp.ge.f32.partialorder %v1366, 0.0
  %vm1909 = vcmp.ge.f32.partialorder %v1369, 0.0
  %vm1910 = vcmp.ge.f32.partialorder %v1374, 0.0
  %vm1911 = vcmp.ge.f32.partialorder %v1377, 0.0
  %vm1912 = vcmp.ge.f32.partialorder %v1382, 0.0
  %vm1913 = vcmp.ge.f32.partialorder %v1385, 0.0
  %vm1914 = vcmp.ge.f32.partialorder %v1390, 0.0
  %vm1915 = vcmp.ge.f32.partialorder %v1393, 0.0
  %vm1916 = vcmp.ge.f32.partialorder %v1398, 0.0
  %vm1917 = vcmp.ge.f32.partialorder %v1401, 0.0
  %vm1918 = vcmp.ge.f32.partialorder %v1406, 0.0
  %vm1919 = vcmp.ge.f32.partialorder %v1409, 0.0
  %vm1920 = vcmp.ge.f32.partialorder %v1414, 0.0
  %vm1921 = vcmp.ge.f32.partialorder %v1417, 0.0
  %vm1922 = vcmp.ge.f32.partialorder %v1422, 0.0
  %vm1923 = vcmp.ge.f32.partialorder %v1425, 0.0
  %vm1924 = vcmp.ge.f32.partialorder %v1430, 0.0
  %vm1925 = vcmp.ge.f32.partialorder %v1433, 0.0
  %vm1926 = vcmp.ge.f32.partialorder %v1438, 0.0
  %vm1927 = vcmp.ge.f32.partialorder %v1441, 0.0
  %vm1928 = vcmp.ge.f32.partialorder %v1446, 0.0
  %vm1929 = vcmp.ge.f32.partialorder %v1449, 0.0
  %vm1930 = vcmp.ge.f32.partialorder %v1454, 0.0
  %vm1931 = vcmp.ge.f32.partialorder %v1457, 0.0
  %vm1932 = vcmp.ge.f32.partialorder %v1462, 0.0
  %vm1933 = vcmp.ge.f32.partialorder %v1465, 0.0
  %vm1934 = vcmp.ge.f32.partialorder %v1470, 0.0
  %vm1935 = vcmp.ge.f32.partialorder %v1473, 0.0
  %vm1936 = vcmp.ge.f32.partialorder %v1478, 0.0
  %vm1937 = vcmp.ge.f32.partialorder %v1481, 0.0
  %vm1938 = vcmp.ge.f32.partialorder %v1486, 0.0
  %vm1939 = vcmp.ge.f32.partialorder %v1489, 0.0
  %vm1940 = vcmp.ge.f32.partialorder %v1494, 0.0
  %vm1941 = vcmp.ge.f32.partialorder %v1497, 0.0
  %vm1942 = vcmp.ge.f32.partialorder %v1502, 0.0
  %vm1943 = vcmp.ge.f32.partialorder %v1505, 0.0
  %vm1944 = vcmp.ge.f32.partialorder %v1510, 0.0
  %vm1945 = vcmp.ge.f32.partialorder %v1513, 0.0
  %vm1946 = vcmp.ge.f32.partialorder %v1518, 0.0
  %vm1947 = vcmp.ge.f32.partialorder %v1521, 0.0
  %vm1948 = vcmp.ge.f32.partialorder %v1526, 0.0
  %vm1949 = vcmp.ge.f32.partialorder %v1529, 0.0
  %vm1950 = vcmp.ge.f32.partialorder %v1534, 0.0
  %vm1951 = vcmp.ge.f32.partialorder %v1537, 0.0
  %vm1952 = vcmp.ge.f32.partialorder %v1542, 0.0
  %vm1953 = vcmp.ge.f32.partialorder %v1545, 0.0
  %vm1954 = vcmp.ge.f32.partialorder %v1550, 0.0
  %vm1955 = vcmp.ge.f32.partialorder %v1553, 0.0
  %vm1956 = vcmp.ge.f32.partialorder %v1558, 0.0
  %vm1957 = vcmp.ge.f32.partialorder %v1561, 0.0
  %vm1958 = vcmp.ge.f32.partialorder %v1566, 0.0
  %vm1959 = vcmp.ge.f32.partialorder %v1569, 0.0
  %vm1960 = vcmp.ge.f32.partialorder %v1574, 0.0
  %vm1961 = vcmp.ge.f32.partialorder %v1577, 0.0
  %vm1962 = vcmp.ge.f32.partialorder %v1582, 0.0
  %vm1963 = vcmp.ge.f32.partialorder %v1585, 0.0
  %vm1964 = vcmp.ge.f32.partialorder %v1590, 0.0
  %vm1965 = vcmp.ge.f32.partialorder %v1593, 0.0
  %vm1966 = vcmp.ge.f32.partialorder %v1598, 0.0
  %vm1967 = vcmp.ge.f32.partialorder %v1601, 0.0
  %vm1968 = vcmp.ge.f32.partialorder %v1606, 0.0
  %vm1969 = vcmp.ge.f32.partialorder %v1609, 0.0
  %vm1970 = vcmp.ge.f32.partialorder %v1614, 0.0
  %vm1971 = vcmp.ge.f32.partialorder %v1617, 0.0
  %vm1972 = vcmp.ge.f32.partialorder %v1622, 0.0
  %vm1973 = vcmp.ge.f32.partialorder %v1625, 0.0
  %vm1974 = vcmp.ge.f32.partialorder %v1630, 0.0
  %vm1975 = vcmp.ge.f32.partialorder %v1633, 0.0
  %vm1976 = vcmp.ge.f32.partialorder %v1638, 0.0
  %vm1977 = vcmp.ge.f32.partialorder %v1641, 0.0
  %vm1978 = vcmp.ge.f32.partialorder %v1646, 0.0
  %vm1979 = vcmp.ge.f32.partialorder %v1649, 0.0
  %vm1980 = vcmp.ge.f32.partialorder %v1654, 0.0
  %vm1981 = vcmp.ge.f32.partialorder %v1657, 0.0
  %vm1982 = vcmp.ge.f32.partialorder %v1662, 0.0
  %vm1983 = vcmp.ge.f32.partialorder %v1665, 0.0
  %vm1984 = vcmp.ge.f32.partialorder %v1670, 0.0
  %vm1985 = vcmp.ge.f32.partialorder %v1673, 0.0
  %vm1986 = vcmp.ge.f32.partialorder %v1678, 0.0
  %vm1987 = vcmp.ge.f32.partialorder %v1681, 0.0
  %vm1988 = vcmp.ge.f32.partialorder %v1686, 0.0
  %vm1989 = vcmp.ge.f32.partialorder %v1689, 0.0
  %vm1990 = vcmp.ge.f32.partialorder %v1694, 0.0
  %vm1991 = vcmp.ge.f32.partialorder %v1697, 0.0
  %vm1992 = vcmp.ge.f32.partialorder %v1702, 0.0
  %vm1993 = vcmp.ge.f32.partialorder %v1705, 0.0
  %vm1994 = vcmp.ge.f32.partialorder %v1710, 0.0
  %vm1995 = vcmp.ge.f32.partialorder %v1713, 0.0
  %vm1996 = vcmp.ge.f32.partialorder %v1718, 0.0
  %vm1997 = vcmp.ge.f32.partialorder %v1721, 0.0
  %vm1998 = vcmp.ge.f32.partialorder %v1726, 0.0
  %vm1999 = vcmp.ge.f32.partialorder %v1729, 0.0
  %vm2000 = vcmp.ge.f32.partialorder %v1734, 0.0
  %vm2001 = vcmp.ge.f32.partialorder %v1737, 0.0
  %vm2002 = vcmp.ge.f32.partialorder %v1742, 0.0
  %vm2003 = vcmp.ge.f32.partialorder %v1745, 0.0
  %vm2004 = vcmp.ge.f32.partialorder %v1750, 0.0
  %vm2005 = vcmp.ge.f32.partialorder %v1753, 0.0
  %vm2006 = vcmp.ge.f32.partialorder %v1758, 0.0
  %vm2007 = vcmp.ge.f32.partialorder %v1761, 0.0
  %vm2008 = vcmp.ge.f32.partialorder %v1766, 0.0
  %vm2009 = vcmp.ge.f32.partialorder %v1769, 0.0
  %vm2010 = vcmp.ge.f32.partialorder %v1774, 0.0
  %vm2011 = vcmp.ge.f32.partialorder %v1777, 0.0
  %vm2012 = vcmp.ge.f32.partialorder %v1782, 0.0
  %vm2013 = vcmp.ge.f32.partialorder %v1785, 0.0
  %vm2014 = vcmp.ge.f32.partialorder %v1790, 0.0
  %vm2015 = vcmp.ge.f32.partialorder %v1793, 0.0
  %vm2016 = vcmp.ge.f32.partialorder %v1798, 0.0
  %vm2017 = vcmp.ge.f32.partialorder %v1801, 0.0
  %vm2018 = vcmp.ge.f32.partialorder %v1806, 0.0
  %vm2019 = vcmp.ge.f32.partialorder %v1809, 0.0
  %vm2020 = vcmp.ge.f32.partialorder %v1814, 0.0
  %vm2021 = vcmp.ge.f32.partialorder %v1817, 0.0
  %vm2022 = vcmp.ge.f32.partialorder %v1822, 0.0
  %vm2023 = vcmp.ge.f32.partialorder %v1825, 0.0
  %v2024 = vmul.f32 %v1046, 0.2
  %v2025 = vmul.f32 %v1049, 0.2
  %v2026 = vmul.f32 %v1054, 0.2
  %v2027 = vmul.f32 %v1057, 0.2
  %v2028 = vmul.f32 %v1062, 0.2
  %v2029 = vmul.f32 %v1065, 0.2
  %v2030 = vmul.f32 %v1070, 0.2
  %v2031 = vmul.f32 %v1073, 0.2
  %v2032 = vmul.f32 %v1078, 0.2
  %v2033 = vmul.f32 %v1081, 0.2
  %v2034 = vmul.f32 %v1086, 0.2
  %v2035 = vmul.f32 %v1089, 0.2
  %v2036 = vmul.f32 %v1094, 0.2
  %v2037 = vmul.f32 %v1097, 0.2
  %v2038 = vmul.f32 %v1102, 0.2
  %v2039 = vmul.f32 %v1105, 0.2
  %v2040 = vmul.f32 %v1110, 0.2
  %v2041 = vmul.f32 %v1113, 0.2
  %v2042 = vmul.f32 %v1118, 0.2
  %v2043 = vmul.f32 %v1121, 0.2
  %v2044 = vmul.f32 %v1126, 0.2
  %v2045 = vmul.f32 %v1129, 0.2
  %v2046 = vmul.f32 %v1134, 0.2
  %v2047 = vmul.f32 %v1137, 0.2
  %v2048 = vmul.f32 %v1142, 0.2
  %v2049 = vmul.f32 %v1145, 0.2
  %v2050 = vmul.f32 %v1150, 0.2
  %v2051 = vmul.f32 %v1153, 0.2
  %v2052 = vmul.f32 %v1158, 0.2
  %v2053 = vmul.f32 %v1161, 0.2
  %v2054 = vmul.f32 %v1166, 0.2
  %v2055 = vmul.f32 %v1169, 0.2
  %v2056 = vmul.f32 %v1174, 0.2
  %v2057 = vmul.f32 %v1177, 0.2
  %v2058 = vmul.f32 %v1182, 0.2
  %v2059 = vmul.f32 %v1185, 0.2
  %v2060 = vmul.f32 %v1190, 0.2
  %v2061 = vmul.f32 %v1193, 0.2
  %v2062 = vmul.f32 %v1198, 0.2
  %v2063 = vmul.f32 %v1201, 0.2
  %v2064 = vmul.f32 %v1206, 0.2
  %v2065 = vmul.f32 %v1209, 0.2
  %v2066 = vmul.f32 %v1214, 0.2
  %v2067 = vmul.f32 %v1217, 0.2
  %v2068 = vmul.f32 %v1222, 0.2
  %v2069 = vmul.f32 %v1225, 0.2
  %v2070 = vmul.f32 %v1230, 0.2
  %v2071 = vmul.f32 %v1233, 0.2
  %v2072 = vmul.f32 %v1238, 0.2
  %v2073 = vmul.f32 %v1241, 0.2
  %v2074 = vmul.f32 %v1246, 0.2
  %v2075 = vmul.f32 %v1249, 0.2
  %v2076 = vmul.f32 %v1254, 0.2
  %v2077 = vmul.f32 %v1257, 0.2
  %v2078 = vmul.f32 %v1262, 0.2
  %v2079 = vmul.f32 %v1265, 0.2
  %v2080 = vmul.f32 %v1270, 0.2
  %v2081 = vmul.f32 %v1273, 0.2
  %v2082 = vmul.f32 %v1278, 0.2
  %v2083 = vmul.f32 %v1281, 0.2
  %v2084 = vmul.f32 %v1286, 0.2
  %v2085 = vmul.f32 %v1289, 0.2
  %v2086 = vmul.f32 %v1294, 0.2
  %v2087 = vmul.f32 %v1297, 0.2
  %v2088 = vmul.f32 %v1302, 0.2
  %v2089 = vmul.f32 %v1305, 0.2
  %v2090 = vmul.f32 %v1310, 0.2
  %v2091 = vmul.f32 %v1313, 0.2
  %v2092 = vmul.f32 %v1318, 0.2
  %v2093 = vmul.f32 %v1321, 0.2
  %v2094 = vmul.f32 %v1326, 0.2
  %v2095 = vmul.f32 %v1329, 0.2
  %v2096 = vmul.f32 %v1334, 0.2
  %v2097 = vmul.f32 %v1337, 0.2
  %v2098 = vmul.f32 %v1342, 0.2
  %v2099 = vmul.f32 %v1345, 0.2
  %v2100 = vmul.f32 %v1350, 0.2
  %v2101 = vmul.f32 %v1353, 0.2
  %v2102 = vmul.f32 %v1358, 0.2
  %v2103 = vmul.f32 %v1361, 0.2
  %v2104 = vmul.f32 %v1366, 0.2
  %v2105 = vmul.f32 %v1369, 0.2
  %v2106 = vmul.f32 %v1374, 0.2
  %v2107 = vmul.f32 %v1377, 0.2
  %v2108 = vmul.f32 %v1382, 0.2
  %v2109 = vmul.f32 %v1385, 0.2
  %v2110 = vmul.f32 %v1390, 0.2
  %v2111 = vmul.f32 %v1393, 0.2
  %v2112 = vmul.f32 %v1398, 0.2
  %v2113 = vmul.f32 %v1401, 0.2
  %v2114 = vmul.f32 %v1406, 0.2
  %v2115 = vmul.f32 %v1409, 0.2
  %v2116 = vmul.f32 %v1414, 0.2
  %v2117 = vmul.f32 %v1417, 0.2
  %v2118 = vmul.f32 %v1422, 0.2
  %v2119 = vmul.f32 %v1425, 0.2
  %v2120 = vmul.f32 %v1430, 0.2
  %v2121 = vmul.f32 %v1433, 0.2
  %v2122 = vmul.f32 %v1438, 0.2
  %v2123 = vmul.f32 %v1441, 0.2
  %v2124 = vmul.f32 %v1446, 0.2
  %v2125 = vmul.f32 %v1449, 0.2
  %v2126 = vmul.f32 %v1454, 0.2
  %v2127 = vmul.f32 %v1457, 0.2
  %v2128 = vmul.f32 %v1462, 0.2
  %v2129 = vmul.f32 %v1465, 0.2
  %v2130 = vmul.f32 %v1470, 0.2
  %v2131 = vmul.f32 %v1473, 0.2
  %v2132 = vmul.f32 %v1478, 0.2
  %v2133 = vmul.f32 %v1481, 0.2
  %v2134 = vmul.f32 %v1486, 0.2
  %v2135 = vmul.f32 %v1489, 0.2
  %v2136 = vmul.f32 %v1494, 0.2
  %v2137 = vmul.f32 %v1497, 0.2
  %v2138 = vmul.f32 %v1502, 0.2
  %v2139 = vmul.f32 %v1505, 0.2
  %v2140 = vmul.f32 %v1510, 0.2
  %v2141 = vmul.f32 %v1513, 0.2
  %v2142 = vmul.f32 %v1518, 0.2
  %v2143 = vmul.f32 %v1521, 0.2
  %v2144 = vmul.f32 %v1526, 0.2
  %v2145 = vmul.f32 %v1529, 0.2
  %v2146 = vmul.f32 %v1534, 0.2
  %v2147 = vmul.f32 %v1537, 0.2
  %v2148 = vmul.f32 %v1542, 0.2
  %v2149 = vmul.f32 %v1545, 0.2
  %v2150 = vmul.f32 %v1550, 0.2
  %v2151 = vmul.f32 %v1553, 0.2
  %v2152 = vmul.f32 %v1558, 0.2
  %v2153 = vmul.f32 %v1561, 0.2
  %v2154 = vmul.f32 %v1566, 0.2
  %v2155 = vmul.f32 %v1569, 0.2
  %v2156 = vmul.f32 %v1574, 0.2
  %v2157 = vmul.f32 %v1577, 0.2
  %v2158 = vmul.f32 %v1582, 0.2
  %v2159 = vmul.f32 %v1585, 0.2
  %v2160 = vmul.f32 %v1590, 0.2
  %v2161 = vmul.f32 %v1593, 0.2
  %v2162 = vmul.f32 %v1598, 0.2
  %v2163 = vmul.f32 %v1601, 0.2
  %v2164 = vmul.f32 %v1606, 0.2
  %v2165 = vmul.f32 %v1609, 0.2
  %v2166 = vmul.f32 %v1614, 0.2
  %v2167 = vmul.f32 %v1617, 0.2
  %v2168 = vmul.f32 %v1622, 0.2
  %v2169 = vmul.f32 %v1625, 0.2
  %v2170 = vmul.f32 %v1630, 0.2
  %v2171 = vmul.f32 %v1633, 0.2
  %v2172 = vmul.f32 %v1638, 0.2
  %v2173 = vmul.f32 %v1641, 0.2
  %v2174 = vmul.f32 %v1646, 0.2
  %v2175 = vmul.f32 %v1649, 0.2
  %v2176 = vmul.f32 %v1654, 0.2
  %v2177 = vmul.f32 %v1657, 0.2
  %v2178 = vmul.f32 %v1662, 0.2
  %v2179 = vmul.f32 %v1665, 0.2
  %v2180 = vmul.f32 %v1670, 0.2
  %v2181 = vmul.f32 %v1673, 0.2
  %v2182 = vmul.f32 %v1678, 0.2
  %v2183 = vmul.f32 %v1681, 0.2
  %v2184 = vmul.f32 %v1686, 0.2
  %v2185 = vmul.f32 %v1689, 0.2
  %v2186 = vmul.f32 %v1694, 0.2
  %v2187 = vmul.f32 %v1697, 0.2
  %v2188 = vmul.f32 %v1702, 0.2
  %v2189 = vmul.f32 %v1705, 0.2
  %v2190 = vmul.f32 %v1710, 0.2
  %v2191 = vmul.f32 %v1713, 0.2
  %v2192 = vmul.f32 %v1718, 0.2
  %v2193 = vmul.f32 %v1721, 0.2
  %v2194 = vmul.f32 %v1726, 0.2
  %v2195 = vmul.f32 %v1729, 0.2
  %v2196 = vmul.f32 %v1734, 0.2
  %v2197 = vmul.f32 %v1737, 0.2
  %v2198 = vmul.f32 %v1742, 0.2
  %v2199 = vmul.f32 %v1745, 0.2
  %v2200 = vmul.f32 %v1750, 0.2
  %v2201 = vmul.f32 %v1753, 0.2
  %v2202 = vmul.f32 %v1758, 0.2
  %v2203 = vmul.f32 %v1761, 0.2
  %v2204 = vmul.f32 %v1766, 0.2
  %v2205 = vmul.f32 %v1769, 0.2
  %v2206 = vmul.f32 %v1774, 0.2
  %v2207 = vmul.f32 %v1777, 0.2
  %v2208 = vmul.f32 %v1782, 0.2
  %v2209 = vmul.f32 %v1785, 0.2
  %v2210 = vmul.f32 %v1790, 0.2
  %v2211 = vmul.f32 %v1793, 0.2
  %v2212 = vmul.f32 %v1798, 0.2
  %v2213 = vmul.f32 %v1801, 0.2
  %v2214 = vmul.f32 %v1806, 0.2
  %v2215 = vmul.f32 %v1809, 0.2
  %v2216 = vmul.f32 %v1814, 0.2
  %v2217 = vmul.f32 %v1817, 0.2
  %v2218 = vmul.f32 %v1822, 0.2
  %v2219 = vmul.f32 %v1825, 0.2
  %v2220 = vsel %vm1828, %v1046, %v2024
  %v2221 = vsel %vm1829, %v1049, %v2025
  %v2222 = vsel %vm1830, %v1054, %v2026
  %v2223 = vsel %vm1831, %v1057, %v2027
  %v2224 = vsel %vm1832, %v1062, %v2028
  %v2225 = vsel %vm1833, %v1065, %v2029
  %v2226 = vsel %vm1834, %v1070, %v2030
  %v2227 = vsel %vm1835, %v1073, %v2031
  %v2228 = vsel %vm1836, %v1078, %v2032
  %v2229 = vsel %vm1837, %v1081, %v2033
  %v2230 = vsel %vm1838, %v1086, %v2034
  %v2231 = vsel %vm1839, %v1089, %v2035
  %v2232 = vsel %vm1840, %v1094, %v2036
  %v2233 = vsel %vm1841, %v1097, %v2037
  %v2234 = vsel %vm1842, %v1102, %v2038
  %v2235 = vsel %vm1843, %v1105, %v2039
  %v2236 = vsel %vm1844, %v1110, %v2040
  %v2237 = vsel %vm1845, %v1113, %v2041
  %v2238 = vsel %vm1846, %v1118, %v2042
  %v2239 = vsel %vm1847, %v1121, %v2043
  %v2240 = vsel %vm1848, %v1126, %v2044
  %v2241 = vsel %vm1849, %v1129, %v2045
  %v2242 = vsel %vm1850, %v1134, %v2046
  %v2243 = vsel %vm1851, %v1137, %v2047
  %v2244 = vsel %vm1852, %v1142, %v2048
  %v2245 = vsel %vm1853, %v1145, %v2049
  %v2246 = vsel %vm1854, %v1150, %v2050
  %v2247 = vsel %vm1855, %v1153, %v2051
  %v2248 = vsel %vm1856, %v1158, %v2052
  %v2249 = vsel %vm1857, %v1161, %v2053
  %v2250 = vsel %vm1858, %v1166, %v2054
  %v2251 = vsel %vm1859, %v1169, %v2055
  %v2252 = vsel %vm1860, %v1174, %v2056
  %v2253 = vsel %vm1861, %v1177, %v2057
  %v2254 = vsel %vm1862, %v1182, %v2058
  %v2255 = vsel %vm1863, %v1185, %v2059
  %v2256 = vsel %vm1864, %v1190, %v2060
  %v2257 = vsel %vm1865, %v1193, %v2061
  %v2258 = vsel %vm1866, %v1198, %v2062
  %v2259 = vsel %vm1867, %v1201, %v2063
  %v2260 = vsel %vm1868, %v1206, %v2064
  %v2261 = vsel %vm1869, %v1209, %v2065
  %v2262 = vsel %vm1870, %v1214, %v2066
  %v2263 = vsel %vm1871, %v1217, %v2067
  %v2264 = vsel %vm1872, %v1222, %v2068
  %v2265 = vsel %vm1873, %v1225, %v2069
  %v2266 = vsel %vm1874, %v1230, %v2070
  %v2267 = vsel %vm1875, %v1233, %v2071
  %v2268 = vsel %vm1876, %v1238, %v2072
  %v2269 = vsel %vm1877, %v1241, %v2073
  %v2270 = vsel %vm1878, %v1246, %v2074
  %v2271 = vsel %vm1879, %v1249, %v2075
  %v2272 = vsel %vm1880, %v1254, %v2076
  %v2273 = vsel %vm1881, %v1257, %v2077
  %v2274 = vsel %vm1882, %v1262, %v2078
  %v2275 = vsel %vm1883, %v1265, %v2079
  %v2276 = vsel %vm1884, %v1270, %v2080
  %v2277 = vsel %vm1885, %v1273, %v2081
  %v2278 = vsel %vm1886, %v1278, %v2082
  %v2279 = vsel %vm1887, %v1281, %v2083
  %v2280 = vsel %vm1888, %v1286, %v2084
  %v2281 = vsel %vm1889, %v1289, %v2085
  %v2282 = vsel %vm1890, %v1294, %v2086
  %v2283 = vsel %vm1891, %v1297, %v2087
  %v2284 = vsel %vm1892, %v1302, %v2088
  %v2285 = vsel %vm1893, %v1305, %v2089
  %v2286 = vsel %vm1894, %v1310, %v2090
  %v2287 = vsel %vm1895, %v1313, %v2091
  %v2288 = vsel %vm1896, %v1318, %v2092
  %v2289 = vsel %vm1897, %v1321, %v2093
  %v2290 = vsel %vm1898, %v1326, %v2094
  %v2291 = vsel %vm1899, %v1329, %v2095
  %v2292 = vsel %vm1900, %v1334, %v2096
  %v2293 = vsel %vm1901, %v1337, %v2097
  %v2294 = vsel %vm1902, %v1342, %v2098
  %v2295 = vsel %vm1903, %v1345, %v2099
  %v2296 = vsel %vm1904, %v1350, %v2100
  %v2297 = vsel %vm1905, %v1353, %v2101
  %v2298 = vsel %vm1906, %v1358, %v2102
  %v2299 = vsel %vm1907, %v1361, %v2103
  %v2300 = vsel %vm1908, %v1366, %v2104
  %v2301 = vsel %vm1909, %v1369, %v2105
  %v2302 = vsel %vm1910, %v1374, %v2106
  %v2303 = vsel %vm1911, %v1377, %v2107
  %v2304 = vsel %vm1912, %v1382, %v2108
  %v2305 = vsel %vm1913, %v1385, %v2109
  %v2306 = vsel %vm1914, %v1390, %v2110
  %v2307 = vsel %vm1915, %v1393, %v2111
  %v2308 = vsel %vm1916, %v1398, %v2112
  %v2309 = vsel %vm1917, %v1401, %v2113
  %v2310 = vsel %vm1918, %v1406, %v2114
  %v2311 = vsel %vm1919, %v1409, %v2115
  %v2312 = vsel %vm1920, %v1414, %v2116
  %v2313 = vsel %vm1921, %v1417, %v2117
  %v2314 = vsel %vm1922, %v1422, %v2118
  %v2315 = vsel %vm1923, %v1425, %v2119
  %v2316 = vsel %vm1924, %v1430, %v2120
  %v2317 = vsel %vm1925, %v1433, %v2121
  %v2318 = vsel %vm1926, %v1438, %v2122
  %v2319 = vsel %vm1927, %v1441, %v2123
  %v2320 = vsel %vm1928, %v1446, %v2124
  %v2321 = vsel %vm1929, %v1449, %v2125
  %v2322 = vsel %vm1930, %v1454, %v2126
  %v2323 = vsel %vm1931, %v1457, %v2127
  %v2324 = vsel %vm1932, %v1462, %v2128
  %v2325 = vsel %vm1933, %v1465, %v2129
  %v2326 = vsel %vm1934, %v1470, %v2130
  %v2327 = vsel %vm1935, %v1473, %v2131
  %v2328 = vsel %vm1936, %v1478, %v2132
  %v2329 = vsel %vm1937, %v1481, %v2133
  %v2330 = vsel %vm1938, %v1486, %v2134
  %v2331 = vsel %vm1939, %v1489, %v2135
  %v2332 = vsel %vm1940, %v1494, %v2136
  %v2333 = vsel %vm1941, %v1497, %v2137
  %v2334 = vsel %vm1942, %v1502, %v2138
  %v2335 = vsel %vm1943, %v1505, %v2139
  %v2336 = vsel %vm1944, %v1510, %v2140
  %v2337 = vsel %vm1945, %v1513, %v2141
  %v2338 = vsel %vm1946, %v1518, %v2142
  %v2339 = vsel %vm1947, %v1521, %v2143
  %v2340 = vsel %vm1948, %v1526, %v2144
  %v2341 = vsel %vm1949, %v1529, %v2145
  %v2342 = vsel %vm1950, %v1534, %v2146
  %v2343 = vsel %vm1951, %v1537, %v2147
  %v2344 = vsel %vm1952, %v1542, %v2148
  %v2345 = vsel %vm1953, %v1545, %v2149
  %v2346 = vsel %vm1954, %v1550, %v2150
  %v2347 = vsel %vm1955, %v1553, %v2151
  %v2348 = vsel %vm1956, %v1558, %v2152
  %v2349 = vsel %vm1957, %v1561, %v2153
  %v2350 = vsel %vm1958, %v1566, %v2154
  %v2351 = vsel %vm1959, %v1569, %v2155
  %v2352 = vsel %vm1960, %v1574, %v2156
  %v2353 = vsel %vm1961, %v1577, %v2157
  %v2354 = vsel %vm1962, %v1582, %v2158
  %v2355 = vsel %vm1963, %v1585, %v2159
  %v2356 = vsel %vm1964, %v1590, %v2160
  %v2357 = vsel %vm1965, %v1593, %v2161
  %v2358 = vsel %vm1966, %v1598, %v2162
  %v2359 = vsel %vm1967, %v1601, %v2163
  %v2360 = vsel %vm1968, %v1606, %v2164
  %v2361 = vsel %vm1969, %v1609, %v2165
  %v2362 = vsel %vm1970, %v1614, %v2166
  %v2363 = vsel %vm1971, %v1617, %v2167
  %v2364 = vsel %vm1972, %v1622, %v2168
  %v2365 = vsel %vm1973, %v1625, %v2169
  %v2366 = vsel %vm1974, %v1630, %v2170
  %v2367 = vsel %vm1975, %v1633, %v2171
  %v2368 = vsel %vm1976, %v1638, %v2172
  %v2369 = vsel %vm1977, %v1641, %v2173
  %v2370 = vsel %vm1978, %v1646, %v2174
  %v2371 = vsel %vm1979, %v1649, %v2175
  %v2372 = vsel %vm1980, %v1654, %v2176
  %v2373 = vsel %vm1981, %v1657, %v2177
  %v2374 = vsel %vm1982, %v1662, %v2178
  %v2375 = vsel %vm1983, %v1665, %v2179
  %v2376 = vsel %vm1984, %v1670, %v2180
  %v2377 = vsel %vm1985, %v1673, %v2181
  %v2378 = vsel %vm1986, %v1678, %v2182
  %v2379 = vsel %vm1987, %v1681, %v2183
  %v2380 = vsel %vm1988, %v1686, %v2184
  %v2381 = vsel %vm1989, %v1689, %v2185
  %v2382 = vsel %vm1990, %v1694, %v2186
  %v2383 = vsel %vm1991, %v1697, %v2187
  %v2384 = vsel %vm1992, %v1702, %v2188
  %v2385 = vsel %vm1993, %v1705, %v2189
  %v2386 = vsel %vm1994, %v1710, %v2190
  %v2387 = vsel %vm1995, %v1713, %v2191
  %v2388 = vsel %vm1996, %v1718, %v2192
  %v2389 = vsel %vm1997, %v1721, %v2193
  %v2390 = vsel %vm1998, %v1726, %v2194
  %v2391 = vsel %vm1999, %v1729, %v2195
  %v2392 = vsel %vm2000, %v1734, %v2196
  %v2393 = vsel %vm2001, %v1737, %v2197
  %v2394 = vsel %vm2002, %v1742, %v2198
  %v2395 = vsel %vm2003, %v1745, %v2199
  %v2396 = vsel %vm2004, %v1750, %v2200
  %v2397 = vsel %vm2005, %v1753, %v2201
  %v2398 = vsel %vm2006, %v1758, %v2202
  %v2399 = vsel %vm2007, %v1761, %v2203
  %v2400 = vsel %vm2008, %v1766, %v2204
  %v2401 = vsel %vm2009, %v1769, %v2205
  %v2402 = vsel %vm2010, %v1774, %v2206
  %v2403 = vsel %vm2011, %v1777, %v2207
  %v2404 = vsel %vm2012, %v1782, %v2208
  %v2405 = vsel %vm2013, %v1785, %v2209
  %v2406 = vsel %vm2014, %v1790, %v2210
  %v2407 = vsel %vm2015, %v1793, %v2211
  %v2408 = vsel %vm2016, %v1798, %v2212
  %v2409 = vsel %vm2017, %v1801, %v2213
  %v2410 = vsel %vm2018, %v1806, %v2214
  %v2411 = vsel %vm2019, %v1809, %v2215
  %v2412 = vsel %vm2020, %v1814, %v2216
  %v2413 = vsel %vm2021, %v1817, %v2217
  %v2414 = vsel %vm2022, %v1822, %v2218
  %v2415 = vsel %vm2023, %v1825, %v2219
  %v2416 = vpack.c.bf16 %v2221, %v2220
  %v2417 = vpack.c.bf16 %v2223, %v2222
  %v2418 = vpack.c.bf16 %v2225, %v2224
  %v2419 = vpack.c.bf16 %v2227, %v2226
  %v2420 = vpack.c.bf16 %v2229, %v2228
  %v2421 = vpack.c.bf16 %v2231, %v2230
  %v2422 = vpack.c.bf16 %v2233, %v2232
  %v2423 = vpack.c.bf16 %v2235, %v2234
  %v2424 = vpack.c.bf16 %v2237, %v2236
  %v2425 = vpack.c.bf16 %v2239, %v2238
  %v2426 = vpack.c.bf16 %v2241, %v2240
  %v2427 = vpack.c.bf16 %v2243, %v2242
  %v2428 = vpack.c.bf16 %v2245, %v2244
  %v2429 = vpack.c.bf16 %v2247, %v2246
  %v2430 = vpack.c.bf16 %v2249, %v2248
  %v2431 = vpack.c.bf16 %v2251, %v2250
  %v2432 = vpack.c.bf16 %v2253, %v2252
  %v2433 = vpack.c.bf16 %v2255, %v2254
  %v2434 = vpack.c.bf16 %v2257, %v2256
  %v2435 = vpack.c.bf16 %v2259, %v2258
  %v2436 = vpack.c.bf16 %v2261, %v2260
  %v2437 = vpack.c.bf16 %v2263, %v2262
  %v2438 = vpack.c.bf16 %v2265, %v2264
  %v2439 = vpack.c.bf16 %v2267, %v2266
  %v2440 = vpack.c.bf16 %v2269, %v2268
  %v2441 = vpack.c.bf16 %v2271, %v2270
  %v2442 = vpack.c.bf16 %v2273, %v2272
  %v2443 = vpack.c.bf16 %v2275, %v2274
  %v2444 = vpack.c.bf16 %v2277, %v2276
  %v2445 = vpack.c.bf16 %v2279, %v2278
  %v2446 = vpack.c.bf16 %v2281, %v2280
  %v2447 = vpack.c.bf16 %v2283, %v2282
  %v2448 = vpack.c.bf16 %v2285, %v2284
  %v2449 = vpack.c.bf16 %v2287, %v2286
  %v2450 = vpack.c.bf16 %v2289, %v2288
  %v2451 = vpack.c.bf16 %v2291, %v2290
  %v2452 = vpack.c.bf16 %v2293, %v2292
  %v2453 = vpack.c.bf16 %v2295, %v2294
  %v2454 = vpack.c.bf16 %v2297, %v2296
  %v2455 = vpack.c.bf16 %v2299, %v2298
  %v2456 = vpack.c.bf16 %v2301, %v2300
  %v2457 = vpack.c.bf16 %v2303, %v2302
  %v2458 = vpack.c.bf16 %v2305, %v2304
  %v2459 = vpack.c.bf16 %v2307, %v2306
  %v2460 = vpack.c.bf16 %v2309, %v2308
  %v2461 = vpack.c.bf16 %v2311, %v2310
  %v2462 = vpack.c.bf16 %v2313, %v2312
  %v2463 = vpack.c.bf16 %v2315, %v2314
  %v2464 = vpack.c.bf16 %v2317, %v2316
  %v2465 = vpack.c.bf16 %v2319, %v2318
  %v2466 = vpack.c.bf16 %v2321, %v2320
  %v2467 = vpack.c.bf16 %v2323, %v2322
  %v2468 = vpack.c.bf16 %v2325, %v2324
  %v2469 = vpack.c.bf16 %v2327, %v2326
  %v2470 = vpack.c.bf16 %v2329, %v2328
  %v2471 = vpack.c.bf16 %v2331, %v2330
  %v2472 = vpack.c.bf16 %v2333, %v2332
  %v2473 = vpack.c.bf16 %v2335, %v2334
  %v2474 = vpack.c.bf16 %v2337, %v2336
  %v2475 = vpack.c.bf16 %v2339, %v2338
  %v2476 = vpack.c.bf16 %v2341, %v2340
  %v2477 = vpack.c.bf16 %v2343, %v2342
  %v2478 = vpack.c.bf16 %v2345, %v2344
  %v2479 = vpack.c.bf16 %v2347, %v2346
  %v2480 = vpack.c.bf16 %v2349, %v2348
  %v2481 = vpack.c.bf16 %v2351, %v2350
  %v2482 = vpack.c.bf16 %v2353, %v2352
  %v2483 = vpack.c.bf16 %v2355, %v2354
  %v2484 = vpack.c.bf16 %v2357, %v2356
  %v2485 = vpack.c.bf16 %v2359, %v2358
  %v2486 = vpack.c.bf16 %v2361, %v2360
  %v2487 = vpack.c.bf16 %v2363, %v2362
  %v2488 = vpack.c.bf16 %v2365, %v2364
  %v2489 = vpack.c.bf16 %v2367, %v2366
  %v2490 = vpack.c.bf16 %v2369, %v2368
  %v2491 = vpack.c.bf16 %v2371, %v2370
  %v2492 = vpack.c.bf16 %v2373, %v2372
  %v2493 = vpack.c.bf16 %v2375, %v2374
  %v2494 = vpack.c.bf16 %v2377, %v2376
  %v2495 = vpack.c.bf16 %v2379, %v2378
  %v2496 = vpack.c.bf16 %v2381, %v2380
  %v2497 = vpack.c.bf16 %v2383, %v2382
  %v2498 = vpack.c.bf16 %v2385, %v2384
  %v2499 = vpack.c.bf16 %v2387, %v2386
  %v2500 = vpack.c.bf16 %v2389, %v2388
  %v2501 = vpack.c.bf16 %v2391, %v2390
  %v2502 = vpack.c.bf16 %v2393, %v2392
  %v2503 = vpack.c.bf16 %v2395, %v2394
  %v2504 = vpack.c.bf16 %v2397, %v2396
  %v2505 = vpack.c.bf16 %v2399, %v2398
  %v2506 = vpack.c.bf16 %v2401, %v2400
  %v2507 = vpack.c.bf16 %v2403, %v2402
  %v2508 = vpack.c.bf16 %v2405, %v2404
  %v2509 = vpack.c.bf16 %v2407, %v2406
  %v2510 = vpack.c.bf16 %v2409, %v2408
  %v2511 = vpack.c.bf16 %v2411, %v2410
  %v2512 = vpack.c.bf16 %v2413, %v2412
  %v2513 = vpack.c.bf16 %v2415, %v2414
  %v2612 = vunpack.c.l.b16 %v2416
  %v2613 = vunpack.c.h.b16 %v2416
  %v2614 = vunpack.c.l.b16 %v2417
  %v2615 = vunpack.c.h.b16 %v2417
  %v2616 = vunpack.c.l.b16 %v2418
  %v2617 = vunpack.c.h.b16 %v2418
  %v2618 = vunpack.c.l.b16 %v2419
  %v2619 = vunpack.c.h.b16 %v2419
  %v2620 = vunpack.c.l.b16 %v2420
  %v2621 = vunpack.c.h.b16 %v2420
  %v2622 = vunpack.c.l.b16 %v2421
  %v2623 = vunpack.c.h.b16 %v2421
  %v2624 = vunpack.c.l.b16 %v2422
  %v2625 = vunpack.c.h.b16 %v2422
  %v2626 = vunpack.c.l.b16 %v2423
  %v2627 = vunpack.c.h.b16 %v2423
  %v2628 = vunpack.c.l.b16 %v2424
  %v2629 = vunpack.c.h.b16 %v2424
  %v2630 = vunpack.c.l.b16 %v2425
  %v2631 = vunpack.c.h.b16 %v2425
  %v2632 = vunpack.c.l.b16 %v2426
  %v2633 = vunpack.c.h.b16 %v2426
  %v2634 = vunpack.c.l.b16 %v2427
  %v2635 = vunpack.c.h.b16 %v2427
  %v2636 = vunpack.c.l.b16 %v2428
  %v2637 = vunpack.c.h.b16 %v2428
  %v2638 = vunpack.c.l.b16 %v2429
  %v2639 = vunpack.c.h.b16 %v2429
  %v2640 = vunpack.c.l.b16 %v2430
  %v2641 = vunpack.c.h.b16 %v2430
  %v2642 = vunpack.c.l.b16 %v2431
  %v2643 = vunpack.c.h.b16 %v2431
  %v2644 = vunpack.c.l.b16 %v2432
  %v2645 = vunpack.c.h.b16 %v2432
  %v2646 = vunpack.c.l.b16 %v2433
  %v2647 = vunpack.c.h.b16 %v2433
  %v2648 = vunpack.c.l.b16 %v2434
  %v2649 = vunpack.c.h.b16 %v2434
  %v2650 = vunpack.c.l.b16 %v2435
  %v2651 = vunpack.c.h.b16 %v2435
  %v2652 = vunpack.c.l.b16 %v2436
  %v2653 = vunpack.c.h.b16 %v2436
  %v2654 = vunpack.c.l.b16 %v2437
  %v2655 = vunpack.c.h.b16 %v2437
  %v2656 = vunpack.c.l.b16 %v2438
  %v2657 = vunpack.c.h.b16 %v2438
  %v2658 = vunpack.c.l.b16 %v2439
  %v2659 = vunpack.c.h.b16 %v2439
  %v2660 = vunpack.c.l.b16 %v2440
  %v2661 = vunpack.c.h.b16 %v2440
  %v2662 = vunpack.c.l.b16 %v2441
  %v2663 = vunpack.c.h.b16 %v2441
  %v2664 = vunpack.c.l.b16 %v2442
  %v2665 = vunpack.c.h.b16 %v2442
  %v2666 = vunpack.c.l.b16 %v2443
  %v2667 = vunpack.c.h.b16 %v2443
  %v2668 = vunpack.c.l.b16 %v2444
  %v2669 = vunpack.c.h.b16 %v2444
  %v2670 = vunpack.c.l.b16 %v2445
  %v2671 = vunpack.c.h.b16 %v2445
  %v2672 = vunpack.c.l.b16 %v2446
  %v2673 = vunpack.c.h.b16 %v2446
  %v2674 = vunpack.c.l.b16 %v2447
  %v2675 = vunpack.c.h.b16 %v2447
  %v2676 = vunpack.c.l.b16 %v2448
  %v2677 = vunpack.c.h.b16 %v2448
  %v2678 = vunpack.c.l.b16 %v2449
  %v2679 = vunpack.c.h.b16 %v2449
  %v2680 = vunpack.c.l.b16 %v2450
  %v2681 = vunpack.c.h.b16 %v2450
  %v2682 = vunpack.c.l.b16 %v2451
  %v2683 = vunpack.c.h.b16 %v2451
  %v2684 = vunpack.c.l.b16 %v2452
  %v2685 = vunpack.c.h.b16 %v2452
  %v2686 = vunpack.c.l.b16 %v2453
  %v2687 = vunpack.c.h.b16 %v2453
  %v2688 = vunpack.c.l.b16 %v2454
  %v2689 = vunpack.c.h.b16 %v2454
  %v2690 = vunpack.c.l.b16 %v2455
  %v2691 = vunpack.c.h.b16 %v2455
  %v2692 = vunpack.c.l.b16 %v2456
  %v2693 = vunpack.c.h.b16 %v2456
  %v2694 = vunpack.c.l.b16 %v2457
  %v2695 = vunpack.c.h.b16 %v2457
  %v2696 = vunpack.c.l.b16 %v2458
  %v2697 = vunpack.c.h.b16 %v2458
  %v2698 = vunpack.c.l.b16 %v2459
  %v2699 = vunpack.c.h.b16 %v2459
  %v2700 = vunpack.c.l.b16 %v2460
  %v2701 = vunpack.c.h.b16 %v2460
  %v2702 = vunpack.c.l.b16 %v2461
  %v2703 = vunpack.c.h.b16 %v2461
  %v2704 = vunpack.c.l.b16 %v2462
  %v2705 = vunpack.c.h.b16 %v2462
  %v2706 = vunpack.c.l.b16 %v2463
  %v2707 = vunpack.c.h.b16 %v2463
  %v2708 = vunpack.c.l.b16 %v2464
  %v2709 = vunpack.c.h.b16 %v2464
  %v2710 = vunpack.c.l.b16 %v2465
  %v2711 = vunpack.c.h.b16 %v2465
  %v2712 = vunpack.c.l.b16 %v2466
  %v2713 = vunpack.c.h.b16 %v2466
  %v2714 = vunpack.c.l.b16 %v2467
  %v2715 = vunpack.c.h.b16 %v2467
  %v2716 = vunpack.c.l.b16 %v2468
  %v2717 = vunpack.c.h.b16 %v2468
  %v2718 = vunpack.c.l.b16 %v2469
  %v2719 = vunpack.c.h.b16 %v2469
  %v2720 = vunpack.c.l.b16 %v2470
  %v2721 = vunpack.c.h.b16 %v2470
  %v2722 = vunpack.c.l.b16 %v2471
  %v2723 = vunpack.c.h.b16 %v2471
  %v2724 = vunpack.c.l.b16 %v2472
  %v2725 = vunpack.c.h.b16 %v2472
  %v2726 = vunpack.c.l.b16 %v2473
  %v2727 = vunpack.c.h.b16 %v2473
  %v2728 = vunpack.c.l.b16 %v2474
  %v2729 = vunpack.c.h.b16 %v2474
  %v2730 = vunpack.c.l.b16 %v2475
  %v2731 = vunpack.c.h.b16 %v2475
  %v2732 = vunpack.c.l.b16 %v2476
  %v2733 = vunpack.c.h.b16 %v2476
  %v2734 = vunpack.c.l.b16 %v2477
  %v2735 = vunpack.c.h.b16 %v2477
  %v2736 = vunpack.c.l.b16 %v2478
  %v2737 = vunpack.c.h.b16 %v2478
  %v2738 = vunpack.c.l.b16 %v2479
  %v2739 = vunpack.c.h.b16 %v2479
  %v2740 = vunpack.c.l.b16 %v2480
  %v2741 = vunpack.c.h.b16 %v2480
  %v2742 = vunpack.c.l.b16 %v2481
  %v2743 = vunpack.c.h.b16 %v2481
  %v2744 = vunpack.c.l.b16 %v2482
  %v2745 = vunpack.c.h.b16 %v2482
  %v2746 = vunpack.c.l.b16 %v2483
  %v2747 = vunpack.c.h.b16 %v2483
  %v2748 = vunpack.c.l.b16 %v2484
  %v2749 = vunpack.c.h.b16 %v2484
  %v2750 = vunpack.c.l.b16 %v2485
  %v2751 = vunpack.c.h.b16 %v2485
  %v2752 = vunpack.c.l.b16 %v2486
  %v2753 = vunpack.c.h.b16 %v2486
  %v2754 = vunpack.c.l.b16 %v2487
  %v2755 = vunpack.c.h.b16 %v2487
  %v2756 = vunpack.c.l.b16 %v2488
  %v2757 = vunpack.c.h.b16 %v2488
  %v2758 = vunpack.c.l.b16 %v2489
  %v2759 = vunpack.c.h.b16 %v2489
  %v2760 = vunpack.c.l.b16 %v2490
  %v2761 = vunpack.c.h.b16 %v2490
  %v2762 = vunpack.c.l.b16 %v2491
  %v2763 = vunpack.c.h.b16 %v2491
  %v2764 = vunpack.c.l.b16 %v2492
  %v2765 = vunpack.c.h.b16 %v2492
  %v2766 = vunpack.c.l.b16 %v2493
  %v2767 = vunpack.c.h.b16 %v2493
  %v2768 = vunpack.c.l.b16 %v2494
  %v2769 = vunpack.c.h.b16 %v2494
  %v2770 = vunpack.c.l.b16 %v2495
  %v2771 = vunpack.c.h.b16 %v2495
  %v2772 = vunpack.c.l.b16 %v2496
  %v2773 = vunpack.c.h.b16 %v2496
  %v2774 = vunpack.c.l.b16 %v2497
  %v2775 = vunpack.c.h.b16 %v2497
  %v2776 = vunpack.c.l.b16 %v2498
  %v2777 = vunpack.c.h.b16 %v2498
  %v2778 = vunpack.c.l.b16 %v2499
  %v2779 = vunpack.c.h.b16 %v2499
  %v2780 = vunpack.c.l.b16 %v2500
  %v2781 = vunpack.c.h.b16 %v2500
  %v2782 = vunpack.c.l.b16 %v2501
  %v2783 = vunpack.c.h.b16 %v2501
  %v2784 = vunpack.c.l.b16 %v2502
  %v2785 = vunpack.c.h.b16 %v2502
  %v2786 = vunpack.c.l.b16 %v2503
  %v2787 = vunpack.c.h.b16 %v2503
  %v2788 = vunpack.c.l.b16 %v2504
  %v2789 = vunpack.c.h.b16 %v2504
  %v2790 = vunpack.c.l.b16 %v2505
  %v2791 = vunpack.c.h.b16 %v2505
  %v2792 = vunpack.c.l.b16 %v2506
  %v2793 = vunpack.c.h.b16 %v2506
  %v2794 = vunpack.c.l.b16 %v2507
  %v2795 = vunpack.c.h.b16 %v2507
  %v2796 = vunpack.c.l.b16 %v2508
  %v2797 = vunpack.c.h.b16 %v2508
  %v2798 = vunpack.c.l.b16 %v2509
  %v2799 = vunpack.c.h.b16 %v2509
  %v2800 = vunpack.c.l.b16 %v2510
  %v2801 = vunpack.c.h.b16 %v2510
  %v2802 = vunpack.c.l.b16 %v2511
  %v2803 = vunpack.c.h.b16 %v2511
  %v2804 = vunpack.c.l.b16 %v2512
  %v2805 = vunpack.c.h.b16 %v2512
  %v2806 = vunpack.c.l.b16 %v2513
  %v2807 = vunpack.c.h.b16 %v2513
  %v2808 = vpack.c.b16 %v2612, %v2612
  %v2809 = vpack.c.b16 %v2613, %v2613
  %v2810 = vpack.c.b16 %v2614, %v2614
  %v2811 = vpack.c.b16 %v2615, %v2615
  %v2812 = vpack.c.b16 %v2616, %v2616
  %v2813 = vpack.c.b16 %v2617, %v2617
  %v2814 = vpack.c.b16 %v2618, %v2618
  %v2815 = vpack.c.b16 %v2619, %v2619
  %v2816 = vpack.c.b16 %v2620, %v2620
  %v2817 = vpack.c.b16 %v2621, %v2621
  %v2818 = vpack.c.b16 %v2622, %v2622
  %v2819 = vpack.c.b16 %v2623, %v2623
  %v2820 = vpack.c.b16 %v2624, %v2624
  %v2821 = vpack.c.b16 %v2625, %v2625
  %v2822 = vpack.c.b16 %v2626, %v2626
  %v2823 = vpack.c.b16 %v2627, %v2627
  %v2824 = vpack.c.b16 %v2628, %v2628
  %v2825 = vpack.c.b16 %v2629, %v2629
  %v2826 = vpack.c.b16 %v2630, %v2630
  %v2827 = vpack.c.b16 %v2631, %v2631
  %v2828 = vpack.c.b16 %v2632, %v2632
  %v2829 = vpack.c.b16 %v2633, %v2633
  %v2830 = vpack.c.b16 %v2634, %v2634
  %v2831 = vpack.c.b16 %v2635, %v2635
  %v2832 = vpack.c.b16 %v2636, %v2636
  %v2833 = vpack.c.b16 %v2637, %v2637
  %v2834 = vpack.c.b16 %v2638, %v2638
  %v2835 = vpack.c.b16 %v2639, %v2639
  %v2836 = vpack.c.b16 %v2640, %v2640
  %v2837 = vpack.c.b16 %v2641, %v2641
  %v2838 = vpack.c.b16 %v2642, %v2642
  %v2839 = vpack.c.b16 %v2643, %v2643
  %v2840 = vpack.c.b16 %v2644, %v2644
  %v2841 = vpack.c.b16 %v2645, %v2645
  %v2842 = vpack.c.b16 %v2646, %v2646
  %v2843 = vpack.c.b16 %v2647, %v2647
  %v2844 = vpack.c.b16 %v2648, %v2648
  %v2845 = vpack.c.b16 %v2649, %v2649
  %v2846 = vpack.c.b16 %v2650, %v2650
  %v2847 = vpack.c.b16 %v2651, %v2651
  %v2848 = vpack.c.b16 %v2652, %v2652
  %v2849 = vpack.c.b16 %v2653, %v2653
  %v2850 = vpack.c.b16 %v2654, %v2654
  %v2851 = vpack.c.b16 %v2655, %v2655
  %v2852 = vpack.c.b16 %v2656, %v2656
  %v2853 = vpack.c.b16 %v2657, %v2657
  %v2854 = vpack.c.b16 %v2658, %v2658
  %v2855 = vpack.c.b16 %v2659, %v2659
  %v2856 = vpack.c.b16 %v2660, %v2660
  %v2857 = vpack.c.b16 %v2661, %v2661
  %v2858 = vpack.c.b16 %v2662, %v2662
  %v2859 = vpack.c.b16 %v2663, %v2663
  %v2860 = vpack.c.b16 %v2664, %v2664
  %v2861 = vpack.c.b16 %v2665, %v2665
  %v2862 = vpack.c.b16 %v2666, %v2666
  %v2863 = vpack.c.b16 %v2667, %v2667
  %v2864 = vpack.c.b16 %v2668, %v2668
  %v2865 = vpack.c.b16 %v2669, %v2669
  %v2866 = vpack.c.b16 %v2670, %v2670
  %v2867 = vpack.c.b16 %v2671, %v2671
  %v2868 = vpack.c.b16 %v2672, %v2672
  %v2869 = vpack.c.b16 %v2673, %v2673
  %v2870 = vpack.c.b16 %v2674, %v2674
  %v2871 = vpack.c.b16 %v2675, %v2675
  %v2872 = vpack.c.b16 %v2676, %v2676
  %v2873 = vpack.c.b16 %v2677, %v2677
  %v2874 = vpack.c.b16 %v2678, %v2678
  %v2875 = vpack.c.b16 %v2679, %v2679
  %v2876 = vpack.c.b16 %v2680, %v2680
  %v2877 = vpack.c.b16 %v2681, %v2681
  %v2878 = vpack.c.b16 %v2682, %v2682
  %v2879 = vpack.c.b16 %v2683, %v2683
  %v2880 = vpack.c.b16 %v2684, %v2684
  %v2881 = vpack.c.b16 %v2685, %v2685
  %v2882 = vpack.c.b16 %v2686, %v2686
  %v2883 = vpack.c.b16 %v2687, %v2687
  %v2884 = vpack.c.b16 %v2688, %v2688
  %v2885 = vpack.c.b16 %v2689, %v2689
  %v2886 = vpack.c.b16 %v2690, %v2690
  %v2887 = vpack.c.b16 %v2691, %v2691
  %v2888 = vpack.c.b16 %v2692, %v2692
  %v2889 = vpack.c.b16 %v2693, %v2693
  %v2890 = vpack.c.b16 %v2694, %v2694
  %v2891 = vpack.c.b16 %v2695, %v2695
  %v2892 = vpack.c.b16 %v2696, %v2696
  %v2893 = vpack.c.b16 %v2697, %v2697
  %v2894 = vpack.c.b16 %v2698, %v2698
  %v2895 = vpack.c.b16 %v2699, %v2699
  %v2896 = vpack.c.b16 %v2700, %v2700
  %v2897 = vpack.c.b16 %v2701, %v2701
  %v2898 = vpack.c.b16 %v2702, %v2702
  %v2899 = vpack.c.b16 %v2703, %v2703
  %v2900 = vpack.c.b16 %v2704, %v2704
  %v2901 = vpack.c.b16 %v2705, %v2705
  %v2902 = vpack.c.b16 %v2706, %v2706
  %v2903 = vpack.c.b16 %v2707, %v2707
  %v2904 = vpack.c.b16 %v2708, %v2708
  %v2905 = vpack.c.b16 %v2709, %v2709
  %v2906 = vpack.c.b16 %v2710, %v2710
  %v2907 = vpack.c.b16 %v2711, %v2711
  %v2908 = vpack.c.b16 %v2712, %v2712
  %v2909 = vpack.c.b16 %v2713, %v2713
  %v2910 = vpack.c.b16 %v2714, %v2714
  %v2911 = vpack.c.b16 %v2715, %v2715
  %v2912 = vpack.c.b16 %v2716, %v2716
  %v2913 = vpack.c.b16 %v2717, %v2717
  %v2914 = vpack.c.b16 %v2718, %v2718
  %v2915 = vpack.c.b16 %v2719, %v2719
  %v2916 = vpack.c.b16 %v2720, %v2720
  %v2917 = vpack.c.b16 %v2721, %v2721
  %v2918 = vpack.c.b16 %v2722, %v2722
  %v2919 = vpack.c.b16 %v2723, %v2723
  %v2920 = vpack.c.b16 %v2724, %v2724
  %v2921 = vpack.c.b16 %v2725, %v2725
  %v2922 = vpack.c.b16 %v2726, %v2726
  %v2923 = vpack.c.b16 %v2727, %v2727
  %v2924 = vpack.c.b16 %v2728, %v2728
  %v2925 = vpack.c.b16 %v2729, %v2729
  %v2926 = vpack.c.b16 %v2730, %v2730
  %v2927 = vpack.c.b16 %v2731, %v2731
  %v2928 = vpack.c.b16 %v2732, %v2732
  %v2929 = vpack.c.b16 %v2733, %v2733
  %v2930 = vpack.c.b16 %v2734, %v2734
  %v2931 = vpack.c.b16 %v2735, %v2735
  %v2932 = vpack.c.b16 %v2736, %v2736
  %v2933 = vpack.c.b16 %v2737, %v2737
  %v2934 = vpack.c.b16 %v2738, %v2738
  %v2935 = vpack.c.b16 %v2739, %v2739
  %v2936 = vpack.c.b16 %v2740, %v2740
  %v2937 = vpack.c.b16 %v2741, %v2741
  %v2938 = vpack.c.b16 %v2742, %v2742
  %v2939 = vpack.c.b16 %v2743, %v2743
  %v2940 = vpack.c.b16 %v2744, %v2744
  %v2941 = vpack.c.b16 %v2745, %v2745
  %v2942 = vpack.c.b16 %v2746, %v2746
  %v2943 = vpack.c.b16 %v2747, %v2747
  %v2944 = vpack.c.b16 %v2748, %v2748
  %v2945 = vpack.c.b16 %v2749, %v2749
  %v2946 = vpack.c.b16 %v2750, %v2750
  %v2947 = vpack.c.b16 %v2751, %v2751
  %v2948 = vpack.c.b16 %v2752, %v2752
  %v2949 = vpack.c.b16 %v2753, %v2753
  %v2950 = vpack.c.b16 %v2754, %v2754
  %v2951 = vpack.c.b16 %v2755, %v2755
  %v2952 = vpack.c.b16 %v2756, %v2756
  %v2953 = vpack.c.b16 %v2757, %v2757
  %v2954 = vpack.c.b16 %v2758, %v2758
  %v2955 = vpack.c.b16 %v2759, %v2759
  %v2956 = vpack.c.b16 %v2760, %v2760
  %v2957 = vpack.c.b16 %v2761, %v2761
  %v2958 = vpack.c.b16 %v2762, %v2762
  %v2959 = vpack.c.b16 %v2763, %v2763
  %v2960 = vpack.c.b16 %v2764, %v2764
  %v2961 = vpack.c.b16 %v2765, %v2765
  %v2962 = vpack.c.b16 %v2766, %v2766
  %v2963 = vpack.c.b16 %v2767, %v2767
  %v2964 = vpack.c.b16 %v2768, %v2768
  %v2965 = vpack.c.b16 %v2769, %v2769
  %v2966 = vpack.c.b16 %v2770, %v2770
  %v2967 = vpack.c.b16 %v2771, %v2771
  %v2968 = vpack.c.b16 %v2772, %v2772
  %v2969 = vpack.c.b16 %v2773, %v2773
  %v2970 = vpack.c.b16 %v2774, %v2774
  %v2971 = vpack.c.b16 %v2775, %v2775
  %v2972 = vpack.c.b16 %v2776, %v2776
  %v2973 = vpack.c.b16 %v2777, %v2777
  %v2974 = vpack.c.b16 %v2778, %v2778
  %v2975 = vpack.c.b16 %v2779, %v2779
  %v2976 = vpack.c.b16 %v2780, %v2780
  %v2977 = vpack.c.b16 %v2781, %v2781
  %v2978 = vpack.c.b16 %v2782, %v2782
  %v2979 = vpack.c.b16 %v2783, %v2783
  %v2980 = vpack.c.b16 %v2784, %v2784
  %v2981 = vpack.c.b16 %v2785, %v2785
  %v2982 = vpack.c.b16 %v2786, %v2786
  %v2983 = vpack.c.b16 %v2787, %v2787
  %v2984 = vpack.c.b16 %v2788, %v2788
  %v2985 = vpack.c.b16 %v2789, %v2789
  %v2986 = vpack.c.b16 %v2790, %v2790
  %v2987 = vpack.c.b16 %v2791, %v2791
  %v2988 = vpack.c.b16 %v2792, %v2792
  %v2989 = vpack.c.b16 %v2793, %v2793
  %v2990 = vpack.c.b16 %v2794, %v2794
  %v2991 = vpack.c.b16 %v2795, %v2795
  %v2992 = vpack.c.b16 %v2796, %v2796
  %v2993 = vpack.c.b16 %v2797, %v2797
  %v2994 = vpack.c.b16 %v2798, %v2798
  %v2995 = vpack.c.b16 %v2799, %v2799
  %v2996 = vpack.c.b16 %v2800, %v2800
  %v2997 = vpack.c.b16 %v2801, %v2801
  %v2998 = vpack.c.b16 %v2802, %v2802
  %v2999 = vpack.c.b16 %v2803, %v2803
  %v3000 = vpack.c.b16 %v2804, %v2804
  %v3001 = vpack.c.b16 %v2805, %v2805
  %v3002 = vpack.c.b16 %v2806, %v2806
  %v3003 = vpack.c.b16 %v2807, %v2807
  %vm3200 = vcmask 519168
  %3201 = vst.msk [vmem:[%s3] sm:$0xf] %vm3200, %v2808
  %3202 = vst.msk [vmem:[%s3 + $0x4] sm:$0xf] %vm3200, %v2809
  %3203 = vst.msk [vmem:[%s3 + $0x8] sm:$0xf] %vm3200, %v2810
  %3204 = vst.msk [vmem:[%s3 + $0xc] sm:$0xf] %vm3200, %v2811
  %3205 = vst.msk [vmem:[%s3 + $0x10] sm:$0xf] %vm3200, %v2812
  %3206 = vst.msk [vmem:[%s3 + $0x14] sm:$0xf] %vm3200, %v2813
  %3207 = vst.msk [vmem:[%s3 + $0x18] sm:$0xf] %vm3200, %v2814
  %3208 = vst.msk [vmem:[%s3 + $0x1c] sm:$0xf] %vm3200, %v2815
  %3209 = vst.msk [vmem:[%s3 + $0x20] sm:$0xf] %vm3200, %v2816
  %3210 = vst.msk [vmem:[%s3 + $0x24] sm:$0xf] %vm3200, %v2817
  %3211 = vst.msk [vmem:[%s3 + $0x28] sm:$0xf] %vm3200, %v2818
  %3212 = vst.msk [vmem:[%s3 + $0x2c] sm:$0xf] %vm3200, %v2819
  %3213 = vst.msk [vmem:[%s3 + $0x30] sm:$0xf] %vm3200, %v2820
  %3214 = vst.msk [vmem:[%s3 + $0x34] sm:$0xf] %vm3200, %v2821
  %3215 = vst.msk [vmem:[%s3 + $0x38] sm:$0xf] %vm3200, %v2822
  %3216 = vst.msk [vmem:[%s3 + $0x3c] sm:$0xf] %vm3200, %v2823
  %3217 = vst.msk [vmem:[%s3 + $0x40] sm:$0xf] %vm3200, %v2824
  %3218 = vst.msk [vmem:[%s3 + $0x44] sm:$0xf] %vm3200, %v2825
  %3219 = vst.msk [vmem:[%s3 + $0x48] sm:$0xf] %vm3200, %v2826
  %3220 = vst.msk [vmem:[%s3 + $0x4c] sm:$0xf] %vm3200, %v2827
  %3221 = vst.msk [vmem:[%s3 + $0x50] sm:$0xf] %vm3200, %v2828
  %3222 = vst.msk [vmem:[%s3 + $0x54] sm:$0xf] %vm3200, %v2829
  %3223 = vst.msk [vmem:[%s3 + $0x58] sm:$0xf] %vm3200, %v2830
  %3224 = vst.msk [vmem:[%s3 + $0x5c] sm:$0xf] %vm3200, %v2831
  %3225 = vst.msk [vmem:[%s3 + $0x60] sm:$0xf] %vm3200, %v2832
  %3226 = vst.msk [vmem:[%s3 + $0x64] sm:$0xf] %vm3200, %v2833
  %3227 = vst.msk [vmem:[%s3 + $0x68] sm:$0xf] %vm3200, %v2834
  %3228 = vst.msk [vmem:[%s3 + $0x6c] sm:$0xf] %vm3200, %v2835
  %3229 = vst.msk [vmem:[%s3 + $0x70] sm:$0xf] %vm3200, %v2836
  %3230 = vst.msk [vmem:[%s3 + $0x74] sm:$0xf] %vm3200, %v2837
  %3231 = vst.msk [vmem:[%s3 + $0x78] sm:$0xf] %vm3200, %v2838
  %3232 = vst.msk [vmem:[%s3 + $0x7c] sm:$0xf] %vm3200, %v2839
  %3233 = vst.msk [vmem:[%s3 + $0x80] sm:$0xf] %vm3200, %v2840
  %3234 = vst.msk [vmem:[%s3 + $0x84] sm:$0xf] %vm3200, %v2841
  %3235 = vst.msk [vmem:[%s3 + $0x88] sm:$0xf] %vm3200, %v2842
  %3236 = vst.msk [vmem:[%s3 + $0x8c] sm:$0xf] %vm3200, %v2843
  %3237 = vst.msk [vmem:[%s3 + $0x90] sm:$0xf] %vm3200, %v2844
  %3238 = vst.msk [vmem:[%s3 + $0x94] sm:$0xf] %vm3200, %v2845
  %3239 = vst.msk [vmem:[%s3 + $0x98] sm:$0xf] %vm3200, %v2846
  %3240 = vst.msk [vmem:[%s3 + $0x9c] sm:$0xf] %vm3200, %v2847
  %3241 = vst.msk [vmem:[%s3 + $0xa0] sm:$0xf] %vm3200, %v2848
  %3242 = vst.msk [vmem:[%s3 + $0xa4] sm:$0xf] %vm3200, %v2849
  %3243 = vst.msk [vmem:[%s3 + $0xa8] sm:$0xf] %vm3200, %v2850
  %3244 = vst.msk [vmem:[%s3 + $0xac] sm:$0xf] %vm3200, %v2851
  %3245 = vst.msk [vmem:[%s3 + $0xb0] sm:$0xf] %vm3200, %v2852
  %3246 = vst.msk [vmem:[%s3 + $0xb4] sm:$0xf] %vm3200, %v2853
  %3247 = vst.msk [vmem:[%s3 + $0xb8] sm:$0xf] %vm3200, %v2854
  %3248 = vst.msk [vmem:[%s3 + $0xbc] sm:$0xf] %vm3200, %v2855
  %3249 = vst.msk [vmem:[%s3 + $0xc0] sm:$0xf] %vm3200, %v2856
  %3250 = vst.msk [vmem:[%s3 + $0xc4] sm:$0xf] %vm3200, %v2857
  %3251 = vst.msk [vmem:[%s3 + $0xc8] sm:$0xf] %vm3200, %v2858
  %3252 = vst.msk [vmem:[%s3 + $0xcc] sm:$0xf] %vm3200, %v2859
  %3253 = vst.msk [vmem:[%s3 + $0xd0] sm:$0xf] %vm3200, %v2860
  %3254 = vst.msk [vmem:[%s3 + $0xd4] sm:$0xf] %vm3200, %v2861
  %3255 = vst.msk [vmem:[%s3 + $0xd8] sm:$0xf] %vm3200, %v2862
  %3256 = vst.msk [vmem:[%s3 + $0xdc] sm:$0xf] %vm3200, %v2863
  %3257 = vst.msk [vmem:[%s3 + $0xe0] sm:$0xf] %vm3200, %v2864
  %3258 = vst.msk [vmem:[%s3 + $0xe4] sm:$0xf] %vm3200, %v2865
  %3259 = vst.msk [vmem:[%s3 + $0xe8] sm:$0xf] %vm3200, %v2866
  %3260 = vst.msk [vmem:[%s3 + $0xec] sm:$0xf] %vm3200, %v2867
  %3261 = vst.msk [vmem:[%s3 + $0xf0] sm:$0xf] %vm3200, %v2868
  %3262 = vst.msk [vmem:[%s3 + $0xf4] sm:$0xf] %vm3200, %v2869
  %3263 = vst.msk [vmem:[%s3 + $0xf8] sm:$0xf] %vm3200, %v2870
  %3264 = vst.msk [vmem:[%s3 + $0xfc] sm:$0xf] %vm3200, %v2871
  %3265 = vst.msk [vmem:[%s3 + $0x100] sm:$0xf] %vm3200, %v2872
  %3266 = vst.msk [vmem:[%s3 + $0x104] sm:$0xf] %vm3200, %v2873
  %3267 = vst.msk [vmem:[%s3 + $0x108] sm:$0xf] %vm3200, %v2874
  %3268 = vst.msk [vmem:[%s3 + $0x10c] sm:$0xf] %vm3200, %v2875
  %3269 = vst.msk [vmem:[%s3 + $0x110] sm:$0xf] %vm3200, %v2876
  %3270 = vst.msk [vmem:[%s3 + $0x114] sm:$0xf] %vm3200, %v2877
  %3271 = vst.msk [vmem:[%s3 + $0x118] sm:$0xf] %vm3200, %v2878
  %3272 = vst.msk [vmem:[%s3 + $0x11c] sm:$0xf] %vm3200, %v2879
  %3273 = vst.msk [vmem:[%s3 + $0x120] sm:$0xf] %vm3200, %v2880
  %3274 = vst.msk [vmem:[%s3 + $0x124] sm:$0xf] %vm3200, %v2881
  %3275 = vst.msk [vmem:[%s3 + $0x128] sm:$0xf] %vm3200, %v2882
  %3276 = vst.msk [vmem:[%s3 + $0x12c] sm:$0xf] %vm3200, %v2883
  %3277 = vst.msk [vmem:[%s3 + $0x130] sm:$0xf] %vm3200, %v2884
  %3278 = vst.msk [vmem:[%s3 + $0x134] sm:$0xf] %vm3200, %v2885
  %3279 = vst.msk [vmem:[%s3 + $0x138] sm:$0xf] %vm3200, %v2886
  %3280 = vst.msk [vmem:[%s3 + $0x13c] sm:$0xf] %vm3200, %v2887
  %3281 = vst.msk [vmem:[%s3 + $0x140] sm:$0xf] %vm3200, %v2888
  %3282 = vst.msk [vmem:[%s3 + $0x144] sm:$0xf] %vm3200, %v2889
  %3283 = vst.msk [vmem:[%s3 + $0x148] sm:$0xf] %vm3200, %v2890
  %3284 = vst.msk [vmem:[%s3 + $0x14c] sm:$0xf] %vm3200, %v2891
  %3285 = vst.msk [vmem:[%s3 + $0x150] sm:$0xf] %vm3200, %v2892
  %3286 = vst.msk [vmem:[%s3 + $0x154] sm:$0xf] %vm3200, %v2893
  %3287 = vst.msk [vmem:[%s3 + $0x158] sm:$0xf] %vm3200, %v2894
  %3288 = vst.msk [vmem:[%s3 + $0x15c] sm:$0xf] %vm3200, %v2895
  %3289 = vst.msk [vmem:[%s3 + $0x160] sm:$0xf] %vm3200, %v2896
  %3290 = vst.msk [vmem:[%s3 + $0x164] sm:$0xf] %vm3200, %v2897
  %3291 = vst.msk [vmem:[%s3 + $0x168] sm:$0xf] %vm3200, %v2898
  %3292 = vst.msk [vmem:[%s3 + $0x16c] sm:$0xf] %vm3200, %v2899
  %3293 = vst.msk [vmem:[%s3 + $0x170] sm:$0xf] %vm3200, %v2900
  %3294 = vst.msk [vmem:[%s3 + $0x174] sm:$0xf] %vm3200, %v2901
  %3295 = vst.msk [vmem:[%s3 + $0x178] sm:$0xf] %vm3200, %v2902
  %3296 = vst.msk [vmem:[%s3 + $0x17c] sm:$0xf] %vm3200, %v2903
  %3297 = vst.msk [vmem:[%s3 + $0x180] sm:$0xf] %vm3200, %v2904
  %3298 = vst.msk [vmem:[%s3 + $0x184] sm:$0xf] %vm3200, %v2905
  %3299 = vst.msk [vmem:[%s3 + $0x188] sm:$0xf] %vm3200, %v2906
  %3300 = vst.msk [vmem:[%s3 + $0x18c] sm:$0xf] %vm3200, %v2907
  %3301 = vst.msk [vmem:[%s3 + $0x190] sm:$0xf] %vm3200, %v2908
  %3302 = vst.msk [vmem:[%s3 + $0x194] sm:$0xf] %vm3200, %v2909
  %3303 = vst.msk [vmem:[%s3 + $0x198] sm:$0xf] %vm3200, %v2910
  %3304 = vst.msk [vmem:[%s3 + $0x19c] sm:$0xf] %vm3200, %v2911
  %3305 = vst.msk [vmem:[%s3 + $0x1a0] sm:$0xf] %vm3200, %v2912
  %3306 = vst.msk [vmem:[%s3 + $0x1a4] sm:$0xf] %vm3200, %v2913
  %3307 = vst.msk [vmem:[%s3 + $0x1a8] sm:$0xf] %vm3200, %v2914
  %3308 = vst.msk [vmem:[%s3 + $0x1ac] sm:$0xf] %vm3200, %v2915
  %3309 = vst.msk [vmem:[%s3 + $0x1b0] sm:$0xf] %vm3200, %v2916
  %3310 = vst.msk [vmem:[%s3 + $0x1b4] sm:$0xf] %vm3200, %v2917
  %3311 = vst.msk [vmem:[%s3 + $0x1b8] sm:$0xf] %vm3200, %v2918
  %3312 = vst.msk [vmem:[%s3 + $0x1bc] sm:$0xf] %vm3200, %v2919
  %3313 = vst.msk [vmem:[%s3 + $0x1c0] sm:$0xf] %vm3200, %v2920
  %3314 = vst.msk [vmem:[%s3 + $0x1c4] sm:$0xf] %vm3200, %v2921
  %3315 = vst.msk [vmem:[%s3 + $0x1c8] sm:$0xf] %vm3200, %v2922
  %3316 = vst.msk [vmem:[%s3 + $0x1cc] sm:$0xf] %vm3200, %v2923
  %3317 = vst.msk [vmem:[%s3 + $0x1d0] sm:$0xf] %vm3200, %v2924
  %3318 = vst.msk [vmem:[%s3 + $0x1d4] sm:$0xf] %vm3200, %v2925
  %3319 = vst.msk [vmem:[%s3 + $0x1d8] sm:$0xf] %vm3200, %v2926
  %3320 = vst.msk [vmem:[%s3 + $0x1dc] sm:$0xf] %vm3200, %v2927
  %3321 = vst.msk [vmem:[%s3 + $0x1e0] sm:$0xf] %vm3200, %v2928
  %3322 = vst.msk [vmem:[%s3 + $0x1e4] sm:$0xf] %vm3200, %v2929
  %3323 = vst.msk [vmem:[%s3 + $0x1e8] sm:$0xf] %vm3200, %v2930
  %3324 = vst.msk [vmem:[%s3 + $0x1ec] sm:$0xf] %vm3200, %v2931
  %3325 = vst.msk [vmem:[%s3 + $0x1f0] sm:$0xf] %vm3200, %v2932
  %3326 = vst.msk [vmem:[%s3 + $0x1f4] sm:$0xf] %vm3200, %v2933
  %3327 = vst.msk [vmem:[%s3 + $0x1f8] sm:$0xf] %vm3200, %v2934
  %3328 = vst.msk [vmem:[%s3 + $0x1fc] sm:$0xf] %vm3200, %v2935
  %3329 = vst.msk [vmem:[%s3 + $0x200] sm:$0xf] %vm3200, %v2936
  %3330 = vst.msk [vmem:[%s3 + $0x204] sm:$0xf] %vm3200, %v2937
  %3331 = vst.msk [vmem:[%s3 + $0x208] sm:$0xf] %vm3200, %v2938
  %3332 = vst.msk [vmem:[%s3 + $0x20c] sm:$0xf] %vm3200, %v2939
  %3333 = vst.msk [vmem:[%s3 + $0x210] sm:$0xf] %vm3200, %v2940
  %3334 = vst.msk [vmem:[%s3 + $0x214] sm:$0xf] %vm3200, %v2941
  %3335 = vst.msk [vmem:[%s3 + $0x218] sm:$0xf] %vm3200, %v2942
  %3336 = vst.msk [vmem:[%s3 + $0x21c] sm:$0xf] %vm3200, %v2943
  %3337 = vst.msk [vmem:[%s3 + $0x220] sm:$0xf] %vm3200, %v2944
  %3338 = vst.msk [vmem:[%s3 + $0x224] sm:$0xf] %vm3200, %v2945
  %3339 = vst.msk [vmem:[%s3 + $0x228] sm:$0xf] %vm3200, %v2946
  %3340 = vst.msk [vmem:[%s3 + $0x22c] sm:$0xf] %vm3200, %v2947
  %3341 = vst.msk [vmem:[%s3 + $0x230] sm:$0xf] %vm3200, %v2948
  %3342 = vst.msk [vmem:[%s3 + $0x234] sm:$0xf] %vm3200, %v2949
  %3343 = vst.msk [vmem:[%s3 + $0x238] sm:$0xf] %vm3200, %v2950
  %3344 = vst.msk [vmem:[%s3 + $0x23c] sm:$0xf] %vm3200, %v2951
  %3345 = vst.msk [vmem:[%s3 + $0x240] sm:$0xf] %vm3200, %v2952
  %3346 = vst.msk [vmem:[%s3 + $0x244] sm:$0xf] %vm3200, %v2953
  %3347 = vst.msk [vmem:[%s3 + $0x248] sm:$0xf] %vm3200, %v2954
  %3348 = vst.msk [vmem:[%s3 + $0x24c] sm:$0xf] %vm3200, %v2955
  %3349 = vst.msk [vmem:[%s3 + $0x250] sm:$0xf] %vm3200, %v2956
  %3350 = vst.msk [vmem:[%s3 + $0x254] sm:$0xf] %vm3200, %v2957
  %3351 = vst.msk [vmem:[%s3 + $0x258] sm:$0xf] %vm3200, %v2958
  %3352 = vst.msk [vmem:[%s3 + $0x25c] sm:$0xf] %vm3200, %v2959
  %3353 = vst.msk [vmem:[%s3 + $0x260] sm:$0xf] %vm3200, %v2960
  %3354 = vst.msk [vmem:[%s3 + $0x264] sm:$0xf] %vm3200, %v2961
  %3355 = vst.msk [vmem:[%s3 + $0x268] sm:$0xf] %vm3200, %v2962
  %3356 = vst.msk [vmem:[%s3 + $0x26c] sm:$0xf] %vm3200, %v2963
  %3357 = vst.msk [vmem:[%s3 + $0x270] sm:$0xf] %vm3200, %v2964
  %3358 = vst.msk [vmem:[%s3 + $0x274] sm:$0xf] %vm3200, %v2965
  %3359 = vst.msk [vmem:[%s3 + $0x278] sm:$0xf] %vm3200, %v2966
  %3360 = vst.msk [vmem:[%s3 + $0x27c] sm:$0xf] %vm3200, %v2967
  %3361 = vst.msk [vmem:[%s3 + $0x280] sm:$0xf] %vm3200, %v2968
  %3362 = vst.msk [vmem:[%s3 + $0x284] sm:$0xf] %vm3200, %v2969
  %3363 = vst.msk [vmem:[%s3 + $0x288] sm:$0xf] %vm3200, %v2970
  %3364 = vst.msk [vmem:[%s3 + $0x28c] sm:$0xf] %vm3200, %v2971
  %3365 = vst.msk [vmem:[%s3 + $0x290] sm:$0xf] %vm3200, %v2972
  %3366 = vst.msk [vmem:[%s3 + $0x294] sm:$0xf] %vm3200, %v2973
  %3367 = vst.msk [vmem:[%s3 + $0x298] sm:$0xf] %vm3200, %v2974
  %3368 = vst.msk [vmem:[%s3 + $0x29c] sm:$0xf] %vm3200, %v2975
  %3369 = vst.msk [vmem:[%s3 + $0x2a0] sm:$0xf] %vm3200, %v2976
  %3370 = vst.msk [vmem:[%s3 + $0x2a4] sm:$0xf] %vm3200, %v2977
  %3371 = vst.msk [vmem:[%s3 + $0x2a8] sm:$0xf] %vm3200, %v2978
  %3372 = vst.msk [vmem:[%s3 + $0x2ac] sm:$0xf] %vm3200, %v2979
  %3373 = vst.msk [vmem:[%s3 + $0x2b0] sm:$0xf] %vm3200, %v2980
  %3374 = vst.msk [vmem:[%s3 + $0x2b4] sm:$0xf] %vm3200, %v2981
  %3375 = vst.msk [vmem:[%s3 + $0x2b8] sm:$0xf] %vm3200, %v2982
  %3376 = vst.msk [vmem:[%s3 + $0x2bc] sm:$0xf] %vm3200, %v2983
  %3377 = vst.msk [vmem:[%s3 + $0x2c0] sm:$0xf] %vm3200, %v2984
  %3378 = vst.msk [vmem:[%s3 + $0x2c4] sm:$0xf] %vm3200, %v2985
  %3379 = vst.msk [vmem:[%s3 + $0x2c8] sm:$0xf] %vm3200, %v2986
  %3380 = vst.msk [vmem:[%s3 + $0x2cc] sm:$0xf] %vm3200, %v2987
  %3381 = vst.msk [vmem:[%s3 + $0x2d0] sm:$0xf] %vm3200, %v2988
  %3382 = vst.msk [vmem:[%s3 + $0x2d4] sm:$0xf] %vm3200, %v2989
  %3383 = vst.msk [vmem:[%s3 + $0x2d8] sm:$0xf] %vm3200, %v2990
  %3384 = vst.msk [vmem:[%s3 + $0x2dc] sm:$0xf] %vm3200, %v2991
  %3385 = vst.msk [vmem:[%s3 + $0x2e0] sm:$0xf] %vm3200, %v2992
  %3386 = vst.msk [vmem:[%s3 + $0x2e4] sm:$0xf] %vm3200, %v2993
  %3387 = vst.msk [vmem:[%s3 + $0x2e8] sm:$0xf] %vm3200, %v2994
  %3388 = vst.msk [vmem:[%s3 + $0x2ec] sm:$0xf] %vm3200, %v2995
  %3389 = vst.msk [vmem:[%s3 + $0x2f0] sm:$0xf] %vm3200, %v2996
  %3390 = vst.msk [vmem:[%s3 + $0x2f4] sm:$0xf] %vm3200, %v2997
  %3391 = vst.msk [vmem:[%s3 + $0x2f8] sm:$0xf] %vm3200, %v2998
  %3392 = vst.msk [vmem:[%s3 + $0x2fc] sm:$0xf] %vm3200, %v2999
  %3393 = vst.msk [vmem:[%s3 + $0x300] sm:$0xf] %vm3200, %v3000
  %3394 = vst.msk [vmem:[%s3 + $0x304] sm:$0xf] %vm3200, %v3001
  %3395 = vst.msk [vmem:[%s3 + $0x308] sm:$0xf] %vm3200, %v3002
  %3396 = vst.msk [vmem:[%s3 + $0x30c] sm:$0xf] %vm3200, %v3003
  // Predicated region
  $region14: #{d_mnist_forward.2} parent=0 // pred_check
    _
  $region15: #{d_mnist_forward.2} parent=0 // pred_check_branch
    %3398 = sbr.rel (0) target = $region17
  $region16: #{d_mnist_forward.2} parent=0 // pred_region
    _
  $region17: #{d_mnist_forward.2} parent=0 // pred_fallthru
    _
  // Predicated region
  $region18: #{d_mnist_forward.2} parent=0 // pred_check
    _
  $region19: #{d_mnist_forward.2} parent=0 // pred_check_branch
    %3400 = sbr.rel (0) target = $region21
  $region20: #{d_mnist_forward.2} parent=0 // pred_region
    _
  $region21: #{d_mnist_forward.2} parent=0 // pred_fallthru
    _

// kernel: d_mnist_forward.3
$region0: #{d_mnist_forward.3}
  #allocation0 [shape = 'u32[]', space=smem, size = 0x4, offset = 0x4, fixed_abs, tag = 'smem constant byte address 0x4 - core index']
  #allocation1 [shape = 'u32[144,128]{1,0:T(1,128)}', space=vmem, size = 0x12000, scoped, tag = 'internal scratch']
  #allocation2 [shape = 'f32[1,1]{1,0:T(1,128)S(1)}', space=vmem, size = 0x200, scoped, tag = 'scoped memory for d_mnist_forward.3']
  %s0 = inlined_call_operand.vmem [shape: bf16[8,4,9,9,64], index: 0, kind: input, shape index: {}]
  %s1 = inlined_call_operand.vmem [shape: bf16[1024,128], index: 1, kind: input, shape index: {}]
  %s2 = inlined_call_operand.vmem [shape: f32[1,128], index: 2, kind: input, shape index: {}]
  %s3 = inlined_call_operand.vmem [shape: f32[1,128], index: 3, kind: input, shape index: {}]
  %s4 = inlined_call_operand.vmem [shape: f32[64,128], index: 4, kind: input, shape index: {}]
  %s5 = inlined_call_operand.<no memory space> [shape: f32[1,1], index: 5, kind: input, shape index: {}]
  %s6 = inlined_call_operand.vmem [shape: f32[8,1], index: 6, kind: output, shape index: {}]
  %s7 = sld [smem:[#allocation0]]
  $region34: #{d_mnist_forward.3} parent=0
    _
  %s9 = ssub.s32 1, %s7
  %s10 = scalar_select 0, %s9, %s7
  %v11 = vstv %s5
  %12 = vst [vmem:[#allocation2] sm:$0x1] %v11
  // Predicated region
  $region2: #{d_mnist_forward.3} parent=0 // pred_check
    _
  $region3: #{d_mnist_forward.3} parent=0 // pred_check_branch
    %14 = sbr.rel (0) target = $region5
  $region4: #{d_mnist_forward.3} parent=0 // pred_region
    _
  $region5: #{d_mnist_forward.3} parent=0 // pred_fallthru
    _
  // Predicated region
  $region6: #{d_mnist_forward.3} parent=0 // pred_check
    _
  $region7: #{d_mnist_forward.3} parent=0 // pred_check_branch
    %16 = sbr.rel (0) target = $region9
  $region8: #{d_mnist_forward.3} parent=0 // pred_region
    _
  $region9: #{d_mnist_forward.3} parent=0 // pred_fallthru
    _
  // Predicated region
  $region10: #{d_mnist_forward.3} parent=0 // pred_check
    _
  $region11: #{d_mnist_forward.3} parent=0 // pred_check_branch
    %18 = sbr.rel (0) target = $region13
  $region12: #{d_mnist_forward.3} parent=0 // pred_region
    _
  $region13: #{d_mnist_forward.3} parent=0 // pred_fallthru
    _
  // Predicated region
  $region14: #{d_mnist_forward.3} parent=0 // pred_check
    _
  $region15: #{d_mnist_forward.3} parent=0 // pred_check_branch
    %20 = sbr.rel (0) target = $region17
  $region16: #{d_mnist_forward.3} parent=0 // pred_region
    _
  $region17: #{d_mnist_forward.3} parent=0 // pred_fallthru
    _
  // Predicated region
  $region18: #{d_mnist_forward.3} parent=0 // pred_check
    _
  $region19: #{d_mnist_forward.3} parent=0 // pred_check_branch
    %22 = sbr.rel (0) target = $region21
  $region20: #{d_mnist_forward.3} parent=0 // pred_region
    _
  $region21: #{d_mnist_forward.3} parent=0 // pred_fallthru
    _
  // Predicated region
  $region22: #{d_mnist_forward.3} parent=0 // pred_check
    _
  $region23: #{d_mnist_forward.3} parent=0 // pred_check_branch
    %24 = sbr.rel (0) target = $region25
  $region24: #{d_mnist_forward.3} parent=0 // pred_region
    _
  $region25: #{d_mnist_forward.3} parent=0 // pred_fallthru
    _
  %v26 = vld [vmem:[%s0] sm:$0xf]
  %v27 = vld [vmem:[%s0 + $0x4] sm:$0x1]
  %v28 = vld [vmem:[%s0 + $0x8] sm:$0xf]
  %v29 = vld [vmem:[%s0 + $0xc] sm:$0x1]
  %v30 = vld [vmem:[%s0 + $0x10] sm:$0xf]
  %v31 = vld [vmem:[%s0 + $0x14] sm:$0x1]
  %v32 = vld [vmem:[%s0 + $0x18] sm:$0xf]
  %v33 = vld [vmem:[%s0 + $0x1c] sm:$0x1]
  %v34 = vld [vmem:[%s0 + $0x20] sm:$0xf]
  %v35 = vld [vmem:[%s0 + $0x24] sm:$0x1]
  %v36 = vld [vmem:[%s0 + $0x28] sm:$0xf]
  %v37 = vld [vmem:[%s0 + $0x2c] sm:$0x1]
  %v38 = vld [vmem:[%s0 + $0x30] sm:$0xf]
  %v39 = vld [vmem:[%s0 + $0x34] sm:$0x1]
  %v40 = vld [vmem:[%s0 + $0x38] sm:$0xf]
  %v41 = vld [vmem:[%s0 + $0x3c] sm:$0x1]
  %v42 = vld [vmem:[%s0 + $0x40] sm:$0xf]
  %v43 = vld [vmem:[%s0 + $0x44] sm:$0x1]
  %v44 = vld [vmem:[%s0 + $0x48] sm:$0xf]
  %v45 = vld [vmem:[%s0 + $0x4c] sm:$0x1]
  %v46 = vld [vmem:[%s0 + $0x50] sm:$0xf]
  %v47 = vld [vmem:[%s0 + $0x54] sm:$0x1]
  %v48 = vld [vmem:[%s0 + $0x58] sm:$0xf]
  %v49 = vld [vmem:[%s0 + $0x5c] sm:$0x1]
  %v50 = vld [vmem:[%s0 + $0x60] sm:$0xf]
  %v51 = vld [vmem:[%s0 + $0x64] sm:$0x1]
  %v52 = vld [vmem:[%s0 + $0x68] sm:$0xf]
  %v53 = vld [vmem:[%s0 + $0x6c] sm:$0x1]
  %v54 = vld [vmem:[%s0 + $0x70] sm:$0xf]
  %v55 = vld [vmem:[%s0 + $0x74] sm:$0x1]
  %v56 = vld [vmem:[%s0 + $0x78] sm:$0xf]
  %v57 = vld [vmem:[%s0 + $0x7c] sm:$0x1]
  %v58 = vld [vmem:[%s0 + $0x80] sm:$0xf]
  %v59 = vld [vmem:[%s0 + $0x84] sm:$0x1]
  %v60 = vld [vmem:[%s0 + $0x88] sm:$0xf]
  %v61 = vld [vmem:[%s0 + $0x8c] sm:$0x1]
  %v62 = vld [vmem:[%s0 + $0x90] sm:$0xf]
  %v63 = vld [vmem:[%s0 + $0x94] sm:$0x1]
  %v64 = vld [vmem:[%s0 + $0x98] sm:$0xf]
  %v65 = vld [vmem:[%s0 + $0x9c] sm:$0x1]
  %v66 = vld [vmem:[%s0 + $0xa0] sm:$0xf]
  %v67 = vld [vmem:[%s0 + $0xa4] sm:$0x1]
  %v68 = vld [vmem:[%s0 + $0xa8] sm:$0xf]
  %v69 = vld [vmem:[%s0 + $0xac] sm:$0x1]
  %v70 = vld [vmem:[%s0 + $0xb0] sm:$0xf]
  %v71 = vld [vmem:[%s0 + $0xb4] sm:$0x1]
  %v72 = vld [vmem:[%s0 + $0xb8] sm:$0xf]
  %v73 = vld [vmem:[%s0 + $0xbc] sm:$0x1]
  %v74 = vld [vmem:[%s0 + $0xc0] sm:$0xf]
  %v75 = vld [vmem:[%s0 + $0xc4] sm:$0x1]
  %v76 = vld [vmem:[%s0 + $0xc8] sm:$0xf]
  %v77 = vld [vmem:[%s0 + $0xcc] sm:$0x1]
  %v78 = vld [vmem:[%s0 + $0xd0] sm:$0xf]
  %v79 = vld [vmem:[%s0 + $0xd4] sm:$0x1]
  %v80 = vld [vmem:[%s0 + $0xd8] sm:$0xf]
  %v81 = vld [vmem:[%s0 + $0xdc] sm:$0x1]
  %v82 = vld [vmem:[%s0 + $0xe0] sm:$0xf]
  %v83 = vld [vmem:[%s0 + $0xe4] sm:$0x1]
  %v84 = vld [vmem:[%s0 + $0xe8] sm:$0xf]
  %v85 = vld [vmem:[%s0 + $0xec] sm:$0x1]
  %v86 = vld [vmem:[%s0 + $0xf0] sm:$0xf]
  %v87 = vld [vmem:[%s0 + $0xf4] sm:$0x1]
  %v88 = vld [vmem:[%s0 + $0xf8] sm:$0xf]
  %v89 = vld [vmem:[%s0 + $0xfc] sm:$0x1]
  %v90 = vld [vmem:[%s0 + $0x100] sm:$0xf]
  %v91 = vld [vmem:[%s0 + $0x104] sm:$0x1]
  %v92 = vld [vmem:[%s0 + $0x108] sm:$0xf]
  %v93 = vld [vmem:[%s0 + $0x10c] sm:$0x1]
  %v94 = vld [vmem:[%s0 + $0x110] sm:$0xf]
  %v95 = vld [vmem:[%s0 + $0x114] sm:$0x1]
  %v96 = vld [vmem:[%s0 + $0x118] sm:$0xf]
  %v97 = vld [vmem:[%s0 + $0x11c] sm:$0x1]
  %v98 = vld [vmem:[%s0 + $0x120] sm:$0xf]
  %v99 = vld [vmem:[%s0 + $0x124] sm:$0x1]
  %v100 = vld [vmem:[%s0 + $0x128] sm:$0xf]
  %v101 = vld [vmem:[%s0 + $0x12c] sm:$0x1]
  %v102 = vld [vmem:[%s0 + $0x130] sm:$0xf]
  %v103 = vld [vmem:[%s0 + $0x134] sm:$0x1]
  %v104 = vld [vmem:[%s0 + $0x138] sm:$0xf]
  %v105 = vld [vmem:[%s0 + $0x13c] sm:$0x1]
  %v106 = vld [vmem:[%s0 + $0x140] sm:$0xf]
  %v107 = vld [vmem:[%s0 + $0x144] sm:$0x1]
  %v108 = vld [vmem:[%s0 + $0x148] sm:$0xf]
  %v109 = vld [vmem:[%s0 + $0x14c] sm:$0x1]
  %v110 = vld [vmem:[%s0 + $0x150] sm:$0xf]
  %v111 = vld [vmem:[%s0 + $0x154] sm:$0x1]
  %v112 = vld [vmem:[%s0 + $0x158] sm:$0xf]
  %v113 = vld [vmem:[%s0 + $0x15c] sm:$0x1]
  %v114 = vld [vmem:[%s0 + $0x160] sm:$0xf]
  %v115 = vld [vmem:[%s0 + $0x164] sm:$0x1]
  %v116 = vld [vmem:[%s0 + $0x168] sm:$0xf]
  %v117 = vld [vmem:[%s0 + $0x16c] sm:$0x1]
  %v118 = vld [vmem:[%s0 + $0x170] sm:$0xf]
  %v119 = vld [vmem:[%s0 + $0x174] sm:$0x1]
  %v120 = vld [vmem:[%s0 + $0x178] sm:$0xf]
  %v121 = vld [vmem:[%s0 + $0x17c] sm:$0x1]
  %v122 = vld [vmem:[%s0 + $0x180] sm:$0xf]
  %v123 = vld [vmem:[%s0 + $0x184] sm:$0x1]
  %v124 = vld [vmem:[%s0 + $0x188] sm:$0xf]
  %v125 = vld [vmem:[%s0 + $0x18c] sm:$0x1]
  %v126 = vld [vmem:[%s0 + $0x190] sm:$0xf]
  %v127 = vld [vmem:[%s0 + $0x194] sm:$0x1]
  %v128 = vld [vmem:[%s0 + $0x198] sm:$0xf]
  %v129 = vld [vmem:[%s0 + $0x19c] sm:$0x1]
  %v130 = vld [vmem:[%s0 + $0x1a0] sm:$0xf]
  %v131 = vld [vmem:[%s0 + $0x1a4] sm:$0x1]
  %v132 = vld [vmem:[%s0 + $0x1a8] sm:$0xf]
  %v133 = vld [vmem:[%s0 + $0x1ac] sm:$0x1]
  %v134 = vld [vmem:[%s0 + $0x1b0] sm:$0xf]
  %v135 = vld [vmem:[%s0 + $0x1b4] sm:$0x1]
  %v136 = vld [vmem:[%s0 + $0x1b8] sm:$0xf]
  %v137 = vld [vmem:[%s0 + $0x1bc] sm:$0x1]
  %v138 = vld [vmem:[%s0 + $0x1c0] sm:$0xf]
  %v139 = vld [vmem:[%s0 + $0x1c4] sm:$0x1]
  %v140 = vld [vmem:[%s0 + $0x1c8] sm:$0xf]
  %v141 = vld [vmem:[%s0 + $0x1cc] sm:$0x1]
  %v142 = vld [vmem:[%s0 + $0x1d0] sm:$0xf]
  %v143 = vld [vmem:[%s0 + $0x1d4] sm:$0x1]
  %v144 = vld [vmem:[%s0 + $0x1d8] sm:$0xf]
  %v145 = vld [vmem:[%s0 + $0x1dc] sm:$0x1]
  %v146 = vld [vmem:[%s0 + $0x1e0] sm:$0xf]
  %v147 = vld [vmem:[%s0 + $0x1e4] sm:$0x1]
  %v148 = vld [vmem:[%s0 + $0x1e8] sm:$0xf]
  %v149 = vld [vmem:[%s0 + $0x1ec] sm:$0x1]
  %v150 = vld [vmem:[%s0 + $0x1f0] sm:$0xf]
  %v151 = vld [vmem:[%s0 + $0x1f4] sm:$0x1]
  %v152 = vld [vmem:[%s0 + $0x1f8] sm:$0xf]
  %v153 = vld [vmem:[%s0 + $0x1fc] sm:$0x1]
  %v154 = vld [vmem:[%s0 + $0x200] sm:$0xf]
  %v155 = vld [vmem:[%s0 + $0x204] sm:$0x1]
  %v156 = vld [vmem:[%s0 + $0x208] sm:$0xf]
  %v157 = vld [vmem:[%s0 + $0x20c] sm:$0x1]
  %v158 = vld [vmem:[%s0 + $0x210] sm:$0xf]
  %v159 = vld [vmem:[%s0 + $0x214] sm:$0x1]
  %v160 = vld [vmem:[%s0 + $0x218] sm:$0xf]
  %v161 = vld [vmem:[%s0 + $0x21c] sm:$0x1]
  %v162 = vld [vmem:[%s0 + $0x220] sm:$0xf]
  %v163 = vld [vmem:[%s0 + $0x224] sm:$0x1]
  %v164 = vld [vmem:[%s0 + $0x228] sm:$0xf]
  %v165 = vld [vmem:[%s0 + $0x22c] sm:$0x1]
  %v166 = vld [vmem:[%s0 + $0x230] sm:$0xf]
  %v167 = vld [vmem:[%s0 + $0x234] sm:$0x1]
  %v168 = vld [vmem:[%s0 + $0x238] sm:$0xf]
  %v169 = vld [vmem:[%s0 + $0x23c] sm:$0x1]
  %v170 = vld [vmem:[%s0 + $0x240] sm:$0xf]
  %v171 = vld [vmem:[%s0 + $0x244] sm:$0x1]
  %v172 = vld [vmem:[%s0 + $0x248] sm:$0xf]
  %v173 = vld [vmem:[%s0 + $0x24c] sm:$0x1]
  %v174 = vld [vmem:[%s0 + $0x250] sm:$0xf]
  %v175 = vld [vmem:[%s0 + $0x254] sm:$0x1]
  %v176 = vld [vmem:[%s0 + $0x258] sm:$0xf]
  %v177 = vld [vmem:[%s0 + $0x25c] sm:$0x1]
  %v178 = vld [vmem:[%s0 + $0x260] sm:$0xf]
  %v179 = vld [vmem:[%s0 + $0x264] sm:$0x1]
  %v180 = vld [vmem:[%s0 + $0x268] sm:$0xf]
  %v181 = vld [vmem:[%s0 + $0x26c] sm:$0x1]
  %v182 = vld [vmem:[%s0 + $0x270] sm:$0xf]
  %v183 = vld [vmem:[%s0 + $0x274] sm:$0x1]
  %v184 = vld [vmem:[%s0 + $0x278] sm:$0xf]
  %v185 = vld [vmem:[%s0 + $0x27c] sm:$0x1]
  %v186 = vld [vmem:[%s0 + $0x280] sm:$0xf]
  %v187 = vld [vmem:[%s0 + $0x284] sm:$0x1]
  %v188 = vld [vmem:[%s0 + $0x288] sm:$0xf]
  %v189 = vld [vmem:[%s0 + $0x28c] sm:$0x1]
  %v190 = vld [vmem:[%s0 + $0x290] sm:$0xf]
  %v191 = vld [vmem:[%s0 + $0x294] sm:$0x1]
  %v192 = vld [vmem:[%s0 + $0x298] sm:$0xf]
  %v193 = vld [vmem:[%s0 + $0x29c] sm:$0x1]
  %v194 = vld [vmem:[%s0 + $0x2a0] sm:$0xf]
  %v195 = vld [vmem:[%s0 + $0x2a4] sm:$0x1]
  %v196 = vld [vmem:[%s0 + $0x2a8] sm:$0xf]
  %v197 = vld [vmem:[%s0 + $0x2ac] sm:$0x1]
  %v198 = vld [vmem:[%s0 + $0x2b0] sm:$0xf]
  %v199 = vld [vmem:[%s0 + $0x2b4] sm:$0x1]
  %v200 = vld [vmem:[%s0 + $0x2b8] sm:$0xf]
  %v201 = vld [vmem:[%s0 + $0x2bc] sm:$0x1]
  %v202 = vld [vmem:[%s0 + $0x2c0] sm:$0xf]
  %v203 = vld [vmem:[%s0 + $0x2c4] sm:$0x1]
  %v204 = vld [vmem:[%s0 + $0x2c8] sm:$0xf]
  %v205 = vld [vmem:[%s0 + $0x2cc] sm:$0x1]
  %v206 = vld [vmem:[%s0 + $0x2d0] sm:$0xf]
  %v207 = vld [vmem:[%s0 + $0x2d4] sm:$0x1]
  %v208 = vld [vmem:[%s0 + $0x2d8] sm:$0xf]
  %v209 = vld [vmem:[%s0 + $0x2dc] sm:$0x1]
  %v210 = vld [vmem:[%s0 + $0x2e0] sm:$0xf]
  %v211 = vld [vmem:[%s0 + $0x2e4] sm:$0x1]
  %v212 = vld [vmem:[%s0 + $0x2e8] sm:$0xf]
  %v213 = vld [vmem:[%s0 + $0x2ec] sm:$0x1]
  %v214 = vld [vmem:[%s0 + $0x2f0] sm:$0xf]
  %v215 = vld [vmem:[%s0 + $0x2f4] sm:$0x1]
  %v216 = vld [vmem:[%s0 + $0x2f8] sm:$0xf]
  %v217 = vld [vmem:[%s0 + $0x2fc] sm:$0x1]
  %v218 = vld [vmem:[%s0 + $0x300] sm:$0xf]
  %v219 = vld [vmem:[%s0 + $0x304] sm:$0x1]
  %v220 = vld [vmem:[%s0 + $0x308] sm:$0xf]
  %v221 = vld [vmem:[%s0 + $0x30c] sm:$0x1]
  %v222 = vld [vmem:[%s0 + $0x310] sm:$0xf]
  %v223 = vld [vmem:[%s0 + $0x314] sm:$0x1]
  %v224 = vld [vmem:[%s0 + $0x318] sm:$0xf]
  %v225 = vld [vmem:[%s0 + $0x31c] sm:$0x1]
  %v226 = vld [vmem:[%s0 + $0x320] sm:$0xf]
  %v227 = vld [vmem:[%s0 + $0x324] sm:$0x1]
  %v228 = vld [vmem:[%s0 + $0x328] sm:$0xf]
  %v229 = vld [vmem:[%s0 + $0x32c] sm:$0x1]
  %v230 = vld [vmem:[%s0 + $0x330] sm:$0xf]
  %v231 = vld [vmem:[%s0 + $0x334] sm:$0x1]
  %v232 = vld [vmem:[%s0 + $0x338] sm:$0xf]
  %v233 = vld [vmem:[%s0 + $0x33c] sm:$0x1]
  %v234 = vld [vmem:[%s0 + $0x340] sm:$0xf]
  %v235 = vld [vmem:[%s0 + $0x344] sm:$0x1]
  %v236 = vld [vmem:[%s0 + $0x348] sm:$0xf]
  %v237 = vld [vmem:[%s0 + $0x34c] sm:$0x1]
  %v238 = vld [vmem:[%s0 + $0x350] sm:$0xf]
  %v239 = vld [vmem:[%s0 + $0x354] sm:$0x1]
  %v240 = vld [vmem:[%s0 + $0x358] sm:$0xf]
  %v241 = vld [vmem:[%s0 + $0x35c] sm:$0x1]
  %v242 = vld [vmem:[%s0 + $0x360] sm:$0xf]
  %v243 = vld [vmem:[%s0 + $0x364] sm:$0x1]
  %v244 = vld [vmem:[%s0 + $0x368] sm:$0xf]
  %v245 = vld [vmem:[%s0 + $0x36c] sm:$0x1]
  %v246 = vld [vmem:[%s0 + $0x370] sm:$0xf]
  %v247 = vld [vmem:[%s0 + $0x374] sm:$0x1]
  %v248 = vld [vmem:[%s0 + $0x378] sm:$0xf]
  %v249 = vld [vmem:[%s0 + $0x37c] sm:$0x1]
  %v250 = vld [vmem:[%s0 + $0x380] sm:$0xf]
  %v251 = vld [vmem:[%s0 + $0x384] sm:$0x1]
  %v252 = vld [vmem:[%s0 + $0x388] sm:$0xf]
  %v253 = vld [vmem:[%s0 + $0x38c] sm:$0x1]
  %v254 = vld [vmem:[%s0 + $0x390] sm:$0xf]
  %v255 = vld [vmem:[%s0 + $0x394] sm:$0x1]
  %v256 = vld [vmem:[%s0 + $0x398] sm:$0xf]
  %v257 = vld [vmem:[%s0 + $0x39c] sm:$0x1]
  %v258 = vld [vmem:[%s0 + $0x3a0] sm:$0xf]
  %v259 = vld [vmem:[%s0 + $0x3a4] sm:$0x1]
  %v260 = vld [vmem:[%s0 + $0x3a8] sm:$0xf]
  %v261 = vld [vmem:[%s0 + $0x3ac] sm:$0x1]
  %v262 = vld [vmem:[%s0 + $0x3b0] sm:$0xf]
  %v263 = vld [vmem:[%s0 + $0x3b4] sm:$0x1]
  %v264 = vld [vmem:[%s0 + $0x3b8] sm:$0xf]
  %v265 = vld [vmem:[%s0 + $0x3bc] sm:$0x1]
  %v266 = vld [vmem:[%s0 + $0x3c0] sm:$0xf]
  %v267 = vld [vmem:[%s0 + $0x3c4] sm:$0x1]
  %v268 = vld [vmem:[%s0 + $0x3c8] sm:$0xf]
  %v269 = vld [vmem:[%s0 + $0x3cc] sm:$0x1]
  %v270 = vld [vmem:[%s0 + $0x3d0] sm:$0xf]
  %v271 = vld [vmem:[%s0 + $0x3d4] sm:$0x1]
  %v272 = vld [vmem:[%s0 + $0x3d8] sm:$0xf]
  %v273 = vld [vmem:[%s0 + $0x3dc] sm:$0x1]
  %v274 = vld [vmem:[%s0 + $0x3e0] sm:$0xf]
  %v275 = vld [vmem:[%s0 + $0x3e4] sm:$0x1]
  %v276 = vld [vmem:[%s0 + $0x3e8] sm:$0xf]
  %v277 = vld [vmem:[%s0 + $0x3ec] sm:$0x1]
  %v278 = vld [vmem:[%s0 + $0x3f0] sm:$0xf]
  %v279 = vld [vmem:[%s0 + $0x3f4] sm:$0x1]
  %v280 = vld [vmem:[%s0 + $0x3f8] sm:$0xf]
  %v281 = vld [vmem:[%s0 + $0x3fc] sm:$0x1]
  %v282 = vld [vmem:[%s0 + $0x400] sm:$0xf]
  %v283 = vld [vmem:[%s0 + $0x404] sm:$0x1]
  %v284 = vld [vmem:[%s0 + $0x408] sm:$0xf]
  %v285 = vld [vmem:[%s0 + $0x40c] sm:$0x1]
  %v286 = vld [vmem:[%s0 + $0x410] sm:$0xf]
  %v287 = vld [vmem:[%s0 + $0x414] sm:$0x1]
  %v288 = vld [vmem:[%s0 + $0x418] sm:$0xf]
  %v289 = vld [vmem:[%s0 + $0x41c] sm:$0x1]
  %v290 = vld [vmem:[%s0 + $0x420] sm:$0xf]
  %v291 = vld [vmem:[%s0 + $0x424] sm:$0x1]
  %v292 = vld [vmem:[%s0 + $0x428] sm:$0xf]
  %v293 = vld [vmem:[%s0 + $0x42c] sm:$0x1]
  %v294 = vld [vmem:[%s0 + $0x430] sm:$0xf]
  %v295 = vld [vmem:[%s0 + $0x434] sm:$0x1]
  %v296 = vld [vmem:[%s0 + $0x438] sm:$0xf]
  %v297 = vld [vmem:[%s0 + $0x43c] sm:$0x1]
  %v298 = vld [vmem:[%s0 + $0x440] sm:$0xf]
  %v299 = vld [vmem:[%s0 + $0x444] sm:$0x1]
  %v300 = vld [vmem:[%s0 + $0x448] sm:$0xf]
  %v301 = vld [vmem:[%s0 + $0x44c] sm:$0x1]
  %v302 = vld [vmem:[%s0 + $0x450] sm:$0xf]
  %v303 = vld [vmem:[%s0 + $0x454] sm:$0x1]
  %v304 = vld [vmem:[%s0 + $0x458] sm:$0xf]
  %v305 = vld [vmem:[%s0 + $0x45c] sm:$0x1]
  %v306 = vld [vmem:[%s0 + $0x460] sm:$0xf]
  %v307 = vld [vmem:[%s0 + $0x464] sm:$0x1]
  %v308 = vld [vmem:[%s0 + $0x468] sm:$0xf]
  %v309 = vld [vmem:[%s0 + $0x46c] sm:$0x1]
  %v310 = vld [vmem:[%s0 + $0x470] sm:$0xf]
  %v311 = vld [vmem:[%s0 + $0x474] sm:$0x1]
  %v312 = vld [vmem:[%s0 + $0x478] sm:$0xf]
  %v313 = vld [vmem:[%s0 + $0x47c] sm:$0x1]
  %v314 = vld [vmem:[%s0 + $0x480] sm:$0xf]
  %v315 = vld [vmem:[%s0 + $0x484] sm:$0x1]
  %v316 = vld [vmem:[%s0 + $0x488] sm:$0xf]
  %v317 = vld [vmem:[%s0 + $0x48c] sm:$0x1]
  %v318 = vld [vmem:[%s0 + $0x490] sm:$0xf]
  %v319 = vld [vmem:[%s0 + $0x494] sm:$0x1]
  %v320 = vld [vmem:[%s0 + $0x498] sm:$0xf]
  %v321 = vld [vmem:[%s0 + $0x49c] sm:$0x1]
  %v322 = vld [vmem:[%s0 + $0x4a0] sm:$0xf]
  %v323 = vld [vmem:[%s0 + $0x4a4] sm:$0x1]
  %v324 = vld [vmem:[%s0 + $0x4a8] sm:$0xf]
  %v325 = vld [vmem:[%s0 + $0x4ac] sm:$0x1]
  %v326 = vld [vmem:[%s0 + $0x4b0] sm:$0xf]
  %v327 = vld [vmem:[%s0 + $0x4b4] sm:$0x1]
  %v328 = vld [vmem:[%s0 + $0x4b8] sm:$0xf]
  %v329 = vld [vmem:[%s0 + $0x4bc] sm:$0x1]
  %v330 = vld [vmem:[%s0 + $0x4c0] sm:$0xf]
  %v331 = vld [vmem:[%s0 + $0x4c4] sm:$0x1]
  %v332 = vld [vmem:[%s0 + $0x4c8] sm:$0xf]
  %v333 = vld [vmem:[%s0 + $0x4cc] sm:$0x1]
  %v334 = vld [vmem:[%s0 + $0x4d0] sm:$0xf]
  %v335 = vld [vmem:[%s0 + $0x4d4] sm:$0x1]
  %v336 = vld [vmem:[%s0 + $0x4d8] sm:$0xf]
  %v337 = vld [vmem:[%s0 + $0x4dc] sm:$0x1]
  %v338 = vld [vmem:[%s0 + $0x4e0] sm:$0xf]
  %v339 = vld [vmem:[%s0 + $0x4e4] sm:$0x1]
  %v340 = vld [vmem:[%s0 + $0x4e8] sm:$0xf]
  %v341 = vld [vmem:[%s0 + $0x4ec] sm:$0x1]
  %v342 = vld [vmem:[%s0 + $0x4f0] sm:$0xf]
  %v343 = vld [vmem:[%s0 + $0x4f4] sm:$0x1]
  %v344 = vld [vmem:[%s0 + $0x4f8] sm:$0xf]
  %v345 = vld [vmem:[%s0 + $0x4fc] sm:$0x1]
  %v346 = vld [vmem:[%s0 + $0x500] sm:$0xf]
  %v347 = vld [vmem:[%s0 + $0x504] sm:$0x1]
  %v348 = vld [vmem:[%s0 + $0x508] sm:$0xf]
  %v349 = vld [vmem:[%s0 + $0x50c] sm:$0x1]
  %v350 = vld [vmem:[%s0 + $0x510] sm:$0xf]
  %v351 = vld [vmem:[%s0 + $0x514] sm:$0x1]
  %v352 = vld [vmem:[%s0 + $0x518] sm:$0xf]
  %v353 = vld [vmem:[%s0 + $0x51c] sm:$0x1]
  %v354 = vld [vmem:[%s0 + $0x520] sm:$0xf]
  %v355 = vld [vmem:[%s0 + $0x524] sm:$0x1]
  %v356 = vld [vmem:[%s0 + $0x528] sm:$0xf]
  %v357 = vld [vmem:[%s0 + $0x52c] sm:$0x1]
  %v358 = vld [vmem:[%s0 + $0x530] sm:$0xf]
  %v359 = vld [vmem:[%s0 + $0x534] sm:$0x1]
  %v360 = vld [vmem:[%s0 + $0x538] sm:$0xf]
  %v361 = vld [vmem:[%s0 + $0x53c] sm:$0x1]
  %v362 = vld [vmem:[%s0 + $0x540] sm:$0xf]
  %v363 = vld [vmem:[%s0 + $0x544] sm:$0x1]
  %v364 = vld [vmem:[%s0 + $0x548] sm:$0xf]
  %v365 = vld [vmem:[%s0 + $0x54c] sm:$0x1]
  %v366 = vld [vmem:[%s0 + $0x550] sm:$0xf]
  %v367 = vld [vmem:[%s0 + $0x554] sm:$0x1]
  %v368 = vld [vmem:[%s0 + $0x558] sm:$0xf]
  %v369 = vld [vmem:[%s0 + $0x55c] sm:$0x1]
  %v370 = vld [vmem:[%s0 + $0x560] sm:$0xf]
  %v371 = vld [vmem:[%s0 + $0x564] sm:$0x1]
  %v372 = vld [vmem:[%s0 + $0x568] sm:$0xf]
  %v373 = vld [vmem:[%s0 + $0x56c] sm:$0x1]
  %v374 = vld [vmem:[%s0 + $0x570] sm:$0xf]
  %v375 = vld [vmem:[%s0 + $0x574] sm:$0x1]
  %v376 = vld [vmem:[%s0 + $0x578] sm:$0xf]
  %v377 = vld [vmem:[%s0 + $0x57c] sm:$0x1]
  %v378 = vld [vmem:[%s0 + $0x580] sm:$0xf]
  %v379 = vld [vmem:[%s0 + $0x584] sm:$0x1]
  %v380 = vld [vmem:[%s0 + $0x588] sm:$0xf]
  %v381 = vld [vmem:[%s0 + $0x58c] sm:$0x1]
  %v382 = vld [vmem:[%s0 + $0x590] sm:$0xf]
  %v383 = vld [vmem:[%s0 + $0x594] sm:$0x1]
  %v384 = vld [vmem:[%s0 + $0x598] sm:$0xf]
  %v385 = vld [vmem:[%s0 + $0x59c] sm:$0x1]
  %v386 = vld [vmem:[%s0 + $0x5a0] sm:$0xf]
  %v387 = vld [vmem:[%s0 + $0x5a4] sm:$0x1]
  %v388 = vld [vmem:[%s0 + $0x5a8] sm:$0xf]
  %v389 = vld [vmem:[%s0 + $0x5ac] sm:$0x1]
  %v390 = vld [vmem:[%s0 + $0x5b0] sm:$0xf]
  %v391 = vld [vmem:[%s0 + $0x5b4] sm:$0x1]
  %v392 = vld [vmem:[%s0 + $0x5b8] sm:$0xf]
  %v393 = vld [vmem:[%s0 + $0x5bc] sm:$0x1]
  %v394 = vld [vmem:[%s0 + $0x5c0] sm:$0xf]
  %v395 = vld [vmem:[%s0 + $0x5c4] sm:$0x1]
  %v396 = vld [vmem:[%s0 + $0x5c8] sm:$0xf]
  %v397 = vld [vmem:[%s0 + $0x5cc] sm:$0x1]
  %v398 = vld [vmem:[%s0 + $0x5d0] sm:$0xf]
  %v399 = vld [vmem:[%s0 + $0x5d4] sm:$0x1]
  %v400 = vld [vmem:[%s0 + $0x5d8] sm:$0xf]
  %v401 = vld [vmem:[%s0 + $0x5dc] sm:$0x1]
  %v402 = vld [vmem:[%s0 + $0x5e0] sm:$0xf]
  %v403 = vld [vmem:[%s0 + $0x5e4] sm:$0x1]
  %v404 = vld [vmem:[%s0 + $0x5e8] sm:$0xf]
  %v405 = vld [vmem:[%s0 + $0x5ec] sm:$0x1]
  %v406 = vld [vmem:[%s0 + $0x5f0] sm:$0xf]
  %v407 = vld [vmem:[%s0 + $0x5f4] sm:$0x1]
  %v408 = vld [vmem:[%s0 + $0x5f8] sm:$0xf]
  %v409 = vld [vmem:[%s0 + $0x5fc] sm:$0x1]
  %v410 = vld [vmem:[%s0 + $0x600] sm:$0xf]
  %v411 = vld [vmem:[%s0 + $0x604] sm:$0x1]
  %v412 = vld [vmem:[%s0 + $0x608] sm:$0xf]
  %v413 = vld [vmem:[%s0 + $0x60c] sm:$0x1]
  %v414 = vld [vmem:[%s0 + $0x610] sm:$0xf]
  %v415 = vld [vmem:[%s0 + $0x614] sm:$0x1]
  %v416 = vld [vmem:[%s0 + $0x618] sm:$0xf]
  %v417 = vld [vmem:[%s0 + $0x61c] sm:$0x1]
  %v418 = vld [vmem:[%s0 + $0x620] sm:$0xf]
  %v419 = vld [vmem:[%s0 + $0x624] sm:$0x1]
  %v420 = vld [vmem:[%s0 + $0x628] sm:$0xf]
  %v421 = vld [vmem:[%s0 + $0x62c] sm:$0x1]
  %v422 = vld [vmem:[%s0 + $0x630] sm:$0xf]
  %v423 = vld [vmem:[%s0 + $0x634] sm:$0x1]
  %v424 = vld [vmem:[%s0 + $0x638] sm:$0xf]
  %v425 = vld [vmem:[%s0 + $0x63c] sm:$0x1]
  %v426 = vld [vmem:[%s0 + $0x640] sm:$0xf]
  %v427 = vld [vmem:[%s0 + $0x644] sm:$0x1]
  %v428 = vld [vmem:[%s0 + $0x648] sm:$0xf]
  %v429 = vld [vmem:[%s0 + $0x64c] sm:$0x1]
  %v430 = vld [vmem:[%s0 + $0x650] sm:$0xf]
  %v431 = vld [vmem:[%s0 + $0x654] sm:$0x1]
  %v432 = vld [vmem:[%s0 + $0x658] sm:$0xf]
  %v433 = vld [vmem:[%s0 + $0x65c] sm:$0x1]
  %v434 = vld [vmem:[%s0 + $0x660] sm:$0xf]
  %v435 = vld [vmem:[%s0 + $0x664] sm:$0x1]
  %v436 = vld [vmem:[%s0 + $0x668] sm:$0xf]
  %v437 = vld [vmem:[%s0 + $0x66c] sm:$0x1]
  %v438 = vld [vmem:[%s0 + $0x670] sm:$0xf]
  %v439 = vld [vmem:[%s0 + $0x674] sm:$0x1]
  %v440 = vld [vmem:[%s0 + $0x678] sm:$0xf]
  %v441 = vld [vmem:[%s0 + $0x67c] sm:$0x1]
  %v442 = vld [vmem:[%s0 + $0x680] sm:$0xf]
  %v443 = vld [vmem:[%s0 + $0x684] sm:$0x1]
  %v444 = vld [vmem:[%s0 + $0x688] sm:$0xf]
  %v445 = vld [vmem:[%s0 + $0x68c] sm:$0x1]
  %v446 = vld [vmem:[%s0 + $0x690] sm:$0xf]
  %v447 = vld [vmem:[%s0 + $0x694] sm:$0x1]
  %v448 = vld [vmem:[%s0 + $0x698] sm:$0xf]
  %v449 = vld [vmem:[%s0 + $0x69c] sm:$0x1]
  %v450 = vld [vmem:[%s0 + $0x6a0] sm:$0xf]
  %v451 = vld [vmem:[%s0 + $0x6a4] sm:$0x1]
  %v452 = vld [vmem:[%s0 + $0x6a8] sm:$0xf]
  %v453 = vld [vmem:[%s0 + $0x6ac] sm:$0x1]
  %v454 = vld [vmem:[%s0 + $0x6b0] sm:$0xf]
  %v455 = vld [vmem:[%s0 + $0x6b4] sm:$0x1]
  %v456 = vld [vmem:[%s0 + $0x6b8] sm:$0xf]
  %v457 = vld [vmem:[%s0 + $0x6bc] sm:$0x1]
  %v458 = vld [vmem:[%s0 + $0x6c0] sm:$0xf]
  %v459 = vld [vmem:[%s0 + $0x6c4] sm:$0x1]
  %v460 = vld [vmem:[%s0 + $0x6c8] sm:$0xf]
  %v461 = vld [vmem:[%s0 + $0x6cc] sm:$0x1]
  %v462 = vld [vmem:[%s0 + $0x6d0] sm:$0xf]
  %v463 = vld [vmem:[%s0 + $0x6d4] sm:$0x1]
  %v464 = vld [vmem:[%s0 + $0x6d8] sm:$0xf]
  %v465 = vld [vmem:[%s0 + $0x6dc] sm:$0x1]
  %v466 = vld [vmem:[%s0 + $0x6e0] sm:$0xf]
  %v467 = vld [vmem:[%s0 + $0x6e4] sm:$0x1]
  %v468 = vld [vmem:[%s0 + $0x6e8] sm:$0xf]
  %v469 = vld [vmem:[%s0 + $0x6ec] sm:$0x1]
  %v470 = vld [vmem:[%s0 + $0x6f0] sm:$0xf]
  %v471 = vld [vmem:[%s0 + $0x6f4] sm:$0x1]
  %v472 = vld [vmem:[%s0 + $0x6f8] sm:$0xf]
  %v473 = vld [vmem:[%s0 + $0x6fc] sm:$0x1]
  %v474 = vld [vmem:[%s0 + $0x700] sm:$0xf]
  %v475 = vld [vmem:[%s0 + $0x704] sm:$0x1]
  %v476 = vld [vmem:[%s0 + $0x708] sm:$0xf]
  %v477 = vld [vmem:[%s0 + $0x70c] sm:$0x1]
  %v478 = vld [vmem:[%s0 + $0x710] sm:$0xf]
  %v479 = vld [vmem:[%s0 + $0x714] sm:$0x1]
  %v480 = vld [vmem:[%s0 + $0x718] sm:$0xf]
  %v481 = vld [vmem:[%s0 + $0x71c] sm:$0x1]
  %v482 = vld [vmem:[%s0 + $0x720] sm:$0xf]
  %v483 = vld [vmem:[%s0 + $0x724] sm:$0x1]
  %v484 = vld [vmem:[%s0 + $0x728] sm:$0xf]
  %v485 = vld [vmem:[%s0 + $0x72c] sm:$0x1]
  %v486 = vld [vmem:[%s0 + $0x730] sm:$0xf]
  %v487 = vld [vmem:[%s0 + $0x734] sm:$0x1]
  %v488 = vld [vmem:[%s0 + $0x738] sm:$0xf]
  %v489 = vld [vmem:[%s0 + $0x73c] sm:$0x1]
  %v490 = vld [vmem:[%s0 + $0x740] sm:$0xf]
  %v491 = vld [vmem:[%s0 + $0x744] sm:$0x1]
  %v492 = vld [vmem:[%s0 + $0x748] sm:$0xf]
  %v493 = vld [vmem:[%s0 + $0x74c] sm:$0x1]
  %v494 = vld [vmem:[%s0 + $0x750] sm:$0xf]
  %v495 = vld [vmem:[%s0 + $0x754] sm:$0x1]
  %v496 = vld [vmem:[%s0 + $0x758] sm:$0xf]
  %v497 = vld [vmem:[%s0 + $0x75c] sm:$0x1]
  %v498 = vld [vmem:[%s0 + $0x760] sm:$0xf]
  %v499 = vld [vmem:[%s0 + $0x764] sm:$0x1]
  %v500 = vld [vmem:[%s0 + $0x768] sm:$0xf]
  %v501 = vld [vmem:[%s0 + $0x76c] sm:$0x1]
  %v502 = vld [vmem:[%s0 + $0x770] sm:$0xf]
  %v503 = vld [vmem:[%s0 + $0x774] sm:$0x1]
  %v504 = vld [vmem:[%s0 + $0x778] sm:$0xf]
  %v505 = vld [vmem:[%s0 + $0x77c] sm:$0x1]
  %v506 = vld [vmem:[%s0 + $0x780] sm:$0xf]
  %v507 = vld [vmem:[%s0 + $0x784] sm:$0x1]
  %v508 = vld [vmem:[%s0 + $0x788] sm:$0xf]
  %v509 = vld [vmem:[%s0 + $0x78c] sm:$0x1]
  %v510 = vld [vmem:[%s0 + $0x790] sm:$0xf]
  %v511 = vld [vmem:[%s0 + $0x794] sm:$0x1]
  %v512 = vld [vmem:[%s0 + $0x798] sm:$0xf]
  %v513 = vld [vmem:[%s0 + $0x79c] sm:$0x1]
  %v514 = vld [vmem:[%s0 + $0x7a0] sm:$0xf]
  %v515 = vld [vmem:[%s0 + $0x7a4] sm:$0x1]
  %v516 = vld [vmem:[%s0 + $0x7a8] sm:$0xf]
  %v517 = vld [vmem:[%s0 + $0x7ac] sm:$0x1]
  %v518 = vld [vmem:[%s0 + $0x7b0] sm:$0xf]
  %v519 = vld [vmem:[%s0 + $0x7b4] sm:$0x1]
  %v520 = vld [vmem:[%s0 + $0x7b8] sm:$0xf]
  %v521 = vld [vmem:[%s0 + $0x7bc] sm:$0x1]
  %v522 = vld [vmem:[%s0 + $0x7c0] sm:$0xf]
  %v523 = vld [vmem:[%s0 + $0x7c4] sm:$0x1]
  %v524 = vld [vmem:[%s0 + $0x7c8] sm:$0xf]
  %v525 = vld [vmem:[%s0 + $0x7cc] sm:$0x1]
  %v526 = vld [vmem:[%s0 + $0x7d0] sm:$0xf]
  %v527 = vld [vmem:[%s0 + $0x7d4] sm:$0x1]
  %v528 = vld [vmem:[%s0 + $0x7d8] sm:$0xf]
  %v529 = vld [vmem:[%s0 + $0x7dc] sm:$0x1]
  %v530 = vld [vmem:[%s0 + $0x7e0] sm:$0xf]
  %v531 = vld [vmem:[%s0 + $0x7e4] sm:$0x1]
  %v532 = vld [vmem:[%s0 + $0x7e8] sm:$0xf]
  %v533 = vld [vmem:[%s0 + $0x7ec] sm:$0x1]
  %v534 = vld [vmem:[%s0 + $0x7f0] sm:$0xf]
  %v535 = vld [vmem:[%s0 + $0x7f4] sm:$0x1]
  %v536 = vld [vmem:[%s0 + $0x7f8] sm:$0xf]
  %v537 = vld [vmem:[%s0 + $0x7fc] sm:$0x1]
  %v538 = vld [vmem:[%s0 + $0x800] sm:$0xf]
  %v539 = vld [vmem:[%s0 + $0x804] sm:$0x1]
  %v540 = vld [vmem:[%s0 + $0x808] sm:$0xf]
  %v541 = vld [vmem:[%s0 + $0x80c] sm:$0x1]
  %v542 = vld [vmem:[%s0 + $0x810] sm:$0xf]
  %v543 = vld [vmem:[%s0 + $0x814] sm:$0x1]
  %v544 = vld [vmem:[%s0 + $0x818] sm:$0xf]
  %v545 = vld [vmem:[%s0 + $0x81c] sm:$0x1]
  %v546 = vld [vmem:[%s0 + $0x820] sm:$0xf]
  %v547 = vld [vmem:[%s0 + $0x824] sm:$0x1]
  %v548 = vld [vmem:[%s0 + $0x828] sm:$0xf]
  %v549 = vld [vmem:[%s0 + $0x82c] sm:$0x1]
  %v550 = vld [vmem:[%s0 + $0x830] sm:$0xf]
  %v551 = vld [vmem:[%s0 + $0x834] sm:$0x1]
  %v552 = vld [vmem:[%s0 + $0x838] sm:$0xf]
  %v553 = vld [vmem:[%s0 + $0x83c] sm:$0x1]
  %v554 = vld [vmem:[%s0 + $0x840] sm:$0xf]
  %v555 = vld [vmem:[%s0 + $0x844] sm:$0x1]
  %v556 = vld [vmem:[%s0 + $0x848] sm:$0xf]
  %v557 = vld [vmem:[%s0 + $0x84c] sm:$0x1]
  %v558 = vld [vmem:[%s0 + $0x850] sm:$0xf]
  %v559 = vld [vmem:[%s0 + $0x854] sm:$0x1]
  %v560 = vld [vmem:[%s0 + $0x858] sm:$0xf]
  %v561 = vld [vmem:[%s0 + $0x85c] sm:$0x1]
  %v562 = vld [vmem:[%s0 + $0x860] sm:$0xf]
  %v563 = vld [vmem:[%s0 + $0x864] sm:$0x1]
  %v564 = vld [vmem:[%s0 + $0x868] sm:$0xf]
  %v565 = vld [vmem:[%s0 + $0x86c] sm:$0x1]
  %v566 = vld [vmem:[%s0 + $0x870] sm:$0xf]
  %v567 = vld [vmem:[%s0 + $0x874] sm:$0x1]
  %v568 = vld [vmem:[%s0 + $0x878] sm:$0xf]
  %v569 = vld [vmem:[%s0 + $0x87c] sm:$0x1]
  %v570 = vld [vmem:[%s0 + $0x880] sm:$0xf]
  %v571 = vld [vmem:[%s0 + $0x884] sm:$0x1]
  %v572 = vld [vmem:[%s0 + $0x888] sm:$0xf]
  %v573 = vld [vmem:[%s0 + $0x88c] sm:$0x1]
  %v574 = vld [vmem:[%s0 + $0x890] sm:$0xf]
  %v575 = vld [vmem:[%s0 + $0x894] sm:$0x1]
  %v576 = vld [vmem:[%s0 + $0x898] sm:$0xf]
  %v577 = vld [vmem:[%s0 + $0x89c] sm:$0x1]
  %v578 = vld [vmem:[%s0 + $0x8a0] sm:$0xf]
  %v579 = vld [vmem:[%s0 + $0x8a4] sm:$0x1]
  %v580 = vld [vmem:[%s0 + $0x8a8] sm:$0xf]
  %v581 = vld [vmem:[%s0 + $0x8ac] sm:$0x1]
  %v582 = vld [vmem:[%s0 + $0x8b0] sm:$0xf]
  %v583 = vld [vmem:[%s0 + $0x8b4] sm:$0x1]
  %v584 = vld [vmem:[%s0 + $0x8b8] sm:$0xf]
  %v585 = vld [vmem:[%s0 + $0x8bc] sm:$0x1]
  %v586 = vld [vmem:[%s0 + $0x8c0] sm:$0xf]
  %v587 = vld [vmem:[%s0 + $0x8c4] sm:$0x1]
  %v588 = vld [vmem:[%s0 + $0x8c8] sm:$0xf]
  %v589 = vld [vmem:[%s0 + $0x8cc] sm:$0x1]
  %v590 = vld [vmem:[%s0 + $0x8d0] sm:$0xf]
  %v591 = vld [vmem:[%s0 + $0x8d4] sm:$0x1]
  %v592 = vld [vmem:[%s0 + $0x8d8] sm:$0xf]
  %v593 = vld [vmem:[%s0 + $0x8dc] sm:$0x1]
  %v594 = vld [vmem:[%s0 + $0x8e0] sm:$0xf]
  %v595 = vld [vmem:[%s0 + $0x8e4] sm:$0x1]
  %v596 = vld [vmem:[%s0 + $0x8e8] sm:$0xf]
  %v597 = vld [vmem:[%s0 + $0x8ec] sm:$0x1]
  %v598 = vld [vmem:[%s0 + $0x8f0] sm:$0xf]
  %v599 = vld [vmem:[%s0 + $0x8f4] sm:$0x1]
  %v600 = vld [vmem:[%s0 + $0x8f8] sm:$0xf]
  %v601 = vld [vmem:[%s0 + $0x8fc] sm:$0x1]
  %v666 = vunpack.c.l.b16 %v44
  %v667 = vunpack.c.l.b16 %v46
  %v668 = vunpack.c.l.b16 %v48
  %v669 = vunpack.c.l.b16 %v50
  %v670 = vunpack.c.l.b16 %v52
  %v671 = vunpack.c.l.b16 %v54
  %v672 = vunpack.c.l.b16 %v56
  %v673 = vunpack.c.l.b16 %v58
  %v674 = vunpack.c.l.b16 %v116
  %v675 = vunpack.c.l.b16 %v118
  %v676 = vunpack.c.l.b16 %v120
  %v677 = vunpack.c.l.b16 %v122
  %v678 = vunpack.c.l.b16 %v124
  %v679 = vunpack.c.l.b16 %v126
  %v680 = vunpack.c.l.b16 %v128
  %v681 = vunpack.c.l.b16 %v130
  %v682 = vunpack.c.l.b16 %v188
  %v683 = vunpack.c.l.b16 %v190
  %v684 = vunpack.c.l.b16 %v192
  %v685 = vunpack.c.l.b16 %v194
  %v686 = vunpack.c.l.b16 %v196
  %v687 = vunpack.c.l.b16 %v198
  %v688 = vunpack.c.l.b16 %v200
  %v689 = vunpack.c.l.b16 %v202
  %v690 = vunpack.c.l.b16 %v260
  %v691 = vunpack.c.l.b16 %v262
  %v692 = vunpack.c.l.b16 %v264
  %v693 = vunpack.c.l.b16 %v266
  %v694 = vunpack.c.l.b16 %v268
  %v695 = vunpack.c.l.b16 %v270
  %v696 = vunpack.c.l.b16 %v272
  %v697 = vunpack.c.l.b16 %v274
  %v698 = vunpack.c.l.b16 %v332
  %v699 = vunpack.c.l.b16 %v334
  %v700 = vunpack.c.l.b16 %v336
  %v701 = vunpack.c.l.b16 %v338
  %v702 = vunpack.c.l.b16 %v340
  %v703 = vunpack.c.l.b16 %v342
  %v704 = vunpack.c.l.b16 %v344
  %v705 = vunpack.c.l.b16 %v346
  %v706 = vunpack.c.l.b16 %v404
  %v707 = vunpack.c.l.b16 %v406
  %v708 = vunpack.c.l.b16 %v408
  %v709 = vunpack.c.l.b16 %v410
  %v710 = vunpack.c.l.b16 %v412
  %v711 = vunpack.c.l.b16 %v414
  %v712 = vunpack.c.l.b16 %v416
  %v713 = vunpack.c.l.b16 %v418
  %v714 = vunpack.c.l.b16 %v476
  %v715 = vunpack.c.l.b16 %v478
  %v716 = vunpack.c.l.b16 %v480
  %v717 = vunpack.c.l.b16 %v482
  %v718 = vunpack.c.l.b16 %v484
  %v719 = vunpack.c.l.b16 %v486
  %v720 = vunpack.c.l.b16 %v488
  %v721 = vunpack.c.l.b16 %v490
  %v722 = vunpack.c.l.b16 %v548
  %v723 = vunpack.c.l.b16 %v550
  %v724 = vunpack.c.l.b16 %v552
  %v725 = vunpack.c.l.b16 %v554
  %v726 = vunpack.c.l.b16 %v556
  %v727 = vunpack.c.l.b16 %v558
  %v728 = vunpack.c.l.b16 %v560
  %v729 = vunpack.c.l.b16 %v562
  %v730 = vpack.c.b16 %v666, %v666
  %v731 = vpack.c.b16 %v667, %v667
  %v732 = vpack.c.b16 %v668, %v668
  %v733 = vpack.c.b16 %v669, %v669
  %v734 = vpack.c.b16 %v670, %v670
  %v735 = vpack.c.b16 %v671, %v671
  %v736 = vpack.c.b16 %v672, %v672
  %v737 = vpack.c.b16 %v673, %v673
  %v738 = vpack.c.b16 %v674, %v674
  %v739 = vpack.c.b16 %v675, %v675
  %v740 = vpack.c.b16 %v676, %v676
  %v741 = vpack.c.b16 %v677, %v677
  %v742 = vpack.c.b16 %v678, %v678
  %v743 = vpack.c.b16 %v679, %v679
  %v744 = vpack.c.b16 %v680, %v680
  %v745 = vpack.c.b16 %v681, %v681
  %v746 = vpack.c.b16 %v682, %v682
  %v747 = vpack.c.b16 %v683, %v683
  %v748 = vpack.c.b16 %v684, %v684
  %v749 = vpack.c.b16 %v685, %v685
  %v750 = vpack.c.b16 %v686, %v686
  %v751 = vpack.c.b16 %v687, %v687
  %v752 = vpack.c.b16 %v688, %v688
  %v753 = vpack.c.b16 %v689, %v689
  %v754 = vpack.c.b16 %v690, %v690
  %v755 = vpack.c.b16 %v691, %v691
  %v756 = vpack.c.b16 %v692, %v692
  %v757 = vpack.c.b16 %v693, %v693
  %v758 = vpack.c.b16 %v694, %v694
  %v759 = vpack.c.b16 %v695, %v695
  %v760 = vpack.c.b16 %v696, %v696
  %v761 = vpack.c.b16 %v697, %v697
  %v762 = vpack.c.b16 %v698, %v698
  %v763 = vpack.c.b16 %v699, %v699
  %v764 = vpack.c.b16 %v700, %v700
  %v765 = vpack.c.b16 %v701, %v701
  %v766 = vpack.c.b16 %v702, %v702
  %v767 = vpack.c.b16 %v703, %v703
  %v768 = vpack.c.b16 %v704, %v704
  %v769 = vpack.c.b16 %v705, %v705
  %v770 = vpack.c.b16 %v706, %v706
  %v771 = vpack.c.b16 %v707, %v707
  %v772 = vpack.c.b16 %v708, %v708
  %v773 = vpack.c.b16 %v709, %v709
  %v774 = vpack.c.b16 %v710, %v710
  %v775 = vpack.c.b16 %v711, %v711
  %v776 = vpack.c.b16 %v712, %v712
  %v777 = vpack.c.b16 %v713, %v713
  %v778 = vpack.c.b16 %v714, %v714
  %v779 = vpack.c.b16 %v715, %v715
  %v780 = vpack.c.b16 %v716, %v716
  %v781 = vpack.c.b16 %v717, %v717
  %v782 = vpack.c.b16 %v718, %v718
  %v783 = vpack.c.b16 %v719, %v719
  %v784 = vpack.c.b16 %v720, %v720
  %v785 = vpack.c.b16 %v721, %v721
  %v786 = vpack.c.b16 %v722, %v722
  %v787 = vpack.c.b16 %v723, %v723
  %v788 = vpack.c.b16 %v724, %v724
  %v789 = vpack.c.b16 %v725, %v725
  %v790 = vpack.c.b16 %v726, %v726
  %v791 = vpack.c.b16 %v727, %v727
  %v792 = vpack.c.b16 %v728, %v728
  %v793 = vpack.c.b16 %v729, %v729
  %794 = vrot.lane.b32.xlu0 %v730, 64
  %v795 = vpop.permute.xlu0 %794
  %796 = vrot.lane.b32.xlu0 %v731, 64
  %v797 = vpop.permute.xlu0 %796
  %798 = vrot.lane.b32.xlu0 %v732, 64
  %v799 = vpop.permute.xlu0 %798
  %800 = vrot.lane.b32.xlu0 %v733, 64
  %v801 = vpop.permute.xlu0 %800
  %802 = vrot.lane.b32.xlu0 %v734, 64
  %v803 = vpop.permute.xlu0 %802
  %804 = vrot.lane.b32.xlu0 %v735, 64
  %v805 = vpop.permute.xlu0 %804
  %806 = vrot.lane.b32.xlu0 %v736, 64
  %v807 = vpop.permute.xlu0 %806
  %808 = vrot.lane.b32.xlu0 %v737, 64
  %v809 = vpop.permute.xlu0 %808
  %810 = vrot.lane.b32.xlu0 %v738, 64
  %v811 = vpop.permute.xlu0 %810
  %812 = vrot.lane.b32.xlu0 %v739, 64
  %v813 = vpop.permute.xlu0 %812
  %814 = vrot.lane.b32.xlu0 %v740, 64
  %v815 = vpop.permute.xlu0 %814
  %816 = vrot.lane.b32.xlu0 %v741, 64
  %v817 = vpop.permute.xlu0 %816
  %818 = vrot.lane.b32.xlu0 %v742, 64
  %v819 = vpop.permute.xlu0 %818
  %820 = vrot.lane.b32.xlu0 %v743, 64
  %v821 = vpop.permute.xlu0 %820
  %822 = vrot.lane.b32.xlu0 %v744, 64
  %v823 = vpop.permute.xlu0 %822
  %824 = vrot.lane.b32.xlu0 %v745, 64
  %v825 = vpop.permute.xlu0 %824
  %826 = vrot.lane.b32.xlu0 %v746, 64
  %v827 = vpop.permute.xlu0 %826
  %828 = vrot.lane.b32.xlu0 %v747, 64
  %v829 = vpop.permute.xlu0 %828
  %830 = vrot.lane.b32.xlu0 %v748, 64
  %v831 = vpop.permute.xlu0 %830
  %832 = vrot.lane.b32.xlu0 %v749, 64
  %v833 = vpop.permute.xlu0 %832
  %834 = vrot.lane.b32.xlu0 %v750, 64
  %v835 = vpop.permute.xlu0 %834
  %836 = vrot.lane.b32.xlu0 %v751, 64
  %v837 = vpop.permute.xlu0 %836
  %838 = vrot.lane.b32.xlu0 %v752, 64
  %v839 = vpop.permute.xlu0 %838
  %840 = vrot.lane.b32.xlu0 %v753, 64
  %v841 = vpop.permute.xlu0 %840
  %842 = vrot.lane.b32.xlu0 %v754, 64
  %v843 = vpop.permute.xlu0 %842
  %844 = vrot.lane.b32.xlu0 %v755, 64
  %v845 = vpop.permute.xlu0 %844
  %846 = vrot.lane.b32.xlu0 %v756, 64
  %v847 = vpop.permute.xlu0 %846
  %848 = vrot.lane.b32.xlu0 %v757, 64
  %v849 = vpop.permute.xlu0 %848
  %850 = vrot.lane.b32.xlu0 %v758, 64
  %v851 = vpop.permute.xlu0 %850
  %852 = vrot.lane.b32.xlu0 %v759, 64
  %v853 = vpop.permute.xlu0 %852
  %854 = vrot.lane.b32.xlu0 %v760, 64
  %v855 = vpop.permute.xlu0 %854
  %856 = vrot.lane.b32.xlu0 %v761, 64
  %v857 = vpop.permute.xlu0 %856
  %858 = vrot.lane.b32.xlu0 %v762, 64
  %v859 = vpop.permute.xlu0 %858
  %860 = vrot.lane.b32.xlu0 %v763, 64
  %v861 = vpop.permute.xlu0 %860
  %862 = vrot.lane.b32.xlu0 %v764, 64
  %v863 = vpop.permute.xlu0 %862
  %864 = vrot.lane.b32.xlu0 %v765, 64
  %v865 = vpop.permute.xlu0 %864
  %866 = vrot.lane.b32.xlu0 %v766, 64
  %v867 = vpop.permute.xlu0 %866
  %868 = vrot.lane.b32.xlu0 %v767, 64
  %v869 = vpop.permute.xlu0 %868
  %870 = vrot.lane.b32.xlu0 %v768, 64
  %v871 = vpop.permute.xlu0 %870
  %872 = vrot.lane.b32.xlu0 %v769, 64
  %v873 = vpop.permute.xlu0 %872
  %874 = vrot.lane.b32.xlu0 %v770, 64
  %v875 = vpop.permute.xlu0 %874
  %876 = vrot.lane.b32.xlu0 %v771, 64
  %v877 = vpop.permute.xlu0 %876
  %878 = vrot.lane.b32.xlu0 %v772, 64
  %v879 = vpop.permute.xlu0 %878
  %880 = vrot.lane.b32.xlu0 %v773, 64
  %v881 = vpop.permute.xlu0 %880
  %882 = vrot.lane.b32.xlu0 %v774, 64
  %v883 = vpop.permute.xlu0 %882
  %884 = vrot.lane.b32.xlu0 %v775, 64
  %v885 = vpop.permute.xlu0 %884
  %886 = vrot.lane.b32.xlu0 %v776, 64
  %v887 = vpop.permute.xlu0 %886
  %888 = vrot.lane.b32.xlu0 %v777, 64
  %v889 = vpop.permute.xlu0 %888
  %890 = vrot.lane.b32.xlu0 %v778, 64
  %v891 = vpop.permute.xlu0 %890
  %892 = vrot.lane.b32.xlu0 %v779, 64
  %v893 = vpop.permute.xlu0 %892
  %894 = vrot.lane.b32.xlu0 %v780, 64
  %v895 = vpop.permute.xlu0 %894
  %896 = vrot.lane.b32.xlu0 %v781, 64
  %v897 = vpop.permute.xlu0 %896
  %898 = vrot.lane.b32.xlu0 %v782, 64
  %v899 = vpop.permute.xlu0 %898
  %900 = vrot.lane.b32.xlu0 %v783, 64
  %v901 = vpop.permute.xlu0 %900
  %902 = vrot.lane.b32.xlu0 %v784, 64
  %v903 = vpop.permute.xlu0 %902
  %904 = vrot.lane.b32.xlu0 %v785, 64
  %v905 = vpop.permute.xlu0 %904
  %906 = vrot.lane.b32.xlu0 %v786, 64
  %v907 = vpop.permute.xlu0 %906
  %908 = vrot.lane.b32.xlu0 %v787, 64
  %v909 = vpop.permute.xlu0 %908
  %910 = vrot.lane.b32.xlu0 %v788, 64
  %v911 = vpop.permute.xlu0 %910
  %912 = vrot.lane.b32.xlu0 %v789, 64
  %v913 = vpop.permute.xlu0 %912
  %914 = vrot.lane.b32.xlu0 %v790, 64
  %v915 = vpop.permute.xlu0 %914
  %916 = vrot.lane.b32.xlu0 %v791, 64
  %v917 = vpop.permute.xlu0 %916
  %918 = vrot.lane.b32.xlu0 %v792, 64
  %v919 = vpop.permute.xlu0 %918
  %920 = vrot.lane.b32.xlu0 %v793, 64
  %v921 = vpop.permute.xlu0 %920
  %v1050 = vunpack.c.l.b16 %v26
  %v1051 = vunpack.c.l.b16 %v27
  %v1052 = vunpack.c.l.b16 %v28
  %v1053 = vunpack.c.l.b16 %v29
  %v1054 = vunpack.c.l.b16 %v30
  %v1055 = vunpack.c.l.b16 %v31
  %v1056 = vunpack.c.l.b16 %v32
  %v1057 = vunpack.c.l.b16 %v33
  %v1058 = vunpack.c.l.b16 %v34
  %v1059 = vunpack.c.l.b16 %v35
  %v1060 = vunpack.c.l.b16 %v36
  %v1061 = vunpack.c.l.b16 %v37
  %v1062 = vunpack.c.l.b16 %v38
  %v1063 = vunpack.c.l.b16 %v39
  %v1064 = vunpack.c.l.b16 %v40
  %v1065 = vunpack.c.l.b16 %v41
  %v1066 = vunpack.c.l.b16 %v98
  %v1067 = vunpack.c.l.b16 %v99
  %v1068 = vunpack.c.l.b16 %v100
  %v1069 = vunpack.c.l.b16 %v101
  %v1070 = vunpack.c.l.b16 %v102
  %v1071 = vunpack.c.l.b16 %v103
  %v1072 = vunpack.c.l.b16 %v104
  %v1073 = vunpack.c.l.b16 %v105
  %v1074 = vunpack.c.l.b16 %v106
  %v1075 = vunpack.c.l.b16 %v107
  %v1076 = vunpack.c.l.b16 %v108
  %v1077 = vunpack.c.l.b16 %v109
  %v1078 = vunpack.c.l.b16 %v110
  %v1079 = vunpack.c.l.b16 %v111
  %v1080 = vunpack.c.l.b16 %v112
  %v1081 = vunpack.c.l.b16 %v113
  %v1082 = vunpack.c.l.b16 %v170
  %v1083 = vunpack.c.l.b16 %v171
  %v1084 = vunpack.c.l.b16 %v172
  %v1085 = vunpack.c.l.b16 %v173
  %v1086 = vunpack.c.l.b16 %v174
  %v1087 = vunpack.c.l.b16 %v175
  %v1088 = vunpack.c.l.b16 %v176
  %v1089 = vunpack.c.l.b16 %v177
  %v1090 = vunpack.c.l.b16 %v178
  %v1091 = vunpack.c.l.b16 %v179
  %v1092 = vunpack.c.l.b16 %v180
  %v1093 = vunpack.c.l.b16 %v181
  %v1094 = vunpack.c.l.b16 %v182
  %v1095 = vunpack.c.l.b16 %v183
  %v1096 = vunpack.c.l.b16 %v184
  %v1097 = vunpack.c.l.b16 %v185
  %v1098 = vunpack.c.l.b16 %v242
  %v1099 = vunpack.c.l.b16 %v243
  %v1100 = vunpack.c.l.b16 %v244
  %v1101 = vunpack.c.l.b16 %v245
  %v1102 = vunpack.c.l.b16 %v246
  %v1103 = vunpack.c.l.b16 %v247
  %v1104 = vunpack.c.l.b16 %v248
  %v1105 = vunpack.c.l.b16 %v249
  %v1106 = vunpack.c.l.b16 %v250
  %v1107 = vunpack.c.l.b16 %v251
  %v1108 = vunpack.c.l.b16 %v252
  %v1109 = vunpack.c.l.b16 %v253
  %v1110 = vunpack.c.l.b16 %v254
  %v1111 = vunpack.c.l.b16 %v255
  %v1112 = vunpack.c.l.b16 %v256
  %v1113 = vunpack.c.l.b16 %v257
  %v1114 = vunpack.c.l.b16 %v314
  %v1115 = vunpack.c.l.b16 %v315
  %v1116 = vunpack.c.l.b16 %v316
  %v1117 = vunpack.c.l.b16 %v317
  %v1118 = vunpack.c.l.b16 %v318
  %v1119 = vunpack.c.l.b16 %v319
  %v1120 = vunpack.c.l.b16 %v320
  %v1121 = vunpack.c.l.b16 %v321
  %v1122 = vunpack.c.l.b16 %v322
  %v1123 = vunpack.c.l.b16 %v323
  %v1124 = vunpack.c.l.b16 %v324
  %v1125 = vunpack.c.l.b16 %v325
  %v1126 = vunpack.c.l.b16 %v326
  %v1127 = vunpack.c.l.b16 %v327
  %v1128 = vunpack.c.l.b16 %v328
  %v1129 = vunpack.c.l.b16 %v329
  %v1130 = vunpack.c.l.b16 %v386
  %v1131 = vunpack.c.l.b16 %v387
  %v1132 = vunpack.c.l.b16 %v388
  %v1133 = vunpack.c.l.b16 %v389
  %v1134 = vunpack.c.l.b16 %v390
  %v1135 = vunpack.c.l.b16 %v391
  %v1136 = vunpack.c.l.b16 %v392
  %v1137 = vunpack.c.l.b16 %v393
  %v1138 = vunpack.c.l.b16 %v394
  %v1139 = vunpack.c.l.b16 %v395
  %v1140 = vunpack.c.l.b16 %v396
  %v1141 = vunpack.c.l.b16 %v397
  %v1142 = vunpack.c.l.b16 %v398
  %v1143 = vunpack.c.l.b16 %v399
  %v1144 = vunpack.c.l.b16 %v400
  %v1145 = vunpack.c.l.b16 %v401
  %v1146 = vunpack.c.l.b16 %v458
  %v1147 = vunpack.c.l.b16 %v459
  %v1148 = vunpack.c.l.b16 %v460
  %v1149 = vunpack.c.l.b16 %v461
  %v1150 = vunpack.c.l.b16 %v462
  %v1151 = vunpack.c.l.b16 %v463
  %v1152 = vunpack.c.l.b16 %v464
  %v1153 = vunpack.c.l.b16 %v465
  %v1154 = vunpack.c.l.b16 %v466
  %v1155 = vunpack.c.l.b16 %v467
  %v1156 = vunpack.c.l.b16 %v468
  %v1157 = vunpack.c.l.b16 %v469
  %v1158 = vunpack.c.l.b16 %v470
  %v1159 = vunpack.c.l.b16 %v471
  %v1160 = vunpack.c.l.b16 %v472
  %v1161 = vunpack.c.l.b16 %v473
  %v1162 = vunpack.c.l.b16 %v530
  %v1163 = vunpack.c.l.b16 %v531
  %v1164 = vunpack.c.l.b16 %v532
  %v1165 = vunpack.c.l.b16 %v533
  %v1166 = vunpack.c.l.b16 %v534
  %v1167 = vunpack.c.l.b16 %v535
  %v1168 = vunpack.c.l.b16 %v536
  %v1169 = vunpack.c.l.b16 %v537
  %v1170 = vunpack.c.l.b16 %v538
  %v1171 = vunpack.c.l.b16 %v539
  %v1172 = vunpack.c.l.b16 %v540
  %v1173 = vunpack.c.l.b16 %v541
  %v1174 = vunpack.c.l.b16 %v542
  %v1175 = vunpack.c.l.b16 %v543
  %v1176 = vunpack.c.l.b16 %v544
  %v1177 = vunpack.c.l.b16 %v545
  %v1178 = vpack.c.b16 %v1051, %v1050
  %v1179 = vpack.c.b16 %v1053, %v1052
  %v1180 = vpack.c.b16 %v1055, %v1054
  %v1181 = vpack.c.b16 %v1057, %v1056
  %v1182 = vpack.c.b16 %v1059, %v1058
  %v1183 = vpack.c.b16 %v1061, %v1060
  %v1184 = vpack.c.b16 %v1063, %v1062
  %v1185 = vpack.c.b16 %v1065, %v1064
  %v1186 = vpack.c.b16 %v1067, %v1066
  %v1187 = vpack.c.b16 %v1069, %v1068
  %v1188 = vpack.c.b16 %v1071, %v1070
  %v1189 = vpack.c.b16 %v1073, %v1072
  %v1190 = vpack.c.b16 %v1075, %v1074
  %v1191 = vpack.c.b16 %v1077, %v1076
  %v1192 = vpack.c.b16 %v1079, %v1078
  %v1193 = vpack.c.b16 %v1081, %v1080
  %v1194 = vpack.c.b16 %v1083, %v1082
  %v1195 = vpack.c.b16 %v1085, %v1084
  %v1196 = vpack.c.b16 %v1087, %v1086
  %v1197 = vpack.c.b16 %v1089, %v1088
  %v1198 = vpack.c.b16 %v1091, %v1090
  %v1199 = vpack.c.b16 %v1093, %v1092
  %v1200 = vpack.c.b16 %v1095, %v1094
  %v1201 = vpack.c.b16 %v1097, %v1096
  %v1202 = vpack.c.b16 %v1099, %v1098
  %v1203 = vpack.c.b16 %v1101, %v1100
  %v1204 = vpack.c.b16 %v1103, %v1102
  %v1205 = vpack.c.b16 %v1105, %v1104
  %v1206 = vpack.c.b16 %v1107, %v1106
  %v1207 = vpack.c.b16 %v1109, %v1108
  %v1208 = vpack.c.b16 %v1111, %v1110
  %v1209 = vpack.c.b16 %v1113, %v1112
  %v1210 = vpack.c.b16 %v1115, %v1114
  %v1211 = vpack.c.b16 %v1117, %v1116
  %v1212 = vpack.c.b16 %v1119, %v1118
  %v1213 = vpack.c.b16 %v1121, %v1120
  %v1214 = vpack.c.b16 %v1123, %v1122
  %v1215 = vpack.c.b16 %v1125, %v1124
  %v1216 = vpack.c.b16 %v1127, %v1126
  %v1217 = vpack.c.b16 %v1129, %v1128
  %v1218 = vpack.c.b16 %v1131, %v1130
  %v1219 = vpack.c.b16 %v1133, %v1132
  %v1220 = vpack.c.b16 %v1135, %v1134
  %v1221 = vpack.c.b16 %v1137, %v1136
  %v1222 = vpack.c.b16 %v1139, %v1138
  %v1223 = vpack.c.b16 %v1141, %v1140
  %v1224 = vpack.c.b16 %v1143, %v1142
  %v1225 = vpack.c.b16 %v1145, %v1144
  %v1226 = vpack.c.b16 %v1147, %v1146
  %v1227 = vpack.c.b16 %v1149, %v1148
  %v1228 = vpack.c.b16 %v1151, %v1150
  %v1229 = vpack.c.b16 %v1153, %v1152
  %v1230 = vpack.c.b16 %v1155, %v1154
  %v1231 = vpack.c.b16 %v1157, %v1156
  %v1232 = vpack.c.b16 %v1159, %v1158
  %v1233 = vpack.c.b16 %v1161, %v1160
  %v1234 = vpack.c.b16 %v1163, %v1162
  %v1235 = vpack.c.b16 %v1165, %v1164
  %v1236 = vpack.c.b16 %v1167, %v1166
  %v1237 = vpack.c.b16 %v1169, %v1168
  %v1238 = vpack.c.b16 %v1171, %v1170
  %v1239 = vpack.c.b16 %v1173, %v1172
  %v1240 = vpack.c.b16 %v1175, %v1174
  %v1241 = vpack.c.b16 %v1177, %v1176
  %v1243 = vshrl.u32 %v1178, 16
  %v1245 = vshll.u32 %v1178, 16
  %v1247 = vrot.slane %v1245, 1
  %v1248 = vor.u32 %v1243, %v1247
  %v1250 = vshrl.u32 %v1179, 16
  %v1252 = vshll.u32 %v1179, 16
  %v1254 = vrot.slane %v1252, 1
  %v1255 = vor.u32 %v1250, %v1254
  %v1257 = vshrl.u32 %v1180, 16
  %v1259 = vshll.u32 %v1180, 16
  %v1261 = vrot.slane %v1259, 1
  %v1262 = vor.u32 %v1257, %v1261
  %v1264 = vshrl.u32 %v1181, 16
  %v1266 = vshll.u32 %v1181, 16
  %v1268 = vrot.slane %v1266, 1
  %v1269 = vor.u32 %v1264, %v1268
  %v1271 = vshrl.u32 %v1182, 16
  %v1273 = vshll.u32 %v1182, 16
  %v1275 = vrot.slane %v1273, 1
  %v1276 = vor.u32 %v1271, %v1275
  %v1278 = vshrl.u32 %v1183, 16
  %v1280 = vshll.u32 %v1183, 16
  %v1282 = vrot.slane %v1280, 1
  %v1283 = vor.u32 %v1278, %v1282
  %v1285 = vshrl.u32 %v1184, 16
  %v1287 = vshll.u32 %v1184, 16
  %v1289 = vrot.slane %v1287, 1
  %v1290 = vor.u32 %v1285, %v1289
  %v1292 = vshrl.u32 %v1185, 16
  %v1294 = vshll.u32 %v1185, 16
  %v1296 = vrot.slane %v1294, 1
  %v1297 = vor.u32 %v1292, %v1296
  %v1299 = vshrl.u32 %v1186, 16
  %v1301 = vshll.u32 %v1186, 16
  %v1303 = vrot.slane %v1301, 1
  %v1304 = vor.u32 %v1299, %v1303
  %v1306 = vshrl.u32 %v1187, 16
  %v1308 = vshll.u32 %v1187, 16
  %v1310 = vrot.slane %v1308, 1
  %v1311 = vor.u32 %v1306, %v1310
  %v1313 = vshrl.u32 %v1188, 16
  %v1315 = vshll.u32 %v1188, 16
  %v1317 = vrot.slane %v1315, 1
  %v1318 = vor.u32 %v1313, %v1317
  %v1320 = vshrl.u32 %v1189, 16
  %v1322 = vshll.u32 %v1189, 16
  %v1324 = vrot.slane %v1322, 1
  %v1325 = vor.u32 %v1320, %v1324
  %v1327 = vshrl.u32 %v1190, 16
  %v1329 = vshll.u32 %v1190, 16
  %v1331 = vrot.slane %v1329, 1
  %v1332 = vor.u32 %v1327, %v1331
  %v1334 = vshrl.u32 %v1191, 16
  %v1336 = vshll.u32 %v1191, 16
  %v1338 = vrot.slane %v1336, 1
  %v1339 = vor.u32 %v1334, %v1338
  %v1341 = vshrl.u32 %v1192, 16
  %v1343 = vshll.u32 %v1192, 16
  %v1345 = vrot.slane %v1343, 1
  %v1346 = vor.u32 %v1341, %v1345
  %v1348 = vshrl.u32 %v1193, 16
  %v1350 = vshll.u32 %v1193, 16
  %v1352 = vrot.slane %v1350, 1
  %v1353 = vor.u32 %v1348, %v1352
  %v1355 = vshrl.u32 %v1194, 16
  %v1357 = vshll.u32 %v1194, 16
  %v1359 = vrot.slane %v1357, 1
  %v1360 = vor.u32 %v1355, %v1359
  %v1362 = vshrl.u32 %v1195, 16
  %v1364 = vshll.u32 %v1195, 16
  %v1366 = vrot.slane %v1364, 1
  %v1367 = vor.u32 %v1362, %v1366
  %v1369 = vshrl.u32 %v1196, 16
  %v1371 = vshll.u32 %v1196, 16
  %v1373 = vrot.slane %v1371, 1
  %v1374 = vor.u32 %v1369, %v1373
  %v1376 = vshrl.u32 %v1197, 16
  %v1378 = vshll.u32 %v1197, 16
  %v1380 = vrot.slane %v1378, 1
  %v1381 = vor.u32 %v1376, %v1380
  %v1383 = vshrl.u32 %v1198, 16
  %v1385 = vshll.u32 %v1198, 16
  %v1387 = vrot.slane %v1385, 1
  %v1388 = vor.u32 %v1383, %v1387
  %v1390 = vshrl.u32 %v1199, 16
  %v1392 = vshll.u32 %v1199, 16
  %v1394 = vrot.slane %v1392, 1
  %v1395 = vor.u32 %v1390, %v1394
  %v1397 = vshrl.u32 %v1200, 16
  %v1399 = vshll.u32 %v1200, 16
  %v1401 = vrot.slane %v1399, 1
  %v1402 = vor.u32 %v1397, %v1401
  %v1404 = vshrl.u32 %v1201, 16
  %v1406 = vshll.u32 %v1201, 16
  %v1408 = vrot.slane %v1406, 1
  %v1409 = vor.u32 %v1404, %v1408
  %v1411 = vshrl.u32 %v1202, 16
  %v1413 = vshll.u32 %v1202, 16
  %v1415 = vrot.slane %v1413, 1
  %v1416 = vor.u32 %v1411, %v1415
  %v1418 = vshrl.u32 %v1203, 16
  %v1420 = vshll.u32 %v1203, 16
  %v1422 = vrot.slane %v1420, 1
  %v1423 = vor.u32 %v1418, %v1422
  %v1425 = vshrl.u32 %v1204, 16
  %v1427 = vshll.u32 %v1204, 16
  %v1429 = vrot.slane %v1427, 1
  %v1430 = vor.u32 %v1425, %v1429
  %v1432 = vshrl.u32 %v1205, 16
  %v1434 = vshll.u32 %v1205, 16
  %v1436 = vrot.slane %v1434, 1
  %v1437 = vor.u32 %v1432, %v1436
  %v1439 = vshrl.u32 %v1206, 16
  %v1441 = vshll.u32 %v1206, 16
  %v1443 = vrot.slane %v1441, 1
  %v1444 = vor.u32 %v1439, %v1443
  %v1446 = vshrl.u32 %v1207, 16
  %v1448 = vshll.u32 %v1207, 16
  %v1450 = vrot.slane %v1448, 1
  %v1451 = vor.u32 %v1446, %v1450
  %v1453 = vshrl.u32 %v1208, 16
  %v1455 = vshll.u32 %v1208, 16
  %v1457 = vrot.slane %v1455, 1
  %v1458 = vor.u32 %v1453, %v1457
  %v1460 = vshrl.u32 %v1209, 16
  %v1462 = vshll.u32 %v1209, 16
  %v1464 = vrot.slane %v1462, 1
  %v1465 = vor.u32 %v1460, %v1464
  %v1467 = vshrl.u32 %v1210, 16
  %v1469 = vshll.u32 %v1210, 16
  %v1471 = vrot.slane %v1469, 1
  %v1472 = vor.u32 %v1467, %v1471
  %v1474 = vshrl.u32 %v1211, 16
  %v1476 = vshll.u32 %v1211, 16
  %v1478 = vrot.slane %v1476, 1
  %v1479 = vor.u32 %v1474, %v1478
  %v1481 = vshrl.u32 %v1212, 16
  %v1483 = vshll.u32 %v1212, 16
  %v1485 = vrot.slane %v1483, 1
  %v1486 = vor.u32 %v1481, %v1485
  %v1488 = vshrl.u32 %v1213, 16
  %v1490 = vshll.u32 %v1213, 16
  %v1492 = vrot.slane %v1490, 1
  %v1493 = vor.u32 %v1488, %v1492
  %v1495 = vshrl.u32 %v1214, 16
  %v1497 = vshll.u32 %v1214, 16
  %v1499 = vrot.slane %v1497, 1
  %v1500 = vor.u32 %v1495, %v1499
  %v1502 = vshrl.u32 %v1215, 16
  %v1504 = vshll.u32 %v1215, 16
  %v1506 = vrot.slane %v1504, 1
  %v1507 = vor.u32 %v1502, %v1506
  %v1509 = vshrl.u32 %v1216, 16
  %v1511 = vshll.u32 %v1216, 16
  %v1513 = vrot.slane %v1511, 1
  %v1514 = vor.u32 %v1509, %v1513
  %v1516 = vshrl.u32 %v1217, 16
  %v1518 = vshll.u32 %v1217, 16
  %v1520 = vrot.slane %v1518, 1
  %v1521 = vor.u32 %v1516, %v1520
  %v1523 = vshrl.u32 %v1218, 16
  %v1525 = vshll.u32 %v1218, 16
  %v1527 = vrot.slane %v1525, 1
  %v1528 = vor.u32 %v1523, %v1527
  %v1530 = vshrl.u32 %v1219, 16
  %v1532 = vshll.u32 %v1219, 16
  %v1534 = vrot.slane %v1532, 1
  %v1535 = vor.u32 %v1530, %v1534
  %v1537 = vshrl.u32 %v1220, 16
  %v1539 = vshll.u32 %v1220, 16
  %v1541 = vrot.slane %v1539, 1
  %v1542 = vor.u32 %v1537, %v1541
  %v1544 = vshrl.u32 %v1221, 16
  %v1546 = vshll.u32 %v1221, 16
  %v1548 = vrot.slane %v1546, 1
  %v1549 = vor.u32 %v1544, %v1548
  %v1551 = vshrl.u32 %v1222, 16
  %v1553 = vshll.u32 %v1222, 16
  %v1555 = vrot.slane %v1553, 1
  %v1556 = vor.u32 %v1551, %v1555
  %v1558 = vshrl.u32 %v1223, 16
  %v1560 = vshll.u32 %v1223, 16
  %v1562 = vrot.slane %v1560, 1
  %v1563 = vor.u32 %v1558, %v1562
  %v1565 = vshrl.u32 %v1224, 16
  %v1567 = vshll.u32 %v1224, 16
  %v1569 = vrot.slane %v1567, 1
  %v1570 = vor.u32 %v1565, %v1569
  %v1572 = vshrl.u32 %v1225, 16
  %v1574 = vshll.u32 %v1225, 16
  %v1576 = vrot.slane %v1574, 1
  %v1577 = vor.u32 %v1572, %v1576
  %v1579 = vshrl.u32 %v1226, 16
  %v1581 = vshll.u32 %v1226, 16
  %v1583 = vrot.slane %v1581, 1
  %v1584 = vor.u32 %v1579, %v1583
  %v1586 = vshrl.u32 %v1227, 16
  %v1588 = vshll.u32 %v1227, 16
  %v1590 = vrot.slane %v1588, 1
  %v1591 = vor.u32 %v1586, %v1590
  %v1593 = vshrl.u32 %v1228, 16
  %v1595 = vshll.u32 %v1228, 16
  %v1597 = vrot.slane %v1595, 1
  %v1598 = vor.u32 %v1593, %v1597
  %v1600 = vshrl.u32 %v1229, 16
  %v1602 = vshll.u32 %v1229, 16
  %v1604 = vrot.slane %v1602, 1
  %v1605 = vor.u32 %v1600, %v1604
  %v1607 = vshrl.u32 %v1230, 16
  %v1609 = vshll.u32 %v1230, 16
  %v1611 = vrot.slane %v1609, 1
  %v1612 = vor.u32 %v1607, %v1611
  %v1614 = vshrl.u32 %v1231, 16
  %v1616 = vshll.u32 %v1231, 16
  %v1618 = vrot.slane %v1616, 1
  %v1619 = vor.u32 %v1614, %v1618
  %v1621 = vshrl.u32 %v1232, 16
  %v1623 = vshll.u32 %v1232, 16
  %v1625 = vrot.slane %v1623, 1
  %v1626 = vor.u32 %v1621, %v1625
  %v1628 = vshrl.u32 %v1233, 16
  %v1630 = vshll.u32 %v1233, 16
  %v1632 = vrot.slane %v1630, 1
  %v1633 = vor.u32 %v1628, %v1632
  %v1635 = vshrl.u32 %v1234, 16
  %v1637 = vshll.u32 %v1234, 16
  %v1639 = vrot.slane %v1637, 1
  %v1640 = vor.u32 %v1635, %v1639
  %v1642 = vshrl.u32 %v1235, 16
  %v1644 = vshll.u32 %v1235, 16
  %v1646 = vrot.slane %v1644, 1
  %v1647 = vor.u32 %v1642, %v1646
  %v1649 = vshrl.u32 %v1236, 16
  %v1651 = vshll.u32 %v1236, 16
  %v1653 = vrot.slane %v1651, 1
  %v1654 = vor.u32 %v1649, %v1653
  %v1656 = vshrl.u32 %v1237, 16
  %v1658 = vshll.u32 %v1237, 16
  %v1660 = vrot.slane %v1658, 1
  %v1661 = vor.u32 %v1656, %v1660
  %v1663 = vshrl.u32 %v1238, 16
  %v1665 = vshll.u32 %v1238, 16
  %v1667 = vrot.slane %v1665, 1
  %v1668 = vor.u32 %v1663, %v1667
  %v1670 = vshrl.u32 %v1239, 16
  %v1672 = vshll.u32 %v1239, 16
  %v1674 = vrot.slane %v1672, 1
  %v1675 = vor.u32 %v1670, %v1674
  %v1677 = vshrl.u32 %v1240, 16
  %v1679 = vshll.u32 %v1240, 16
  %v1681 = vrot.slane %v1679, 1
  %v1682 = vor.u32 %v1677, %v1681
  %v1684 = vshrl.u32 %v1241, 16
  %v1686 = vshll.u32 %v1241, 16
  %v1688 = vrot.slane %v1686, 1
  %v1689 = vor.u32 %v1684, %v1688
  %v1754 = vunpack.c.l.b16 %v45
  %v1755 = vunpack.c.l.b16 %v47
  %v1756 = vunpack.c.l.b16 %v49
  %v1757 = vunpack.c.l.b16 %v51
  %v1758 = vunpack.c.l.b16 %v53
  %v1759 = vunpack.c.l.b16 %v55
  %v1760 = vunpack.c.l.b16 %v57
  %v1761 = vunpack.c.l.b16 %v59
  %v1762 = vunpack.c.l.b16 %v117
  %v1763 = vunpack.c.l.b16 %v119
  %v1764 = vunpack.c.l.b16 %v121
  %v1765 = vunpack.c.l.b16 %v123
  %v1766 = vunpack.c.l.b16 %v125
  %v1767 = vunpack.c.l.b16 %v127
  %v1768 = vunpack.c.l.b16 %v129
  %v1769 = vunpack.c.l.b16 %v131
  %v1770 = vunpack.c.l.b16 %v189
  %v1771 = vunpack.c.l.b16 %v191
  %v1772 = vunpack.c.l.b16 %v193
  %v1773 = vunpack.c.l.b16 %v195
  %v1774 = vunpack.c.l.b16 %v197
  %v1775 = vunpack.c.l.b16 %v199
  %v1776 = vunpack.c.l.b16 %v201
  %v1777 = vunpack.c.l.b16 %v203
  %v1778 = vunpack.c.l.b16 %v261
  %v1779 = vunpack.c.l.b16 %v263
  %v1780 = vunpack.c.l.b16 %v265
  %v1781 = vunpack.c.l.b16 %v267
  %v1782 = vunpack.c.l.b16 %v269
  %v1783 = vunpack.c.l.b16 %v271
  %v1784 = vunpack.c.l.b16 %v273
  %v1785 = vunpack.c.l.b16 %v275
  %v1786 = vunpack.c.l.b16 %v333
  %v1787 = vunpack.c.l.b16 %v335
  %v1788 = vunpack.c.l.b16 %v337
  %v1789 = vunpack.c.l.b16 %v339
  %v1790 = vunpack.c.l.b16 %v341
  %v1791 = vunpack.c.l.b16 %v343
  %v1792 = vunpack.c.l.b16 %v345
  %v1793 = vunpack.c.l.b16 %v347
  %v1794 = vunpack.c.l.b16 %v405
  %v1795 = vunpack.c.l.b16 %v407
  %v1796 = vunpack.c.l.b16 %v409
  %v1797 = vunpack.c.l.b16 %v411
  %v1798 = vunpack.c.l.b16 %v413
  %v1799 = vunpack.c.l.b16 %v415
  %v1800 = vunpack.c.l.b16 %v417
  %v1801 = vunpack.c.l.b16 %v419
  %v1802 = vunpack.c.l.b16 %v477
  %v1803 = vunpack.c.l.b16 %v479
  %v1804 = vunpack.c.l.b16 %v481
  %v1805 = vunpack.c.l.b16 %v483
  %v1806 = vunpack.c.l.b16 %v485
  %v1807 = vunpack.c.l.b16 %v487
  %v1808 = vunpack.c.l.b16 %v489
  %v1809 = vunpack.c.l.b16 %v491
  %v1810 = vunpack.c.l.b16 %v549
  %v1811 = vunpack.c.l.b16 %v551
  %v1812 = vunpack.c.l.b16 %v553
  %v1813 = vunpack.c.l.b16 %v555
  %v1814 = vunpack.c.l.b16 %v557
  %v1815 = vunpack.c.l.b16 %v559
  %v1816 = vunpack.c.l.b16 %v561
  %v1817 = vunpack.c.l.b16 %v563
  %v1818 = vpack.c.b16 %v1754, %v666
  %v1819 = vpack.c.b16 %v1755, %v667
  %v1820 = vpack.c.b16 %v1756, %v668
  %v1821 = vpack.c.b16 %v1757, %v669
  %v1822 = vpack.c.b16 %v1758, %v670
  %v1823 = vpack.c.b16 %v1759, %v671
  %v1824 = vpack.c.b16 %v1760, %v672
  %v1825 = vpack.c.b16 %v1761, %v673
  %v1826 = vpack.c.b16 %v1762, %v674
  %v1827 = vpack.c.b16 %v1763, %v675
  %v1828 = vpack.c.b16 %v1764, %v676
  %v1829 = vpack.c.b16 %v1765, %v677
  %v1830 = vpack.c.b16 %v1766, %v678
  %v1831 = vpack.c.b16 %v1767, %v679
  %v1832 = vpack.c.b16 %v1768, %v680
  %v1833 = vpack.c.b16 %v1769, %v681
  %v1834 = vpack.c.b16 %v1770, %v682
  %v1835 = vpack.c.b16 %v1771, %v683
  %v1836 = vpack.c.b16 %v1772, %v684
  %v1837 = vpack.c.b16 %v1773, %v685
  %v1838 = vpack.c.b16 %v1774, %v686
  %v1839 = vpack.c.b16 %v1775, %v687
  %v1840 = vpack.c.b16 %v1776, %v688
  %v1841 = vpack.c.b16 %v1777, %v689
  %v1842 = vpack.c.b16 %v1778, %v690
  %v1843 = vpack.c.b16 %v1779, %v691
  %v1844 = vpack.c.b16 %v1780, %v692
  %v1845 = vpack.c.b16 %v1781, %v693
  %v1846 = vpack.c.b16 %v1782, %v694
  %v1847 = vpack.c.b16 %v1783, %v695
  %v1848 = vpack.c.b16 %v1784, %v696
  %v1849 = vpack.c.b16 %v1785, %v697
  %v1850 = vpack.c.b16 %v1786, %v698
  %v1851 = vpack.c.b16 %v1787, %v699
  %v1852 = vpack.c.b16 %v1788, %v700
  %v1853 = vpack.c.b16 %v1789, %v701
  %v1854 = vpack.c.b16 %v1790, %v702
  %v1855 = vpack.c.b16 %v1791, %v703
  %v1856 = vpack.c.b16 %v1792, %v704
  %v1857 = vpack.c.b16 %v1793, %v705
  %v1858 = vpack.c.b16 %v1794, %v706
  %v1859 = vpack.c.b16 %v1795, %v707
  %v1860 = vpack.c.b16 %v1796, %v708
  %v1861 = vpack.c.b16 %v1797, %v709
  %v1862 = vpack.c.b16 %v1798, %v710
  %v1863 = vpack.c.b16 %v1799, %v711
  %v1864 = vpack.c.b16 %v1800, %v712
  %v1865 = vpack.c.b16 %v1801, %v713
  %v1866 = vpack.c.b16 %v1802, %v714
  %v1867 = vpack.c.b16 %v1803, %v715
  %v1868 = vpack.c.b16 %v1804, %v716
  %v1869 = vpack.c.b16 %v1805, %v717
  %v1870 = vpack.c.b16 %v1806, %v718
  %v1871 = vpack.c.b16 %v1807, %v719
  %v1872 = vpack.c.b16 %v1808, %v720
  %v1873 = vpack.c.b16 %v1809, %v721
  %v1874 = vpack.c.b16 %v1810, %v722
  %v1875 = vpack.c.b16 %v1811, %v723
  %v1876 = vpack.c.b16 %v1812, %v724
  %v1877 = vpack.c.b16 %v1813, %v725
  %v1878 = vpack.c.b16 %v1814, %v726
  %v1879 = vpack.c.b16 %v1815, %v727
  %v1880 = vpack.c.b16 %v1816, %v728
  %v1881 = vpack.c.b16 %v1817, %v729
  %v1883 = vshrl.u32 %v1818, 16
  %v1885 = vshll.u32 %v1818, 16
  %v1887 = vrot.slane %v1885, 1
  %v1888 = vor.u32 %v1883, %v1887
  %v1890 = vshrl.u32 %v1819, 16
  %v1892 = vshll.u32 %v1819, 16
  %v1894 = vrot.slane %v1892, 1
  %v1895 = vor.u32 %v1890, %v1894
  %v1897 = vshrl.u32 %v1820, 16
  %v1899 = vshll.u32 %v1820, 16
  %v1901 = vrot.slane %v1899, 1
  %v1902 = vor.u32 %v1897, %v1901
  %v1904 = vshrl.u32 %v1821, 16
  %v1906 = vshll.u32 %v1821, 16
  %v1908 = vrot.slane %v1906, 1
  %v1909 = vor.u32 %v1904, %v1908
  %v1911 = vshrl.u32 %v1822, 16
  %v1913 = vshll.u32 %v1822, 16
  %v1915 = vrot.slane %v1913, 1
  %v1916 = vor.u32 %v1911, %v1915
  %v1918 = vshrl.u32 %v1823, 16
  %v1920 = vshll.u32 %v1823, 16
  %v1922 = vrot.slane %v1920, 1
  %v1923 = vor.u32 %v1918, %v1922
  %v1925 = vshrl.u32 %v1824, 16
  %v1927 = vshll.u32 %v1824, 16
  %v1929 = vrot.slane %v1927, 1
  %v1930 = vor.u32 %v1925, %v1929
  %v1932 = vshrl.u32 %v1825, 16
  %v1934 = vshll.u32 %v1825, 16
  %v1936 = vrot.slane %v1934, 1
  %v1937 = vor.u32 %v1932, %v1936
  %v1939 = vshrl.u32 %v1826, 16
  %v1941 = vshll.u32 %v1826, 16
  %v1943 = vrot.slane %v1941, 1
  %v1944 = vor.u32 %v1939, %v1943
  %v1946 = vshrl.u32 %v1827, 16
  %v1948 = vshll.u32 %v1827, 16
  %v1950 = vrot.slane %v1948, 1
  %v1951 = vor.u32 %v1946, %v1950
  %v1953 = vshrl.u32 %v1828, 16
  %v1955 = vshll.u32 %v1828, 16
  %v1957 = vrot.slane %v1955, 1
  %v1958 = vor.u32 %v1953, %v1957
  %v1960 = vshrl.u32 %v1829, 16
  %v1962 = vshll.u32 %v1829, 16
  %v1964 = vrot.slane %v1962, 1
  %v1965 = vor.u32 %v1960, %v1964
  %v1967 = vshrl.u32 %v1830, 16
  %v1969 = vshll.u32 %v1830, 16
  %v1971 = vrot.slane %v1969, 1
  %v1972 = vor.u32 %v1967, %v1971
  %v1974 = vshrl.u32 %v1831, 16
  %v1976 = vshll.u32 %v1831, 16
  %v1978 = vrot.slane %v1976, 1
  %v1979 = vor.u32 %v1974, %v1978
  %v1981 = vshrl.u32 %v1832, 16
  %v1983 = vshll.u32 %v1832, 16
  %v1985 = vrot.slane %v1983, 1
  %v1986 = vor.u32 %v1981, %v1985
  %v1988 = vshrl.u32 %v1833, 16
  %v1990 = vshll.u32 %v1833, 16
  %v1992 = vrot.slane %v1990, 1
  %v1993 = vor.u32 %v1988, %v1992
  %v1995 = vshrl.u32 %v1834, 16
  %v1997 = vshll.u32 %v1834, 16
  %v1999 = vrot.slane %v1997, 1
  %v2000 = vor.u32 %v1995, %v1999
  %v2002 = vshrl.u32 %v1835, 16
  %v2004 = vshll.u32 %v1835, 16
  %v2006 = vrot.slane %v2004, 1
  %v2007 = vor.u32 %v2002, %v2006
  %v2009 = vshrl.u32 %v1836, 16
  %v2011 = vshll.u32 %v1836, 16
  %v2013 = vrot.slane %v2011, 1
  %v2014 = vor.u32 %v2009, %v2013
  %v2016 = vshrl.u32 %v1837, 16
  %v2018 = vshll.u32 %v1837, 16
  %v2020 = vrot.slane %v2018, 1
  %v2021 = vor.u32 %v2016, %v2020
  %v2023 = vshrl.u32 %v1838, 16
  %v2025 = vshll.u32 %v1838, 16
  %v2027 = vrot.slane %v2025, 1
  %v2028 = vor.u32 %v2023, %v2027
  %v2030 = vshrl.u32 %v1839, 16
  %v2032 = vshll.u32 %v1839, 16
  %v2034 = vrot.slane %v2032, 1
  %v2035 = vor.u32 %v2030, %v2034
  %v2037 = vshrl.u32 %v1840, 16
  %v2039 = vshll.u32 %v1840, 16
  %v2041 = vrot.slane %v2039, 1
  %v2042 = vor.u32 %v2037, %v2041
  %v2044 = vshrl.u32 %v1841, 16
  %v2046 = vshll.u32 %v1841, 16
  %v2048 = vrot.slane %v2046, 1
  %v2049 = vor.u32 %v2044, %v2048
  %v2051 = vshrl.u32 %v1842, 16
  %v2053 = vshll.u32 %v1842, 16
  %v2055 = vrot.slane %v2053, 1
  %v2056 = vor.u32 %v2051, %v2055
  %v2058 = vshrl.u32 %v1843, 16
  %v2060 = vshll.u32 %v1843, 16
  %v2062 = vrot.slane %v2060, 1
  %v2063 = vor.u32 %v2058, %v2062
  %v2065 = vshrl.u32 %v1844, 16
  %v2067 = vshll.u32 %v1844, 16
  %v2069 = vrot.slane %v2067, 1
  %v2070 = vor.u32 %v2065, %v2069
  %v2072 = vshrl.u32 %v1845, 16
  %v2074 = vshll.u32 %v1845, 16
  %v2076 = vrot.slane %v2074, 1
  %v2077 = vor.u32 %v2072, %v2076
  %v2079 = vshrl.u32 %v1846, 16
  %v2081 = vshll.u32 %v1846, 16
  %v2083 = vrot.slane %v2081, 1
  %v2084 = vor.u32 %v2079, %v2083
  %v2086 = vshrl.u32 %v1847, 16
  %v2088 = vshll.u32 %v1847, 16
  %v2090 = vrot.slane %v2088, 1
  %v2091 = vor.u32 %v2086, %v2090
  %v2093 = vshrl.u32 %v1848, 16
  %v2095 = vshll.u32 %v1848, 16
  %v2097 = vrot.slane %v2095, 1
  %v2098 = vor.u32 %v2093, %v2097
  %v2100 = vshrl.u32 %v1849, 16
  %v2102 = vshll.u32 %v1849, 16
  %v2104 = vrot.slane %v2102, 1
  %v2105 = vor.u32 %v2100, %v2104
  %v2107 = vshrl.u32 %v1850, 16
  %v2109 = vshll.u32 %v1850, 16
  %v2111 = vrot.slane %v2109, 1
  %v2112 = vor.u32 %v2107, %v2111
  %v2114 = vshrl.u32 %v1851, 16
  %v2116 = vshll.u32 %v1851, 16
  %v2118 = vrot.slane %v2116, 1
  %v2119 = vor.u32 %v2114, %v2118
  %v2121 = vshrl.u32 %v1852, 16
  %v2123 = vshll.u32 %v1852, 16
  %v2125 = vrot.slane %v2123, 1
  %v2126 = vor.u32 %v2121, %v2125
  %v2128 = vshrl.u32 %v1853, 16
  %v2130 = vshll.u32 %v1853, 16
  %v2132 = vrot.slane %v2130, 1
  %v2133 = vor.u32 %v2128, %v2132
  %v2135 = vshrl.u32 %v1854, 16
  %v2137 = vshll.u32 %v1854, 16
  %v2139 = vrot.slane %v2137, 1
  %v2140 = vor.u32 %v2135, %v2139
  %v2142 = vshrl.u32 %v1855, 16
  %v2144 = vshll.u32 %v1855, 16
  %v2146 = vrot.slane %v2144, 1
  %v2147 = vor.u32 %v2142, %v2146
  %v2149 = vshrl.u32 %v1856, 16
  %v2151 = vshll.u32 %v1856, 16
  %v2153 = vrot.slane %v2151, 1
  %v2154 = vor.u32 %v2149, %v2153
  %v2156 = vshrl.u32 %v1857, 16
  %v2158 = vshll.u32 %v1857, 16
  %v2160 = vrot.slane %v2158, 1
  %v2161 = vor.u32 %v2156, %v2160
  %v2163 = vshrl.u32 %v1858, 16
  %v2165 = vshll.u32 %v1858, 16
  %v2167 = vrot.slane %v2165, 1
  %v2168 = vor.u32 %v2163, %v2167
  %v2170 = vshrl.u32 %v1859, 16
  %v2172 = vshll.u32 %v1859, 16
  %v2174 = vrot.slane %v2172, 1
  %v2175 = vor.u32 %v2170, %v2174
  %v2177 = vshrl.u32 %v1860, 16
  %v2179 = vshll.u32 %v1860, 16
  %v2181 = vrot.slane %v2179, 1
  %v2182 = vor.u32 %v2177, %v2181
  %v2184 = vshrl.u32 %v1861, 16
  %v2186 = vshll.u32 %v1861, 16
  %v2188 = vrot.slane %v2186, 1
  %v2189 = vor.u32 %v2184, %v2188
  %v2191 = vshrl.u32 %v1862, 16
  %v2193 = vshll.u32 %v1862, 16
  %v2195 = vrot.slane %v2193, 1
  %v2196 = vor.u32 %v2191, %v2195
  %v2198 = vshrl.u32 %v1863, 16
  %v2200 = vshll.u32 %v1863, 16
  %v2202 = vrot.slane %v2200, 1
  %v2203 = vor.u32 %v2198, %v2202
  %v2205 = vshrl.u32 %v1864, 16
  %v2207 = vshll.u32 %v1864, 16
  %v2209 = vrot.slane %v2207, 1
  %v2210 = vor.u32 %v2205, %v2209
  %v2212 = vshrl.u32 %v1865, 16
  %v2214 = vshll.u32 %v1865, 16
  %v2216 = vrot.slane %v2214, 1
  %v2217 = vor.u32 %v2212, %v2216
  %v2219 = vshrl.u32 %v1866, 16
  %v2221 = vshll.u32 %v1866, 16
  %v2223 = vrot.slane %v2221, 1
  %v2224 = vor.u32 %v2219, %v2223
  %v2226 = vshrl.u32 %v1867, 16
  %v2228 = vshll.u32 %v1867, 16
  %v2230 = vrot.slane %v2228, 1
  %v2231 = vor.u32 %v2226, %v2230
  %v2233 = vshrl.u32 %v1868, 16
  %v2235 = vshll.u32 %v1868, 16
  %v2237 = vrot.slane %v2235, 1
  %v2238 = vor.u32 %v2233, %v2237
  %v2240 = vshrl.u32 %v1869, 16
  %v2242 = vshll.u32 %v1869, 16
  %v2244 = vrot.slane %v2242, 1
  %v2245 = vor.u32 %v2240, %v2244
  %v2247 = vshrl.u32 %v1870, 16
  %v2249 = vshll.u32 %v1870, 16
  %v2251 = vrot.slane %v2249, 1
  %v2252 = vor.u32 %v2247, %v2251
  %v2254 = vshrl.u32 %v1871, 16
  %v2256 = vshll.u32 %v1871, 16
  %v2258 = vrot.slane %v2256, 1
  %v2259 = vor.u32 %v2254, %v2258
  %v2261 = vshrl.u32 %v1872, 16
  %v2263 = vshll.u32 %v1872, 16
  %v2265 = vrot.slane %v2263, 1
  %v2266 = vor.u32 %v2261, %v2265
  %v2268 = vshrl.u32 %v1873, 16
  %v2270 = vshll.u32 %v1873, 16
  %v2272 = vrot.slane %v2270, 1
  %v2273 = vor.u32 %v2268, %v2272
  %v2275 = vshrl.u32 %v1874, 16
  %v2277 = vshll.u32 %v1874, 16
  %v2279 = vrot.slane %v2277, 1
  %v2280 = vor.u32 %v2275, %v2279
  %v2282 = vshrl.u32 %v1875, 16
  %v2284 = vshll.u32 %v1875, 16
  %v2286 = vrot.slane %v2284, 1
  %v2287 = vor.u32 %v2282, %v2286
  %v2289 = vshrl.u32 %v1876, 16
  %v2291 = vshll.u32 %v1876, 16
  %v2293 = vrot.slane %v2291, 1
  %v2294 = vor.u32 %v2289, %v2293
  %v2296 = vshrl.u32 %v1877, 16
  %v2298 = vshll.u32 %v1877, 16
  %v2300 = vrot.slane %v2298, 1
  %v2301 = vor.u32 %v2296, %v2300
  %v2303 = vshrl.u32 %v1878, 16
  %v2305 = vshll.u32 %v1878, 16
  %v2307 = vrot.slane %v2305, 1
  %v2308 = vor.u32 %v2303, %v2307
  %v2310 = vshrl.u32 %v1879, 16
  %v2312 = vshll.u32 %v1879, 16
  %v2314 = vrot.slane %v2312, 1
  %v2315 = vor.u32 %v2310, %v2314
  %v2317 = vshrl.u32 %v1880, 16
  %v2319 = vshll.u32 %v1880, 16
  %v2321 = vrot.slane %v2319, 1
  %v2322 = vor.u32 %v2317, %v2321
  %v2324 = vshrl.u32 %v1881, 16
  %v2326 = vshll.u32 %v1881, 16
  %v2328 = vrot.slane %v2326, 1
  %v2329 = vor.u32 %v2324, %v2328
  %2330 = vrot.lane.b32.xlu0 %v1888, 64
  %v2331 = vpop.permute.xlu0 %2330
  %2332 = vrot.lane.b32.xlu0 %v1895, 64
  %v2333 = vpop.permute.xlu0 %2332
  %2334 = vrot.lane.b32.xlu0 %v1902, 64
  %v2335 = vpop.permute.xlu0 %2334
  %2336 = vrot.lane.b32.xlu0 %v1909, 64
  %v2337 = vpop.permute.xlu0 %2336
  %2338 = vrot.lane.b32.xlu0 %v1916, 64
  %v2339 = vpop.permute.xlu0 %2338
  %2340 = vrot.lane.b32.xlu0 %v1923, 64
  %v2341 = vpop.permute.xlu0 %2340
  %2342 = vrot.lane.b32.xlu0 %v1930, 64
  %v2343 = vpop.permute.xlu0 %2342
  %2344 = vrot.lane.b32.xlu0 %v1937, 64
  %v2345 = vpop.permute.xlu0 %2344
  %2346 = vrot.lane.b32.xlu0 %v1944, 64
  %v2347 = vpop.permute.xlu0 %2346
  %2348 = vrot.lane.b32.xlu0 %v1951, 64
  %v2349 = vpop.permute.xlu0 %2348
  %2350 = vrot.lane.b32.xlu0 %v1958, 64
  %v2351 = vpop.permute.xlu0 %2350
  %2352 = vrot.lane.b32.xlu0 %v1965, 64
  %v2353 = vpop.permute.xlu0 %2352
  %2354 = vrot.lane.b32.xlu0 %v1972, 64
  %v2355 = vpop.permute.xlu0 %2354
  %2356 = vrot.lane.b32.xlu0 %v1979, 64
  %v2357 = vpop.permute.xlu0 %2356
  %2358 = vrot.lane.b32.xlu0 %v1986, 64
  %v2359 = vpop.permute.xlu0 %2358
  %2360 = vrot.lane.b32.xlu0 %v1993, 64
  %v2361 = vpop.permute.xlu0 %2360
  %2362 = vrot.lane.b32.xlu0 %v2000, 64
  %v2363 = vpop.permute.xlu0 %2362
  %2364 = vrot.lane.b32.xlu0 %v2007, 64
  %v2365 = vpop.permute.xlu0 %2364
  %2366 = vrot.lane.b32.xlu0 %v2014, 64
  %v2367 = vpop.permute.xlu0 %2366
  %2368 = vrot.lane.b32.xlu0 %v2021, 64
  %v2369 = vpop.permute.xlu0 %2368
  %2370 = vrot.lane.b32.xlu0 %v2028, 64
  %v2371 = vpop.permute.xlu0 %2370
  %2372 = vrot.lane.b32.xlu0 %v2035, 64
  %v2373 = vpop.permute.xlu0 %2372
  %2374 = vrot.lane.b32.xlu0 %v2042, 64
  %v2375 = vpop.permute.xlu0 %2374
  %2376 = vrot.lane.b32.xlu0 %v2049, 64
  %v2377 = vpop.permute.xlu0 %2376
  %2378 = vrot.lane.b32.xlu0 %v2056, 64
  %v2379 = vpop.permute.xlu0 %2378
  %2380 = vrot.lane.b32.xlu0 %v2063, 64
  %v2381 = vpop.permute.xlu0 %2380
  %2382 = vrot.lane.b32.xlu0 %v2070, 64
  %v2383 = vpop.permute.xlu0 %2382
  %2384 = vrot.lane.b32.xlu0 %v2077, 64
  %v2385 = vpop.permute.xlu0 %2384
  %2386 = vrot.lane.b32.xlu0 %v2084, 64
  %v2387 = vpop.permute.xlu0 %2386
  %2388 = vrot.lane.b32.xlu0 %v2091, 64
  %v2389 = vpop.permute.xlu0 %2388
  %2390 = vrot.lane.b32.xlu0 %v2098, 64
  %v2391 = vpop.permute.xlu0 %2390
  %2392 = vrot.lane.b32.xlu0 %v2105, 64
  %v2393 = vpop.permute.xlu0 %2392
  %2394 = vrot.lane.b32.xlu0 %v2112, 64
  %v2395 = vpop.permute.xlu0 %2394
  %2396 = vrot.lane.b32.xlu0 %v2119, 64
  %v2397 = vpop.permute.xlu0 %2396
  %2398 = vrot.lane.b32.xlu0 %v2126, 64
  %v2399 = vpop.permute.xlu0 %2398
  %2400 = vrot.lane.b32.xlu0 %v2133, 64
  %v2401 = vpop.permute.xlu0 %2400
  %2402 = vrot.lane.b32.xlu0 %v2140, 64
  %v2403 = vpop.permute.xlu0 %2402
  %2404 = vrot.lane.b32.xlu0 %v2147, 64
  %v2405 = vpop.permute.xlu0 %2404
  %2406 = vrot.lane.b32.xlu0 %v2154, 64
  %v2407 = vpop.permute.xlu0 %2406
  %2408 = vrot.lane.b32.xlu0 %v2161, 64
  %v2409 = vpop.permute.xlu0 %2408
  %2410 = vrot.lane.b32.xlu0 %v2168, 64
  %v2411 = vpop.permute.xlu0 %2410
  %2412 = vrot.lane.b32.xlu0 %v2175, 64
  %v2413 = vpop.permute.xlu0 %2412
  %2414 = vrot.lane.b32.xlu0 %v2182, 64
  %v2415 = vpop.permute.xlu0 %2414
  %2416 = vrot.lane.b32.xlu0 %v2189, 64
  %v2417 = vpop.permute.xlu0 %2416
  %2418 = vrot.lane.b32.xlu0 %v2196, 64
  %v2419 = vpop.permute.xlu0 %2418
  %2420 = vrot.lane.b32.xlu0 %v2203, 64
  %v2421 = vpop.permute.xlu0 %2420
  %2422 = vrot.lane.b32.xlu0 %v2210, 64
  %v2423 = vpop.permute.xlu0 %2422
  %2424 = vrot.lane.b32.xlu0 %v2217, 64
  %v2425 = vpop.permute.xlu0 %2424
  %2426 = vrot.lane.b32.xlu0 %v2224, 64
  %v2427 = vpop.permute.xlu0 %2426
  %2428 = vrot.lane.b32.xlu0 %v2231, 64
  %v2429 = vpop.permute.xlu0 %2428
  %2430 = vrot.lane.b32.xlu0 %v2238, 64
  %v2431 = vpop.permute.xlu0 %2430
  %2432 = vrot.lane.b32.xlu0 %v2245, 64
  %v2433 = vpop.permute.xlu0 %2432
  %2434 = vrot.lane.b32.xlu0 %v2252, 64
  %v2435 = vpop.permute.xlu0 %2434
  %2436 = vrot.lane.b32.xlu0 %v2259, 64
  %v2437 = vpop.permute.xlu0 %2436
  %2438 = vrot.lane.b32.xlu0 %v2266, 64
  %v2439 = vpop.permute.xlu0 %2438
  %2440 = vrot.lane.b32.xlu0 %v2273, 64
  %v2441 = vpop.permute.xlu0 %2440
  %2442 = vrot.lane.b32.xlu0 %v2280, 64
  %v2443 = vpop.permute.xlu0 %2442
  %2444 = vrot.lane.b32.xlu0 %v2287, 64
  %v2445 = vpop.permute.xlu0 %2444
  %2446 = vrot.lane.b32.xlu0 %v2294, 64
  %v2447 = vpop.permute.xlu0 %2446
  %2448 = vrot.lane.b32.xlu0 %v2301, 64
  %v2449 = vpop.permute.xlu0 %2448
  %2450 = vrot.lane.b32.xlu0 %v2308, 64
  %v2451 = vpop.permute.xlu0 %2450
  %2452 = vrot.lane.b32.xlu0 %v2315, 64
  %v2453 = vpop.permute.xlu0 %2452
  %2454 = vrot.lane.b32.xlu0 %v2322, 64
  %v2455 = vpop.permute.xlu0 %2454
  %2456 = vrot.lane.b32.xlu0 %v2329, 64
  %v2457 = vpop.permute.xlu0 %2456
  %v2522 = vunpack.c.l.b16 %v80
  %v2523 = vunpack.c.l.b16 %v82
  %v2524 = vunpack.c.l.b16 %v84
  %v2525 = vunpack.c.l.b16 %v86
  %v2526 = vunpack.c.l.b16 %v88
  %v2527 = vunpack.c.l.b16 %v90
  %v2528 = vunpack.c.l.b16 %v92
  %v2529 = vunpack.c.l.b16 %v94
  %v2530 = vunpack.c.l.b16 %v152
  %v2531 = vunpack.c.l.b16 %v154
  %v2532 = vunpack.c.l.b16 %v156
  %v2533 = vunpack.c.l.b16 %v158
  %v2534 = vunpack.c.l.b16 %v160
  %v2535 = vunpack.c.l.b16 %v162
  %v2536 = vunpack.c.l.b16 %v164
  %v2537 = vunpack.c.l.b16 %v166
  %v2538 = vunpack.c.l.b16 %v224
  %v2539 = vunpack.c.l.b16 %v226
  %v2540 = vunpack.c.l.b16 %v228
  %v2541 = vunpack.c.l.b16 %v230
  %v2542 = vunpack.c.l.b16 %v232
  %v2543 = vunpack.c.l.b16 %v234
  %v2544 = vunpack.c.l.b16 %v236
  %v2545 = vunpack.c.l.b16 %v238
  %v2546 = vunpack.c.l.b16 %v296
  %v2547 = vunpack.c.l.b16 %v298
  %v2548 = vunpack.c.l.b16 %v300
  %v2549 = vunpack.c.l.b16 %v302
  %v2550 = vunpack.c.l.b16 %v304
  %v2551 = vunpack.c.l.b16 %v306
  %v2552 = vunpack.c.l.b16 %v308
  %v2553 = vunpack.c.l.b16 %v310
  %v2554 = vunpack.c.l.b16 %v368
  %v2555 = vunpack.c.l.b16 %v370
  %v2556 = vunpack.c.l.b16 %v372
  %v2557 = vunpack.c.l.b16 %v374
  %v2558 = vunpack.c.l.b16 %v376
  %v2559 = vunpack.c.l.b16 %v378
  %v2560 = vunpack.c.l.b16 %v380
  %v2561 = vunpack.c.l.b16 %v382
  %v2562 = vunpack.c.l.b16 %v440
  %v2563 = vunpack.c.l.b16 %v442
  %v2564 = vunpack.c.l.b16 %v444
  %v2565 = vunpack.c.l.b16 %v446
  %v2566 = vunpack.c.l.b16 %v448
  %v2567 = vunpack.c.l.b16 %v450
  %v2568 = vunpack.c.l.b16 %v452
  %v2569 = vunpack.c.l.b16 %v454
  %v2570 = vunpack.c.l.b16 %v512
  %v2571 = vunpack.c.l.b16 %v514
  %v2572 = vunpack.c.l.b16 %v516
  %v2573 = vunpack.c.l.b16 %v518
  %v2574 = vunpack.c.l.b16 %v520
  %v2575 = vunpack.c.l.b16 %v522
  %v2576 = vunpack.c.l.b16 %v524
  %v2577 = vunpack.c.l.b16 %v526
  %v2578 = vunpack.c.l.b16 %v584
  %v2579 = vunpack.c.l.b16 %v586
  %v2580 = vunpack.c.l.b16 %v588
  %v2581 = vunpack.c.l.b16 %v590
  %v2582 = vunpack.c.l.b16 %v592
  %v2583 = vunpack.c.l.b16 %v594
  %v2584 = vunpack.c.l.b16 %v596
  %v2585 = vunpack.c.l.b16 %v598
  %v2586 = vpack.c.b16 %v2522, %v2522
  %v2587 = vpack.c.b16 %v2523, %v2523
  %v2588 = vpack.c.b16 %v2524, %v2524
  %v2589 = vpack.c.b16 %v2525, %v2525
  %v2590 = vpack.c.b16 %v2526, %v2526
  %v2591 = vpack.c.b16 %v2527, %v2527
  %v2592 = vpack.c.b16 %v2528, %v2528
  %v2593 = vpack.c.b16 %v2529, %v2529
  %v2594 = vpack.c.b16 %v2530, %v2530
  %v2595 = vpack.c.b16 %v2531, %v2531
  %v2596 = vpack.c.b16 %v2532, %v2532
  %v2597 = vpack.c.b16 %v2533, %v2533
  %v2598 = vpack.c.b16 %v2534, %v2534
  %v2599 = vpack.c.b16 %v2535, %v2535
  %v2600 = vpack.c.b16 %v2536, %v2536
  %v2601 = vpack.c.b16 %v2537, %v2537
  %v2602 = vpack.c.b16 %v2538, %v2538
  %v2603 = vpack.c.b16 %v2539, %v2539
  %v2604 = vpack.c.b16 %v2540, %v2540
  %v2605 = vpack.c.b16 %v2541, %v2541
  %v2606 = vpack.c.b16 %v2542, %v2542
  %v2607 = vpack.c.b16 %v2543, %v2543
  %v2608 = vpack.c.b16 %v2544, %v2544
  %v2609 = vpack.c.b16 %v2545, %v2545
  %v2610 = vpack.c.b16 %v2546, %v2546
  %v2611 = vpack.c.b16 %v2547, %v2547
  %v2612 = vpack.c.b16 %v2548, %v2548
  %v2613 = vpack.c.b16 %v2549, %v2549
  %v2614 = vpack.c.b16 %v2550, %v2550
  %v2615 = vpack.c.b16 %v2551, %v2551
  %v2616 = vpack.c.b16 %v2552, %v2552
  %v2617 = vpack.c.b16 %v2553, %v2553
  %v2618 = vpack.c.b16 %v2554, %v2554
  %v2619 = vpack.c.b16 %v2555, %v2555
  %v2620 = vpack.c.b16 %v2556, %v2556
  %v2621 = vpack.c.b16 %v2557, %v2557
  %v2622 = vpack.c.b16 %v2558, %v2558
  %v2623 = vpack.c.b16 %v2559, %v2559
  %v2624 = vpack.c.b16 %v2560, %v2560
  %v2625 = vpack.c.b16 %v2561, %v2561
  %v2626 = vpack.c.b16 %v2562, %v2562
  %v2627 = vpack.c.b16 %v2563, %v2563
  %v2628 = vpack.c.b16 %v2564, %v2564
  %v2629 = vpack.c.b16 %v2565, %v2565
  %v2630 = vpack.c.b16 %v2566, %v2566
  %v2631 = vpack.c.b16 %v2567, %v2567
  %v2632 = vpack.c.b16 %v2568, %v2568
  %v2633 = vpack.c.b16 %v2569, %v2569
  %v2634 = vpack.c.b16 %v2570, %v2570
  %v2635 = vpack.c.b16 %v2571, %v2571
  %v2636 = vpack.c.b16 %v2572, %v2572
  %v2637 = vpack.c.b16 %v2573, %v2573
  %v2638 = vpack.c.b16 %v2574, %v2574
  %v2639 = vpack.c.b16 %v2575, %v2575
  %v2640 = vpack.c.b16 %v2576, %v2576
  %v2641 = vpack.c.b16 %v2577, %v2577
  %v2642 = vpack.c.b16 %v2578, %v2578
  %v2643 = vpack.c.b16 %v2579, %v2579
  %v2644 = vpack.c.b16 %v2580, %v2580
  %v2645 = vpack.c.b16 %v2581, %v2581
  %v2646 = vpack.c.b16 %v2582, %v2582
  %v2647 = vpack.c.b16 %v2583, %v2583
  %v2648 = vpack.c.b16 %v2584, %v2584
  %v2649 = vpack.c.b16 %v2585, %v2585
  %2650 = vrot.lane.b32.xlu0 %v2586, 64
  %v2651 = vpop.permute.xlu0 %2650
  %2652 = vrot.lane.b32.xlu0 %v2587, 64
  %v2653 = vpop.permute.xlu0 %2652
  %2654 = vrot.lane.b32.xlu0 %v2588, 64
  %v2655 = vpop.permute.xlu0 %2654
  %2656 = vrot.lane.b32.xlu0 %v2589, 64
  %v2657 = vpop.permute.xlu0 %2656
  %2658 = vrot.lane.b32.xlu0 %v2590, 64
  %v2659 = vpop.permute.xlu0 %2658
  %2660 = vrot.lane.b32.xlu0 %v2591, 64
  %v2661 = vpop.permute.xlu0 %2660
  %2662 = vrot.lane.b32.xlu0 %v2592, 64
  %v2663 = vpop.permute.xlu0 %2662
  %2664 = vrot.lane.b32.xlu0 %v2593, 64
  %v2665 = vpop.permute.xlu0 %2664
  %2666 = vrot.lane.b32.xlu0 %v2594, 64
  %v2667 = vpop.permute.xlu0 %2666
  %2668 = vrot.lane.b32.xlu0 %v2595, 64
  %v2669 = vpop.permute.xlu0 %2668
  %2670 = vrot.lane.b32.xlu0 %v2596, 64
  %v2671 = vpop.permute.xlu0 %2670
  %2672 = vrot.lane.b32.xlu0 %v2597, 64
  %v2673 = vpop.permute.xlu0 %2672
  %2674 = vrot.lane.b32.xlu0 %v2598, 64
  %v2675 = vpop.permute.xlu0 %2674
  %2676 = vrot.lane.b32.xlu0 %v2599, 64
  %v2677 = vpop.permute.xlu0 %2676
  %2678 = vrot.lane.b32.xlu0 %v2600, 64
  %v2679 = vpop.permute.xlu0 %2678
  %2680 = vrot.lane.b32.xlu0 %v2601, 64
  %v2681 = vpop.permute.xlu0 %2680
  %2682 = vrot.lane.b32.xlu0 %v2602, 64
  %v2683 = vpop.permute.xlu0 %2682
  %2684 = vrot.lane.b32.xlu0 %v2603, 64
  %v2685 = vpop.permute.xlu0 %2684
  %2686 = vrot.lane.b32.xlu0 %v2604, 64
  %v2687 = vpop.permute.xlu0 %2686
  %2688 = vrot.lane.b32.xlu0 %v2605, 64
  %v2689 = vpop.permute.xlu0 %2688
  %2690 = vrot.lane.b32.xlu0 %v2606, 64
  %v2691 = vpop.permute.xlu0 %2690
  %2692 = vrot.lane.b32.xlu0 %v2607, 64
  %v2693 = vpop.permute.xlu0 %2692
  %2694 = vrot.lane.b32.xlu0 %v2608, 64
  %v2695 = vpop.permute.xlu0 %2694
  %2696 = vrot.lane.b32.xlu0 %v2609, 64
  %v2697 = vpop.permute.xlu0 %2696
  %2698 = vrot.lane.b32.xlu0 %v2610, 64
  %v2699 = vpop.permute.xlu0 %2698
  %2700 = vrot.lane.b32.xlu0 %v2611, 64
  %v2701 = vpop.permute.xlu0 %2700
  %2702 = vrot.lane.b32.xlu0 %v2612, 64
  %v2703 = vpop.permute.xlu0 %2702
  %2704 = vrot.lane.b32.xlu0 %v2613, 64
  %v2705 = vpop.permute.xlu0 %2704
  %2706 = vrot.lane.b32.xlu0 %v2614, 64
  %v2707 = vpop.permute.xlu0 %2706
  %2708 = vrot.lane.b32.xlu0 %v2615, 64
  %v2709 = vpop.permute.xlu0 %2708
  %2710 = vrot.lane.b32.xlu0 %v2616, 64
  %v2711 = vpop.permute.xlu0 %2710
  %2712 = vrot.lane.b32.xlu0 %v2617, 64
  %v2713 = vpop.permute.xlu0 %2712
  %2714 = vrot.lane.b32.xlu0 %v2618, 64
  %v2715 = vpop.permute.xlu0 %2714
  %2716 = vrot.lane.b32.xlu0 %v2619, 64
  %v2717 = vpop.permute.xlu0 %2716
  %2718 = vrot.lane.b32.xlu0 %v2620, 64
  %v2719 = vpop.permute.xlu0 %2718
  %2720 = vrot.lane.b32.xlu0 %v2621, 64
  %v2721 = vpop.permute.xlu0 %2720
  %2722 = vrot.lane.b32.xlu0 %v2622, 64
  %v2723 = vpop.permute.xlu0 %2722
  %2724 = vrot.lane.b32.xlu0 %v2623, 64
  %v2725 = vpop.permute.xlu0 %2724
  %2726 = vrot.lane.b32.xlu0 %v2624, 64
  %v2727 = vpop.permute.xlu0 %2726
  %2728 = vrot.lane.b32.xlu0 %v2625, 64
  %v2729 = vpop.permute.xlu0 %2728
  %2730 = vrot.lane.b32.xlu0 %v2626, 64
  %v2731 = vpop.permute.xlu0 %2730
  %2732 = vrot.lane.b32.xlu0 %v2627, 64
  %v2733 = vpop.permute.xlu0 %2732
  %2734 = vrot.lane.b32.xlu0 %v2628, 64
  %v2735 = vpop.permute.xlu0 %2734
  %2736 = vrot.lane.b32.xlu0 %v2629, 64
  %v2737 = vpop.permute.xlu0 %2736
  %2738 = vrot.lane.b32.xlu0 %v2630, 64
  %v2739 = vpop.permute.xlu0 %2738
  %2740 = vrot.lane.b32.xlu0 %v2631, 64
  %v2741 = vpop.permute.xlu0 %2740
  %2742 = vrot.lane.b32.xlu0 %v2632, 64
  %v2743 = vpop.permute.xlu0 %2742
  %2744 = vrot.lane.b32.xlu0 %v2633, 64
  %v2745 = vpop.permute.xlu0 %2744
  %2746 = vrot.lane.b32.xlu0 %v2634, 64
  %v2747 = vpop.permute.xlu0 %2746
  %2748 = vrot.lane.b32.xlu0 %v2635, 64
  %v2749 = vpop.permute.xlu0 %2748
  %2750 = vrot.lane.b32.xlu0 %v2636, 64
  %v2751 = vpop.permute.xlu0 %2750
  %2752 = vrot.lane.b32.xlu0 %v2637, 64
  %v2753 = vpop.permute.xlu0 %2752
  %2754 = vrot.lane.b32.xlu0 %v2638, 64
  %v2755 = vpop.permute.xlu0 %2754
  %2756 = vrot.lane.b32.xlu0 %v2639, 64
  %v2757 = vpop.permute.xlu0 %2756
  %2758 = vrot.lane.b32.xlu0 %v2640, 64
  %v2759 = vpop.permute.xlu0 %2758
  %2760 = vrot.lane.b32.xlu0 %v2641, 64
  %v2761 = vpop.permute.xlu0 %2760
  %2762 = vrot.lane.b32.xlu0 %v2642, 64
  %v2763 = vpop.permute.xlu0 %2762
  %2764 = vrot.lane.b32.xlu0 %v2643, 64
  %v2765 = vpop.permute.xlu0 %2764
  %2766 = vrot.lane.b32.xlu0 %v2644, 64
  %v2767 = vpop.permute.xlu0 %2766
  %2768 = vrot.lane.b32.xlu0 %v2645, 64
  %v2769 = vpop.permute.xlu0 %2768
  %2770 = vrot.lane.b32.xlu0 %v2646, 64
  %v2771 = vpop.permute.xlu0 %2770
  %2772 = vrot.lane.b32.xlu0 %v2647, 64
  %v2773 = vpop.permute.xlu0 %2772
  %2774 = vrot.lane.b32.xlu0 %v2648, 64
  %v2775 = vpop.permute.xlu0 %2774
  %2776 = vrot.lane.b32.xlu0 %v2649, 64
  %v2777 = vpop.permute.xlu0 %2776
  %v2906 = vunpack.c.l.b16 %v62
  %v2907 = vunpack.c.l.b16 %v63
  %v2908 = vunpack.c.l.b16 %v64
  %v2909 = vunpack.c.l.b16 %v65
  %v2910 = vunpack.c.l.b16 %v66
  %v2911 = vunpack.c.l.b16 %v67
  %v2912 = vunpack.c.l.b16 %v68
  %v2913 = vunpack.c.l.b16 %v69
  %v2914 = vunpack.c.l.b16 %v70
  %v2915 = vunpack.c.l.b16 %v71
  %v2916 = vunpack.c.l.b16 %v72
  %v2917 = vunpack.c.l.b16 %v73
  %v2918 = vunpack.c.l.b16 %v74
  %v2919 = vunpack.c.l.b16 %v75
  %v2920 = vunpack.c.l.b16 %v76
  %v2921 = vunpack.c.l.b16 %v77
  %v2922 = vunpack.c.l.b16 %v134
  %v2923 = vunpack.c.l.b16 %v135
  %v2924 = vunpack.c.l.b16 %v136
  %v2925 = vunpack.c.l.b16 %v137
  %v2926 = vunpack.c.l.b16 %v138
  %v2927 = vunpack.c.l.b16 %v139
  %v2928 = vunpack.c.l.b16 %v140
  %v2929 = vunpack.c.l.b16 %v141
  %v2930 = vunpack.c.l.b16 %v142
  %v2931 = vunpack.c.l.b16 %v143
  %v2932 = vunpack.c.l.b16 %v144
  %v2933 = vunpack.c.l.b16 %v145
  %v2934 = vunpack.c.l.b16 %v146
  %v2935 = vunpack.c.l.b16 %v147
  %v2936 = vunpack.c.l.b16 %v148
  %v2937 = vunpack.c.l.b16 %v149
  %v2938 = vunpack.c.l.b16 %v206
  %v2939 = vunpack.c.l.b16 %v207
  %v2940 = vunpack.c.l.b16 %v208
  %v2941 = vunpack.c.l.b16 %v209
  %v2942 = vunpack.c.l.b16 %v210
  %v2943 = vunpack.c.l.b16 %v211
  %v2944 = vunpack.c.l.b16 %v212
  %v2945 = vunpack.c.l.b16 %v213
  %v2946 = vunpack.c.l.b16 %v214
  %v2947 = vunpack.c.l.b16 %v215
  %v2948 = vunpack.c.l.b16 %v216
  %v2949 = vunpack.c.l.b16 %v217
  %v2950 = vunpack.c.l.b16 %v218
  %v2951 = vunpack.c.l.b16 %v219
  %v2952 = vunpack.c.l.b16 %v220
  %v2953 = vunpack.c.l.b16 %v221
  %v2954 = vunpack.c.l.b16 %v278
  %v2955 = vunpack.c.l.b16 %v279
  %v2956 = vunpack.c.l.b16 %v280
  %v2957 = vunpack.c.l.b16 %v281
  %v2958 = vunpack.c.l.b16 %v282
  %v2959 = vunpack.c.l.b16 %v283
  %v2960 = vunpack.c.l.b16 %v284
  %v2961 = vunpack.c.l.b16 %v285
  %v2962 = vunpack.c.l.b16 %v286
  %v2963 = vunpack.c.l.b16 %v287
  %v2964 = vunpack.c.l.b16 %v288
  %v2965 = vunpack.c.l.b16 %v289
  %v2966 = vunpack.c.l.b16 %v290
  %v2967 = vunpack.c.l.b16 %v291
  %v2968 = vunpack.c.l.b16 %v292
  %v2969 = vunpack.c.l.b16 %v293
  %v2970 = vunpack.c.l.b16 %v350
  %v2971 = vunpack.c.l.b16 %v351
  %v2972 = vunpack.c.l.b16 %v352
  %v2973 = vunpack.c.l.b16 %v353
  %v2974 = vunpack.c.l.b16 %v354
  %v2975 = vunpack.c.l.b16 %v355
  %v2976 = vunpack.c.l.b16 %v356
  %v2977 = vunpack.c.l.b16 %v357
  %v2978 = vunpack.c.l.b16 %v358
  %v2979 = vunpack.c.l.b16 %v359
  %v2980 = vunpack.c.l.b16 %v360
  %v2981 = vunpack.c.l.b16 %v361
  %v2982 = vunpack.c.l.b16 %v362
  %v2983 = vunpack.c.l.b16 %v363
  %v2984 = vunpack.c.l.b16 %v364
  %v2985 = vunpack.c.l.b16 %v365
  %v2986 = vunpack.c.l.b16 %v422
  %v2987 = vunpack.c.l.b16 %v423
  %v2988 = vunpack.c.l.b16 %v424
  %v2989 = vunpack.c.l.b16 %v425
  %v2990 = vunpack.c.l.b16 %v426
  %v2991 = vunpack.c.l.b16 %v427
  %v2992 = vunpack.c.l.b16 %v428
  %v2993 = vunpack.c.l.b16 %v429
  %v2994 = vunpack.c.l.b16 %v430
  %v2995 = vunpack.c.l.b16 %v431
  %v2996 = vunpack.c.l.b16 %v432
  %v2997 = vunpack.c.l.b16 %v433
  %v2998 = vunpack.c.l.b16 %v434
  %v2999 = vunpack.c.l.b16 %v435
  %v3000 = vunpack.c.l.b16 %v436
  %v3001 = vunpack.c.l.b16 %v437
  %v3002 = vunpack.c.l.b16 %v494
  %v3003 = vunpack.c.l.b16 %v495
  %v3004 = vunpack.c.l.b16 %v496
  %v3005 = vunpack.c.l.b16 %v497
  %v3006 = vunpack.c.l.b16 %v498
  %v3007 = vunpack.c.l.b16 %v499
  %v3008 = vunpack.c.l.b16 %v500
  %v3009 = vunpack.c.l.b16 %v501
  %v3010 = vunpack.c.l.b16 %v502
  %v3011 = vunpack.c.l.b16 %v503
  %v3012 = vunpack.c.l.b16 %v504
  %v3013 = vunpack.c.l.b16 %v505
  %v3014 = vunpack.c.l.b16 %v506
  %v3015 = vunpack.c.l.b16 %v507
  %v3016 = vunpack.c.l.b16 %v508
  %v3017 = vunpack.c.l.b16 %v509
  %v3018 = vunpack.c.l.b16 %v566
  %v3019 = vunpack.c.l.b16 %v567
  %v3020 = vunpack.c.l.b16 %v568
  %v3021 = vunpack.c.l.b16 %v569
  %v3022 = vunpack.c.l.b16 %v570
  %v3023 = vunpack.c.l.b16 %v571
  %v3024 = vunpack.c.l.b16 %v572
  %v3025 = vunpack.c.l.b16 %v573
  %v3026 = vunpack.c.l.b16 %v574
  %v3027 = vunpack.c.l.b16 %v575
  %v3028 = vunpack.c.l.b16 %v576
  %v3029 = vunpack.c.l.b16 %v577
  %v3030 = vunpack.c.l.b16 %v578
  %v3031 = vunpack.c.l.b16 %v579
  %v3032 = vunpack.c.l.b16 %v580
  %v3033 = vunpack.c.l.b16 %v581
  %v3034 = vpack.c.b16 %v2907, %v2906
  %v3035 = vpack.c.b16 %v2909, %v2908
  %v3036 = vpack.c.b16 %v2911, %v2910
  %v3037 = vpack.c.b16 %v2913, %v2912
  %v3038 = vpack.c.b16 %v2915, %v2914
  %v3039 = vpack.c.b16 %v2917, %v2916
  %v3040 = vpack.c.b16 %v2919, %v2918
  %v3041 = vpack.c.b16 %v2921, %v2920
  %v3042 = vpack.c.b16 %v2923, %v2922
  %v3043 = vpack.c.b16 %v2925, %v2924
  %v3044 = vpack.c.b16 %v2927, %v2926
  %v3045 = vpack.c.b16 %v2929, %v2928
  %v3046 = vpack.c.b16 %v2931, %v2930
  %v3047 = vpack.c.b16 %v2933, %v2932
  %v3048 = vpack.c.b16 %v2935, %v2934
  %v3049 = vpack.c.b16 %v2937, %v2936
  %v3050 = vpack.c.b16 %v2939, %v2938
  %v3051 = vpack.c.b16 %v2941, %v2940
  %v3052 = vpack.c.b16 %v2943, %v2942
  %v3053 = vpack.c.b16 %v2945, %v2944
  %v3054 = vpack.c.b16 %v2947, %v2946
  %v3055 = vpack.c.b16 %v2949, %v2948
  %v3056 = vpack.c.b16 %v2951, %v2950
  %v3057 = vpack.c.b16 %v2953, %v2952
  %v3058 = vpack.c.b16 %v2955, %v2954
  %v3059 = vpack.c.b16 %v2957, %v2956
  %v3060 = vpack.c.b16 %v2959, %v2958
  %v3061 = vpack.c.b16 %v2961, %v2960
  %v3062 = vpack.c.b16 %v2963, %v2962
  %v3063 = vpack.c.b16 %v2965, %v2964
  %v3064 = vpack.c.b16 %v2967, %v2966
  %v3065 = vpack.c.b16 %v2969, %v2968
  %v3066 = vpack.c.b16 %v2971, %v2970
  %v3067 = vpack.c.b16 %v2973, %v2972
  %v3068 = vpack.c.b16 %v2975, %v2974
  %v3069 = vpack.c.b16 %v2977, %v2976
  %v3070 = vpack.c.b16 %v2979, %v2978
  %v3071 = vpack.c.b16 %v2981, %v2980
  %v3072 = vpack.c.b16 %v2983, %v2982
  %v3073 = vpack.c.b16 %v2985, %v2984
  %v3074 = vpack.c.b16 %v2987, %v2986
  %v3075 = vpack.c.b16 %v2989, %v2988
  %v3076 = vpack.c.b16 %v2991, %v2990
  %v3077 = vpack.c.b16 %v2993, %v2992
  %v3078 = vpack.c.b16 %v2995, %v2994
  %v3079 = vpack.c.b16 %v2997, %v2996
  %v3080 = vpack.c.b16 %v2999, %v2998
  %v3081 = vpack.c.b16 %v3001, %v3000
  %v3082 = vpack.c.b16 %v3003, %v3002
  %v3083 = vpack.c.b16 %v3005, %v3004
  %v3084 = vpack.c.b16 %v3007, %v3006
  %v3085 = vpack.c.b16 %v3009, %v3008
  %v3086 = vpack.c.b16 %v3011, %v3010
  %v3087 = vpack.c.b16 %v3013, %v3012
  %v3088 = vpack.c.b16 %v3015, %v3014
  %v3089 = vpack.c.b16 %v3017, %v3016
  %v3090 = vpack.c.b16 %v3019, %v3018
  %v3091 = vpack.c.b16 %v3021, %v3020
  %v3092 = vpack.c.b16 %v3023, %v3022
  %v3093 = vpack.c.b16 %v3025, %v3024
  %v3094 = vpack.c.b16 %v3027, %v3026
  %v3095 = vpack.c.b16 %v3029, %v3028
  %v3096 = vpack.c.b16 %v3031, %v3030
  %v3097 = vpack.c.b16 %v3033, %v3032
  %v3099 = vshrl.u32 %v3034, 16
  %v3101 = vshll.u32 %v3034, 16
  %v3103 = vrot.slane %v3101, 1
  %v3104 = vor.u32 %v3099, %v3103
  %v3106 = vshrl.u32 %v3035, 16
  %v3108 = vshll.u32 %v3035, 16
  %v3110 = vrot.slane %v3108, 1
  %v3111 = vor.u32 %v3106, %v3110
  %v3113 = vshrl.u32 %v3036, 16
  %v3115 = vshll.u32 %v3036, 16
  %v3117 = vrot.slane %v3115, 1
  %v3118 = vor.u32 %v3113, %v3117
  %v3120 = vshrl.u32 %v3037, 16
  %v3122 = vshll.u32 %v3037, 16
  %v3124 = vrot.slane %v3122, 1
  %v3125 = vor.u32 %v3120, %v3124
  %v3127 = vshrl.u32 %v3038, 16
  %v3129 = vshll.u32 %v3038, 16
  %v3131 = vrot.slane %v3129, 1
  %v3132 = vor.u32 %v3127, %v3131
  %v3134 = vshrl.u32 %v3039, 16
  %v3136 = vshll.u32 %v3039, 16
  %v3138 = vrot.slane %v3136, 1
  %v3139 = vor.u32 %v3134, %v3138
  %v3141 = vshrl.u32 %v3040, 16
  %v3143 = vshll.u32 %v3040, 16
  %v3145 = vrot.slane %v3143, 1
  %v3146 = vor.u32 %v3141, %v3145
  %v3148 = vshrl.u32 %v3041, 16
  %v3150 = vshll.u32 %v3041, 16
  %v3152 = vrot.slane %v3150, 1
  %v3153 = vor.u32 %v3148, %v3152
  %v3155 = vshrl.u32 %v3042, 16
  %v3157 = vshll.u32 %v3042, 16
  %v3159 = vrot.slane %v3157, 1
  %v3160 = vor.u32 %v3155, %v3159
  %v3162 = vshrl.u32 %v3043, 16
  %v3164 = vshll.u32 %v3043, 16
  %v3166 = vrot.slane %v3164, 1
  %v3167 = vor.u32 %v3162, %v3166
  %v3169 = vshrl.u32 %v3044, 16
  %v3171 = vshll.u32 %v3044, 16
  %v3173 = vrot.slane %v3171, 1
  %v3174 = vor.u32 %v3169, %v3173
  %v3176 = vshrl.u32 %v3045, 16
  %v3178 = vshll.u32 %v3045, 16
  %v3180 = vrot.slane %v3178, 1
  %v3181 = vor.u32 %v3176, %v3180
  %v3183 = vshrl.u32 %v3046, 16
  %v3185 = vshll.u32 %v3046, 16
  %v3187 = vrot.slane %v3185, 1
  %v3188 = vor.u32 %v3183, %v3187
  %v3190 = vshrl.u32 %v3047, 16
  %v3192 = vshll.u32 %v3047, 16
  %v3194 = vrot.slane %v3192, 1
  %v3195 = vor.u32 %v3190, %v3194
  %v3197 = vshrl.u32 %v3048, 16
  %v3199 = vshll.u32 %v3048, 16
  %v3201 = vrot.slane %v3199, 1
  %v3202 = vor.u32 %v3197, %v3201
  %v3204 = vshrl.u32 %v3049, 16
  %v3206 = vshll.u32 %v3049, 16
  %v3208 = vrot.slane %v3206, 1
  %v3209 = vor.u32 %v3204, %v3208
  %v3211 = vshrl.u32 %v3050, 16
  %v3213 = vshll.u32 %v3050, 16
  %v3215 = vrot.slane %v3213, 1
  %v3216 = vor.u32 %v3211, %v3215
  %v3218 = vshrl.u32 %v3051, 16
  %v3220 = vshll.u32 %v3051, 16
  %v3222 = vrot.slane %v3220, 1
  %v3223 = vor.u32 %v3218, %v3222
  %v3225 = vshrl.u32 %v3052, 16
  %v3227 = vshll.u32 %v3052, 16
  %v3229 = vrot.slane %v3227, 1
  %v3230 = vor.u32 %v3225, %v3229
  %v3232 = vshrl.u32 %v3053, 16
  %v3234 = vshll.u32 %v3053, 16
  %v3236 = vrot.slane %v3234, 1
  %v3237 = vor.u32 %v3232, %v3236
  %v3239 = vshrl.u32 %v3054, 16
  %v3241 = vshll.u32 %v3054, 16
  %v3243 = vrot.slane %v3241, 1
  %v3244 = vor.u32 %v3239, %v3243
  %v3246 = vshrl.u32 %v3055, 16
  %v3248 = vshll.u32 %v3055, 16
  %v3250 = vrot.slane %v3248, 1
  %v3251 = vor.u32 %v3246, %v3250
  %v3253 = vshrl.u32 %v3056, 16
  %v3255 = vshll.u32 %v3056, 16
  %v3257 = vrot.slane %v3255, 1
  %v3258 = vor.u32 %v3253, %v3257
  %v3260 = vshrl.u32 %v3057, 16
  %v3262 = vshll.u32 %v3057, 16
  %v3264 = vrot.slane %v3262, 1
  %v3265 = vor.u32 %v3260, %v3264
  %v3267 = vshrl.u32 %v3058, 16
  %v3269 = vshll.u32 %v3058, 16
  %v3271 = vrot.slane %v3269, 1
  %v3272 = vor.u32 %v3267, %v3271
  %v3274 = vshrl.u32 %v3059, 16
  %v3276 = vshll.u32 %v3059, 16
  %v3278 = vrot.slane %v3276, 1
  %v3279 = vor.u32 %v3274, %v3278
  %v3281 = vshrl.u32 %v3060, 16
  %v3283 = vshll.u32 %v3060, 16
  %v3285 = vrot.slane %v3283, 1
  %v3286 = vor.u32 %v3281, %v3285
  %v3288 = vshrl.u32 %v3061, 16
  %v3290 = vshll.u32 %v3061, 16
  %v3292 = vrot.slane %v3290, 1
  %v3293 = vor.u32 %v3288, %v3292
  %v3295 = vshrl.u32 %v3062, 16
  %v3297 = vshll.u32 %v3062, 16
  %v3299 = vrot.slane %v3297, 1
  %v3300 = vor.u32 %v3295, %v3299
  %v3302 = vshrl.u32 %v3063, 16
  %v3304 = vshll.u32 %v3063, 16
  %v3306 = vrot.slane %v3304, 1
  %v3307 = vor.u32 %v3302, %v3306
  %v3309 = vshrl.u32 %v3064, 16
  %v3311 = vshll.u32 %v3064, 16
  %v3313 = vrot.slane %v3311, 1
  %v3314 = vor.u32 %v3309, %v3313
  %v3316 = vshrl.u32 %v3065, 16
  %v3318 = vshll.u32 %v3065, 16
  %v3320 = vrot.slane %v3318, 1
  %v3321 = vor.u32 %v3316, %v3320
  %v3323 = vshrl.u32 %v3066, 16
  %v3325 = vshll.u32 %v3066, 16
  %v3327 = vrot.slane %v3325, 1
  %v3328 = vor.u32 %v3323, %v3327
  %v3330 = vshrl.u32 %v3067, 16
  %v3332 = vshll.u32 %v3067, 16
  %v3334 = vrot.slane %v3332, 1
  %v3335 = vor.u32 %v3330, %v3334
  %v3337 = vshrl.u32 %v3068, 16
  %v3339 = vshll.u32 %v3068, 16
  %v3341 = vrot.slane %v3339, 1
  %v3342 = vor.u32 %v3337, %v3341
  %v3344 = vshrl.u32 %v3069, 16
  %v3346 = vshll.u32 %v3069, 16
  %v3348 = vrot.slane %v3346, 1
  %v3349 = vor.u32 %v3344, %v3348
  %v3351 = vshrl.u32 %v3070, 16
  %v3353 = vshll.u32 %v3070, 16
  %v3355 = vrot.slane %v3353, 1
  %v3356 = vor.u32 %v3351, %v3355
  %v3358 = vshrl.u32 %v3071, 16
  %v3360 = vshll.u32 %v3071, 16
  %v3362 = vrot.slane %v3360, 1
  %v3363 = vor.u32 %v3358, %v3362
  %v3365 = vshrl.u32 %v3072, 16
  %v3367 = vshll.u32 %v3072, 16
  %v3369 = vrot.slane %v3367, 1
  %v3370 = vor.u32 %v3365, %v3369
  %v3372 = vshrl.u32 %v3073, 16
  %v3374 = vshll.u32 %v3073, 16
  %v3376 = vrot.slane %v3374, 1
  %v3377 = vor.u32 %v3372, %v3376
  %v3379 = vshrl.u32 %v3074, 16
  %v3381 = vshll.u32 %v3074, 16
  %v3383 = vrot.slane %v3381, 1
  %v3384 = vor.u32 %v3379, %v3383
  %v3386 = vshrl.u32 %v3075, 16
  %v3388 = vshll.u32 %v3075, 16
  %v3390 = vrot.slane %v3388, 1
  %v3391 = vor.u32 %v3386, %v3390
  %v3393 = vshrl.u32 %v3076, 16
  %v3395 = vshll.u32 %v3076, 16
  %v3397 = vrot.slane %v3395, 1
  %v3398 = vor.u32 %v3393, %v3397
  %v3400 = vshrl.u32 %v3077, 16
  %v3402 = vshll.u32 %v3077, 16
  %v3404 = vrot.slane %v3402, 1
  %v3405 = vor.u32 %v3400, %v3404
  %v3407 = vshrl.u32 %v3078, 16
  %v3409 = vshll.u32 %v3078, 16
  %v3411 = vrot.slane %v3409, 1
  %v3412 = vor.u32 %v3407, %v3411
  %v3414 = vshrl.u32 %v3079, 16
  %v3416 = vshll.u32 %v3079, 16
  %v3418 = vrot.slane %v3416, 1
  %v3419 = vor.u32 %v3414, %v3418
  %v3421 = vshrl.u32 %v3080, 16
  %v3423 = vshll.u32 %v3080, 16
  %v3425 = vrot.slane %v3423, 1
  %v3426 = vor.u32 %v3421, %v3425
  %v3428 = vshrl.u32 %v3081, 16
  %v3430 = vshll.u32 %v3081, 16
  %v3432 = vrot.slane %v3430, 1
  %v3433 = vor.u32 %v3428, %v3432
  %v3435 = vshrl.u32 %v3082, 16
  %v3437 = vshll.u32 %v3082, 16
  %v3439 = vrot.slane %v3437, 1
  %v3440 = vor.u32 %v3435, %v3439
  %v3442 = vshrl.u32 %v3083, 16
  %v3444 = vshll.u32 %v3083, 16
  %v3446 = vrot.slane %v3444, 1
  %v3447 = vor.u32 %v3442, %v3446
  %v3449 = vshrl.u32 %v3084, 16
  %v3451 = vshll.u32 %v3084, 16
  %v3453 = vrot.slane %v3451, 1
  %v3454 = vor.u32 %v3449, %v3453
  %v3456 = vshrl.u32 %v3085, 16
  %v3458 = vshll.u32 %v3085, 16
  %v3460 = vrot.slane %v3458, 1
  %v3461 = vor.u32 %v3456, %v3460
  %v3463 = vshrl.u32 %v3086, 16
  %v3465 = vshll.u32 %v3086, 16
  %v3467 = vrot.slane %v3465, 1
  %v3468 = vor.u32 %v3463, %v3467
  %v3470 = vshrl.u32 %v3087, 16
  %v3472 = vshll.u32 %v3087, 16
  %v3474 = vrot.slane %v3472, 1
  %v3475 = vor.u32 %v3470, %v3474
  %v3477 = vshrl.u32 %v3088, 16
  %v3479 = vshll.u32 %v3088, 16
  %v3481 = vrot.slane %v3479, 1
  %v3482 = vor.u32 %v3477, %v3481
  %v3484 = vshrl.u32 %v3089, 16
  %v3486 = vshll.u32 %v3089, 16
  %v3488 = vrot.slane %v3486, 1
  %v3489 = vor.u32 %v3484, %v3488
  %v3491 = vshrl.u32 %v3090, 16
  %v3493 = vshll.u32 %v3090, 16
  %v3495 = vrot.slane %v3493, 1
  %v3496 = vor.u32 %v3491, %v3495
  %v3498 = vshrl.u32 %v3091, 16
  %v3500 = vshll.u32 %v3091, 16
  %v3502 = vrot.slane %v3500, 1
  %v3503 = vor.u32 %v3498, %v3502
  %v3505 = vshrl.u32 %v3092, 16
  %v3507 = vshll.u32 %v3092, 16
  %v3509 = vrot.slane %v3507, 1
  %v3510 = vor.u32 %v3505, %v3509
  %v3512 = vshrl.u32 %v3093, 16
  %v3514 = vshll.u32 %v3093, 16
  %v3516 = vrot.slane %v3514, 1
  %v3517 = vor.u32 %v3512, %v3516
  %v3519 = vshrl.u32 %v3094, 16
  %v3521 = vshll.u32 %v3094, 16
  %v3523 = vrot.slane %v3521, 1
  %v3524 = vor.u32 %v3519, %v3523
  %v3526 = vshrl.u32 %v3095, 16
  %v3528 = vshll.u32 %v3095, 16
  %v3530 = vrot.slane %v3528, 1
  %v3531 = vor.u32 %v3526, %v3530
  %v3533 = vshrl.u32 %v3096, 16
  %v3535 = vshll.u32 %v3096, 16
  %v3537 = vrot.slane %v3535, 1
  %v3538 = vor.u32 %v3533, %v3537
  %v3540 = vshrl.u32 %v3097, 16
  %v3542 = vshll.u32 %v3097, 16
  %v3544 = vrot.slane %v3542, 1
  %v3545 = vor.u32 %v3540, %v3544
  %v3610 = vunpack.c.l.b16 %v81
  %v3611 = vunpack.c.l.b16 %v83
  %v3612 = vunpack.c.l.b16 %v85
  %v3613 = vunpack.c.l.b16 %v87
  %v3614 = vunpack.c.l.b16 %v89
  %v3615 = vunpack.c.l.b16 %v91
  %v3616 = vunpack.c.l.b16 %v93
  %v3617 = vunpack.c.l.b16 %v95
  %v3618 = vunpack.c.l.b16 %v153
  %v3619 = vunpack.c.l.b16 %v155
  %v3620 = vunpack.c.l.b16 %v157
  %v3621 = vunpack.c.l.b16 %v159
  %v3622 = vunpack.c.l.b16 %v161
  %v3623 = vunpack.c.l.b16 %v163
  %v3624 = vunpack.c.l.b16 %v165
  %v3625 = vunpack.c.l.b16 %v167
  %v3626 = vunpack.c.l.b16 %v225
  %v3627 = vunpack.c.l.b16 %v227
  %v3628 = vunpack.c.l.b16 %v229
  %v3629 = vunpack.c.l.b16 %v231
  %v3630 = vunpack.c.l.b16 %v233
  %v3631 = vunpack.c.l.b16 %v235
  %v3632 = vunpack.c.l.b16 %v237
  %v3633 = vunpack.c.l.b16 %v239
  %v3634 = vunpack.c.l.b16 %v297
  %v3635 = vunpack.c.l.b16 %v299
  %v3636 = vunpack.c.l.b16 %v301
  %v3637 = vunpack.c.l.b16 %v303
  %v3638 = vunpack.c.l.b16 %v305
  %v3639 = vunpack.c.l.b16 %v307
  %v3640 = vunpack.c.l.b16 %v309
  %v3641 = vunpack.c.l.b16 %v311
  %v3642 = vunpack.c.l.b16 %v369
  %v3643 = vunpack.c.l.b16 %v371
  %v3644 = vunpack.c.l.b16 %v373
  %v3645 = vunpack.c.l.b16 %v375
  %v3646 = vunpack.c.l.b16 %v377
  %v3647 = vunpack.c.l.b16 %v379
  %v3648 = vunpack.c.l.b16 %v381
  %v3649 = vunpack.c.l.b16 %v383
  %v3650 = vunpack.c.l.b16 %v441
  %v3651 = vunpack.c.l.b16 %v443
  %v3652 = vunpack.c.l.b16 %v445
  %v3653 = vunpack.c.l.b16 %v447
  %v3654 = vunpack.c.l.b16 %v449
  %v3655 = vunpack.c.l.b16 %v451
  %v3656 = vunpack.c.l.b16 %v453
  %v3657 = vunpack.c.l.b16 %v455
  %v3658 = vunpack.c.l.b16 %v513
  %v3659 = vunpack.c.l.b16 %v515
  %v3660 = vunpack.c.l.b16 %v517
  %v3661 = vunpack.c.l.b16 %v519
  %v3662 = vunpack.c.l.b16 %v521
  %v3663 = vunpack.c.l.b16 %v523
  %v3664 = vunpack.c.l.b16 %v525
  %v3665 = vunpack.c.l.b16 %v527
  %v3666 = vunpack.c.l.b16 %v585
  %v3667 = vunpack.c.l.b16 %v587
  %v3668 = vunpack.c.l.b16 %v589
  %v3669 = vunpack.c.l.b16 %v591
  %v3670 = vunpack.c.l.b16 %v593
  %v3671 = vunpack.c.l.b16 %v595
  %v3672 = vunpack.c.l.b16 %v597
  %v3673 = vunpack.c.l.b16 %v599
  %v3674 = vpack.c.b16 %v3610, %v2522
  %v3675 = vpack.c.b16 %v3611, %v2523
  %v3676 = vpack.c.b16 %v3612, %v2524
  %v3677 = vpack.c.b16 %v3613, %v2525
  %v3678 = vpack.c.b16 %v3614, %v2526
  %v3679 = vpack.c.b16 %v3615, %v2527
  %v3680 = vpack.c.b16 %v3616, %v2528
  %v3681 = vpack.c.b16 %v3617, %v2529
  %v3682 = vpack.c.b16 %v3618, %v2530
  %v3683 = vpack.c.b16 %v3619, %v2531
  %v3684 = vpack.c.b16 %v3620, %v2532
  %v3685 = vpack.c.b16 %v3621, %v2533
  %v3686 = vpack.c.b16 %v3622, %v2534
  %v3687 = vpack.c.b16 %v3623, %v2535
  %v3688 = vpack.c.b16 %v3624, %v2536
  %v3689 = vpack.c.b16 %v3625, %v2537
  %v3690 = vpack.c.b16 %v3626, %v2538
  %v3691 = vpack.c.b16 %v3627, %v2539
  %v3692 = vpack.c.b16 %v3628, %v2540
  %v3693 = vpack.c.b16 %v3629, %v2541
  %v3694 = vpack.c.b16 %v3630, %v2542
  %v3695 = vpack.c.b16 %v3631, %v2543
  %v3696 = vpack.c.b16 %v3632, %v2544
  %v3697 = vpack.c.b16 %v3633, %v2545
  %v3698 = vpack.c.b16 %v3634, %v2546
  %v3699 = vpack.c.b16 %v3635, %v2547
  %v3700 = vpack.c.b16 %v3636, %v2548
  %v3701 = vpack.c.b16 %v3637, %v2549
  %v3702 = vpack.c.b16 %v3638, %v2550
  %v3703 = vpack.c.b16 %v3639, %v2551
  %v3704 = vpack.c.b16 %v3640, %v2552
  %v3705 = vpack.c.b16 %v3641, %v2553
  %v3706 = vpack.c.b16 %v3642, %v2554
  %v3707 = vpack.c.b16 %v3643, %v2555
  %v3708 = vpack.c.b16 %v3644, %v2556
  %v3709 = vpack.c.b16 %v3645, %v2557
  %v3710 = vpack.c.b16 %v3646, %v2558
  %v3711 = vpack.c.b16 %v3647, %v2559
  %v3712 = vpack.c.b16 %v3648, %v2560
  %v3713 = vpack.c.b16 %v3649, %v2561
  %v3714 = vpack.c.b16 %v3650, %v2562
  %v3715 = vpack.c.b16 %v3651, %v2563
  %v3716 = vpack.c.b16 %v3652, %v2564
  %v3717 = vpack.c.b16 %v3653, %v2565
  %v3718 = vpack.c.b16 %v3654, %v2566
  %v3719 = vpack.c.b16 %v3655, %v2567
  %v3720 = vpack.c.b16 %v3656, %v2568
  %v3721 = vpack.c.b16 %v3657, %v2569
  %v3722 = vpack.c.b16 %v3658, %v2570
  %v3723 = vpack.c.b16 %v3659, %v2571
  %v3724 = vpack.c.b16 %v3660, %v2572
  %v3725 = vpack.c.b16 %v3661, %v2573
  %v3726 = vpack.c.b16 %v3662, %v2574
  %v3727 = vpack.c.b16 %v3663, %v2575
  %v3728 = vpack.c.b16 %v3664, %v2576
  %v3729 = vpack.c.b16 %v3665, %v2577
  %v3730 = vpack.c.b16 %v3666, %v2578
  %v3731 = vpack.c.b16 %v3667, %v2579
  %v3732 = vpack.c.b16 %v3668, %v2580
  %v3733 = vpack.c.b16 %v3669, %v2581
  %v3734 = vpack.c.b16 %v3670, %v2582
  %v3735 = vpack.c.b16 %v3671, %v2583
  %v3736 = vpack.c.b16 %v3672, %v2584
  %v3737 = vpack.c.b16 %v3673, %v2585
  %v3739 = vshrl.u32 %v3674, 16
  %v3741 = vshll.u32 %v3674, 16
  %v3743 = vrot.slane %v3741, 1
  %v3744 = vor.u32 %v3739, %v3743
  %v3746 = vshrl.u32 %v3675, 16
  %v3748 = vshll.u32 %v3675, 16
  %v3750 = vrot.slane %v3748, 1
  %v3751 = vor.u32 %v3746, %v3750
  %v3753 = vshrl.u32 %v3676, 16
  %v3755 = vshll.u32 %v3676, 16
  %v3757 = vrot.slane %v3755, 1
  %v3758 = vor.u32 %v3753, %v3757
  %v3760 = vshrl.u32 %v3677, 16
  %v3762 = vshll.u32 %v3677, 16
  %v3764 = vrot.slane %v3762, 1
  %v3765 = vor.u32 %v3760, %v3764
  %v3767 = vshrl.u32 %v3678, 16
  %v3769 = vshll.u32 %v3678, 16
  %v3771 = vrot.slane %v3769, 1
  %v3772 = vor.u32 %v3767, %v3771
  %v3774 = vshrl.u32 %v3679, 16
  %v3776 = vshll.u32 %v3679, 16
  %v3778 = vrot.slane %v3776, 1
  %v3779 = vor.u32 %v3774, %v3778
  %v3781 = vshrl.u32 %v3680, 16
  %v3783 = vshll.u32 %v3680, 16
  %v3785 = vrot.slane %v3783, 1
  %v3786 = vor.u32 %v3781, %v3785
  %v3788 = vshrl.u32 %v3681, 16
  %v3790 = vshll.u32 %v3681, 16
  %v3792 = vrot.slane %v3790, 1
  %v3793 = vor.u32 %v3788, %v3792
  %v3795 = vshrl.u32 %v3682, 16
  %v3797 = vshll.u32 %v3682, 16
  %v3799 = vrot.slane %v3797, 1
  %v3800 = vor.u32 %v3795, %v3799
  %v3802 = vshrl.u32 %v3683, 16
  %v3804 = vshll.u32 %v3683, 16
  %v3806 = vrot.slane %v3804, 1
  %v3807 = vor.u32 %v3802, %v3806
  %v3809 = vshrl.u32 %v3684, 16
  %v3811 = vshll.u32 %v3684, 16
  %v3813 = vrot.slane %v3811, 1
  %v3814 = vor.u32 %v3809, %v3813
  %v3816 = vshrl.u32 %v3685, 16
  %v3818 = vshll.u32 %v3685, 16
  %v3820 = vrot.slane %v3818, 1
  %v3821 = vor.u32 %v3816, %v3820
  %v3823 = vshrl.u32 %v3686, 16
  %v3825 = vshll.u32 %v3686, 16
  %v3827 = vrot.slane %v3825, 1
  %v3828 = vor.u32 %v3823, %v3827
  %v3830 = vshrl.u32 %v3687, 16
  %v3832 = vshll.u32 %v3687, 16
  %v3834 = vrot.slane %v3832, 1
  %v3835 = vor.u32 %v3830, %v3834
  %v3837 = vshrl.u32 %v3688, 16
  %v3839 = vshll.u32 %v3688, 16
  %v3841 = vrot.slane %v3839, 1
  %v3842 = vor.u32 %v3837, %v3841
  %v3844 = vshrl.u32 %v3689, 16
  %v3846 = vshll.u32 %v3689, 16
  %v3848 = vrot.slane %v3846, 1
  %v3849 = vor.u32 %v3844, %v3848
  %v3851 = vshrl.u32 %v3690, 16
  %v3853 = vshll.u32 %v3690, 16
  %v3855 = vrot.slane %v3853, 1
  %v3856 = vor.u32 %v3851, %v3855
  %v3858 = vshrl.u32 %v3691, 16
  %v3860 = vshll.u32 %v3691, 16
  %v3862 = vrot.slane %v3860, 1
  %v3863 = vor.u32 %v3858, %v3862
  %v3865 = vshrl.u32 %v3692, 16
  %v3867 = vshll.u32 %v3692, 16
  %v3869 = vrot.slane %v3867, 1
  %v3870 = vor.u32 %v3865, %v3869
  %v3872 = vshrl.u32 %v3693, 16
  %v3874 = vshll.u32 %v3693, 16
  %v3876 = vrot.slane %v3874, 1
  %v3877 = vor.u32 %v3872, %v3876
  %v3879 = vshrl.u32 %v3694, 16
  %v3881 = vshll.u32 %v3694, 16
  %v3883 = vrot.slane %v3881, 1
  %v3884 = vor.u32 %v3879, %v3883
  %v3886 = vshrl.u32 %v3695, 16
  %v3888 = vshll.u32 %v3695, 16
  %v3890 = vrot.slane %v3888, 1
  %v3891 = vor.u32 %v3886, %v3890
  %v3893 = vshrl.u32 %v3696, 16
  %v3895 = vshll.u32 %v3696, 16
  %v3897 = vrot.slane %v3895, 1
  %v3898 = vor.u32 %v3893, %v3897
  %v3900 = vshrl.u32 %v3697, 16
  %v3902 = vshll.u32 %v3697, 16
  %v3904 = vrot.slane %v3902, 1
  %v3905 = vor.u32 %v3900, %v3904
  %v3907 = vshrl.u32 %v3698, 16
  %v3909 = vshll.u32 %v3698, 16
  %v3911 = vrot.slane %v3909, 1
  %v3912 = vor.u32 %v3907, %v3911
  %v3914 = vshrl.u32 %v3699, 16
  %v3916 = vshll.u32 %v3699, 16
  %v3918 = vrot.slane %v3916, 1
  %v3919 = vor.u32 %v3914, %v3918
  %v3921 = vshrl.u32 %v3700, 16
  %v3923 = vshll.u32 %v3700, 16
  %v3925 = vrot.slane %v3923, 1
  %v3926 = vor.u32 %v3921, %v3925
  %v3928 = vshrl.u32 %v3701, 16
  %v3930 = vshll.u32 %v3701, 16
  %v3932 = vrot.slane %v3930, 1
  %v3933 = vor.u32 %v3928, %v3932
  %v3935 = vshrl.u32 %v3702, 16
  %v3937 = vshll.u32 %v3702, 16
  %v3939 = vrot.slane %v3937, 1
  %v3940 = vor.u32 %v3935, %v3939
  %v3942 = vshrl.u32 %v3703, 16
  %v3944 = vshll.u32 %v3703, 16
  %v3946 = vrot.slane %v3944, 1
  %v3947 = vor.u32 %v3942, %v3946
  %v3949 = vshrl.u32 %v3704, 16
  %v3951 = vshll.u32 %v3704, 16
  %v3953 = vrot.slane %v3951, 1
  %v3954 = vor.u32 %v3949, %v3953
  %v3956 = vshrl.u32 %v3705, 16
  %v3958 = vshll.u32 %v3705, 16
  %v3960 = vrot.slane %v3958, 1
  %v3961 = vor.u32 %v3956, %v3960
  %v3963 = vshrl.u32 %v3706, 16
  %v3965 = vshll.u32 %v3706, 16
  %v3967 = vrot.slane %v3965, 1
  %v3968 = vor.u32 %v3963, %v3967
  %v3970 = vshrl.u32 %v3707, 16
  %v3972 = vshll.u32 %v3707, 16
  %v3974 = vrot.slane %v3972, 1
  %v3975 = vor.u32 %v3970, %v3974
  %v3977 = vshrl.u32 %v3708, 16
  %v3979 = vshll.u32 %v3708, 16
  %v3981 = vrot.slane %v3979, 1
  %v3982 = vor.u32 %v3977, %v3981
  %v3984 = vshrl.u32 %v3709, 16
  %v3986 = vshll.u32 %v3709, 16
  %v3988 = vrot.slane %v3986, 1
  %v3989 = vor.u32 %v3984, %v3988
  %v3991 = vshrl.u32 %v3710, 16
  %v3993 = vshll.u32 %v3710, 16
  %v3995 = vrot.slane %v3993, 1
  %v3996 = vor.u32 %v3991, %v3995
  %v3998 = vshrl.u32 %v3711, 16
  %v4000 = vshll.u32 %v3711, 16
  %v4002 = vrot.slane %v4000, 1
  %v4003 = vor.u32 %v3998, %v4002
  %v4005 = vshrl.u32 %v3712, 16
  %v4007 = vshll.u32 %v3712, 16
  %v4009 = vrot.slane %v4007, 1
  %v4010 = vor.u32 %v4005, %v4009
  %v4012 = vshrl.u32 %v3713, 16
  %v4014 = vshll.u32 %v3713, 16
  %v4016 = vrot.slane %v4014, 1
  %v4017 = vor.u32 %v4012, %v4016
  %v4019 = vshrl.u32 %v3714, 16
  %v4021 = vshll.u32 %v3714, 16
  %v4023 = vrot.slane %v4021, 1
  %v4024 = vor.u32 %v4019, %v4023
  %v4026 = vshrl.u32 %v3715, 16
  %v4028 = vshll.u32 %v3715, 16
  %v4030 = vrot.slane %v4028, 1
  %v4031 = vor.u32 %v4026, %v4030
  %v4033 = vshrl.u32 %v3716, 16
  %v4035 = vshll.u32 %v3716, 16
  %v4037 = vrot.slane %v4035, 1
  %v4038 = vor.u32 %v4033, %v4037
  %v4040 = vshrl.u32 %v3717, 16
  %v4042 = vshll.u32 %v3717, 16
  %v4044 = vrot.slane %v4042, 1
  %v4045 = vor.u32 %v4040, %v4044
  %v4047 = vshrl.u32 %v3718, 16
  %v4049 = vshll.u32 %v3718, 16
  %v4051 = vrot.slane %v4049, 1
  %v4052 = vor.u32 %v4047, %v4051
  %v4054 = vshrl.u32 %v3719, 16
  %v4056 = vshll.u32 %v3719, 16
  %v4058 = vrot.slane %v4056, 1
  %v4059 = vor.u32 %v4054, %v4058
  %v4061 = vshrl.u32 %v3720, 16
  %v4063 = vshll.u32 %v3720, 16
  %v4065 = vrot.slane %v4063, 1
  %v4066 = vor.u32 %v4061, %v4065
  %v4068 = vshrl.u32 %v3721, 16
  %v4070 = vshll.u32 %v3721, 16
  %v4072 = vrot.slane %v4070, 1
  %v4073 = vor.u32 %v4068, %v4072
  %v4075 = vshrl.u32 %v3722, 16
  %v4077 = vshll.u32 %v3722, 16
  %v4079 = vrot.slane %v4077, 1
  %v4080 = vor.u32 %v4075, %v4079
  %v4082 = vshrl.u32 %v3723, 16
  %v4084 = vshll.u32 %v3723, 16
  %v4086 = vrot.slane %v4084, 1
  %v4087 = vor.u32 %v4082, %v4086
  %v4089 = vshrl.u32 %v3724, 16
  %v4091 = vshll.u32 %v3724, 16
  %v4093 = vrot.slane %v4091, 1
  %v4094 = vor.u32 %v4089, %v4093
  %v4096 = vshrl.u32 %v3725, 16
  %v4098 = vshll.u32 %v3725, 16
  %v4100 = vrot.slane %v4098, 1
  %v4101 = vor.u32 %v4096, %v4100
  %v4103 = vshrl.u32 %v3726, 16
  %v4105 = vshll.u32 %v3726, 16
  %v4107 = vrot.slane %v4105, 1
  %v4108 = vor.u32 %v4103, %v4107
  %v4110 = vshrl.u32 %v3727, 16
  %v4112 = vshll.u32 %v3727, 16
  %v4114 = vrot.slane %v4112, 1
  %v4115 = vor.u32 %v4110, %v4114
  %v4117 = vshrl.u32 %v3728, 16
  %v4119 = vshll.u32 %v3728, 16
  %v4121 = vrot.slane %v4119, 1
  %v4122 = vor.u32 %v4117, %v4121
  %v4124 = vshrl.u32 %v3729, 16
  %v4126 = vshll.u32 %v3729, 16
  %v4128 = vrot.slane %v4126, 1
  %v4129 = vor.u32 %v4124, %v4128
  %v4131 = vshrl.u32 %v3730, 16
  %v4133 = vshll.u32 %v3730, 16
  %v4135 = vrot.slane %v4133, 1
  %v4136 = vor.u32 %v4131, %v4135
  %v4138 = vshrl.u32 %v3731, 16
  %v4140 = vshll.u32 %v3731, 16
  %v4142 = vrot.slane %v4140, 1
  %v4143 = vor.u32 %v4138, %v4142
  %v4145 = vshrl.u32 %v3732, 16
  %v4147 = vshll.u32 %v3732, 16
  %v4149 = vrot.slane %v4147, 1
  %v4150 = vor.u32 %v4145, %v4149
  %v4152 = vshrl.u32 %v3733, 16
  %v4154 = vshll.u32 %v3733, 16
  %v4156 = vrot.slane %v4154, 1
  %v4157 = vor.u32 %v4152, %v4156
  %v4159 = vshrl.u32 %v3734, 16
  %v4161 = vshll.u32 %v3734, 16
  %v4163 = vrot.slane %v4161, 1
  %v4164 = vor.u32 %v4159, %v4163
  %v4166 = vshrl.u32 %v3735, 16
  %v4168 = vshll.u32 %v3735, 16
  %v4170 = vrot.slane %v4168, 1
  %v4171 = vor.u32 %v4166, %v4170
  %v4173 = vshrl.u32 %v3736, 16
  %v4175 = vshll.u32 %v3736, 16
  %v4177 = vrot.slane %v4175, 1
  %v4178 = vor.u32 %v4173, %v4177
  %v4180 = vshrl.u32 %v3737, 16
  %v4182 = vshll.u32 %v3737, 16
  %v4184 = vrot.slane %v4182, 1
  %v4185 = vor.u32 %v4180, %v4184
  %4186 = vrot.lane.b32.xlu0 %v3744, 64
  %v4187 = vpop.permute.xlu0 %4186
  %4188 = vrot.lane.b32.xlu0 %v3751, 64
  %v4189 = vpop.permute.xlu0 %4188
  %4190 = vrot.lane.b32.xlu0 %v3758, 64
  %v4191 = vpop.permute.xlu0 %4190
  %4192 = vrot.lane.b32.xlu0 %v3765, 64
  %v4193 = vpop.permute.xlu0 %4192
  %4194 = vrot.lane.b32.xlu0 %v3772, 64
  %v4195 = vpop.permute.xlu0 %4194
  %4196 = vrot.lane.b32.xlu0 %v3779, 64
  %v4197 = vpop.permute.xlu0 %4196
  %4198 = vrot.lane.b32.xlu0 %v3786, 64
  %v4199 = vpop.permute.xlu0 %4198
  %4200 = vrot.lane.b32.xlu0 %v3793, 64
  %v4201 = vpop.permute.xlu0 %4200
  %4202 = vrot.lane.b32.xlu0 %v3800, 64
  %v4203 = vpop.permute.xlu0 %4202
  %4204 = vrot.lane.b32.xlu0 %v3807, 64
  %v4205 = vpop.permute.xlu0 %4204
  %4206 = vrot.lane.b32.xlu0 %v3814, 64
  %v4207 = vpop.permute.xlu0 %4206
  %4208 = vrot.lane.b32.xlu0 %v3821, 64
  %v4209 = vpop.permute.xlu0 %4208
  %4210 = vrot.lane.b32.xlu0 %v3828, 64
  %v4211 = vpop.permute.xlu0 %4210
  %4212 = vrot.lane.b32.xlu0 %v3835, 64
  %v4213 = vpop.permute.xlu0 %4212
  %4214 = vrot.lane.b32.xlu0 %v3842, 64
  %v4215 = vpop.permute.xlu0 %4214
  %4216 = vrot.lane.b32.xlu0 %v3849, 64
  %v4217 = vpop.permute.xlu0 %4216
  %4218 = vrot.lane.b32.xlu0 %v3856, 64
  %v4219 = vpop.permute.xlu0 %4218
  %4220 = vrot.lane.b32.xlu0 %v3863, 64
  %v4221 = vpop.permute.xlu0 %4220
  %4222 = vrot.lane.b32.xlu0 %v3870, 64
  %v4223 = vpop.permute.xlu0 %4222
  %4224 = vrot.lane.b32.xlu0 %v3877, 64
  %v4225 = vpop.permute.xlu0 %4224
  %4226 = vrot.lane.b32.xlu0 %v3884, 64
  %v4227 = vpop.permute.xlu0 %4226
  %4228 = vrot.lane.b32.xlu0 %v3891, 64
  %v4229 = vpop.permute.xlu0 %4228
  %4230 = vrot.lane.b32.xlu0 %v3898, 64
  %v4231 = vpop.permute.xlu0 %4230
  %4232 = vrot.lane.b32.xlu0 %v3905, 64
  %v4233 = vpop.permute.xlu0 %4232
  %4234 = vrot.lane.b32.xlu0 %v3912, 64
  %v4235 = vpop.permute.xlu0 %4234
  %4236 = vrot.lane.b32.xlu0 %v3919, 64
  %v4237 = vpop.permute.xlu0 %4236
  %4238 = vrot.lane.b32.xlu0 %v3926, 64
  %v4239 = vpop.permute.xlu0 %4238
  %4240 = vrot.lane.b32.xlu0 %v3933, 64
  %v4241 = vpop.permute.xlu0 %4240
  %4242 = vrot.lane.b32.xlu0 %v3940, 64
  %v4243 = vpop.permute.xlu0 %4242
  %4244 = vrot.lane.b32.xlu0 %v3947, 64
  %v4245 = vpop.permute.xlu0 %4244
  %4246 = vrot.lane.b32.xlu0 %v3954, 64
  %v4247 = vpop.permute.xlu0 %4246
  %4248 = vrot.lane.b32.xlu0 %v3961, 64
  %v4249 = vpop.permute.xlu0 %4248
  %4250 = vrot.lane.b32.xlu0 %v3968, 64
  %v4251 = vpop.permute.xlu0 %4250
  %4252 = vrot.lane.b32.xlu0 %v3975, 64
  %v4253 = vpop.permute.xlu0 %4252
  %4254 = vrot.lane.b32.xlu0 %v3982, 64
  %v4255 = vpop.permute.xlu0 %4254
  %4256 = vrot.lane.b32.xlu0 %v3989, 64
  %v4257 = vpop.permute.xlu0 %4256
  %4258 = vrot.lane.b32.xlu0 %v3996, 64
  %v4259 = vpop.permute.xlu0 %4258
  %4260 = vrot.lane.b32.xlu0 %v4003, 64
  %v4261 = vpop.permute.xlu0 %4260
  %4262 = vrot.lane.b32.xlu0 %v4010, 64
  %v4263 = vpop.permute.xlu0 %4262
  %4264 = vrot.lane.b32.xlu0 %v4017, 64
  %v4265 = vpop.permute.xlu0 %4264
  %4266 = vrot.lane.b32.xlu0 %v4024, 64
  %v4267 = vpop.permute.xlu0 %4266
  %4268 = vrot.lane.b32.xlu0 %v4031, 64
  %v4269 = vpop.permute.xlu0 %4268
  %4270 = vrot.lane.b32.xlu0 %v4038, 64
  %v4271 = vpop.permute.xlu0 %4270
  %4272 = vrot.lane.b32.xlu0 %v4045, 64
  %v4273 = vpop.permute.xlu0 %4272
  %4274 = vrot.lane.b32.xlu0 %v4052, 64
  %v4275 = vpop.permute.xlu0 %4274
  %4276 = vrot.lane.b32.xlu0 %v4059, 64
  %v4277 = vpop.permute.xlu0 %4276
  %4278 = vrot.lane.b32.xlu0 %v4066, 64
  %v4279 = vpop.permute.xlu0 %4278
  %4280 = vrot.lane.b32.xlu0 %v4073, 64
  %v4281 = vpop.permute.xlu0 %4280
  %4282 = vrot.lane.b32.xlu0 %v4080, 64
  %v4283 = vpop.permute.xlu0 %4282
  %4284 = vrot.lane.b32.xlu0 %v4087, 64
  %v4285 = vpop.permute.xlu0 %4284
  %4286 = vrot.lane.b32.xlu0 %v4094, 64
  %v4287 = vpop.permute.xlu0 %4286
  %4288 = vrot.lane.b32.xlu0 %v4101, 64
  %v4289 = vpop.permute.xlu0 %4288
  %4290 = vrot.lane.b32.xlu0 %v4108, 64
  %v4291 = vpop.permute.xlu0 %4290
  %4292 = vrot.lane.b32.xlu0 %v4115, 64
  %v4293 = vpop.permute.xlu0 %4292
  %4294 = vrot.lane.b32.xlu0 %v4122, 64
  %v4295 = vpop.permute.xlu0 %4294
  %4296 = vrot.lane.b32.xlu0 %v4129, 64
  %v4297 = vpop.permute.xlu0 %4296
  %4298 = vrot.lane.b32.xlu0 %v4136, 64
  %v4299 = vpop.permute.xlu0 %4298
  %4300 = vrot.lane.b32.xlu0 %v4143, 64
  %v4301 = vpop.permute.xlu0 %4300
  %4302 = vrot.lane.b32.xlu0 %v4150, 64
  %v4303 = vpop.permute.xlu0 %4302
  %4304 = vrot.lane.b32.xlu0 %v4157, 64
  %v4305 = vpop.permute.xlu0 %4304
  %4306 = vrot.lane.b32.xlu0 %v4164, 64
  %v4307 = vpop.permute.xlu0 %4306
  %4308 = vrot.lane.b32.xlu0 %v4171, 64
  %v4309 = vpop.permute.xlu0 %4308
  %4310 = vrot.lane.b32.xlu0 %v4178, 64
  %v4311 = vpop.permute.xlu0 %4310
  %4312 = vrot.lane.b32.xlu0 %v4185, 64
  %v4313 = vpop.permute.xlu0 %4312
  %v4322 = vunpack.c.l.b16 %v60
  %v4323 = vunpack.c.l.b16 %v132
  %v4324 = vunpack.c.l.b16 %v204
  %v4325 = vunpack.c.l.b16 %v276
  %v4326 = vunpack.c.l.b16 %v348
  %v4327 = vunpack.c.l.b16 %v420
  %v4328 = vunpack.c.l.b16 %v492
  %v4329 = vunpack.c.l.b16 %v564
  %v4330 = vpack.c.b16 %v4322, %v4322
  %v4331 = vpack.c.b16 %v4323, %v4323
  %v4332 = vpack.c.b16 %v4324, %v4324
  %v4333 = vpack.c.b16 %v4325, %v4325
  %v4334 = vpack.c.b16 %v4326, %v4326
  %v4335 = vpack.c.b16 %v4327, %v4327
  %v4336 = vpack.c.b16 %v4328, %v4328
  %v4337 = vpack.c.b16 %v4329, %v4329
  %4338 = vrot.lane.b32.xlu0 %v4330, 64
  %v4339 = vpop.permute.xlu0 %4338
  %4340 = vrot.lane.b32.xlu0 %v4331, 64
  %v4341 = vpop.permute.xlu0 %4340
  %4342 = vrot.lane.b32.xlu0 %v4332, 64
  %v4343 = vpop.permute.xlu0 %4342
  %4344 = vrot.lane.b32.xlu0 %v4333, 64
  %v4345 = vpop.permute.xlu0 %4344
  %4346 = vrot.lane.b32.xlu0 %v4334, 64
  %v4347 = vpop.permute.xlu0 %4346
  %4348 = vrot.lane.b32.xlu0 %v4335, 64
  %v4349 = vpop.permute.xlu0 %4348
  %4350 = vrot.lane.b32.xlu0 %v4336, 64
  %v4351 = vpop.permute.xlu0 %4350
  %4352 = vrot.lane.b32.xlu0 %v4337, 64
  %v4353 = vpop.permute.xlu0 %4352
  %v4370 = vunpack.c.l.b16 %v42
  %v4371 = vunpack.c.l.b16 %v43
  %v4372 = vunpack.c.l.b16 %v114
  %v4373 = vunpack.c.l.b16 %v115
  %v4374 = vunpack.c.l.b16 %v186
  %v4375 = vunpack.c.l.b16 %v187
  %v4376 = vunpack.c.l.b16 %v258
  %v4377 = vunpack.c.l.b16 %v259
  %v4378 = vunpack.c.l.b16 %v330
  %v4379 = vunpack.c.l.b16 %v331
  %v4380 = vunpack.c.l.b16 %v402
  %v4381 = vunpack.c.l.b16 %v403
  %v4382 = vunpack.c.l.b16 %v474
  %v4383 = vunpack.c.l.b16 %v475
  %v4384 = vunpack.c.l.b16 %v546
  %v4385 = vunpack.c.l.b16 %v547
  %v4386 = vpack.c.b16 %v4371, %v4370
  %v4387 = vpack.c.b16 %v4373, %v4372
  %v4388 = vpack.c.b16 %v4375, %v4374
  %v4389 = vpack.c.b16 %v4377, %v4376
  %v4390 = vpack.c.b16 %v4379, %v4378
  %v4391 = vpack.c.b16 %v4381, %v4380
  %v4392 = vpack.c.b16 %v4383, %v4382
  %v4393 = vpack.c.b16 %v4385, %v4384
  %v4395 = vshrl.u32 %v4386, 16
  %v4397 = vshll.u32 %v4386, 16
  %v4399 = vrot.slane %v4397, 1
  %v4400 = vor.u32 %v4395, %v4399
  %v4402 = vshrl.u32 %v4387, 16
  %v4404 = vshll.u32 %v4387, 16
  %v4406 = vrot.slane %v4404, 1
  %v4407 = vor.u32 %v4402, %v4406
  %v4409 = vshrl.u32 %v4388, 16
  %v4411 = vshll.u32 %v4388, 16
  %v4413 = vrot.slane %v4411, 1
  %v4414 = vor.u32 %v4409, %v4413
  %v4416 = vshrl.u32 %v4389, 16
  %v4418 = vshll.u32 %v4389, 16
  %v4420 = vrot.slane %v4418, 1
  %v4421 = vor.u32 %v4416, %v4420
  %v4423 = vshrl.u32 %v4390, 16
  %v4425 = vshll.u32 %v4390, 16
  %v4427 = vrot.slane %v4425, 1
  %v4428 = vor.u32 %v4423, %v4427
  %v4430 = vshrl.u32 %v4391, 16
  %v4432 = vshll.u32 %v4391, 16
  %v4434 = vrot.slane %v4432, 1
  %v4435 = vor.u32 %v4430, %v4434
  %v4437 = vshrl.u32 %v4392, 16
  %v4439 = vshll.u32 %v4392, 16
  %v4441 = vrot.slane %v4439, 1
  %v4442 = vor.u32 %v4437, %v4441
  %v4444 = vshrl.u32 %v4393, 16
  %v4446 = vshll.u32 %v4393, 16
  %v4448 = vrot.slane %v4446, 1
  %v4449 = vor.u32 %v4444, %v4448
  %v4458 = vunpack.c.l.b16 %v61
  %v4459 = vunpack.c.l.b16 %v133
  %v4460 = vunpack.c.l.b16 %v205
  %v4461 = vunpack.c.l.b16 %v277
  %v4462 = vunpack.c.l.b16 %v349
  %v4463 = vunpack.c.l.b16 %v421
  %v4464 = vunpack.c.l.b16 %v493
  %v4465 = vunpack.c.l.b16 %v565
  %v4466 = vpack.c.b16 %v4458, %v4322
  %v4467 = vpack.c.b16 %v4459, %v4323
  %v4468 = vpack.c.b16 %v4460, %v4324
  %v4469 = vpack.c.b16 %v4461, %v4325
  %v4470 = vpack.c.b16 %v4462, %v4326
  %v4471 = vpack.c.b16 %v4463, %v4327
  %v4472 = vpack.c.b16 %v4464, %v4328
  %v4473 = vpack.c.b16 %v4465, %v4329
  %v4475 = vshrl.u32 %v4466, 16
  %v4477 = vshll.u32 %v4466, 16
  %v4479 = vrot.slane %v4477, 1
  %v4480 = vor.u32 %v4475, %v4479
  %v4482 = vshrl.u32 %v4467, 16
  %v4484 = vshll.u32 %v4467, 16
  %v4486 = vrot.slane %v4484, 1
  %v4487 = vor.u32 %v4482, %v4486
  %v4489 = vshrl.u32 %v4468, 16
  %v4491 = vshll.u32 %v4468, 16
  %v4493 = vrot.slane %v4491, 1
  %v4494 = vor.u32 %v4489, %v4493
  %v4496 = vshrl.u32 %v4469, 16
  %v4498 = vshll.u32 %v4469, 16
  %v4500 = vrot.slane %v4498, 1
  %v4501 = vor.u32 %v4496, %v4500
  %v4503 = vshrl.u32 %v4470, 16
  %v4505 = vshll.u32 %v4470, 16
  %v4507 = vrot.slane %v4505, 1
  %v4508 = vor.u32 %v4503, %v4507
  %v4510 = vshrl.u32 %v4471, 16
  %v4512 = vshll.u32 %v4471, 16
  %v4514 = vrot.slane %v4512, 1
  %v4515 = vor.u32 %v4510, %v4514
  %v4517 = vshrl.u32 %v4472, 16
  %v4519 = vshll.u32 %v4472, 16
  %v4521 = vrot.slane %v4519, 1
  %v4522 = vor.u32 %v4517, %v4521
  %v4524 = vshrl.u32 %v4473, 16
  %v4526 = vshll.u32 %v4473, 16
  %v4528 = vrot.slane %v4526, 1
  %v4529 = vor.u32 %v4524, %v4528
  %4530 = vrot.lane.b32.xlu0 %v4480, 64
  %v4531 = vpop.permute.xlu0 %4530
  %4532 = vrot.lane.b32.xlu0 %v4487, 64
  %v4533 = vpop.permute.xlu0 %4532
  %4534 = vrot.lane.b32.xlu0 %v4494, 64
  %v4535 = vpop.permute.xlu0 %4534
  %4536 = vrot.lane.b32.xlu0 %v4501, 64
  %v4537 = vpop.permute.xlu0 %4536
  %4538 = vrot.lane.b32.xlu0 %v4508, 64
  %v4539 = vpop.permute.xlu0 %4538
  %4540 = vrot.lane.b32.xlu0 %v4515, 64
  %v4541 = vpop.permute.xlu0 %4540
  %4542 = vrot.lane.b32.xlu0 %v4522, 64
  %v4543 = vpop.permute.xlu0 %4542
  %4544 = vrot.lane.b32.xlu0 %v4529, 64
  %v4545 = vpop.permute.xlu0 %4544
  %v4554 = vunpack.c.l.b16 %v96
  %v4555 = vunpack.c.l.b16 %v168
  %v4556 = vunpack.c.l.b16 %v240
  %v4557 = vunpack.c.l.b16 %v312
  %v4558 = vunpack.c.l.b16 %v384
  %v4559 = vunpack.c.l.b16 %v456
  %v4560 = vunpack.c.l.b16 %v528
  %v4561 = vunpack.c.l.b16 %v600
  %v4562 = vpack.c.b16 %v4554, %v4554
  %v4563 = vpack.c.b16 %v4555, %v4555
  %v4564 = vpack.c.b16 %v4556, %v4556
  %v4565 = vpack.c.b16 %v4557, %v4557
  %v4566 = vpack.c.b16 %v4558, %v4558
  %v4567 = vpack.c.b16 %v4559, %v4559
  %v4568 = vpack.c.b16 %v4560, %v4560
  %v4569 = vpack.c.b16 %v4561, %v4561
  %4570 = vrot.lane.b32.xlu0 %v4562, 64
  %v4571 = vpop.permute.xlu0 %4570
  %4572 = vrot.lane.b32.xlu0 %v4563, 64
  %v4573 = vpop.permute.xlu0 %4572
  %4574 = vrot.lane.b32.xlu0 %v4564, 64
  %v4575 = vpop.permute.xlu0 %4574
  %4576 = vrot.lane.b32.xlu0 %v4565, 64
  %v4577 = vpop.permute.xlu0 %4576
  %4578 = vrot.lane.b32.xlu0 %v4566, 64
  %v4579 = vpop.permute.xlu0 %4578
  %4580 = vrot.lane.b32.xlu0 %v4567, 64
  %v4581 = vpop.permute.xlu0 %4580
  %4582 = vrot.lane.b32.xlu0 %v4568, 64
  %v4583 = vpop.permute.xlu0 %4582
  %4584 = vrot.lane.b32.xlu0 %v4569, 64
  %v4585 = vpop.permute.xlu0 %4584
  %v4602 = vunpack.c.l.b16 %v78
  %v4603 = vunpack.c.l.b16 %v79
  %v4604 = vunpack.c.l.b16 %v150
  %v4605 = vunpack.c.l.b16 %v151
  %v4606 = vunpack.c.l.b16 %v222
  %v4607 = vunpack.c.l.b16 %v223
  %v4608 = vunpack.c.l.b16 %v294
  %v4609 = vunpack.c.l.b16 %v295
  %v4610 = vunpack.c.l.b16 %v366
  %v4611 = vunpack.c.l.b16 %v367
  %v4612 = vunpack.c.l.b16 %v438
  %v4613 = vunpack.c.l.b16 %v439
  %v4614 = vunpack.c.l.b16 %v510
  %v4615 = vunpack.c.l.b16 %v511
  %v4616 = vunpack.c.l.b16 %v582
  %v4617 = vunpack.c.l.b16 %v583
  %v4618 = vpack.c.b16 %v4603, %v4602
  %v4619 = vpack.c.b16 %v4605, %v4604
  %v4620 = vpack.c.b16 %v4607, %v4606
  %v4621 = vpack.c.b16 %v4609, %v4608
  %v4622 = vpack.c.b16 %v4611, %v4610
  %v4623 = vpack.c.b16 %v4613, %v4612
  %v4624 = vpack.c.b16 %v4615, %v4614
  %v4625 = vpack.c.b16 %v4617, %v4616
  %v4627 = vshrl.u32 %v4618, 16
  %v4629 = vshll.u32 %v4618, 16
  %v4631 = vrot.slane %v4629, 1
  %v4632 = vor.u32 %v4627, %v4631
  %v4634 = vshrl.u32 %v4619, 16
  %v4636 = vshll.u32 %v4619, 16
  %v4638 = vrot.slane %v4636, 1
  %v4639 = vor.u32 %v4634, %v4638
  %v4641 = vshrl.u32 %v4620, 16
  %v4643 = vshll.u32 %v4620, 16
  %v4645 = vrot.slane %v4643, 1
  %v4646 = vor.u32 %v4641, %v4645
  %v4648 = vshrl.u32 %v4621, 16
  %v4650 = vshll.u32 %v4621, 16
  %v4652 = vrot.slane %v4650, 1
  %v4653 = vor.u32 %v4648, %v4652
  %v4655 = vshrl.u32 %v4622, 16
  %v4657 = vshll.u32 %v4622, 16
  %v4659 = vrot.slane %v4657, 1
  %v4660 = vor.u32 %v4655, %v4659
  %v4662 = vshrl.u32 %v4623, 16
  %v4664 = vshll.u32 %v4623, 16
  %v4666 = vrot.slane %v4664, 1
  %v4667 = vor.u32 %v4662, %v4666
  %v4669 = vshrl.u32 %v4624, 16
  %v4671 = vshll.u32 %v4624, 16
  %v4673 = vrot.slane %v4671, 1
  %v4674 = vor.u32 %v4669, %v4673
  %v4676 = vshrl.u32 %v4625, 16
  %v4678 = vshll.u32 %v4625, 16
  %v4680 = vrot.slane %v4678, 1
  %v4681 = vor.u32 %v4676, %v4680
  %v4690 = vunpack.c.l.b16 %v97
  %v4691 = vunpack.c.l.b16 %v169
  %v4692 = vunpack.c.l.b16 %v241
  %v4693 = vunpack.c.l.b16 %v313
  %v4694 = vunpack.c.l.b16 %v385
  %v4695 = vunpack.c.l.b16 %v457
  %v4696 = vunpack.c.l.b16 %v529
  %v4697 = vunpack.c.l.b16 %v601
  %v4698 = vpack.c.b16 %v4690, %v4554
  %v4699 = vpack.c.b16 %v4691, %v4555
  %v4700 = vpack.c.b16 %v4692, %v4556
  %v4701 = vpack.c.b16 %v4693, %v4557
  %v4702 = vpack.c.b16 %v4694, %v4558
  %v4703 = vpack.c.b16 %v4695, %v4559
  %v4704 = vpack.c.b16 %v4696, %v4560
  %v4705 = vpack.c.b16 %v4697, %v4561
  %v4707 = vshrl.u32 %v4698, 16
  %v4709 = vshll.u32 %v4698, 16
  %v4711 = vrot.slane %v4709, 1
  %v4712 = vor.u32 %v4707, %v4711
  %v4714 = vshrl.u32 %v4699, 16
  %v4716 = vshll.u32 %v4699, 16
  %v4718 = vrot.slane %v4716, 1
  %v4719 = vor.u32 %v4714, %v4718
  %v4721 = vshrl.u32 %v4700, 16
  %v4723 = vshll.u32 %v4700, 16
  %v4725 = vrot.slane %v4723, 1
  %v4726 = vor.u32 %v4721, %v4725
  %v4728 = vshrl.u32 %v4701, 16
  %v4730 = vshll.u32 %v4701, 16
  %v4732 = vrot.slane %v4730, 1
  %v4733 = vor.u32 %v4728, %v4732
  %v4735 = vshrl.u32 %v4702, 16
  %v4737 = vshll.u32 %v4702, 16
  %v4739 = vrot.slane %v4737, 1
  %v4740 = vor.u32 %v4735, %v4739
  %v4742 = vshrl.u32 %v4703, 16
  %v4744 = vshll.u32 %v4703, 16
  %v4746 = vrot.slane %v4744, 1
  %v4747 = vor.u32 %v4742, %v4746
  %v4749 = vshrl.u32 %v4704, 16
  %v4751 = vshll.u32 %v4704, 16
  %v4753 = vrot.slane %v4751, 1
  %v4754 = vor.u32 %v4749, %v4753
  %v4756 = vshrl.u32 %v4705, 16
  %v4758 = vshll.u32 %v4705, 16
  %v4760 = vrot.slane %v4758, 1
  %v4761 = vor.u32 %v4756, %v4760
  %4762 = vrot.lane.b32.xlu0 %v4712, 64
  %v4763 = vpop.permute.xlu0 %4762
  %4764 = vrot.lane.b32.xlu0 %v4719, 64
  %v4765 = vpop.permute.xlu0 %4764
  %4766 = vrot.lane.b32.xlu0 %v4726, 64
  %v4767 = vpop.permute.xlu0 %4766
  %4768 = vrot.lane.b32.xlu0 %v4733, 64
  %v4769 = vpop.permute.xlu0 %4768
  %4770 = vrot.lane.b32.xlu0 %v4740, 64
  %v4771 = vpop.permute.xlu0 %4770
  %4772 = vrot.lane.b32.xlu0 %v4747, 64
  %v4773 = vpop.permute.xlu0 %4772
  %4774 = vrot.lane.b32.xlu0 %v4754, 64
  %v4775 = vpop.permute.xlu0 %4774
  %4776 = vrot.lane.b32.xlu0 %v4761, 64
  %v4777 = vpop.permute.xlu0 %4776
  %vm4778 = vcmask 523264
  %v4781 = vsel %vm4778, %v26, %v795
  %v4784 = vsel %vm4778, %v28, %v797
  %v4787 = vsel %vm4778, %v30, %v799
  %v4790 = vsel %vm4778, %v32, %v801
  %v4793 = vsel %vm4778, %v34, %v803
  %v4796 = vsel %vm4778, %v36, %v805
  %v4799 = vsel %vm4778, %v38, %v807
  %v4802 = vsel %vm4778, %v40, %v809
  %v4805 = vsel %vm4778, %v98, %v811
  %v4808 = vsel %vm4778, %v100, %v813
  %v4811 = vsel %vm4778, %v102, %v815
  %v4814 = vsel %vm4778, %v104, %v817
  %v4817 = vsel %vm4778, %v106, %v819
  %v4820 = vsel %vm4778, %v108, %v821
  %v4823 = vsel %vm4778, %v110, %v823
  %v4826 = vsel %vm4778, %v112, %v825
  %v4829 = vsel %vm4778, %v170, %v827
  %v4832 = vsel %vm4778, %v172, %v829
  %v4835 = vsel %vm4778, %v174, %v831
  %v4838 = vsel %vm4778, %v176, %v833
  %v4841 = vsel %vm4778, %v178, %v835
  %v4844 = vsel %vm4778, %v180, %v837
  %v4847 = vsel %vm4778, %v182, %v839
  %v4850 = vsel %vm4778, %v184, %v841
  %v4853 = vsel %vm4778, %v242, %v843
  %v4856 = vsel %vm4778, %v244, %v845
  %v4859 = vsel %vm4778, %v246, %v847
  %v4862 = vsel %vm4778, %v248, %v849
  %v4865 = vsel %vm4778, %v250, %v851
  %v4868 = vsel %vm4778, %v252, %v853
  %v4871 = vsel %vm4778, %v254, %v855
  %v4874 = vsel %vm4778, %v256, %v857
  %v4877 = vsel %vm4778, %v314, %v859
  %v4880 = vsel %vm4778, %v316, %v861
  %v4883 = vsel %vm4778, %v318, %v863
  %v4886 = vsel %vm4778, %v320, %v865
  %v4889 = vsel %vm4778, %v322, %v867
  %v4892 = vsel %vm4778, %v324, %v869
  %v4895 = vsel %vm4778, %v326, %v871
  %v4898 = vsel %vm4778, %v328, %v873
  %v4901 = vsel %vm4778, %v386, %v875
  %v4904 = vsel %vm4778, %v388, %v877
  %v4907 = vsel %vm4778, %v390, %v879
  %v4910 = vsel %vm4778, %v392, %v881
  %v4913 = vsel %vm4778, %v394, %v883
  %v4916 = vsel %vm4778, %v396, %v885
  %v4919 = vsel %vm4778, %v398, %v887
  %v4922 = vsel %vm4778, %v400, %v889
  %v4925 = vsel %vm4778, %v458, %v891
  %v4928 = vsel %vm4778, %v460, %v893
  %v4931 = vsel %vm4778, %v462, %v895
  %v4934 = vsel %vm4778, %v464, %v897
  %v4937 = vsel %vm4778, %v466, %v899
  %v4940 = vsel %vm4778, %v468, %v901
  %v4943 = vsel %vm4778, %v470, %v903
  %v4946 = vsel %vm4778, %v472, %v905
  %v4949 = vsel %vm4778, %v530, %v907
  %v4952 = vsel %vm4778, %v532, %v909
  %v4955 = vsel %vm4778, %v534, %v911
  %v4958 = vsel %vm4778, %v536, %v913
  %v4961 = vsel %vm4778, %v538, %v915
  %v4964 = vsel %vm4778, %v540, %v917
  %v4967 = vsel %vm4778, %v542, %v919
  %v4970 = vsel %vm4778, %v544, %v921
  %v4973 = vsel %vm4778, %v1248, %v2331
  %v4976 = vsel %vm4778, %v1255, %v2333
  %v4979 = vsel %vm4778, %v1262, %v2335
  %v4982 = vsel %vm4778, %v1269, %v2337
  %v4985 = vsel %vm4778, %v1276, %v2339
  %v4988 = vsel %vm4778, %v1283, %v2341
  %v4991 = vsel %vm4778, %v1290, %v2343
  %v4994 = vsel %vm4778, %v1297, %v2345
  %v4997 = vsel %vm4778, %v1304, %v2347
  %v5000 = vsel %vm4778, %v1311, %v2349
  %v5003 = vsel %vm4778, %v1318, %v2351
  %v5006 = vsel %vm4778, %v1325, %v2353
  %v5009 = vsel %vm4778, %v1332, %v2355
  %v5012 = vsel %vm4778, %v1339, %v2357
  %v5015 = vsel %vm4778, %v1346, %v2359
  %v5018 = vsel %vm4778, %v1353, %v2361
  %v5021 = vsel %vm4778, %v1360, %v2363
  %v5024 = vsel %vm4778, %v1367, %v2365
  %v5027 = vsel %vm4778, %v1374, %v2367
  %v5030 = vsel %vm4778, %v1381, %v2369
  %v5033 = vsel %vm4778, %v1388, %v2371
  %v5036 = vsel %vm4778, %v1395, %v2373
  %v5039 = vsel %vm4778, %v1402, %v2375
  %v5042 = vsel %vm4778, %v1409, %v2377
  %v5045 = vsel %vm4778, %v1416, %v2379
  %v5048 = vsel %vm4778, %v1423, %v2381
  %v5051 = vsel %vm4778, %v1430, %v2383
  %v5054 = vsel %vm4778, %v1437, %v2385
  %v5057 = vsel %vm4778, %v1444, %v2387
  %v5060 = vsel %vm4778, %v1451, %v2389
  %v5063 = vsel %vm4778, %v1458, %v2391
  %v5066 = vsel %vm4778, %v1465, %v2393
  %v5069 = vsel %vm4778, %v1472, %v2395
  %v5072 = vsel %vm4778, %v1479, %v2397
  %v5075 = vsel %vm4778, %v1486, %v2399
  %v5078 = vsel %vm4778, %v1493, %v2401
  %v5081 = vsel %vm4778, %v1500, %v2403
  %v5084 = vsel %vm4778, %v1507, %v2405
  %v5087 = vsel %vm4778, %v1514, %v2407
  %v5090 = vsel %vm4778, %v1521, %v2409
  %v5093 = vsel %vm4778, %v1528, %v2411
  %v5096 = vsel %vm4778, %v1535, %v2413
  %v5099 = vsel %vm4778, %v1542, %v2415
  %v5102 = vsel %vm4778, %v1549, %v2417
  %v5105 = vsel %vm4778, %v1556, %v2419
  %v5108 = vsel %vm4778, %v1563, %v2421
  %v5111 = vsel %vm4778, %v1570, %v2423
  %v5114 = vsel %vm4778, %v1577, %v2425
  %v5117 = vsel %vm4778, %v1584, %v2427
  %v5120 = vsel %vm4778, %v1591, %v2429
  %v5123 = vsel %vm4778, %v1598, %v2431
  %v5126 = vsel %vm4778, %v1605, %v2433
  %v5129 = vsel %vm4778, %v1612, %v2435
  %v5132 = vsel %vm4778, %v1619, %v2437
  %v5135 = vsel %vm4778, %v1626, %v2439
  %v5138 = vsel %vm4778, %v1633, %v2441
  %v5141 = vsel %vm4778, %v1640, %v2443
  %v5144 = vsel %vm4778, %v1647, %v2445
  %v5147 = vsel %vm4778, %v1654, %v2447
  %v5150 = vsel %vm4778, %v1661, %v2449
  %v5153 = vsel %vm4778, %v1668, %v2451
  %v5156 = vsel %vm4778, %v1675, %v2453
  %v5159 = vsel %vm4778, %v1682, %v2455
  %v5162 = vsel %vm4778, %v1689, %v2457
  %v5165 = vsel %vm4778, %v62, %v2651
  %v5168 = vsel %vm4778, %v64, %v2653
  %v5171 = vsel %vm4778, %v66, %v2655
  %v5174 = vsel %vm4778, %v68, %v2657
  %v5177 = vsel %vm4778, %v70, %v2659
  %v5180 = vsel %vm4778, %v72, %v2661
  %v5183 = vsel %vm4778, %v74, %v2663
  %v5186 = vsel %vm4778, %v76, %v2665
  %v5189 = vsel %vm4778, %v134, %v2667
  %v5192 = vsel %vm4778, %v136, %v2669
  %v5195 = vsel %vm4778, %v138, %v2671
  %v5198 = vsel %vm4778, %v140, %v2673
  %v5201 = vsel %vm4778, %v142, %v2675
  %v5204 = vsel %vm4778, %v144, %v2677
  %v5207 = vsel %vm4778, %v146, %v2679
  %v5210 = vsel %vm4778, %v148, %v2681
  %v5213 = vsel %vm4778, %v206, %v2683
  %v5216 = vsel %vm4778, %v208, %v2685
  %v5219 = vsel %vm4778, %v210, %v2687
  %v5222 = vsel %vm4778, %v212, %v2689
  %v5225 = vsel %vm4778, %v214, %v2691
  %v5228 = vsel %vm4778, %v216, %v2693
  %v5231 = vsel %vm4778, %v218, %v2695
  %v5234 = vsel %vm4778, %v220, %v2697
  %v5237 = vsel %vm4778, %v278, %v2699
  %v5240 = vsel %vm4778, %v280, %v2701
  %v5243 = vsel %vm4778, %v282, %v2703
  %v5246 = vsel %vm4778, %v284, %v2705
  %v5249 = vsel %vm4778, %v286, %v2707
  %v5252 = vsel %vm4778, %v288, %v2709
  %v5255 = vsel %vm4778, %v290, %v2711
  %v5258 = vsel %vm4778, %v292, %v2713
  %v5261 = vsel %vm4778, %v350, %v2715
  %v5264 = vsel %vm4778, %v352, %v2717
  %v5267 = vsel %vm4778, %v354, %v2719
  %v5270 = vsel %vm4778, %v356, %v2721
  %v5273 = vsel %vm4778, %v358, %v2723
  %v5276 = vsel %vm4778, %v360, %v2725
  %v5279 = vsel %vm4778, %v362, %v2727
  %v5282 = vsel %vm4778, %v364, %v2729
  %v5285 = vsel %vm4778, %v422, %v2731
  %v5288 = vsel %vm4778, %v424, %v2733
  %v5291 = vsel %vm4778, %v426, %v2735
  %v5294 = vsel %vm4778, %v428, %v2737
  %v5297 = vsel %vm4778, %v430, %v2739
  %v5300 = vsel %vm4778, %v432, %v2741
  %v5303 = vsel %vm4778, %v434, %v2743
  %v5306 = vsel %vm4778, %v436, %v2745
  %v5309 = vsel %vm4778, %v494, %v2747
  %v5312 = vsel %vm4778, %v496, %v2749
  %v5315 = vsel %vm4778, %v498, %v2751
  %v5318 = vsel %vm4778, %v500, %v2753
  %v5321 = vsel %vm4778, %v502, %v2755
  %v5324 = vsel %vm4778, %v504, %v2757
  %v5327 = vsel %vm4778, %v506, %v2759
  %v5330 = vsel %vm4778, %v508, %v2761
  %v5333 = vsel %vm4778, %v566, %v2763
  %v5336 = vsel %vm4778, %v568, %v2765
  %v5339 = vsel %vm4778, %v570, %v2767
  %v5342 = vsel %vm4778, %v572, %v2769
  %v5345 = vsel %vm4778, %v574, %v2771
  %v5348 = vsel %vm4778, %v576, %v2773
  %v5351 = vsel %vm4778, %v578, %v2775
  %v5354 = vsel %vm4778, %v580, %v2777
  %v5357 = vsel %vm4778, %v3104, %v4187
  %v5360 = vsel %vm4778, %v3111, %v4189
  %v5363 = vsel %vm4778, %v3118, %v4191
  %v5366 = vsel %vm4778, %v3125, %v4193
  %v5369 = vsel %vm4778, %v3132, %v4195
  %v5372 = vsel %vm4778, %v3139, %v4197
  %v5375 = vsel %vm4778, %v3146, %v4199
  %v5378 = vsel %vm4778, %v3153, %v4201
  %v5381 = vsel %vm4778, %v3160, %v4203
  %v5384 = vsel %vm4778, %v3167, %v4205
  %v5387 = vsel %vm4778, %v3174, %v4207
  %v5390 = vsel %vm4778, %v3181, %v4209
  %v5393 = vsel %vm4778, %v3188, %v4211
  %v5396 = vsel %vm4778, %v3195, %v4213
  %v5399 = vsel %vm4778, %v3202, %v4215
  %v5402 = vsel %vm4778, %v3209, %v4217
  %v5405 = vsel %vm4778, %v3216, %v4219
  %v5408 = vsel %vm4778, %v3223, %v4221
  %v5411 = vsel %vm4778, %v3230, %v4223
  %v5414 = vsel %vm4778, %v3237, %v4225
  %v5417 = vsel %vm4778, %v3244, %v4227
  %v5420 = vsel %vm4778, %v3251, %v4229
  %v5423 = vsel %vm4778, %v3258, %v4231
  %v5426 = vsel %vm4778, %v3265, %v4233
  %v5429 = vsel %vm4778, %v3272, %v4235
  %v5432 = vsel %vm4778, %v3279, %v4237
  %v5435 = vsel %vm4778, %v3286, %v4239
  %v5438 = vsel %vm4778, %v3293, %v4241
  %v5441 = vsel %vm4778, %v3300, %v4243
  %v5444 = vsel %vm4778, %v3307, %v4245
  %v5447 = vsel %vm4778, %v3314, %v4247
  %v5450 = vsel %vm4778, %v3321, %v4249
  %v5453 = vsel %vm4778, %v3328, %v4251
  %v5456 = vsel %vm4778, %v3335, %v4253
  %v5459 = vsel %vm4778, %v3342, %v4255
  %v5462 = vsel %vm4778, %v3349, %v4257
  %v5465 = vsel %vm4778, %v3356, %v4259
  %v5468 = vsel %vm4778, %v3363, %v4261
  %v5471 = vsel %vm4778, %v3370, %v4263
  %v5474 = vsel %vm4778, %v3377, %v4265
  %v5477 = vsel %vm4778, %v3384, %v4267
  %v5480 = vsel %vm4778, %v3391, %v4269
  %v5483 = vsel %vm4778, %v3398, %v4271
  %v5486 = vsel %vm4778, %v3405, %v4273
  %v5489 = vsel %vm4778, %v3412, %v4275
  %v5492 = vsel %vm4778, %v3419, %v4277
  %v5495 = vsel %vm4778, %v3426, %v4279
  %v5498 = vsel %vm4778, %v3433, %v4281
  %v5501 = vsel %vm4778, %v3440, %v4283
  %v5504 = vsel %vm4778, %v3447, %v4285
  %v5507 = vsel %vm4778, %v3454, %v4287
  %v5510 = vsel %vm4778, %v3461, %v4289
  %v5513 = vsel %vm4778, %v3468, %v4291
  %v5516 = vsel %vm4778, %v3475, %v4293
  %v5519 = vsel %vm4778, %v3482, %v4295
  %v5522 = vsel %vm4778, %v3489, %v4297
  %v5525 = vsel %vm4778, %v3496, %v4299
  %v5528 = vsel %vm4778, %v3503, %v4301
  %v5531 = vsel %vm4778, %v3510, %v4303
  %v5534 = vsel %vm4778, %v3517, %v4305
  %v5537 = vsel %vm4778, %v3524, %v4307
  %v5540 = vsel %vm4778, %v3531, %v4309
  %v5543 = vsel %vm4778, %v3538, %v4311
  %v5546 = vsel %vm4778, %v3545, %v4313
  %v5549 = vsel %vm4778, %v42, %v4339
  %v5552 = vsel %vm4778, %v114, %v4341
  %v5555 = vsel %vm4778, %v186, %v4343
  %v5558 = vsel %vm4778, %v258, %v4345
  %v5561 = vsel %vm4778, %v330, %v4347
  %v5564 = vsel %vm4778, %v402, %v4349
  %v5567 = vsel %vm4778, %v474, %v4351
  %v5570 = vsel %vm4778, %v546, %v4353
  %v5573 = vsel %vm4778, %v4400, %v4531
  %v5576 = vsel %vm4778, %v4407, %v4533
  %v5579 = vsel %vm4778, %v4414, %v4535
  %v5582 = vsel %vm4778, %v4421, %v4537
  %v5585 = vsel %vm4778, %v4428, %v4539
  %v5588 = vsel %vm4778, %v4435, %v4541
  %v5591 = vsel %vm4778, %v4442, %v4543
  %v5594 = vsel %vm4778, %v4449, %v4545
  %v5597 = vsel %vm4778, %v78, %v4571
  %v5600 = vsel %vm4778, %v150, %v4573
  %v5603 = vsel %vm4778, %v222, %v4575
  %v5606 = vsel %vm4778, %v294, %v4577
  %v5609 = vsel %vm4778, %v366, %v4579
  %v5612 = vsel %vm4778, %v438, %v4581
  %v5615 = vsel %vm4778, %v510, %v4583
  %v5618 = vsel %vm4778, %v582, %v4585
  %v5621 = vsel %vm4778, %v4632, %v4763
  %v5624 = vsel %vm4778, %v4639, %v4765
  %v5627 = vsel %vm4778, %v4646, %v4767
  %v5630 = vsel %vm4778, %v4653, %v4769
  %v5633 = vsel %vm4778, %v4660, %v4771
  %v5636 = vsel %vm4778, %v4667, %v4773
  %v5639 = vsel %vm4778, %v4674, %v4775
  %v5642 = vsel %vm4778, %v4681, %v4777
  %v5931 = vunpack.c.l.b16 %v4781
  %v5932 = vunpack.c.l.b16 %v4973
  %v5933 = vunpack.c.l.b16 %v5165
  %v5934 = vunpack.c.l.b16 %v5357
  %v5935 = vunpack.c.l.b16 %v4784
  %v5936 = vunpack.c.l.b16 %v4976
  %v5937 = vunpack.c.l.b16 %v5168
  %v5938 = vunpack.c.l.b16 %v5360
  %v5939 = vunpack.c.l.b16 %v4787
  %v5940 = vunpack.c.l.b16 %v4979
  %v5941 = vunpack.c.l.b16 %v5171
  %v5942 = vunpack.c.l.b16 %v5363
  %v5943 = vunpack.c.l.b16 %v4790
  %v5944 = vunpack.c.l.b16 %v4982
  %v5945 = vunpack.c.l.b16 %v5174
  %v5946 = vunpack.c.l.b16 %v5366
  %v5947 = vunpack.c.l.b16 %v4793
  %v5948 = vunpack.c.l.b16 %v4985
  %v5949 = vunpack.c.l.b16 %v5177
  %v5950 = vunpack.c.l.b16 %v5369
  %v5951 = vunpack.c.l.b16 %v4796
  %v5952 = vunpack.c.l.b16 %v4988
  %v5953 = vunpack.c.l.b16 %v5180
  %v5954 = vunpack.c.l.b16 %v5372
  %v5955 = vunpack.c.l.b16 %v4799
  %v5956 = vunpack.c.l.b16 %v4991
  %v5957 = vunpack.c.l.b16 %v5183
  %v5958 = vunpack.c.l.b16 %v5375
  %v5959 = vunpack.c.l.b16 %v4802
  %v5960 = vunpack.c.l.b16 %v4994
  %v5961 = vunpack.c.l.b16 %v5186
  %v5962 = vunpack.c.l.b16 %v5378
  %v5963 = vunpack.c.l.b16 %v5549
  %v5964 = vunpack.c.l.b16 %v5573
  %v5965 = vunpack.c.l.b16 %v5597
  %v5966 = vunpack.c.l.b16 %v5621
  %v5967 = vunpack.c.l.b16 %v4805
  %v5968 = vunpack.c.l.b16 %v4997
  %v5969 = vunpack.c.l.b16 %v5189
  %v5970 = vunpack.c.l.b16 %v5381
  %v5971 = vunpack.c.l.b16 %v4808
  %v5972 = vunpack.c.l.b16 %v5000
  %v5973 = vunpack.c.l.b16 %v5192
  %v5974 = vunpack.c.l.b16 %v5384
  %v5975 = vunpack.c.l.b16 %v4811
  %v5976 = vunpack.c.l.b16 %v5003
  %v5977 = vunpack.c.l.b16 %v5195
  %v5978 = vunpack.c.l.b16 %v5387
  %v5979 = vunpack.c.l.b16 %v4814
  %v5980 = vunpack.c.l.b16 %v5006
  %v5981 = vunpack.c.l.b16 %v5198
  %v5982 = vunpack.c.l.b16 %v5390
  %v5983 = vunpack.c.l.b16 %v4817
  %v5984 = vunpack.c.l.b16 %v5009
  %v5985 = vunpack.c.l.b16 %v5201
  %v5986 = vunpack.c.l.b16 %v5393
  %v5987 = vunpack.c.l.b16 %v4820
  %v5988 = vunpack.c.l.b16 %v5012
  %v5989 = vunpack.c.l.b16 %v5204
  %v5990 = vunpack.c.l.b16 %v5396
  %v5991 = vunpack.c.l.b16 %v4823
  %v5992 = vunpack.c.l.b16 %v5015
  %v5993 = vunpack.c.l.b16 %v5207
  %v5994 = vunpack.c.l.b16 %v5399
  %v5995 = vunpack.c.l.b16 %v4826
  %v5996 = vunpack.c.l.b16 %v5018
  %v5997 = vunpack.c.l.b16 %v5210
  %v5998 = vunpack.c.l.b16 %v5402
  %v5999 = vunpack.c.l.b16 %v5552
  %v6000 = vunpack.c.l.b16 %v5576
  %v6001 = vunpack.c.l.b16 %v5600
  %v6002 = vunpack.c.l.b16 %v5624
  %v6003 = vunpack.c.l.b16 %v4829
  %v6004 = vunpack.c.l.b16 %v5021
  %v6005 = vunpack.c.l.b16 %v5213
  %v6006 = vunpack.c.l.b16 %v5405
  %v6007 = vunpack.c.l.b16 %v4832
  %v6008 = vunpack.c.l.b16 %v5024
  %v6009 = vunpack.c.l.b16 %v5216
  %v6010 = vunpack.c.l.b16 %v5408
  %v6011 = vunpack.c.l.b16 %v4835
  %v6012 = vunpack.c.l.b16 %v5027
  %v6013 = vunpack.c.l.b16 %v5219
  %v6014 = vunpack.c.l.b16 %v5411
  %v6015 = vunpack.c.l.b16 %v4838
  %v6016 = vunpack.c.l.b16 %v5030
  %v6017 = vunpack.c.l.b16 %v5222
  %v6018 = vunpack.c.l.b16 %v5414
  %v6019 = vunpack.c.l.b16 %v4841
  %v6020 = vunpack.c.l.b16 %v5033
  %v6021 = vunpack.c.l.b16 %v5225
  %v6022 = vunpack.c.l.b16 %v5417
  %v6023 = vunpack.c.l.b16 %v4844
  %v6024 = vunpack.c.l.b16 %v5036
  %v6025 = vunpack.c.l.b16 %v5228
  %v6026 = vunpack.c.l.b16 %v5420
  %v6027 = vunpack.c.l.b16 %v4847
  %v6028 = vunpack.c.l.b16 %v5039
  %v6029 = vunpack.c.l.b16 %v5231
  %v6030 = vunpack.c.l.b16 %v5423
  %v6031 = vunpack.c.l.b16 %v4850
  %v6032 = vunpack.c.l.b16 %v5042
  %v6033 = vunpack.c.l.b16 %v5234
  %v6034 = vunpack.c.l.b16 %v5426
  %v6035 = vunpack.c.l.b16 %v5555
  %v6036 = vunpack.c.l.b16 %v5579
  %v6037 = vunpack.c.l.b16 %v5603
  %v6038 = vunpack.c.l.b16 %v5627
  %v6039 = vunpack.c.l.b16 %v4853
  %v6040 = vunpack.c.l.b16 %v5045
  %v6041 = vunpack.c.l.b16 %v5237
  %v6042 = vunpack.c.l.b16 %v5429
  %v6043 = vunpack.c.l.b16 %v4856
  %v6044 = vunpack.c.l.b16 %v5048
  %v6045 = vunpack.c.l.b16 %v5240
  %v6046 = vunpack.c.l.b16 %v5432
  %v6047 = vunpack.c.l.b16 %v4859
  %v6048 = vunpack.c.l.b16 %v5051
  %v6049 = vunpack.c.l.b16 %v5243
  %v6050 = vunpack.c.l.b16 %v5435
  %v6051 = vunpack.c.l.b16 %v4862
  %v6052 = vunpack.c.l.b16 %v5054
  %v6053 = vunpack.c.l.b16 %v5246
  %v6054 = vunpack.c.l.b16 %v5438
  %v6055 = vunpack.c.l.b16 %v4865
  %v6056 = vunpack.c.l.b16 %v5057
  %v6057 = vunpack.c.l.b16 %v5249
  %v6058 = vunpack.c.l.b16 %v5441
  %v6059 = vunpack.c.l.b16 %v4868
  %v6060 = vunpack.c.l.b16 %v5060
  %v6061 = vunpack.c.l.b16 %v5252
  %v6062 = vunpack.c.l.b16 %v5444
  %v6063 = vunpack.c.l.b16 %v4871
  %v6064 = vunpack.c.l.b16 %v5063
  %v6065 = vunpack.c.l.b16 %v5255
  %v6066 = vunpack.c.l.b16 %v5447
  %v6067 = vunpack.c.l.b16 %v4874
  %v6068 = vunpack.c.l.b16 %v5066
  %v6069 = vunpack.c.l.b16 %v5258
  %v6070 = vunpack.c.l.b16 %v5450
  %v6071 = vunpack.c.l.b16 %v5558
  %v6072 = vunpack.c.l.b16 %v5582
  %v6073 = vunpack.c.l.b16 %v5606
  %v6074 = vunpack.c.l.b16 %v5630
  %v6075 = vunpack.c.l.b16 %v4877
  %v6076 = vunpack.c.l.b16 %v5069
  %v6077 = vunpack.c.l.b16 %v5261
  %v6078 = vunpack.c.l.b16 %v5453
  %v6079 = vunpack.c.l.b16 %v4880
  %v6080 = vunpack.c.l.b16 %v5072
  %v6081 = vunpack.c.l.b16 %v5264
  %v6082 = vunpack.c.l.b16 %v5456
  %v6083 = vunpack.c.l.b16 %v4883
  %v6084 = vunpack.c.l.b16 %v5075
  %v6085 = vunpack.c.l.b16 %v5267
  %v6086 = vunpack.c.l.b16 %v5459
  %v6087 = vunpack.c.l.b16 %v4886
  %v6088 = vunpack.c.l.b16 %v5078
  %v6089 = vunpack.c.l.b16 %v5270
  %v6090 = vunpack.c.l.b16 %v5462
  %v6091 = vunpack.c.l.b16 %v4889
  %v6092 = vunpack.c.l.b16 %v5081
  %v6093 = vunpack.c.l.b16 %v5273
  %v6094 = vunpack.c.l.b16 %v5465
  %v6095 = vunpack.c.l.b16 %v4892
  %v6096 = vunpack.c.l.b16 %v5084
  %v6097 = vunpack.c.l.b16 %v5276
  %v6098 = vunpack.c.l.b16 %v5468
  %v6099 = vunpack.c.l.b16 %v4895
  %v6100 = vunpack.c.l.b16 %v5087
  %v6101 = vunpack.c.l.b16 %v5279
  %v6102 = vunpack.c.l.b16 %v5471
  %v6103 = vunpack.c.l.b16 %v4898
  %v6104 = vunpack.c.l.b16 %v5090
  %v6105 = vunpack.c.l.b16 %v5282
  %v6106 = vunpack.c.l.b16 %v5474
  %v6107 = vunpack.c.l.b16 %v5561
  %v6108 = vunpack.c.l.b16 %v5585
  %v6109 = vunpack.c.l.b16 %v5609
  %v6110 = vunpack.c.l.b16 %v5633
  %v6111 = vunpack.c.l.b16 %v4901
  %v6112 = vunpack.c.l.b16 %v5093
  %v6113 = vunpack.c.l.b16 %v5285
  %v6114 = vunpack.c.l.b16 %v5477
  %v6115 = vunpack.c.l.b16 %v4904
  %v6116 = vunpack.c.l.b16 %v5096
  %v6117 = vunpack.c.l.b16 %v5288
  %v6118 = vunpack.c.l.b16 %v5480
  %v6119 = vunpack.c.l.b16 %v4907
  %v6120 = vunpack.c.l.b16 %v5099
  %v6121 = vunpack.c.l.b16 %v5291
  %v6122 = vunpack.c.l.b16 %v5483
  %v6123 = vunpack.c.l.b16 %v4910
  %v6124 = vunpack.c.l.b16 %v5102
  %v6125 = vunpack.c.l.b16 %v5294
  %v6126 = vunpack.c.l.b16 %v5486
  %v6127 = vunpack.c.l.b16 %v4913
  %v6128 = vunpack.c.l.b16 %v5105
  %v6129 = vunpack.c.l.b16 %v5297
  %v6130 = vunpack.c.l.b16 %v5489
  %v6131 = vunpack.c.l.b16 %v4916
  %v6132 = vunpack.c.l.b16 %v5108
  %v6133 = vunpack.c.l.b16 %v5300
  %v6134 = vunpack.c.l.b16 %v5492
  %v6135 = vunpack.c.l.b16 %v4919
  %v6136 = vunpack.c.l.b16 %v5111
  %v6137 = vunpack.c.l.b16 %v5303
  %v6138 = vunpack.c.l.b16 %v5495
  %v6139 = vunpack.c.l.b16 %v4922
  %v6140 = vunpack.c.l.b16 %v5114
  %v6141 = vunpack.c.l.b16 %v5306
  %v6142 = vunpack.c.l.b16 %v5498
  %v6143 = vunpack.c.l.b16 %v5564
  %v6144 = vunpack.c.l.b16 %v5588
  %v6145 = vunpack.c.l.b16 %v5612
  %v6146 = vunpack.c.l.b16 %v5636
  %v6147 = vunpack.c.l.b16 %v4925
  %v6148 = vunpack.c.l.b16 %v5117
  %v6149 = vunpack.c.l.b16 %v5309
  %v6150 = vunpack.c.l.b16 %v5501
  %v6151 = vunpack.c.l.b16 %v4928
  %v6152 = vunpack.c.l.b16 %v5120
  %v6153 = vunpack.c.l.b16 %v5312
  %v6154 = vunpack.c.l.b16 %v5504
  %v6155 = vunpack.c.l.b16 %v4931
  %v6156 = vunpack.c.l.b16 %v5123
  %v6157 = vunpack.c.l.b16 %v5315
  %v6158 = vunpack.c.l.b16 %v5507
  %v6159 = vunpack.c.l.b16 %v4934
  %v6160 = vunpack.c.l.b16 %v5126
  %v6161 = vunpack.c.l.b16 %v5318
  %v6162 = vunpack.c.l.b16 %v5510
  %v6163 = vunpack.c.l.b16 %v4937
  %v6164 = vunpack.c.l.b16 %v5129
  %v6165 = vunpack.c.l.b16 %v5321
  %v6166 = vunpack.c.l.b16 %v5513
  %v6167 = vunpack.c.l.b16 %v4940
  %v6168 = vunpack.c.l.b16 %v5132
  %v6169 = vunpack.c.l.b16 %v5324
  %v6170 = vunpack.c.l.b16 %v5516
  %v6171 = vunpack.c.l.b16 %v4943
  %v6172 = vunpack.c.l.b16 %v5135
  %v6173 = vunpack.c.l.b16 %v5327
  %v6174 = vunpack.c.l.b16 %v5519
  %v6175 = vunpack.c.l.b16 %v4946
  %v6176 = vunpack.c.l.b16 %v5138
  %v6177 = vunpack.c.l.b16 %v5330
  %v6178 = vunpack.c.l.b16 %v5522
  %v6179 = vunpack.c.l.b16 %v5567
  %v6180 = vunpack.c.l.b16 %v5591
  %v6181 = vunpack.c.l.b16 %v5615
  %v6182 = vunpack.c.l.b16 %v5639
  %v6183 = vunpack.c.l.b16 %v4949
  %v6184 = vunpack.c.l.b16 %v5141
  %v6185 = vunpack.c.l.b16 %v5333
  %v6186 = vunpack.c.l.b16 %v5525
  %v6187 = vunpack.c.l.b16 %v4952
  %v6188 = vunpack.c.l.b16 %v5144
  %v6189 = vunpack.c.l.b16 %v5336
  %v6190 = vunpack.c.l.b16 %v5528
  %v6191 = vunpack.c.l.b16 %v4955
  %v6192 = vunpack.c.l.b16 %v5147
  %v6193 = vunpack.c.l.b16 %v5339
  %v6194 = vunpack.c.l.b16 %v5531
  %v6195 = vunpack.c.l.b16 %v4958
  %v6196 = vunpack.c.l.b16 %v5150
  %v6197 = vunpack.c.l.b16 %v5342
  %v6198 = vunpack.c.l.b16 %v5534
  %v6199 = vunpack.c.l.b16 %v4961
  %v6200 = vunpack.c.l.b16 %v5153
  %v6201 = vunpack.c.l.b16 %v5345
  %v6202 = vunpack.c.l.b16 %v5537
  %v6203 = vunpack.c.l.b16 %v4964
  %v6204 = vunpack.c.l.b16 %v5156
  %v6205 = vunpack.c.l.b16 %v5348
  %v6206 = vunpack.c.l.b16 %v5540
  %v6207 = vunpack.c.l.b16 %v4967
  %v6208 = vunpack.c.l.b16 %v5159
  %v6209 = vunpack.c.l.b16 %v5351
  %v6210 = vunpack.c.l.b16 %v5543
  %v6211 = vunpack.c.l.b16 %v4970
  %v6212 = vunpack.c.l.b16 %v5162
  %v6213 = vunpack.c.l.b16 %v5354
  %v6214 = vunpack.c.l.b16 %v5546
  %v6215 = vunpack.c.l.b16 %v5570
  %v6216 = vunpack.c.l.b16 %v5594
  %v6217 = vunpack.c.l.b16 %v5618
  %v6218 = vunpack.c.l.b16 %v5642
  %v6219 = vld [vmem:[%s1] sm:$0xf]
  %v6220 = vld [vmem:[%s1 + $0x4] sm:$0xf]
  %v6221 = vld [vmem:[%s1 + $0x8] sm:$0xf]
  %v6222 = vld [vmem:[%s1 + $0xc] sm:$0xf]
  %v6223 = vld [vmem:[%s1 + $0x10] sm:$0xf]
  %v6224 = vld [vmem:[%s1 + $0x14] sm:$0xf]
  %v6225 = vld [vmem:[%s1 + $0x18] sm:$0xf]
  %v6226 = vld [vmem:[%s1 + $0x1c] sm:$0xf]
  %v6227 = vld [vmem:[%s1 + $0x20] sm:$0xf]
  %v6228 = vld [vmem:[%s1 + $0x24] sm:$0xf]
  %v6229 = vld [vmem:[%s1 + $0x28] sm:$0xf]
  %v6230 = vld [vmem:[%s1 + $0x2c] sm:$0xf]
  %v6231 = vld [vmem:[%s1 + $0x30] sm:$0xf]
  %v6232 = vld [vmem:[%s1 + $0x34] sm:$0xf]
  %v6233 = vld [vmem:[%s1 + $0x38] sm:$0xf]
  %v6234 = vld [vmem:[%s1 + $0x3c] sm:$0xf]
  %v6235 = vld [vmem:[%s1 + $0x40] sm:$0xf]
  %v6236 = vld [vmem:[%s1 + $0x44] sm:$0xf]
  %v6237 = vld [vmem:[%s1 + $0x48] sm:$0xf]
  %v6238 = vld [vmem:[%s1 + $0x4c] sm:$0xf]
  %v6239 = vld [vmem:[%s1 + $0x50] sm:$0xf]
  %v6240 = vld [vmem:[%s1 + $0x54] sm:$0xf]
  %v6241 = vld [vmem:[%s1 + $0x58] sm:$0xf]
  %v6242 = vld [vmem:[%s1 + $0x5c] sm:$0xf]
  %v6243 = vld [vmem:[%s1 + $0x60] sm:$0xf]
  %v6244 = vld [vmem:[%s1 + $0x64] sm:$0xf]
  %v6245 = vld [vmem:[%s1 + $0x68] sm:$0xf]
  %v6246 = vld [vmem:[%s1 + $0x6c] sm:$0xf]
  %v6247 = vld [vmem:[%s1 + $0x70] sm:$0xf]
  %v6248 = vld [vmem:[%s1 + $0x74] sm:$0xf]
  %v6249 = vld [vmem:[%s1 + $0x78] sm:$0xf]
  %v6250 = vld [vmem:[%s1 + $0x7c] sm:$0xf]
  %v6251 = vld [vmem:[%s1 + $0x80] sm:$0xf]
  %v6252 = vld [vmem:[%s1 + $0x84] sm:$0xf]
  %v6253 = vld [vmem:[%s1 + $0x88] sm:$0xf]
  %v6254 = vld [vmem:[%s1 + $0x8c] sm:$0xf]
  %v6255 = vld [vmem:[%s1 + $0x90] sm:$0xf]
  %v6256 = vld [vmem:[%s1 + $0x94] sm:$0xf]
  %v6257 = vld [vmem:[%s1 + $0x98] sm:$0xf]
  %v6258 = vld [vmem:[%s1 + $0x9c] sm:$0xf]
  %v6259 = vld [vmem:[%s1 + $0xa0] sm:$0xf]
  %v6260 = vld [vmem:[%s1 + $0xa4] sm:$0xf]
  %v6261 = vld [vmem:[%s1 + $0xa8] sm:$0xf]
  %v6262 = vld [vmem:[%s1 + $0xac] sm:$0xf]
  %v6263 = vld [vmem:[%s1 + $0xb0] sm:$0xf]
  %v6264 = vld [vmem:[%s1 + $0xb4] sm:$0xf]
  %v6265 = vld [vmem:[%s1 + $0xb8] sm:$0xf]
  %v6266 = vld [vmem:[%s1 + $0xbc] sm:$0xf]
  %v6267 = vld [vmem:[%s1 + $0xc0] sm:$0xf]
  %v6268 = vld [vmem:[%s1 + $0xc4] sm:$0xf]
  %v6269 = vld [vmem:[%s1 + $0xc8] sm:$0xf]
  %v6270 = vld [vmem:[%s1 + $0xcc] sm:$0xf]
  %v6271 = vld [vmem:[%s1 + $0xd0] sm:$0xf]
  %v6272 = vld [vmem:[%s1 + $0xd4] sm:$0xf]
  %v6273 = vld [vmem:[%s1 + $0xd8] sm:$0xf]
  %v6274 = vld [vmem:[%s1 + $0xdc] sm:$0xf]
  %v6275 = vld [vmem:[%s1 + $0xe0] sm:$0xf]
  %v6276 = vld [vmem:[%s1 + $0xe4] sm:$0xf]
  %v6277 = vld [vmem:[%s1 + $0xe8] sm:$0xf]
  %v6278 = vld [vmem:[%s1 + $0xec] sm:$0xf]
  %v6279 = vld [vmem:[%s1 + $0xf0] sm:$0xf]
  %v6280 = vld [vmem:[%s1 + $0xf4] sm:$0xf]
  %v6281 = vld [vmem:[%s1 + $0xf8] sm:$0xf]
  %v6282 = vld [vmem:[%s1 + $0xfc] sm:$0xf]
  %v6283 = vld [vmem:[%s1 + $0x100] sm:$0xf]
  %v6284 = vld [vmem:[%s1 + $0x104] sm:$0xf]
  %v6285 = vld [vmem:[%s1 + $0x108] sm:$0xf]
  %v6286 = vld [vmem:[%s1 + $0x10c] sm:$0xf]
  %v6287 = vld [vmem:[%s1 + $0x110] sm:$0xf]
  %v6288 = vld [vmem:[%s1 + $0x114] sm:$0xf]
  %v6289 = vld [vmem:[%s1 + $0x118] sm:$0xf]
  %v6290 = vld [vmem:[%s1 + $0x11c] sm:$0xf]
  %v6291 = vld [vmem:[%s1 + $0x120] sm:$0xf]
  %v6292 = vld [vmem:[%s1 + $0x124] sm:$0xf]
  %v6293 = vld [vmem:[%s1 + $0x128] sm:$0xf]
  %v6294 = vld [vmem:[%s1 + $0x12c] sm:$0xf]
  %v6295 = vld [vmem:[%s1 + $0x130] sm:$0xf]
  %v6296 = vld [vmem:[%s1 + $0x134] sm:$0xf]
  %v6297 = vld [vmem:[%s1 + $0x138] sm:$0xf]
  %v6298 = vld [vmem:[%s1 + $0x13c] sm:$0xf]
  %v6299 = vld [vmem:[%s1 + $0x140] sm:$0xf]
  %v6300 = vld [vmem:[%s1 + $0x144] sm:$0xf]
  %v6301 = vld [vmem:[%s1 + $0x148] sm:$0xf]
  %v6302 = vld [vmem:[%s1 + $0x14c] sm:$0xf]
  %v6303 = vld [vmem:[%s1 + $0x150] sm:$0xf]
  %v6304 = vld [vmem:[%s1 + $0x154] sm:$0xf]
  %v6305 = vld [vmem:[%s1 + $0x158] sm:$0xf]
  %v6306 = vld [vmem:[%s1 + $0x15c] sm:$0xf]
  %v6307 = vld [vmem:[%s1 + $0x160] sm:$0xf]
  %v6308 = vld [vmem:[%s1 + $0x164] sm:$0xf]
  %v6309 = vld [vmem:[%s1 + $0x168] sm:$0xf]
  %v6310 = vld [vmem:[%s1 + $0x16c] sm:$0xf]
  %v6311 = vld [vmem:[%s1 + $0x170] sm:$0xf]
  %v6312 = vld [vmem:[%s1 + $0x174] sm:$0xf]
  %v6313 = vld [vmem:[%s1 + $0x178] sm:$0xf]
  %v6314 = vld [vmem:[%s1 + $0x17c] sm:$0xf]
  %v6315 = vld [vmem:[%s1 + $0x180] sm:$0xf]
  %v6316 = vld [vmem:[%s1 + $0x184] sm:$0xf]
  %v6317 = vld [vmem:[%s1 + $0x188] sm:$0xf]
  %v6318 = vld [vmem:[%s1 + $0x18c] sm:$0xf]
  %v6319 = vld [vmem:[%s1 + $0x190] sm:$0xf]
  %v6320 = vld [vmem:[%s1 + $0x194] sm:$0xf]
  %v6321 = vld [vmem:[%s1 + $0x198] sm:$0xf]
  %v6322 = vld [vmem:[%s1 + $0x19c] sm:$0xf]
  %v6323 = vld [vmem:[%s1 + $0x1a0] sm:$0xf]
  %v6324 = vld [vmem:[%s1 + $0x1a4] sm:$0xf]
  %v6325 = vld [vmem:[%s1 + $0x1a8] sm:$0xf]
  %v6326 = vld [vmem:[%s1 + $0x1ac] sm:$0xf]
  %v6327 = vld [vmem:[%s1 + $0x1b0] sm:$0xf]
  %v6328 = vld [vmem:[%s1 + $0x1b4] sm:$0xf]
  %v6329 = vld [vmem:[%s1 + $0x1b8] sm:$0xf]
  %v6330 = vld [vmem:[%s1 + $0x1bc] sm:$0xf]
  %v6331 = vld [vmem:[%s1 + $0x1c0] sm:$0xf]
  %v6332 = vld [vmem:[%s1 + $0x1c4] sm:$0xf]
  %v6333 = vld [vmem:[%s1 + $0x1c8] sm:$0xf]
  %v6334 = vld [vmem:[%s1 + $0x1cc] sm:$0xf]
  %v6335 = vld [vmem:[%s1 + $0x1d0] sm:$0xf]
  %v6336 = vld [vmem:[%s1 + $0x1d4] sm:$0xf]
  %v6337 = vld [vmem:[%s1 + $0x1d8] sm:$0xf]
  %v6338 = vld [vmem:[%s1 + $0x1dc] sm:$0xf]
  %v6339 = vld [vmem:[%s1 + $0x1e0] sm:$0xf]
  %v6340 = vld [vmem:[%s1 + $0x1e4] sm:$0xf]
  %v6341 = vld [vmem:[%s1 + $0x1e8] sm:$0xf]
  %v6342 = vld [vmem:[%s1 + $0x1ec] sm:$0xf]
  %v6343 = vld [vmem:[%s1 + $0x1f0] sm:$0xf]
  %v6344 = vld [vmem:[%s1 + $0x1f4] sm:$0xf]
  %v6345 = vld [vmem:[%s1 + $0x1f8] sm:$0xf]
  %v6346 = vld [vmem:[%s1 + $0x1fc] sm:$0xf]
  %v6347 = vpack.c.b16 %v5935, %v5931
  %v6348 = vpack.c.b16 %v5936, %v5932
  %v6349 = vpack.c.b16 %v5937, %v5933
  %v6350 = vpack.c.b16 %v5938, %v5934
  %v6351 = vpack.c.b16 %v5939, %v5935
  %v6352 = vpack.c.b16 %v5940, %v5936
  %v6353 = vpack.c.b16 %v5941, %v5937
  %v6354 = vpack.c.b16 %v5942, %v5938
  %v6355 = vpack.c.b16 %v5943, %v5939
  %v6356 = vpack.c.b16 %v5944, %v5940
  %v6357 = vpack.c.b16 %v5945, %v5941
  %v6358 = vpack.c.b16 %v5946, %v5942
  %v6359 = vpack.c.b16 %v5947, %v5943
  %v6360 = vpack.c.b16 %v5948, %v5944
  %v6361 = vpack.c.b16 %v5949, %v5945
  %v6362 = vpack.c.b16 %v5950, %v5946
  %v6363 = vpack.c.b16 %v5951, %v5947
  %v6364 = vpack.c.b16 %v5952, %v5948
  %v6365 = vpack.c.b16 %v5953, %v5949
  %v6366 = vpack.c.b16 %v5954, %v5950
  %v6367 = vpack.c.b16 %v5955, %v5951
  %v6368 = vpack.c.b16 %v5956, %v5952
  %v6369 = vpack.c.b16 %v5957, %v5953
  %v6370 = vpack.c.b16 %v5958, %v5954
  %v6371 = vpack.c.b16 %v5959, %v5955
  %v6372 = vpack.c.b16 %v5960, %v5956
  %v6373 = vpack.c.b16 %v5961, %v5957
  %v6374 = vpack.c.b16 %v5962, %v5958
  %v6375 = vpack.c.b16 %v5963, %v5959
  %v6376 = vpack.c.b16 %v5964, %v5960
  %v6377 = vpack.c.b16 %v5965, %v5961
  %v6378 = vpack.c.b16 %v5966, %v5962
  %v6379 = vpack.c.b16 %v5971, %v5967
  %v6380 = vpack.c.b16 %v5972, %v5968
  %v6381 = vpack.c.b16 %v5973, %v5969
  %v6382 = vpack.c.b16 %v5974, %v5970
  %v6383 = vpack.c.b16 %v5975, %v5971
  %v6384 = vpack.c.b16 %v5976, %v5972
  %v6385 = vpack.c.b16 %v5977, %v5973
  %v6386 = vpack.c.b16 %v5978, %v5974
  %v6387 = vpack.c.b16 %v5979, %v5975
  %v6388 = vpack.c.b16 %v5980, %v5976
  %v6389 = vpack.c.b16 %v5981, %v5977
  %v6390 = vpack.c.b16 %v5982, %v5978
  %v6391 = vpack.c.b16 %v5983, %v5979
  %v6392 = vpack.c.b16 %v5984, %v5980
  %v6393 = vpack.c.b16 %v5985, %v5981
  %v6394 = vpack.c.b16 %v5986, %v5982
  %v6395 = vpack.c.b16 %v5987, %v5983
  %v6396 = vpack.c.b16 %v5988, %v5984
  %v6397 = vpack.c.b16 %v5989, %v5985
  %v6398 = vpack.c.b16 %v5990, %v5986
  %v6399 = vpack.c.b16 %v5991, %v5987
  %v6400 = vpack.c.b16 %v5992, %v5988
  %v6401 = vpack.c.b16 %v5993, %v5989
  %v6402 = vpack.c.b16 %v5994, %v5990
  %v6403 = vpack.c.b16 %v5995, %v5991
  %v6404 = vpack.c.b16 %v5996, %v5992
  %v6405 = vpack.c.b16 %v5997, %v5993
  %v6406 = vpack.c.b16 %v5998, %v5994
  %v6407 = vpack.c.b16 %v5999, %v5995
  %v6408 = vpack.c.b16 %v6000, %v5996
  %v6409 = vpack.c.b16 %v6001, %v5997
  %v6410 = vpack.c.b16 %v6002, %v5998
  %v6411 = vpack.c.b16 %v6007, %v6003
  %v6412 = vpack.c.b16 %v6008, %v6004
  %v6413 = vpack.c.b16 %v6009, %v6005
  %v6414 = vpack.c.b16 %v6010, %v6006
  %v6415 = vpack.c.b16 %v6011, %v6007
  %v6416 = vpack.c.b16 %v6012, %v6008
  %v6417 = vpack.c.b16 %v6013, %v6009
  %v6418 = vpack.c.b16 %v6014, %v6010
  %v6419 = vpack.c.b16 %v6015, %v6011
  %v6420 = vpack.c.b16 %v6016, %v6012
  %v6421 = vpack.c.b16 %v6017, %v6013
  %v6422 = vpack.c.b16 %v6018, %v6014
  %v6423 = vpack.c.b16 %v6019, %v6015
  %v6424 = vpack.c.b16 %v6020, %v6016
  %v6425 = vpack.c.b16 %v6021, %v6017
  %v6426 = vpack.c.b16 %v6022, %v6018
  %v6427 = vpack.c.b16 %v6023, %v6019
  %v6428 = vpack.c.b16 %v6024, %v6020
  %v6429 = vpack.c.b16 %v6025, %v6021
  %v6430 = vpack.c.b16 %v6026, %v6022
  %v6431 = vpack.c.b16 %v6027, %v6023
  %v6432 = vpack.c.b16 %v6028, %v6024
  %v6433 = vpack.c.b16 %v6029, %v6025
  %v6434 = vpack.c.b16 %v6030, %v6026
  %v6435 = vpack.c.b16 %v6031, %v6027
  %v6436 = vpack.c.b16 %v6032, %v6028
  %v6437 = vpack.c.b16 %v6033, %v6029
  %v6438 = vpack.c.b16 %v6034, %v6030
  %v6439 = vpack.c.b16 %v6035, %v6031
  %v6440 = vpack.c.b16 %v6036, %v6032
  %v6441 = vpack.c.b16 %v6037, %v6033
  %v6442 = vpack.c.b16 %v6038, %v6034
  %v6443 = vpack.c.b16 %v6043, %v6039
  %v6444 = vpack.c.b16 %v6044, %v6040
  %v6445 = vpack.c.b16 %v6045, %v6041
  %v6446 = vpack.c.b16 %v6046, %v6042
  %v6447 = vpack.c.b16 %v6047, %v6043
  %v6448 = vpack.c.b16 %v6048, %v6044
  %v6449 = vpack.c.b16 %v6049, %v6045
  %v6450 = vpack.c.b16 %v6050, %v6046
  %v6451 = vpack.c.b16 %v6051, %v6047
  %v6452 = vpack.c.b16 %v6052, %v6048
  %v6453 = vpack.c.b16 %v6053, %v6049
  %v6454 = vpack.c.b16 %v6054, %v6050
  %v6455 = vpack.c.b16 %v6055, %v6051
  %v6456 = vpack.c.b16 %v6056, %v6052
  %v6457 = vpack.c.b16 %v6057, %v6053
  %v6458 = vpack.c.b16 %v6058, %v6054
  %v6459 = vpack.c.b16 %v6059, %v6055
  %v6460 = vpack.c.b16 %v6060, %v6056
  %v6461 = vpack.c.b16 %v6061, %v6057
  %v6462 = vpack.c.b16 %v6062, %v6058
  %v6463 = vpack.c.b16 %v6063, %v6059
  %v6464 = vpack.c.b16 %v6064, %v6060
  %v6465 = vpack.c.b16 %v6065, %v6061
  %v6466 = vpack.c.b16 %v6066, %v6062
  %v6467 = vpack.c.b16 %v6067, %v6063
  %v6468 = vpack.c.b16 %v6068, %v6064
  %v6469 = vpack.c.b16 %v6069, %v6065
  %v6470 = vpack.c.b16 %v6070, %v6066
  %v6471 = vpack.c.b16 %v6071, %v6067
  %v6472 = vpack.c.b16 %v6072, %v6068
  %v6473 = vpack.c.b16 %v6073, %v6069
  %v6474 = vpack.c.b16 %v6074, %v6070
  %v6475 = vpack.c.b16 %v6079, %v6075
  %v6476 = vpack.c.b16 %v6080, %v6076
  %v6477 = vpack.c.b16 %v6081, %v6077
  %v6478 = vpack.c.b16 %v6082, %v6078
  %v6479 = vpack.c.b16 %v6083, %v6079
  %v6480 = vpack.c.b16 %v6084, %v6080
  %v6481 = vpack.c.b16 %v6085, %v6081
  %v6482 = vpack.c.b16 %v6086, %v6082
  %v6483 = vpack.c.b16 %v6087, %v6083
  %v6484 = vpack.c.b16 %v6088, %v6084
  %v6485 = vpack.c.b16 %v6089, %v6085
  %v6486 = vpack.c.b16 %v6090, %v6086
  %v6487 = vpack.c.b16 %v6091, %v6087
  %v6488 = vpack.c.b16 %v6092, %v6088
  %v6489 = vpack.c.b16 %v6093, %v6089
  %v6490 = vpack.c.b16 %v6094, %v6090
  %v6491 = vpack.c.b16 %v6095, %v6091
  %v6492 = vpack.c.b16 %v6096, %v6092
  %v6493 = vpack.c.b16 %v6097, %v6093
  %v6494 = vpack.c.b16 %v6098, %v6094
  %v6495 = vpack.c.b16 %v6099, %v6095
  %v6496 = vpack.c.b16 %v6100, %v6096
  %v6497 = vpack.c.b16 %v6101, %v6097
  %v6498 = vpack.c.b16 %v6102, %v6098
  %v6499 = vpack.c.b16 %v6103, %v6099
  %v6500 = vpack.c.b16 %v6104, %v6100
  %v6501 = vpack.c.b16 %v6105, %v6101
  %v6502 = vpack.c.b16 %v6106, %v6102
  %v6503 = vpack.c.b16 %v6107, %v6103
  %v6504 = vpack.c.b16 %v6108, %v6104
  %v6505 = vpack.c.b16 %v6109, %v6105
  %v6506 = vpack.c.b16 %v6110, %v6106
  %v6507 = vpack.c.b16 %v6115, %v6111
  %v6508 = vpack.c.b16 %v6116, %v6112
  %v6509 = vpack.c.b16 %v6117, %v6113
  %v6510 = vpack.c.b16 %v6118, %v6114
  %v6511 = vpack.c.b16 %v6119, %v6115
  %v6512 = vpack.c.b16 %v6120, %v6116
  %v6513 = vpack.c.b16 %v6121, %v6117
  %v6514 = vpack.c.b16 %v6122, %v6118
  %v6515 = vpack.c.b16 %v6123, %v6119
  %v6516 = vpack.c.b16 %v6124, %v6120
  %v6517 = vpack.c.b16 %v6125, %v6121
  %v6518 = vpack.c.b16 %v6126, %v6122
  %v6519 = vpack.c.b16 %v6127, %v6123
  %v6520 = vpack.c.b16 %v6128, %v6124
  %v6521 = vpack.c.b16 %v6129, %v6125
  %v6522 = vpack.c.b16 %v6130, %v6126
  %v6523 = vpack.c.b16 %v6131, %v6127
  %v6524 = vpack.c.b16 %v6132, %v6128
  %v6525 = vpack.c.b16 %v6133, %v6129
  %v6526 = vpack.c.b16 %v6134, %v6130
  %v6527 = vpack.c.b16 %v6135, %v6131
  %v6528 = vpack.c.b16 %v6136, %v6132
  %v6529 = vpack.c.b16 %v6137, %v6133
  %v6530 = vpack.c.b16 %v6138, %v6134
  %v6531 = vpack.c.b16 %v6139, %v6135
  %v6532 = vpack.c.b16 %v6140, %v6136
  %v6533 = vpack.c.b16 %v6141, %v6137
  %v6534 = vpack.c.b16 %v6142, %v6138
  %v6535 = vpack.c.b16 %v6143, %v6139
  %v6536 = vpack.c.b16 %v6144, %v6140
  %v6537 = vpack.c.b16 %v6145, %v6141
  %v6538 = vpack.c.b16 %v6146, %v6142
  %v6539 = vpack.c.b16 %v6151, %v6147
  %v6540 = vpack.c.b16 %v6152, %v6148
  %v6541 = vpack.c.b16 %v6153, %v6149
  %v6542 = vpack.c.b16 %v6154, %v6150
  %v6543 = vpack.c.b16 %v6155, %v6151
  %v6544 = vpack.c.b16 %v6156, %v6152
  %v6545 = vpack.c.b16 %v6157, %v6153
  %v6546 = vpack.c.b16 %v6158, %v6154
  %v6547 = vpack.c.b16 %v6159, %v6155
  %v6548 = vpack.c.b16 %v6160, %v6156
  %v6549 = vpack.c.b16 %v6161, %v6157
  %v6550 = vpack.c.b16 %v6162, %v6158
  %v6551 = vpack.c.b16 %v6163, %v6159
  %v6552 = vpack.c.b16 %v6164, %v6160
  %v6553 = vpack.c.b16 %v6165, %v6161
  %v6554 = vpack.c.b16 %v6166, %v6162
  %v6555 = vpack.c.b16 %v6167, %v6163
  %v6556 = vpack.c.b16 %v6168, %v6164
  %v6557 = vpack.c.b16 %v6169, %v6165
  %v6558 = vpack.c.b16 %v6170, %v6166
  %v6559 = vpack.c.b16 %v6171, %v6167
  %v6560 = vpack.c.b16 %v6172, %v6168
  %v6561 = vpack.c.b16 %v6173, %v6169
  %v6562 = vpack.c.b16 %v6174, %v6170
  %v6563 = vpack.c.b16 %v6175, %v6171
  %v6564 = vpack.c.b16 %v6176, %v6172
  %v6565 = vpack.c.b16 %v6177, %v6173
  %v6566 = vpack.c.b16 %v6178, %v6174
  %v6567 = vpack.c.b16 %v6179, %v6175
  %v6568 = vpack.c.b16 %v6180, %v6176
  %v6569 = vpack.c.b16 %v6181, %v6177
  %v6570 = vpack.c.b16 %v6182, %v6178
  %v6571 = vpack.c.b16 %v6187, %v6183
  %v6572 = vpack.c.b16 %v6188, %v6184
  %v6573 = vpack.c.b16 %v6189, %v6185
  %v6574 = vpack.c.b16 %v6190, %v6186
  %v6575 = vpack.c.b16 %v6191, %v6187
  %v6576 = vpack.c.b16 %v6192, %v6188
  %v6577 = vpack.c.b16 %v6193, %v6189
  %v6578 = vpack.c.b16 %v6194, %v6190
  %v6579 = vpack.c.b16 %v6195, %v6191
  %v6580 = vpack.c.b16 %v6196, %v6192
  %v6581 = vpack.c.b16 %v6197, %v6193
  %v6582 = vpack.c.b16 %v6198, %v6194
  %v6583 = vpack.c.b16 %v6199, %v6195
  %v6584 = vpack.c.b16 %v6200, %v6196
  %v6585 = vpack.c.b16 %v6201, %v6197
  %v6586 = vpack.c.b16 %v6202, %v6198
  %v6587 = vpack.c.b16 %v6203, %v6199
  %v6588 = vpack.c.b16 %v6204, %v6200
  %v6589 = vpack.c.b16 %v6205, %v6201
  %v6590 = vpack.c.b16 %v6206, %v6202
  %v6591 = vpack.c.b16 %v6207, %v6203
  %v6592 = vpack.c.b16 %v6208, %v6204
  %v6593 = vpack.c.b16 %v6209, %v6205
  %v6594 = vpack.c.b16 %v6210, %v6206
  %v6595 = vpack.c.b16 %v6211, %v6207
  %v6596 = vpack.c.b16 %v6212, %v6208
  %v6597 = vpack.c.b16 %v6213, %v6209
  %v6598 = vpack.c.b16 %v6214, %v6210
  %v6599 = vpack.c.b16 %v6215, %v6211
  %v6600 = vpack.c.b16 %v6216, %v6212
  %v6601 = vpack.c.b16 %v6217, %v6213
  %v6602 = vpack.c.b16 %v6218, %v6214
  %v6987 = vunpack.c.l.b16 %v6219
  %v6988 = vunpack.c.l.b16 %v6220
  %v6989 = vunpack.c.l.b16 %v6221
  %v6990 = vunpack.c.l.b16 %v6222
  %v6991 = vunpack.c.l.b16 %v6223
  %v6992 = vunpack.c.l.b16 %v6224
  %v6993 = vunpack.c.l.b16 %v6225
  %v6994 = vunpack.c.l.b16 %v6226
  %v6995 = vunpack.c.l.b16 %v6227
  %v6996 = vunpack.c.l.b16 %v6228
  %v6997 = vunpack.c.l.b16 %v6229
  %v6998 = vunpack.c.l.b16 %v6230
  %v6999 = vunpack.c.l.b16 %v6231
  %v7000 = vunpack.c.l.b16 %v6232
  %v7001 = vunpack.c.l.b16 %v6233
  %v7002 = vunpack.c.l.b16 %v6234
  %v7003 = vunpack.c.l.b16 %v6235
  %v7004 = vunpack.c.l.b16 %v6236
  %v7005 = vunpack.c.l.b16 %v6237
  %v7006 = vunpack.c.l.b16 %v6238
  %v7007 = vunpack.c.l.b16 %v6239
  %v7008 = vunpack.c.l.b16 %v6240
  %v7009 = vunpack.c.l.b16 %v6241
  %v7010 = vunpack.c.l.b16 %v6242
  %v7011 = vunpack.c.l.b16 %v6243
  %v7012 = vunpack.c.l.b16 %v6244
  %v7013 = vunpack.c.l.b16 %v6245
  %v7014 = vunpack.c.l.b16 %v6246
  %v7015 = vunpack.c.l.b16 %v6247
  %v7016 = vunpack.c.l.b16 %v6248
  %v7017 = vunpack.c.l.b16 %v6249
  %v7018 = vunpack.c.l.b16 %v6250
  %v7019 = vunpack.c.l.b16 %v6251
  %v7020 = vunpack.c.l.b16 %v6252
  %v7021 = vunpack.c.l.b16 %v6253
  %v7022 = vunpack.c.l.b16 %v6254
  %v7023 = vunpack.c.l.b16 %v6255
  %v7024 = vunpack.c.l.b16 %v6256
  %v7025 = vunpack.c.l.b16 %v6257
  %v7026 = vunpack.c.l.b16 %v6258
  %v7027 = vunpack.c.l.b16 %v6259
  %v7028 = vunpack.c.l.b16 %v6260
  %v7029 = vunpack.c.l.b16 %v6261
  %v7030 = vunpack.c.l.b16 %v6262
  %v7031 = vunpack.c.l.b16 %v6263
  %v7032 = vunpack.c.l.b16 %v6264
  %v7033 = vunpack.c.l.b16 %v6265
  %v7034 = vunpack.c.l.b16 %v6266
  %v7035 = vunpack.c.l.b16 %v6267
  %v7036 = vunpack.c.l.b16 %v6268
  %v7037 = vunpack.c.l.b16 %v6269
  %v7038 = vunpack.c.l.b16 %v6270
  %v7039 = vunpack.c.l.b16 %v6271
  %v7040 = vunpack.c.l.b16 %v6272
  %v7041 = vunpack.c.l.b16 %v6273
  %v7042 = vunpack.c.l.b16 %v6274
  %v7043 = vunpack.c.l.b16 %v6275
  %v7044 = vunpack.c.l.b16 %v6276
  %v7045 = vunpack.c.l.b16 %v6277
  %v7046 = vunpack.c.l.b16 %v6278
  %v7047 = vunpack.c.l.b16 %v6279
  %v7048 = vunpack.c.l.b16 %v6280
  %v7049 = vunpack.c.l.b16 %v6281
  %v7050 = vunpack.c.l.b16 %v6282
  %v7051 = vunpack.c.l.b16 %v6283
  %v7052 = vunpack.c.l.b16 %v6284
  %v7053 = vunpack.c.l.b16 %v6285
  %v7054 = vunpack.c.l.b16 %v6286
  %v7055 = vunpack.c.l.b16 %v6287
  %v7056 = vunpack.c.l.b16 %v6288
  %v7057 = vunpack.c.l.b16 %v6289
  %v7058 = vunpack.c.l.b16 %v6290
  %v7059 = vunpack.c.l.b16 %v6291
  %v7060 = vunpack.c.l.b16 %v6292
  %v7061 = vunpack.c.l.b16 %v6293
  %v7062 = vunpack.c.l.b16 %v6294
  %v7063 = vunpack.c.l.b16 %v6295
  %v7064 = vunpack.c.l.b16 %v6296
  %v7065 = vunpack.c.l.b16 %v6297
  %v7066 = vunpack.c.l.b16 %v6298
  %v7067 = vunpack.c.l.b16 %v6299
  %v7068 = vunpack.c.l.b16 %v6300
  %v7069 = vunpack.c.l.b16 %v6301
  %v7070 = vunpack.c.l.b16 %v6302
  %v7071 = vunpack.c.l.b16 %v6303
  %v7072 = vunpack.c.l.b16 %v6304
  %v7073 = vunpack.c.l.b16 %v6305
  %v7074 = vunpack.c.l.b16 %v6306
  %v7075 = vunpack.c.l.b16 %v6307
  %v7076 = vunpack.c.l.b16 %v6308
  %v7077 = vunpack.c.l.b16 %v6309
  %v7078 = vunpack.c.l.b16 %v6310
  %v7079 = vunpack.c.l.b16 %v6311
  %v7080 = vunpack.c.l.b16 %v6312
  %v7081 = vunpack.c.l.b16 %v6313
  %v7082 = vunpack.c.l.b16 %v6314
  %v7083 = vunpack.c.l.b16 %v6315
  %v7084 = vunpack.c.l.b16 %v6316
  %v7085 = vunpack.c.l.b16 %v6317
  %v7086 = vunpack.c.l.b16 %v6318
  %v7087 = vunpack.c.l.b16 %v6319
  %v7088 = vunpack.c.l.b16 %v6320
  %v7089 = vunpack.c.l.b16 %v6321
  %v7090 = vunpack.c.l.b16 %v6322
  %v7091 = vunpack.c.l.b16 %v6323
  %v7092 = vunpack.c.l.b16 %v6324
  %v7093 = vunpack.c.l.b16 %v6325
  %v7094 = vunpack.c.l.b16 %v6326
  %v7095 = vunpack.c.l.b16 %v6327
  %v7096 = vunpack.c.l.b16 %v6328
  %v7097 = vunpack.c.l.b16 %v6329
  %v7098 = vunpack.c.l.b16 %v6330
  %v7099 = vunpack.c.l.b16 %v6331
  %v7100 = vunpack.c.l.b16 %v6332
  %v7101 = vunpack.c.l.b16 %v6333
  %v7102 = vunpack.c.l.b16 %v6334
  %v7103 = vunpack.c.l.b16 %v6335
  %v7104 = vunpack.c.l.b16 %v6336
  %v7105 = vunpack.c.l.b16 %v6337
  %v7106 = vunpack.c.l.b16 %v6338
  %v7107 = vunpack.c.l.b16 %v6339
  %v7108 = vunpack.c.l.b16 %v6340
  %v7109 = vunpack.c.l.b16 %v6341
  %v7110 = vunpack.c.l.b16 %v6342
  %v7111 = vunpack.c.l.b16 %v6343
  %v7112 = vunpack.c.l.b16 %v6344
  %v7113 = vunpack.c.l.b16 %v6345
  %v7114 = vunpack.c.l.b16 %v6346
  %v7115 = vpack.c.b16 %v6988, %v6987
  %v7116 = vpack.c.b16 %v6990, %v6989
  %v7117 = vpack.c.b16 %v6992, %v6991
  %v7118 = vpack.c.b16 %v6994, %v6993
  %v7119 = vpack.c.b16 %v6996, %v6995
  %v7120 = vpack.c.b16 %v6998, %v6997
  %v7121 = vpack.c.b16 %v7000, %v6999
  %v7122 = vpack.c.b16 %v7002, %v7001
  %v7123 = vpack.c.b16 %v7004, %v7003
  %v7124 = vpack.c.b16 %v7006, %v7005
  %v7125 = vpack.c.b16 %v7008, %v7007
  %v7126 = vpack.c.b16 %v7010, %v7009
  %v7127 = vpack.c.b16 %v7012, %v7011
  %v7128 = vpack.c.b16 %v7014, %v7013
  %v7129 = vpack.c.b16 %v7016, %v7015
  %v7130 = vpack.c.b16 %v7018, %v7017
  %v7131 = vpack.c.b16 %v7020, %v7019
  %v7132 = vpack.c.b16 %v7022, %v7021
  %v7133 = vpack.c.b16 %v7024, %v7023
  %v7134 = vpack.c.b16 %v7026, %v7025
  %v7135 = vpack.c.b16 %v7028, %v7027
  %v7136 = vpack.c.b16 %v7030, %v7029
  %v7137 = vpack.c.b16 %v7032, %v7031
  %v7138 = vpack.c.b16 %v7034, %v7033
  %v7139 = vpack.c.b16 %v7036, %v7035
  %v7140 = vpack.c.b16 %v7038, %v7037
  %v7141 = vpack.c.b16 %v7040, %v7039
  %v7142 = vpack.c.b16 %v7042, %v7041
  %v7143 = vpack.c.b16 %v7044, %v7043
  %v7144 = vpack.c.b16 %v7046, %v7045
  %v7145 = vpack.c.b16 %v7048, %v7047
  %v7146 = vpack.c.b16 %v7050, %v7049
  %v7147 = vpack.c.b16 %v7052, %v7051
  %v7148 = vpack.c.b16 %v7054, %v7053
  %v7149 = vpack.c.b16 %v7056, %v7055
  %v7150 = vpack.c.b16 %v7058, %v7057
  %v7151 = vpack.c.b16 %v7060, %v7059
  %v7152 = vpack.c.b16 %v7062, %v7061
  %v7153 = vpack.c.b16 %v7064, %v7063
  %v7154 = vpack.c.b16 %v7066, %v7065
  %v7155 = vpack.c.b16 %v7068, %v7067
  %v7156 = vpack.c.b16 %v7070, %v7069
  %v7157 = vpack.c.b16 %v7072, %v7071
  %v7158 = vpack.c.b16 %v7074, %v7073
  %v7159 = vpack.c.b16 %v7076, %v7075
  %v7160 = vpack.c.b16 %v7078, %v7077
  %v7161 = vpack.c.b16 %v7080, %v7079
  %v7162 = vpack.c.b16 %v7082, %v7081
  %v7163 = vpack.c.b16 %v7084, %v7083
  %v7164 = vpack.c.b16 %v7086, %v7085
  %v7165 = vpack.c.b16 %v7088, %v7087
  %v7166 = vpack.c.b16 %v7090, %v7089
  %v7167 = vpack.c.b16 %v7092, %v7091
  %v7168 = vpack.c.b16 %v7094, %v7093
  %v7169 = vpack.c.b16 %v7096, %v7095
  %v7170 = vpack.c.b16 %v7098, %v7097
  %v7171 = vpack.c.b16 %v7100, %v7099
  %v7172 = vpack.c.b16 %v7102, %v7101
  %v7173 = vpack.c.b16 %v7104, %v7103
  %v7174 = vpack.c.b16 %v7106, %v7105
  %v7175 = vpack.c.b16 %v7108, %v7107
  %v7176 = vpack.c.b16 %v7110, %v7109
  %v7177 = vpack.c.b16 %v7112, %v7111
  %v7178 = vpack.c.b16 %v7114, %v7113
  %7243 = vmatprep.subr.bf16.mxu0 0
  %7244 = vmatpush1.bf16.msra.mxu0 %v7115
  %7245 = vmatprep.subr.bf16.mxu0 0
  %7246 = vmatpush1.bf16.msra.mxu0 %v7116
  %7247 = vmatprep.subr.bf16.mxu0 0
  %7248 = vmatpush1.bf16.msra.mxu0 %v7117
  %7249 = vmatprep.subr.bf16.mxu0 0
  %7250 = vmatpush1.bf16.msra.mxu0 %v7118
  %7251 = vmatprep.subr.bf16.mxu0 0
  %7252 = vmatpush1.bf16.msra.mxu0 %v7119
  %7253 = vmatprep.subr.bf16.mxu0 0
  %7254 = vmatpush1.bf16.msra.mxu0 %v7120
  %7255 = vmatprep.subr.bf16.mxu0 0
  %7256 = vmatpush1.bf16.msra.mxu0 %v7121
  %7257 = vmatprep.subr.bf16.mxu0 0
  %7258 = vmatpush1.bf16.msra.mxu0 %v7122
  %7259 = vmatprep.subr.bf16.mxu0 0
  %7260 = vmatpush1.bf16.msra.mxu0 %v7123
  %7261 = vmatprep.subr.bf16.mxu0 0
  %7262 = vmatpush1.bf16.msra.mxu0 %v7124
  %7263 = vmatprep.subr.bf16.mxu0 0
  %7264 = vmatpush1.bf16.msra.mxu0 %v7125
  %7265 = vmatprep.subr.bf16.mxu0 0
  %7266 = vmatpush1.bf16.msra.mxu0 %v7126
  %7267 = vmatprep.subr.bf16.mxu0 0
  %7268 = vmatpush1.bf16.msra.mxu0 %v7127
  %7269 = vmatprep.subr.bf16.mxu0 0
  %7270 = vmatpush1.bf16.msra.mxu0 %v7128
  %7271 = vmatprep.subr.bf16.mxu0 0
  %7272 = vmatpush1.bf16.msra.mxu0 %v7129
  %7273 = vmatprep.subr.bf16.mxu0 0
  %7274 = vmatpush1.bf16.msra.mxu0 %v7130
  %7275 = vmatprep.mubr.bf16.mxu0 %v6348
  %7276 = vmatmul.mubr.bf16.gmra.mrb[0].mxu0 %v6347
  %v7277 = vpop.f32.mrb[0].mxu0
  %v7278 = vadd.f32 0.0, %v7277
  %v7279 = vpop.f32.mrb[0].mxu0
  %v7280 = vpop.f32.mrb[0].mxu0
  %v7281 = vadd.f32 0.0, %v7280
  %v7282 = vpop.f32.mrb[0].mxu0
  %7283 = vmatprep.mubr.bf16.mxu0 %v6356
  %7284 = vmatmul.mubr.bf16.gmra.mrb[0].mxu0 %v6355
  %v7285 = vpop.f32.mrb[0].mxu0
  %v7286 = vadd.f32 0.0, %v7285
  %v7287 = vpop.f32.mrb[0].mxu0
  %v7288 = vpop.f32.mrb[0].mxu0
  %v7289 = vadd.f32 0.0, %v7288
  %v7290 = vpop.f32.mrb[0].mxu0
  %7291 = vmatprep.mubr.bf16.mxu0 %v6364
  %7292 = vmatmul.mubr.bf16.gmra.mrb[0].mxu0 %v6363
  %v7293 = vpop.f32.mrb[0].mxu0
  %v7294 = vadd.f32 0.0, %v7293
  %v7295 = vpop.f32.mrb[0].mxu0
  %v7296 = vpop.f32.mrb[0].mxu0
  %v7297 = vadd.f32 0.0, %v7296
  %v7298 = vpop.f32.mrb[0].mxu0
  %7299 = vmatprep.mubr.bf16.mxu0 %v6372
  %7300 = vmatmul.mubr.bf16.gmra.mrb[0].mxu0 %v6371
  %v7301 = vpop.f32.mrb[0].mxu0
  %v7302 = vadd.f32 0.0, %v7301
  %v7303 = vpop.f32.mrb[0].mxu0
  %v7304 = vpop.f32.mrb[0].mxu0
  %v7305 = vadd.f32 0.0, %v7304
  %v7306 = vpop.f32.mrb[0].mxu0
  %7307 = vmatprep.mubr.bf16.mxu0 %v6380
  %7308 = vmatmul.mubr.bf16.gmra.mrb[0].mxu0 %v6379
  %v7309 = vpop.f32.mrb[0].mxu0
  %v7310 = vadd.f32 0.0, %v7309
  %v7311 = vpop.f32.mrb[0].mxu0
  %v7312 = vpop.f32.mrb[0].mxu0
  %v7313 = vadd.f32 0.0, %v7312
  %v7314 = vpop.f32.mrb[0].mxu0
  %7315 = vmatprep.mubr.bf16.mxu0 %v6388
  %7316 = vmatmul.mubr.bf16.gmra.mrb[0].mxu0 %v6387
  %v7317 = vpop.f32.mrb[0].mxu0
  %v7318 = vadd.f32 0.0, %v7317
  %v7319 = vpop.f32.mrb[0].mxu0
  %v7320 = vpop.f32.mrb[0].mxu0
  %v7321 = vadd.f32 0.0, %v7320
  %v7322 = vpop.f32.mrb[0].mxu0
  %7323 = vmatprep.mubr.bf16.mxu0 %v6396
  %7324 = vmatmul.mubr.bf16.gmra.mrb[0].mxu0 %v6395
  %v7325 = vpop.f32.mrb[0].mxu0
  %v7326 = vadd.f32 0.0, %v7325
  %v7327 = vpop.f32.mrb[0].mxu0
  %v7328 = vpop.f32.mrb[0].mxu0
  %v7329 = vadd.f32 0.0, %v7328
  %v7330 = vpop.f32.mrb[0].mxu0
  %7331 = vmatprep.mubr.bf16.mxu0 %v6404
  %7332 = vmatmul.mubr.bf16.gmra.mrb[0].mxu0 %v6403
  %v7333 = vpop.f32.mrb[0].mxu0
  %v7334 = vadd.f32 0.0, %v7333
  %v7335 = vpop.f32.mrb[0].mxu0
  %v7336 = vpop.f32.mrb[0].mxu0
  %v7337 = vadd.f32 0.0, %v7336
  %v7338 = vpop.f32.mrb[0].mxu0
  %7339 = vmatprep.mubr.bf16.mxu0 %v6412
  %7340 = vmatmul.mubr.bf16.gmra.mrb[0].mxu0 %v6411
  %v7341 = vpop.f32.mrb[0].mxu0
  %v7342 = vadd.f32 0.0, %v7341
  %v7343 = vpop.f32.mrb[0].mxu0
  %v7344 = vpop.f32.mrb[0].mxu0
  %v7345 = vadd.f32 0.0, %v7344
  %v7346 = vpop.f32.mrb[0].mxu0
  %7347 = vmatprep.mubr.bf16.mxu0 %v6420
  %7348 = vmatmul.mubr.bf16.gmra.mrb[0].mxu0 %v6419
  %v7349 = vpop.f32.mrb[0].mxu0
  %v7350 = vadd.f32 0.0, %v7349
  %v7351 = vpop.f32.mrb[0].mxu0
  %v7352 = vpop.f32.mrb[0].mxu0
  %v7353 = vadd.f32 0.0, %v7352
  %v7354 = vpop.f32.mrb[0].mxu0
  %7355 = vmatprep.mubr.bf16.mxu0 %v6428
  %7356 = vmatmul.mubr.bf16.gmra.mrb[0].mxu0 %v6427
  %v7357 = vpop.f32.mrb[0].mxu0
  %v7358 = vadd.f32 0.0, %v7357
  %v7359 = vpop.f32.mrb[0].mxu0
  %v7360 = vpop.f32.mrb[0].mxu0
  %v7361 = vadd.f32 0.0, %v7360
  %v7362 = vpop.f32.mrb[0].mxu0
  %7363 = vmatprep.mubr.bf16.mxu0 %v6436
  %7364 = vmatmul.mubr.bf16.gmra.mrb[0].mxu0 %v6435
  %v7365 = vpop.f32.mrb[0].mxu0
  %v7366 = vadd.f32 0.0, %v7365
  %v7367 = vpop.f32.mrb[0].mxu0
  %v7368 = vpop.f32.mrb[0].mxu0
  %v7369 = vadd.f32 0.0, %v7368
  %v7370 = vpop.f32.mrb[0].mxu0
  %7371 = vmatprep.mubr.bf16.mxu0 %v6444
  %7372 = vmatmul.mubr.bf16.gmra.mrb[0].mxu0 %v6443
  %v7373 = vpop.f32.mrb[0].mxu0
  %v7374 = vadd.f32 0.0, %v7373
  %v7375 = vpop.f32.mrb[0].mxu0
  %v7376 = vpop.f32.mrb[0].mxu0
  %v7377 = vadd.f32 0.0, %v7376
  %v7378 = vpop.f32.mrb[0].mxu0
  %7379 = vmatprep.mubr.bf16.mxu0 %v6452
  %7380 = vmatmul.mubr.bf16.gmra.mrb[0].mxu0 %v6451
  %v7381 = vpop.f32.mrb[0].mxu0
  %v7382 = vadd.f32 0.0, %v7381
  %v7383 = vpop.f32.mrb[0].mxu0
  %v7384 = vpop.f32.mrb[0].mxu0
  %v7385 = vadd.f32 0.0, %v7384
  %v7386 = vpop.f32.mrb[0].mxu0
  %7387 = vmatprep.mubr.bf16.mxu0 %v6460
  %7388 = vmatmul.mubr.bf16.gmra.mrb[0].mxu0 %v6459
  %v7389 = vpop.f32.mrb[0].mxu0
  %v7390 = vadd.f32 0.0, %v7389
  %v7391 = vpop.f32.mrb[0].mxu0
  %v7392 = vpop.f32.mrb[0].mxu0
  %v7393 = vadd.f32 0.0, %v7392
  %v7394 = vpop.f32.mrb[0].mxu0
  %7395 = vmatprep.mubr.bf16.mxu0 %v6468
  %7396 = vmatmul.mubr.bf16.gmra.mrb[0].mxu0 %v6467
  %v7397 = vpop.f32.mrb[0].mxu0
  %v7398 = vadd.f32 0.0, %v7397
  %v7399 = vpop.f32.mrb[0].mxu0
  %v7400 = vpop.f32.mrb[0].mxu0
  %v7401 = vadd.f32 0.0, %v7400
  %v7402 = vpop.f32.mrb[0].mxu0
  %7403 = vmatprep.mubr.bf16.mxu0 %v6476
  %7404 = vmatmul.mubr.bf16.gmra.mrb[0].mxu0 %v6475
  %v7405 = vpop.f32.mrb[0].mxu0
  %v7406 = vadd.f32 0.0, %v7405
  %v7407 = vpop.f32.mrb[0].mxu0
  %v7408 = vpop.f32.mrb[0].mxu0
  %v7409 = vadd.f32 0.0, %v7408
  %v7410 = vpop.f32.mrb[0].mxu0
  %7411 = vmatprep.mubr.bf16.mxu0 %v6484
  %7412 = vmatmul.mubr.bf16.gmra.mrb[0].mxu0 %v6483
  %v7413 = vpop.f32.mrb[0].mxu0
  %v7414 = vadd.f32 0.0, %v7413
  %v7415 = vpop.f32.mrb[0].mxu0
  %v7416 = vpop.f32.mrb[0].mxu0
  %v7417 = vadd.f32 0.0, %v7416
  %v7418 = vpop.f32.mrb[0].mxu0
  %7419 = vmatprep.mubr.bf16.mxu0 %v6492
  %7420 = vmatmul.mubr.bf16.gmra.mrb[0].mxu0 %v6491
  %v7421 = vpop.f32.mrb[0].mxu0
  %v7422 = vadd.f32 0.0, %v7421
  %v7423 = vpop.f32.mrb[0].mxu0
  %v7424 = vpop.f32.mrb[0].mxu0
  %v7425 = vadd.f32 0.0, %v7424
  %v7426 = vpop.f32.mrb[0].mxu0
  %7427 = vmatprep.mubr.bf16.mxu0 %v6500
  %7428 = vmatmul.mubr.bf16.gmra.mrb[0].mxu0 %v6499
  %v7429 = vpop.f32.mrb[0].mxu0
  %v7430 = vadd.f32 0.0, %v7429
  %v7431 = vpop.f32.mrb[0].mxu0
  %v7432 = vpop.f32.mrb[0].mxu0
  %v7433 = vadd.f32 0.0, %v7432
  %v7434 = vpop.f32.mrb[0].mxu0
  %7435 = vmatprep.mubr.bf16.mxu0 %v6508
  %7436 = vmatmul.mubr.bf16.gmra.mrb[0].mxu0 %v6507
  %v7437 = vpop.f32.mrb[0].mxu0
  %v7438 = vadd.f32 0.0, %v7437
  %v7439 = vpop.f32.mrb[0].mxu0
  %v7440 = vpop.f32.mrb[0].mxu0
  %v7441 = vadd.f32 0.0, %v7440
  %v7442 = vpop.f32.mrb[0].mxu0
  %7443 = vmatprep.mubr.bf16.mxu0 %v6516
  %7444 = vmatmul.mubr.bf16.gmra.mrb[0].mxu0 %v6515
  %v7445 = vpop.f32.mrb[0].mxu0
  %v7446 = vadd.f32 0.0, %v7445
  %v7447 = vpop.f32.mrb[0].mxu0
  %v7448 = vpop.f32.mrb[0].mxu0
  %v7449 = vadd.f32 0.0, %v7448
  %v7450 = vpop.f32.mrb[0].mxu0
  %7451 = vmatprep.mubr.bf16.mxu0 %v6524
  %7452 = vmatmul.mubr.bf16.gmra.mrb[0].mxu0 %v6523
  %v7453 = vpop.f32.mrb[0].mxu0
  %v7454 = vadd.f32 0.0, %v7453
  %v7455 = vpop.f32.mrb[0].mxu0
  %v7456 = vpop.f32.mrb[0].mxu0
  %v7457 = vadd.f32 0.0, %v7456
  %v7458 = vpop.f32.mrb[0].mxu0
  %7459 = vmatprep.mubr.bf16.mxu0 %v6532
  %7460 = vmatmul.mubr.bf16.gmra.mrb[0].mxu0 %v6531
  %v7461 = vpop.f32.mrb[0].mxu0
  %v7462 = vadd.f32 0.0, %v7461
  %v7463 = vpop.f32.mrb[0].mxu0
  %v7464 = vpop.f32.mrb[0].mxu0
  %v7465 = vadd.f32 0.0, %v7464
  %v7466 = vpop.f32.mrb[0].mxu0
  %7467 = vmatprep.mubr.bf16.mxu0 %v6540
  %7468 = vmatmul.mubr.bf16.gmra.mrb[0].mxu0 %v6539
  %v7469 = vpop.f32.mrb[0].mxu0
  %v7470 = vadd.f32 0.0, %v7469
  %v7471 = vpop.f32.mrb[0].mxu0
  %v7472 = vpop.f32.mrb[0].mxu0
  %v7473 = vadd.f32 0.0, %v7472
  %v7474 = vpop.f32.mrb[0].mxu0
  %7475 = vmatprep.mubr.bf16.mxu0 %v6548
  %7476 = vmatmul.mubr.bf16.gmra.mrb[0].mxu0 %v6547
  %v7477 = vpop.f32.mrb[0].mxu0
  %v7478 = vadd.f32 0.0, %v7477
  %v7479 = vpop.f32.mrb[0].mxu0
  %v7480 = vpop.f32.mrb[0].mxu0
  %v7481 = vadd.f32 0.0, %v7480
  %v7482 = vpop.f32.mrb[0].mxu0
  %7483 = vmatprep.mubr.bf16.mxu0 %v6556
  %7484 = vmatmul.mubr.bf16.gmra.mrb[0].mxu0 %v6555
  %v7485 = vpop.f32.mrb[0].mxu0
  %v7486 = vadd.f32 0.0, %v7485
  %v7487 = vpop.f32.mrb[0].mxu0
  %v7488 = vpop.f32.mrb[0].mxu0
  %v7489 = vadd.f32 0.0, %v7488
  %v7490 = vpop.f32.mrb[0].mxu0
  %7491 = vmatprep.mubr.bf16.mxu0 %v6564
  %7492 = vmatmul.mubr.bf16.gmra.mrb[0].mxu0 %v6563
  %v7493 = vpop.f32.mrb[0].mxu0
  %v7494 = vadd.f32 0.0, %v7493
  %v7495 = vpop.f32.mrb[0].mxu0
  %v7496 = vpop.f32.mrb[0].mxu0
  %v7497 = vadd.f32 0.0, %v7496
  %v7498 = vpop.f32.mrb[0].mxu0
  %7499 = vmatprep.mubr.bf16.mxu0 %v6572
  %7500 = vmatmul.mubr.bf16.gmra.mrb[0].mxu0 %v6571
  %v7501 = vpop.f32.mrb[0].mxu0
  %v7502 = vadd.f32 0.0, %v7501
  %v7503 = vpop.f32.mrb[0].mxu0
  %v7504 = vpop.f32.mrb[0].mxu0
  %v7505 = vadd.f32 0.0, %v7504
  %v7506 = vpop.f32.mrb[0].mxu0
  %7507 = vmatprep.mubr.bf16.mxu0 %v6580
  %7508 = vmatmul.mubr.bf16.gmra.mrb[0].mxu0 %v6579
  %v7509 = vpop.f32.mrb[0].mxu0
  %v7510 = vadd.f32 0.0, %v7509
  %v7511 = vpop.f32.mrb[0].mxu0
  %v7512 = vpop.f32.mrb[0].mxu0
  %v7513 = vadd.f32 0.0, %v7512
  %v7514 = vpop.f32.mrb[0].mxu0
  %7515 = vmatprep.mubr.bf16.mxu0 %v6588
  %7516 = vmatmul.mubr.bf16.gmra.mrb[0].mxu0 %v6587
  %v7517 = vpop.f32.mrb[0].mxu0
  %v7518 = vadd.f32 0.0, %v7517
  %v7519 = vpop.f32.mrb[0].mxu0
  %v7520 = vpop.f32.mrb[0].mxu0
  %v7521 = vadd.f32 0.0, %v7520
  %v7522 = vpop.f32.mrb[0].mxu0
  %7523 = vmatprep.mubr.bf16.mxu0 %v6596
  %7524 = vmatmul.mubr.bf16.gmra.mrb[0].mxu0 %v6595
  %v7525 = vpop.f32.mrb[0].mxu0
  %v7526 = vadd.f32 0.0, %v7525
  %v7527 = vpop.f32.mrb[0].mxu0
  %v7528 = vpop.f32.mrb[0].mxu0
  %v7529 = vadd.f32 0.0, %v7528
  %v7530 = vpop.f32.mrb[0].mxu0
  %7531 = vdwg.mxu0
  %7532 = vmatprep.subr.bf16.mxu0 0
  %7533 = vmatpush1.bf16.msra.mxu0 %v7131
  %7534 = vmatprep.subr.bf16.mxu0 0
  %7535 = vmatpush1.bf16.msra.mxu0 %v7132
  %7536 = vmatprep.subr.bf16.mxu0 0
  %7537 = vmatpush1.bf16.msra.mxu0 %v7133
  %7538 = vmatprep.subr.bf16.mxu0 0
  %7539 = vmatpush1.bf16.msra.mxu0 %v7134
  %7540 = vmatprep.subr.bf16.mxu0 0
  %7541 = vmatpush1.bf16.msra.mxu0 %v7135
  %7542 = vmatprep.subr.bf16.mxu0 0
  %7543 = vmatpush1.bf16.msra.mxu0 %v7136
  %7544 = vmatprep.subr.bf16.mxu0 0
  %7545 = vmatpush1.bf16.msra.mxu0 %v7137
  %7546 = vmatprep.subr.bf16.mxu0 0
  %7547 = vmatpush1.bf16.msra.mxu0 %v7138
  %7548 = vmatprep.subr.bf16.mxu0 0
  %7549 = vmatpush1.bf16.msra.mxu0 %v7139
  %7550 = vmatprep.subr.bf16.mxu0 0
  %7551 = vmatpush1.bf16.msra.mxu0 %v7140
  %7552 = vmatprep.subr.bf16.mxu0 0
  %7553 = vmatpush1.bf16.msra.mxu0 %v7141
  %7554 = vmatprep.subr.bf16.mxu0 0
  %7555 = vmatpush1.bf16.msra.mxu0 %v7142
  %7556 = vmatprep.subr.bf16.mxu0 0
  %7557 = vmatpush1.bf16.msra.mxu0 %v7143
  %7558 = vmatprep.subr.bf16.mxu0 0
  %7559 = vmatpush1.bf16.msra.mxu0 %v7144
  %7560 = vmatprep.subr.bf16.mxu0 0
  %7561 = vmatpush1.bf16.msra.mxu0 %v7145
  %7562 = vmatprep.subr.bf16.mxu0 0
  %7563 = vmatpush1.bf16.msra.mxu0 %v7146
  %7564 = vmatprep.mubr.bf16.mxu0 %v6350
  %7565 = vmatmul.mubr.bf16.gmra.mrb[0].mxu0 %v6349
  %v7566 = vpop.f32.mrb[0].mxu0
  %v7567 = vadd.f32 %v7278, %v7566
  %v7568 = vpop.f32.mrb[0].mxu0
  %v7569 = vpop.f32.mrb[0].mxu0
  %v7570 = vadd.f32 %v7281, %v7569
  %v7571 = vpop.f32.mrb[0].mxu0
  %7572 = vmatprep.mubr.bf16.mxu0 %v6358
  %7573 = vmatmul.mubr.bf16.gmra.mrb[0].mxu0 %v6357
  %v7574 = vpop.f32.mrb[0].mxu0
  %v7575 = vadd.f32 %v7286, %v7574
  %v7576 = vpop.f32.mrb[0].mxu0
  %v7577 = vpop.f32.mrb[0].mxu0
  %v7578 = vadd.f32 %v7289, %v7577
  %v7579 = vpop.f32.mrb[0].mxu0
  %7580 = vmatprep.mubr.bf16.mxu0 %v6366
  %7581 = vmatmul.mubr.bf16.gmra.mrb[0].mxu0 %v6365
  %v7582 = vpop.f32.mrb[0].mxu0
  %v7583 = vadd.f32 %v7294, %v7582
  %v7584 = vpop.f32.mrb[0].mxu0
  %v7585 = vpop.f32.mrb[0].mxu0
  %v7586 = vadd.f32 %v7297, %v7585
  %v7587 = vpop.f32.mrb[0].mxu0
  %7588 = vmatprep.mubr.bf16.mxu0 %v6374
  %7589 = vmatmul.mubr.bf16.gmra.mrb[0].mxu0 %v6373
  %v7590 = vpop.f32.mrb[0].mxu0
  %v7591 = vadd.f32 %v7302, %v7590
  %v7592 = vpop.f32.mrb[0].mxu0
  %v7593 = vpop.f32.mrb[0].mxu0
  %v7594 = vadd.f32 %v7305, %v7593
  %v7595 = vpop.f32.mrb[0].mxu0
  %7596 = vmatprep.mubr.bf16.mxu0 %v6382
  %7597 = vmatmul.mubr.bf16.gmra.mrb[0].mxu0 %v6381
  %v7598 = vpop.f32.mrb[0].mxu0
  %v7599 = vadd.f32 %v7310, %v7598
  %v7600 = vpop.f32.mrb[0].mxu0
  %v7601 = vpop.f32.mrb[0].mxu0
  %v7602 = vadd.f32 %v7313, %v7601
  %v7603 = vpop.f32.mrb[0].mxu0
  %7604 = vmatprep.mubr.bf16.mxu0 %v6390
  %7605 = vmatmul.mubr.bf16.gmra.mrb[0].mxu0 %v6389
  %v7606 = vpop.f32.mrb[0].mxu0
  %v7607 = vadd.f32 %v7318, %v7606
  %v7608 = vpop.f32.mrb[0].mxu0
  %v7609 = vpop.f32.mrb[0].mxu0
  %v7610 = vadd.f32 %v7321, %v7609
  %v7611 = vpop.f32.mrb[0].mxu0
  %7612 = vmatprep.mubr.bf16.mxu0 %v6398
  %7613 = vmatmul.mubr.bf16.gmra.mrb[0].mxu0 %v6397
  %v7614 = vpop.f32.mrb[0].mxu0
  %v7615 = vadd.f32 %v7326, %v7614
  %v7616 = vpop.f32.mrb[0].mxu0
  %v7617 = vpop.f32.mrb[0].mxu0
  %v7618 = vadd.f32 %v7329, %v7617
  %v7619 = vpop.f32.mrb[0].mxu0
  %7620 = vmatprep.mubr.bf16.mxu0 %v6406
  %7621 = vmatmul.mubr.bf16.gmra.mrb[0].mxu0 %v6405
  %v7622 = vpop.f32.mrb[0].mxu0
  %v7623 = vadd.f32 %v7334, %v7622
  %v7624 = vpop.f32.mrb[0].mxu0
  %v7625 = vpop.f32.mrb[0].mxu0
  %v7626 = vadd.f32 %v7337, %v7625
  %v7627 = vpop.f32.mrb[0].mxu0
  %7628 = vmatprep.mubr.bf16.mxu0 %v6414
  %7629 = vmatmul.mubr.bf16.gmra.mrb[0].mxu0 %v6413
  %v7630 = vpop.f32.mrb[0].mxu0
  %v7631 = vadd.f32 %v7342, %v7630
  %v7632 = vpop.f32.mrb[0].mxu0
  %v7633 = vpop.f32.mrb[0].mxu0
  %v7634 = vadd.f32 %v7345, %v7633
  %v7635 = vpop.f32.mrb[0].mxu0
  %7636 = vmatprep.mubr.bf16.mxu0 %v6422
  %7637 = vmatmul.mubr.bf16.gmra.mrb[0].mxu0 %v6421
  %v7638 = vpop.f32.mrb[0].mxu0
  %v7639 = vadd.f32 %v7350, %v7638
  %v7640 = vpop.f32.mrb[0].mxu0
  %v7641 = vpop.f32.mrb[0].mxu0
  %v7642 = vadd.f32 %v7353, %v7641
  %v7643 = vpop.f32.mrb[0].mxu0
  %7644 = vmatprep.mubr.bf16.mxu0 %v6430
  %7645 = vmatmul.mubr.bf16.gmra.mrb[0].mxu0 %v6429
  %v7646 = vpop.f32.mrb[0].mxu0
  %v7647 = vadd.f32 %v7358, %v7646
  %v7648 = vpop.f32.mrb[0].mxu0
  %v7649 = vpop.f32.mrb[0].mxu0
  %v7650 = vadd.f32 %v7361, %v7649
  %v7651 = vpop.f32.mrb[0].mxu0
  %7652 = vmatprep.mubr.bf16.mxu0 %v6438
  %7653 = vmatmul.mubr.bf16.gmra.mrb[0].mxu0 %v6437
  %v7654 = vpop.f32.mrb[0].mxu0
  %v7655 = vadd.f32 %v7366, %v7654
  %v7656 = vpop.f32.mrb[0].mxu0
  %v7657 = vpop.f32.mrb[0].mxu0
  %v7658 = vadd.f32 %v7369, %v7657
  %v7659 = vpop.f32.mrb[0].mxu0
  %7660 = vmatprep.mubr.bf16.mxu0 %v6446
  %7661 = vmatmul.mubr.bf16.gmra.mrb[0].mxu0 %v6445
  %v7662 = vpop.f32.mrb[0].mxu0
  %v7663 = vadd.f32 %v7374, %v7662
  %v7664 = vpop.f32.mrb[0].mxu0
  %v7665 = vpop.f32.mrb[0].mxu0
  %v7666 = vadd.f32 %v7377, %v7665
  %v7667 = vpop.f32.mrb[0].mxu0
  %7668 = vmatprep.mubr.bf16.mxu0 %v6454
  %7669 = vmatmul.mubr.bf16.gmra.mrb[0].mxu0 %v6453
  %v7670 = vpop.f32.mrb[0].mxu0
  %v7671 = vadd.f32 %v7382, %v7670
  %v7672 = vpop.f32.mrb[0].mxu0
  %v7673 = vpop.f32.mrb[0].mxu0
  %v7674 = vadd.f32 %v7385, %v7673
  %v7675 = vpop.f32.mrb[0].mxu0
  %7676 = vmatprep.mubr.bf16.mxu0 %v6462
  %7677 = vmatmul.mubr.bf16.gmra.mrb[0].mxu0 %v6461
  %v7678 = vpop.f32.mrb[0].mxu0
  %v7679 = vadd.f32 %v7390, %v7678
  %v7680 = vpop.f32.mrb[0].mxu0
  %v7681 = vpop.f32.mrb[0].mxu0
  %v7682 = vadd.f32 %v7393, %v7681
  %v7683 = vpop.f32.mrb[0].mxu0
  %7684 = vmatprep.mubr.bf16.mxu0 %v6470
  %7685 = vmatmul.mubr.bf16.gmra.mrb[0].mxu0 %v6469
  %v7686 = vpop.f32.mrb[0].mxu0
  %v7687 = vadd.f32 %v7398, %v7686
  %v7688 = vpop.f32.mrb[0].mxu0
  %v7689 = vpop.f32.mrb[0].mxu0
  %v7690 = vadd.f32 %v7401, %v7689
  %v7691 = vpop.f32.mrb[0].mxu0
  %7692 = vmatprep.mubr.bf16.mxu0 %v6478
  %7693 = vmatmul.mubr.bf16.gmra.mrb[0].mxu0 %v6477
  %v7694 = vpop.f32.mrb[0].mxu0
  %v7695 = vadd.f32 %v7406, %v7694
  %v7696 = vpop.f32.mrb[0].mxu0
  %v7697 = vpop.f32.mrb[0].mxu0
  %v7698 = vadd.f32 %v7409, %v7697
  %v7699 = vpop.f32.mrb[0].mxu0
  %7700 = vmatprep.mubr.bf16.mxu0 %v6486
  %7701 = vmatmul.mubr.bf16.gmra.mrb[0].mxu0 %v6485
  %v7702 = vpop.f32.mrb[0].mxu0
  %v7703 = vadd.f32 %v7414, %v7702
  %v7704 = vpop.f32.mrb[0].mxu0
  %v7705 = vpop.f32.mrb[0].mxu0
  %v7706 = vadd.f32 %v7417, %v7705
  %v7707 = vpop.f32.mrb[0].mxu0
  %7708 = vmatprep.mubr.bf16.mxu0 %v6494
  %7709 = vmatmul.mubr.bf16.gmra.mrb[0].mxu0 %v6493
  %v7710 = vpop.f32.mrb[0].mxu0
  %v7711 = vadd.f32 %v7422, %v7710
  %v7712 = vpop.f32.mrb[0].mxu0
  %v7713 = vpop.f32.mrb[0].mxu0
  %v7714 = vadd.f32 %v7425, %v7713
  %v7715 = vpop.f32.mrb[0].mxu0
  %7716 = vmatprep.mubr.bf16.mxu0 %v6502
  %7717 = vmatmul.mubr.bf16.gmra.mrb[0].mxu0 %v6501
  %v7718 = vpop.f32.mrb[0].mxu0
  %v7719 = vadd.f32 %v7430, %v7718
  %v7720 = vpop.f32.mrb[0].mxu0
  %v7721 = vpop.f32.mrb[0].mxu0
  %v7722 = vadd.f32 %v7433, %v7721
  %v7723 = vpop.f32.mrb[0].mxu0
  %7724 = vmatprep.mubr.bf16.mxu0 %v6510
  %7725 = vmatmul.mubr.bf16.gmra.mrb[0].mxu0 %v6509
  %v7726 = vpop.f32.mrb[0].mxu0
  %v7727 = vadd.f32 %v7438, %v7726
  %v7728 = vpop.f32.mrb[0].mxu0
  %v7729 = vpop.f32.mrb[0].mxu0
  %v7730 = vadd.f32 %v7441, %v7729
  %v7731 = vpop.f32.mrb[0].mxu0
  %7732 = vmatprep.mubr.bf16.mxu0 %v6518
  %7733 = vmatmul.mubr.bf16.gmra.mrb[0].mxu0 %v6517
  %v7734 = vpop.f32.mrb[0].mxu0
  %v7735 = vadd.f32 %v7446, %v7734
  %v7736 = vpop.f32.mrb[0].mxu0
  %v7737 = vpop.f32.mrb[0].mxu0
  %v7738 = vadd.f32 %v7449, %v7737
  %v7739 = vpop.f32.mrb[0].mxu0
  %7740 = vmatprep.mubr.bf16.mxu0 %v6526
  %7741 = vmatmul.mubr.bf16.gmra.mrb[0].mxu0 %v6525
  %v7742 = vpop.f32.mrb[0].mxu0
  %v7743 = vadd.f32 %v7454, %v7742
  %v7744 = vpop.f32.mrb[0].mxu0
  %v7745 = vpop.f32.mrb[0].mxu0
  %v7746 = vadd.f32 %v7457, %v7745
  %v7747 = vpop.f32.mrb[0].mxu0
  %7748 = vmatprep.mubr.bf16.mxu0 %v6534
  %7749 = vmatmul.mubr.bf16.gmra.mrb[0].mxu0 %v6533
  %v7750 = vpop.f32.mrb[0].mxu0
  %v7751 = vadd.f32 %v7462, %v7750
  %v7752 = vpop.f32.mrb[0].mxu0
  %v7753 = vpop.f32.mrb[0].mxu0
  %v7754 = vadd.f32 %v7465, %v7753
  %v7755 = vpop.f32.mrb[0].mxu0
  %7756 = vmatprep.mubr.bf16.mxu0 %v6542
  %7757 = vmatmul.mubr.bf16.gmra.mrb[0].mxu0 %v6541
  %v7758 = vpop.f32.mrb[0].mxu0
  %v7759 = vadd.f32 %v7470, %v7758
  %v7760 = vpop.f32.mrb[0].mxu0
  %v7761 = vpop.f32.mrb[0].mxu0
  %v7762 = vadd.f32 %v7473, %v7761
  %v7763 = vpop.f32.mrb[0].mxu0
  %7764 = vmatprep.mubr.bf16.mxu0 %v6550
  %7765 = vmatmul.mubr.bf16.gmra.mrb[0].mxu0 %v6549
  %v7766 = vpop.f32.mrb[0].mxu0
  %v7767 = vadd.f32 %v7478, %v7766
  %v7768 = vpop.f32.mrb[0].mxu0
  %v7769 = vpop.f32.mrb[0].mxu0
  %v7770 = vadd.f32 %v7481, %v7769
  %v7771 = vpop.f32.mrb[0].mxu0
  %7772 = vmatprep.mubr.bf16.mxu0 %v6558
  %7773 = vmatmul.mubr.bf16.gmra.mrb[0].mxu0 %v6557
  %v7774 = vpop.f32.mrb[0].mxu0
  %v7775 = vadd.f32 %v7486, %v7774
  %v7776 = vpop.f32.mrb[0].mxu0
  %v7777 = vpop.f32.mrb[0].mxu0
  %v7778 = vadd.f32 %v7489, %v7777
  %v7779 = vpop.f32.mrb[0].mxu0
  %7780 = vmatprep.mubr.bf16.mxu0 %v6566
  %7781 = vmatmul.mubr.bf16.gmra.mrb[0].mxu0 %v6565
  %v7782 = vpop.f32.mrb[0].mxu0
  %v7783 = vadd.f32 %v7494, %v7782
  %v7784 = vpop.f32.mrb[0].mxu0
  %v7785 = vpop.f32.mrb[0].mxu0
  %v7786 = vadd.f32 %v7497, %v7785
  %v7787 = vpop.f32.mrb[0].mxu0
  %7788 = vmatprep.mubr.bf16.mxu0 %v6574
  %7789 = vmatmul.mubr.bf16.gmra.mrb[0].mxu0 %v6573
  %v7790 = vpop.f32.mrb[0].mxu0
  %v7791 = vadd.f32 %v7502, %v7790
  %v7792 = vpop.f32.mrb[0].mxu0
  %v7793 = vpop.f32.mrb[0].mxu0
  %v7794 = vadd.f32 %v7505, %v7793
  %v7795 = vpop.f32.mrb[0].mxu0
  %7796 = vmatprep.mubr.bf16.mxu0 %v6582
  %7797 = vmatmul.mubr.bf16.gmra.mrb[0].mxu0 %v6581
  %v7798 = vpop.f32.mrb[0].mxu0
  %v7799 = vadd.f32 %v7510, %v7798
  %v7800 = vpop.f32.mrb[0].mxu0
  %v7801 = vpop.f32.mrb[0].mxu0
  %v7802 = vadd.f32 %v7513, %v7801
  %v7803 = vpop.f32.mrb[0].mxu0
  %7804 = vmatprep.mubr.bf16.mxu0 %v6590
  %7805 = vmatmul.mubr.bf16.gmra.mrb[0].mxu0 %v6589
  %v7806 = vpop.f32.mrb[0].mxu0
  %v7807 = vadd.f32 %v7518, %v7806
  %v7808 = vpop.f32.mrb[0].mxu0
  %v7809 = vpop.f32.mrb[0].mxu0
  %v7810 = vadd.f32 %v7521, %v7809
  %v7811 = vpop.f32.mrb[0].mxu0
  %7812 = vmatprep.mubr.bf16.mxu0 %v6598
  %7813 = vmatmul.mubr.bf16.gmra.mrb[0].mxu0 %v6597
  %v7814 = vpop.f32.mrb[0].mxu0
  %v7815 = vadd.f32 %v7526, %v7814
  %v7816 = vpop.f32.mrb[0].mxu0
  %v7817 = vpop.f32.mrb[0].mxu0
  %v7818 = vadd.f32 %v7529, %v7817
  %v7819 = vpop.f32.mrb[0].mxu0
  %7820 = vdwg.mxu0
  %7821 = vmatprep.subr.bf16.mxu0 0
  %7822 = vmatpush1.bf16.msra.mxu0 %v7147
  %7823 = vmatprep.subr.bf16.mxu0 0
  %7824 = vmatpush1.bf16.msra.mxu0 %v7148
  %7825 = vmatprep.subr.bf16.mxu0 0
  %7826 = vmatpush1.bf16.msra.mxu0 %v7149
  %7827 = vmatprep.subr.bf16.mxu0 0
  %7828 = vmatpush1.bf16.msra.mxu0 %v7150
  %7829 = vmatprep.subr.bf16.mxu0 0
  %7830 = vmatpush1.bf16.msra.mxu0 %v7151
  %7831 = vmatprep.subr.bf16.mxu0 0
  %7832 = vmatpush1.bf16.msra.mxu0 %v7152
  %7833 = vmatprep.subr.bf16.mxu0 0
  %7834 = vmatpush1.bf16.msra.mxu0 %v7153
  %7835 = vmatprep.subr.bf16.mxu0 0
  %7836 = vmatpush1.bf16.msra.mxu0 %v7154
  %7837 = vmatprep.subr.bf16.mxu0 0
  %7838 = vmatpush1.bf16.msra.mxu0 %v7155
  %7839 = vmatprep.subr.bf16.mxu0 0
  %7840 = vmatpush1.bf16.msra.mxu0 %v7156
  %7841 = vmatprep.subr.bf16.mxu0 0
  %7842 = vmatpush1.bf16.msra.mxu0 %v7157
  %7843 = vmatprep.subr.bf16.mxu0 0
  %7844 = vmatpush1.bf16.msra.mxu0 %v7158
  %7845 = vmatprep.subr.bf16.mxu0 0
  %7846 = vmatpush1.bf16.msra.mxu0 %v7159
  %7847 = vmatprep.subr.bf16.mxu0 0
  %7848 = vmatpush1.bf16.msra.mxu0 %v7160
  %7849 = vmatprep.subr.bf16.mxu0 0
  %7850 = vmatpush1.bf16.msra.mxu0 %v7161
  %7851 = vmatprep.subr.bf16.mxu0 0
  %7852 = vmatpush1.bf16.msra.mxu0 %v7162
  %7853 = vmatprep.mubr.bf16.mxu0 %v6352
  %7854 = vmatmul.mubr.bf16.gmra.mrb[0].mxu0 %v6351
  %v7855 = vpop.f32.mrb[0].mxu0
  %v7856 = vadd.f32 %v7567, %v7855
  %v7857 = vpop.f32.mrb[0].mxu0
  %v7858 = vpop.f32.mrb[0].mxu0
  %v7859 = vadd.f32 %v7570, %v7858
  %v7860 = vpop.f32.mrb[0].mxu0
  %7861 = vmatprep.mubr.bf16.mxu0 %v6360
  %7862 = vmatmul.mubr.bf16.gmra.mrb[0].mxu0 %v6359
  %v7863 = vpop.f32.mrb[0].mxu0
  %v7864 = vadd.f32 %v7575, %v7863
  %v7865 = vpop.f32.mrb[0].mxu0
  %v7866 = vpop.f32.mrb[0].mxu0
  %v7867 = vadd.f32 %v7578, %v7866
  %v7868 = vpop.f32.mrb[0].mxu0
  %7869 = vmatprep.mubr.bf16.mxu0 %v6368
  %7870 = vmatmul.mubr.bf16.gmra.mrb[0].mxu0 %v6367
  %v7871 = vpop.f32.mrb[0].mxu0
  %v7872 = vadd.f32 %v7583, %v7871
  %v7873 = vpop.f32.mrb[0].mxu0
  %v7874 = vpop.f32.mrb[0].mxu0
  %v7875 = vadd.f32 %v7586, %v7874
  %v7876 = vpop.f32.mrb[0].mxu0
  %7877 = vmatprep.mubr.bf16.mxu0 %v6376
  %7878 = vmatmul.mubr.bf16.gmra.mrb[0].mxu0 %v6375
  %v7879 = vpop.f32.mrb[0].mxu0
  %v7880 = vadd.f32 %v7591, %v7879
  %v7881 = vpop.f32.mrb[0].mxu0
  %v7882 = vpop.f32.mrb[0].mxu0
  %v7883 = vadd.f32 %v7594, %v7882
  %v7884 = vpop.f32.mrb[0].mxu0
  %7885 = vmatprep.mubr.bf16.mxu0 %v6384
  %7886 = vmatmul.mubr.bf16.gmra.mrb[0].mxu0 %v6383
  %v7887 = vpop.f32.mrb[0].mxu0
  %v7888 = vadd.f32 %v7599, %v7887
  %v7889 = vpop.f32.mrb[0].mxu0
  %v7890 = vpop.f32.mrb[0].mxu0
  %v7891 = vadd.f32 %v7602, %v7890
  %v7892 = vpop.f32.mrb[0].mxu0
  %7893 = vmatprep.mubr.bf16.mxu0 %v6392
  %7894 = vmatmul.mubr.bf16.gmra.mrb[0].mxu0 %v6391
  %v7895 = vpop.f32.mrb[0].mxu0
  %v7896 = vadd.f32 %v7607, %v7895
  %v7897 = vpop.f32.mrb[0].mxu0
  %v7898 = vpop.f32.mrb[0].mxu0
  %v7899 = vadd.f32 %v7610, %v7898
  %v7900 = vpop.f32.mrb[0].mxu0
  %7901 = vmatprep.mubr.bf16.mxu0 %v6400
  %7902 = vmatmul.mubr.bf16.gmra.mrb[0].mxu0 %v6399
  %v7903 = vpop.f32.mrb[0].mxu0
  %v7904 = vadd.f32 %v7615, %v7903
  %v7905 = vpop.f32.mrb[0].mxu0
  %v7906 = vpop.f32.mrb[0].mxu0
  %v7907 = vadd.f32 %v7618, %v7906
  %v7908 = vpop.f32.mrb[0].mxu0
  %7909 = vmatprep.mubr.bf16.mxu0 %v6408
  %7910 = vmatmul.mubr.bf16.gmra.mrb[0].mxu0 %v6407
  %v7911 = vpop.f32.mrb[0].mxu0
  %v7912 = vadd.f32 %v7623, %v7911
  %v7913 = vpop.f32.mrb[0].mxu0
  %v7914 = vpop.f32.mrb[0].mxu0
  %v7915 = vadd.f32 %v7626, %v7914
  %v7916 = vpop.f32.mrb[0].mxu0
  %7917 = vmatprep.mubr.bf16.mxu0 %v6416
  %7918 = vmatmul.mubr.bf16.gmra.mrb[0].mxu0 %v6415
  %v7919 = vpop.f32.mrb[0].mxu0
  %v7920 = vadd.f32 %v7631, %v7919
  %v7921 = vpop.f32.mrb[0].mxu0
  %v7922 = vpop.f32.mrb[0].mxu0
  %v7923 = vadd.f32 %v7634, %v7922
  %v7924 = vpop.f32.mrb[0].mxu0
  %7925 = vmatprep.mubr.bf16.mxu0 %v6424
  %7926 = vmatmul.mubr.bf16.gmra.mrb[0].mxu0 %v6423
  %v7927 = vpop.f32.mrb[0].mxu0
  %v7928 = vadd.f32 %v7639, %v7927
  %v7929 = vpop.f32.mrb[0].mxu0
  %v7930 = vpop.f32.mrb[0].mxu0
  %v7931 = vadd.f32 %v7642, %v7930
  %v7932 = vpop.f32.mrb[0].mxu0
  %7933 = vmatprep.mubr.bf16.mxu0 %v6432
  %7934 = vmatmul.mubr.bf16.gmra.mrb[0].mxu0 %v6431
  %v7935 = vpop.f32.mrb[0].mxu0
  %v7936 = vadd.f32 %v7647, %v7935
  %v7937 = vpop.f32.mrb[0].mxu0
  %v7938 = vpop.f32.mrb[0].mxu0
  %v7939 = vadd.f32 %v7650, %v7938
  %v7940 = vpop.f32.mrb[0].mxu0
  %7941 = vmatprep.mubr.bf16.mxu0 %v6440
  %7942 = vmatmul.mubr.bf16.gmra.mrb[0].mxu0 %v6439
  %v7943 = vpop.f32.mrb[0].mxu0
  %v7944 = vadd.f32 %v7655, %v7943
  %v7945 = vpop.f32.mrb[0].mxu0
  %v7946 = vpop.f32.mrb[0].mxu0
  %v7947 = vadd.f32 %v7658, %v7946
  %v7948 = vpop.f32.mrb[0].mxu0
  %7949 = vmatprep.mubr.bf16.mxu0 %v6448
  %7950 = vmatmul.mubr.bf16.gmra.mrb[0].mxu0 %v6447
  %v7951 = vpop.f32.mrb[0].mxu0
  %v7952 = vadd.f32 %v7663, %v7951
  %v7953 = vpop.f32.mrb[0].mxu0
  %v7954 = vpop.f32.mrb[0].mxu0
  %v7955 = vadd.f32 %v7666, %v7954
  %v7956 = vpop.f32.mrb[0].mxu0
  %7957 = vmatprep.mubr.bf16.mxu0 %v6456
  %7958 = vmatmul.mubr.bf16.gmra.mrb[0].mxu0 %v6455
  %v7959 = vpop.f32.mrb[0].mxu0
  %v7960 = vadd.f32 %v7671, %v7959
  %v7961 = vpop.f32.mrb[0].mxu0
  %v7962 = vpop.f32.mrb[0].mxu0
  %v7963 = vadd.f32 %v7674, %v7962
  %v7964 = vpop.f32.mrb[0].mxu0
  %7965 = vmatprep.mubr.bf16.mxu0 %v6464
  %7966 = vmatmul.mubr.bf16.gmra.mrb[0].mxu0 %v6463
  %v7967 = vpop.f32.mrb[0].mxu0
  %v7968 = vadd.f32 %v7679, %v7967
  %v7969 = vpop.f32.mrb[0].mxu0
  %v7970 = vpop.f32.mrb[0].mxu0
  %v7971 = vadd.f32 %v7682, %v7970
  %v7972 = vpop.f32.mrb[0].mxu0
  %7973 = vmatprep.mubr.bf16.mxu0 %v6472
  %7974 = vmatmul.mubr.bf16.gmra.mrb[0].mxu0 %v6471
  %v7975 = vpop.f32.mrb[0].mxu0
  %v7976 = vadd.f32 %v7687, %v7975
  %v7977 = vpop.f32.mrb[0].mxu0
  %v7978 = vpop.f32.mrb[0].mxu0
  %v7979 = vadd.f32 %v7690, %v7978
  %v7980 = vpop.f32.mrb[0].mxu0
  %7981 = vmatprep.mubr.bf16.mxu0 %v6480
  %7982 = vmatmul.mubr.bf16.gmra.mrb[0].mxu0 %v6479
  %v7983 = vpop.f32.mrb[0].mxu0
  %v7984 = vadd.f32 %v7695, %v7983
  %v7985 = vpop.f32.mrb[0].mxu0
  %v7986 = vpop.f32.mrb[0].mxu0
  %v7987 = vadd.f32 %v7698, %v7986
  %v7988 = vpop.f32.mrb[0].mxu0
  %7989 = vmatprep.mubr.bf16.mxu0 %v6488
  %7990 = vmatmul.mubr.bf16.gmra.mrb[0].mxu0 %v6487
  %v7991 = vpop.f32.mrb[0].mxu0
  %v7992 = vadd.f32 %v7703, %v7991
  %v7993 = vpop.f32.mrb[0].mxu0
  %v7994 = vpop.f32.mrb[0].mxu0
  %v7995 = vadd.f32 %v7706, %v7994
  %v7996 = vpop.f32.mrb[0].mxu0
  %7997 = vmatprep.mubr.bf16.mxu0 %v6496
  %7998 = vmatmul.mubr.bf16.gmra.mrb[0].mxu0 %v6495
  %v7999 = vpop.f32.mrb[0].mxu0
  %v8000 = vadd.f32 %v7711, %v7999
  %v8001 = vpop.f32.mrb[0].mxu0
  %v8002 = vpop.f32.mrb[0].mxu0
  %v8003 = vadd.f32 %v7714, %v8002
  %v8004 = vpop.f32.mrb[0].mxu0
  %8005 = vmatprep.mubr.bf16.mxu0 %v6504
  %8006 = vmatmul.mubr.bf16.gmra.mrb[0].mxu0 %v6503
  %v8007 = vpop.f32.mrb[0].mxu0
  %v8008 = vadd.f32 %v7719, %v8007
  %v8009 = vpop.f32.mrb[0].mxu0
  %v8010 = vpop.f32.mrb[0].mxu0
  %v8011 = vadd.f32 %v7722, %v8010
  %v8012 = vpop.f32.mrb[0].mxu0
  %8013 = vmatprep.mubr.bf16.mxu0 %v6512
  %8014 = vmatmul.mubr.bf16.gmra.mrb[0].mxu0 %v6511
  %v8015 = vpop.f32.mrb[0].mxu0
  %v8016 = vadd.f32 %v7727, %v8015
  %v8017 = vpop.f32.mrb[0].mxu0
  %v8018 = vpop.f32.mrb[0].mxu0
  %v8019 = vadd.f32 %v7730, %v8018
  %v8020 = vpop.f32.mrb[0].mxu0
  %8021 = vmatprep.mubr.bf16.mxu0 %v6520
  %8022 = vmatmul.mubr.bf16.gmra.mrb[0].mxu0 %v6519
  %v8023 = vpop.f32.mrb[0].mxu0
  %v8024 = vadd.f32 %v7735, %v8023
  %v8025 = vpop.f32.mrb[0].mxu0
  %v8026 = vpop.f32.mrb[0].mxu0
  %v8027 = vadd.f32 %v7738, %v8026
  %v8028 = vpop.f32.mrb[0].mxu0
  %8029 = vmatprep.mubr.bf16.mxu0 %v6528
  %8030 = vmatmul.mubr.bf16.gmra.mrb[0].mxu0 %v6527
  %v8031 = vpop.f32.mrb[0].mxu0
  %v8032 = vadd.f32 %v7743, %v8031
  %v8033 = vpop.f32.mrb[0].mxu0
  %v8034 = vpop.f32.mrb[0].mxu0
  %v8035 = vadd.f32 %v7746, %v8034
  %v8036 = vpop.f32.mrb[0].mxu0
  %8037 = vmatprep.mubr.bf16.mxu0 %v6536
  %8038 = vmatmul.mubr.bf16.gmra.mrb[0].mxu0 %v6535
  %v8039 = vpop.f32.mrb[0].mxu0
  %v8040 = vadd.f32 %v7751, %v8039
  %v8041 = vpop.f32.mrb[0].mxu0
  %v8042 = vpop.f32.mrb[0].mxu0
  %v8043 = vadd.f32 %v7754, %v8042
  %v8044 = vpop.f32.mrb[0].mxu0
  %8045 = vmatprep.mubr.bf16.mxu0 %v6544
  %8046 = vmatmul.mubr.bf16.gmra.mrb[0].mxu0 %v6543
  %v8047 = vpop.f32.mrb[0].mxu0
  %v8048 = vadd.f32 %v7759, %v8047
  %v8049 = vpop.f32.mrb[0].mxu0
  %v8050 = vpop.f32.mrb[0].mxu0
  %v8051 = vadd.f32 %v7762, %v8050
  %v8052 = vpop.f32.mrb[0].mxu0
  %8053 = vmatprep.mubr.bf16.mxu0 %v6552
  %8054 = vmatmul.mubr.bf16.gmra.mrb[0].mxu0 %v6551
  %v8055 = vpop.f32.mrb[0].mxu0
  %v8056 = vadd.f32 %v7767, %v8055
  %v8057 = vpop.f32.mrb[0].mxu0
  %v8058 = vpop.f32.mrb[0].mxu0
  %v8059 = vadd.f32 %v7770, %v8058
  %v8060 = vpop.f32.mrb[0].mxu0
  %8061 = vmatprep.mubr.bf16.mxu0 %v6560
  %8062 = vmatmul.mubr.bf16.gmra.mrb[0].mxu0 %v6559
  %v8063 = vpop.f32.mrb[0].mxu0
  %v8064 = vadd.f32 %v7775, %v8063
  %v8065 = vpop.f32.mrb[0].mxu0
  %v8066 = vpop.f32.mrb[0].mxu0
  %v8067 = vadd.f32 %v7778, %v8066
  %v8068 = vpop.f32.mrb[0].mxu0
  %8069 = vmatprep.mubr.bf16.mxu0 %v6568
  %8070 = vmatmul.mubr.bf16.gmra.mrb[0].mxu0 %v6567
  %v8071 = vpop.f32.mrb[0].mxu0
  %v8072 = vadd.f32 %v7783, %v8071
  %v8073 = vpop.f32.mrb[0].mxu0
  %v8074 = vpop.f32.mrb[0].mxu0
  %v8075 = vadd.f32 %v7786, %v8074
  %v8076 = vpop.f32.mrb[0].mxu0
  %8077 = vmatprep.mubr.bf16.mxu0 %v6576
  %8078 = vmatmul.mubr.bf16.gmra.mrb[0].mxu0 %v6575
  %v8079 = vpop.f32.mrb[0].mxu0
  %v8080 = vadd.f32 %v7791, %v8079
  %v8081 = vpop.f32.mrb[0].mxu0
  %v8082 = vpop.f32.mrb[0].mxu0
  %v8083 = vadd.f32 %v7794, %v8082
  %v8084 = vpop.f32.mrb[0].mxu0
  %8085 = vmatprep.mubr.bf16.mxu0 %v6584
  %8086 = vmatmul.mubr.bf16.gmra.mrb[0].mxu0 %v6583
  %v8087 = vpop.f32.mrb[0].mxu0
  %v8088 = vadd.f32 %v7799, %v8087
  %v8089 = vpop.f32.mrb[0].mxu0
  %v8090 = vpop.f32.mrb[0].mxu0
  %v8091 = vadd.f32 %v7802, %v8090
  %v8092 = vpop.f32.mrb[0].mxu0
  %8093 = vmatprep.mubr.bf16.mxu0 %v6592
  %8094 = vmatmul.mubr.bf16.gmra.mrb[0].mxu0 %v6591
  %v8095 = vpop.f32.mrb[0].mxu0
  %v8096 = vadd.f32 %v7807, %v8095
  %v8097 = vpop.f32.mrb[0].mxu0
  %v8098 = vpop.f32.mrb[0].mxu0
  %v8099 = vadd.f32 %v7810, %v8098
  %v8100 = vpop.f32.mrb[0].mxu0
  %8101 = vmatprep.mubr.bf16.mxu0 %v6600
  %8102 = vmatmul.mubr.bf16.gmra.mrb[0].mxu0 %v6599
  %v8103 = vpop.f32.mrb[0].mxu0
  %v8104 = vadd.f32 %v7815, %v8103
  %v8105 = vpop.f32.mrb[0].mxu0
  %v8106 = vpop.f32.mrb[0].mxu0
  %v8107 = vadd.f32 %v7818, %v8106
  %v8108 = vpop.f32.mrb[0].mxu0
  %8109 = vdwg.mxu0
  %8110 = vmatprep.subr.bf16.mxu0 0
  %8111 = vmatpush1.bf16.msra.mxu0 %v7163
  %8112 = vmatprep.subr.bf16.mxu0 0
  %8113 = vmatpush1.bf16.msra.mxu0 %v7164
  %8114 = vmatprep.subr.bf16.mxu0 0
  %8115 = vmatpush1.bf16.msra.mxu0 %v7165
  %8116 = vmatprep.subr.bf16.mxu0 0
  %8117 = vmatpush1.bf16.msra.mxu0 %v7166
  %8118 = vmatprep.subr.bf16.mxu0 0
  %8119 = vmatpush1.bf16.msra.mxu0 %v7167
  %8120 = vmatprep.subr.bf16.mxu0 0
  %8121 = vmatpush1.bf16.msra.mxu0 %v7168
  %8122 = vmatprep.subr.bf16.mxu0 0
  %8123 = vmatpush1.bf16.msra.mxu0 %v7169
  %8124 = vmatprep.subr.bf16.mxu0 0
  %8125 = vmatpush1.bf16.msra.mxu0 %v7170
  %8126 = vmatprep.subr.bf16.mxu0 0
  %8127 = vmatpush1.bf16.msra.mxu0 %v7171
  %8128 = vmatprep.subr.bf16.mxu0 0
  %8129 = vmatpush1.bf16.msra.mxu0 %v7172
  %8130 = vmatprep.subr.bf16.mxu0 0
  %8131 = vmatpush1.bf16.msra.mxu0 %v7173
  %8132 = vmatprep.subr.bf16.mxu0 0
  %8133 = vmatpush1.bf16.msra.mxu0 %v7174
  %8134 = vmatprep.subr.bf16.mxu0 0
  %8135 = vmatpush1.bf16.msra.mxu0 %v7175
  %8136 = vmatprep.subr.bf16.mxu0 0
  %8137 = vmatpush1.bf16.msra.mxu0 %v7176
  %8138 = vmatprep.subr.bf16.mxu0 0
  %8139 = vmatpush1.bf16.msra.mxu0 %v7177
  %8140 = vmatprep.subr.bf16.mxu0 0
  %8141 = vmatpush1.bf16.msra.mxu0 %v7178
  %8142 = vmatprep.mubr.bf16.mxu0 %v6354
  %8143 = vmatmul.mubr.bf16.gmra.mrb[0].mxu0 %v6353
  %v8144 = vpop.f32.mrb[0].mxu0
  %v8145 = vadd.f32 %v7856, %v8144
  %v8146 = vpop.f32.mrb[0].mxu0
  %v8147 = vpop.f32.mrb[0].mxu0
  %v8148 = vadd.f32 %v7859, %v8147
  %v8149 = vpop.f32.mrb[0].mxu0
  %8150 = vmatprep.mubr.bf16.mxu0 %v6362
  %8151 = vmatmul.mubr.bf16.gmra.mrb[0].mxu0 %v6361
  %v8152 = vpop.f32.mrb[0].mxu0
  %v8153 = vadd.f32 %v7864, %v8152
  %v8154 = vpop.f32.mrb[0].mxu0
  %v8155 = vpop.f32.mrb[0].mxu0
  %v8156 = vadd.f32 %v7867, %v8155
  %v8157 = vpop.f32.mrb[0].mxu0
  %8158 = vmatprep.mubr.bf16.mxu0 %v6370
  %8159 = vmatmul.mubr.bf16.gmra.mrb[0].mxu0 %v6369
  %v8160 = vpop.f32.mrb[0].mxu0
  %v8161 = vadd.f32 %v7872, %v8160
  %v8162 = vpop.f32.mrb[0].mxu0
  %v8163 = vpop.f32.mrb[0].mxu0
  %v8164 = vadd.f32 %v7875, %v8163
  %v8165 = vpop.f32.mrb[0].mxu0
  %8166 = vmatprep.mubr.bf16.mxu0 %v6378
  %8167 = vmatmul.mubr.bf16.gmra.mrb[0].mxu0 %v6377
  %v8168 = vpop.f32.mrb[0].mxu0
  %v8169 = vadd.f32 %v7880, %v8168
  %v8170 = vpop.f32.mrb[0].mxu0
  %v8171 = vpop.f32.mrb[0].mxu0
  %v8172 = vadd.f32 %v7883, %v8171
  %v8173 = vpop.f32.mrb[0].mxu0
  %8174 = vmatprep.mubr.bf16.mxu0 %v6386
  %8175 = vmatmul.mubr.bf16.gmra.mrb[0].mxu0 %v6385
  %v8176 = vpop.f32.mrb[0].mxu0
  %v8177 = vadd.f32 %v7888, %v8176
  %v8178 = vpop.f32.mrb[0].mxu0
  %v8179 = vpop.f32.mrb[0].mxu0
  %v8180 = vadd.f32 %v7891, %v8179
  %v8181 = vpop.f32.mrb[0].mxu0
  %8182 = vmatprep.mubr.bf16.mxu0 %v6394
  %8183 = vmatmul.mubr.bf16.gmra.mrb[0].mxu0 %v6393
  %v8184 = vpop.f32.mrb[0].mxu0
  %v8185 = vadd.f32 %v7896, %v8184
  %v8186 = vpop.f32.mrb[0].mxu0
  %v8187 = vpop.f32.mrb[0].mxu0
  %v8188 = vadd.f32 %v7899, %v8187
  %v8189 = vpop.f32.mrb[0].mxu0
  %8190 = vmatprep.mubr.bf16.mxu0 %v6402
  %8191 = vmatmul.mubr.bf16.gmra.mrb[0].mxu0 %v6401
  %v8192 = vpop.f32.mrb[0].mxu0
  %v8193 = vadd.f32 %v7904, %v8192
  %v8194 = vpop.f32.mrb[0].mxu0
  %v8195 = vpop.f32.mrb[0].mxu0
  %v8196 = vadd.f32 %v7907, %v8195
  %v8197 = vpop.f32.mrb[0].mxu0
  %8198 = vmatprep.mubr.bf16.mxu0 %v6410
  %8199 = vmatmul.mubr.bf16.gmra.mrb[0].mxu0 %v6409
  %v8200 = vpop.f32.mrb[0].mxu0
  %v8201 = vadd.f32 %v7912, %v8200
  %v8202 = vpop.f32.mrb[0].mxu0
  %v8203 = vpop.f32.mrb[0].mxu0
  %v8204 = vadd.f32 %v7915, %v8203
  %v8205 = vpop.f32.mrb[0].mxu0
  %8206 = vmatprep.mubr.bf16.mxu0 %v6418
  %8207 = vmatmul.mubr.bf16.gmra.mrb[0].mxu0 %v6417
  %v8208 = vpop.f32.mrb[0].mxu0
  %v8209 = vadd.f32 %v7920, %v8208
  %v8210 = vpop.f32.mrb[0].mxu0
  %v8211 = vpop.f32.mrb[0].mxu0
  %v8212 = vadd.f32 %v7923, %v8211
  %v8213 = vpop.f32.mrb[0].mxu0
  %8214 = vmatprep.mubr.bf16.mxu0 %v6426
  %8215 = vmatmul.mubr.bf16.gmra.mrb[0].mxu0 %v6425
  %v8216 = vpop.f32.mrb[0].mxu0
  %v8217 = vadd.f32 %v7928, %v8216
  %v8218 = vpop.f32.mrb[0].mxu0
  %v8219 = vpop.f32.mrb[0].mxu0
  %v8220 = vadd.f32 %v7931, %v8219
  %v8221 = vpop.f32.mrb[0].mxu0
  %8222 = vmatprep.mubr.bf16.mxu0 %v6434
  %8223 = vmatmul.mubr.bf16.gmra.mrb[0].mxu0 %v6433
  %v8224 = vpop.f32.mrb[0].mxu0
  %v8225 = vadd.f32 %v7936, %v8224
  %v8226 = vpop.f32.mrb[0].mxu0
  %v8227 = vpop.f32.mrb[0].mxu0
  %v8228 = vadd.f32 %v7939, %v8227
  %v8229 = vpop.f32.mrb[0].mxu0
  %8230 = vmatprep.mubr.bf16.mxu0 %v6442
  %8231 = vmatmul.mubr.bf16.gmra.mrb[0].mxu0 %v6441
  %v8232 = vpop.f32.mrb[0].mxu0
  %v8233 = vadd.f32 %v7944, %v8232
  %v8234 = vpop.f32.mrb[0].mxu0
  %v8235 = vpop.f32.mrb[0].mxu0
  %v8236 = vadd.f32 %v7947, %v8235
  %v8237 = vpop.f32.mrb[0].mxu0
  %8238 = vmatprep.mubr.bf16.mxu0 %v6450
  %8239 = vmatmul.mubr.bf16.gmra.mrb[0].mxu0 %v6449
  %v8240 = vpop.f32.mrb[0].mxu0
  %v8241 = vadd.f32 %v7952, %v8240
  %v8242 = vpop.f32.mrb[0].mxu0
  %v8243 = vpop.f32.mrb[0].mxu0
  %v8244 = vadd.f32 %v7955, %v8243
  %v8245 = vpop.f32.mrb[0].mxu0
  %8246 = vmatprep.mubr.bf16.mxu0 %v6458
  %8247 = vmatmul.mubr.bf16.gmra.mrb[0].mxu0 %v6457
  %v8248 = vpop.f32.mrb[0].mxu0
  %v8249 = vadd.f32 %v7960, %v8248
  %v8250 = vpop.f32.mrb[0].mxu0
  %v8251 = vpop.f32.mrb[0].mxu0
  %v8252 = vadd.f32 %v7963, %v8251
  %v8253 = vpop.f32.mrb[0].mxu0
  %8254 = vmatprep.mubr.bf16.mxu0 %v6466
  %8255 = vmatmul.mubr.bf16.gmra.mrb[0].mxu0 %v6465
  %v8256 = vpop.f32.mrb[0].mxu0
  %v8257 = vadd.f32 %v7968, %v8256
  %v8258 = vpop.f32.mrb[0].mxu0
  %v8259 = vpop.f32.mrb[0].mxu0
  %v8260 = vadd.f32 %v7971, %v8259
  %v8261 = vpop.f32.mrb[0].mxu0
  %8262 = vmatprep.mubr.bf16.mxu0 %v6474
  %8263 = vmatmul.mubr.bf16.gmra.mrb[0].mxu0 %v6473
  %v8264 = vpop.f32.mrb[0].mxu0
  %v8265 = vadd.f32 %v7976, %v8264
  %v8266 = vpop.f32.mrb[0].mxu0
  %v8267 = vpop.f32.mrb[0].mxu0
  %v8268 = vadd.f32 %v7979, %v8267
  %v8269 = vpop.f32.mrb[0].mxu0
  %8270 = vmatprep.mubr.bf16.mxu0 %v6482
  %8271 = vmatmul.mubr.bf16.gmra.mrb[0].mxu0 %v6481
  %v8272 = vpop.f32.mrb[0].mxu0
  %v8273 = vadd.f32 %v7984, %v8272
  %v8274 = vpop.f32.mrb[0].mxu0
  %v8275 = vpop.f32.mrb[0].mxu0
  %v8276 = vadd.f32 %v7987, %v8275
  %v8277 = vpop.f32.mrb[0].mxu0
  %8278 = vmatprep.mubr.bf16.mxu0 %v6490
  %8279 = vmatmul.mubr.bf16.gmra.mrb[0].mxu0 %v6489
  %v8280 = vpop.f32.mrb[0].mxu0
  %v8281 = vadd.f32 %v7992, %v8280
  %v8282 = vpop.f32.mrb[0].mxu0
  %v8283 = vpop.f32.mrb[0].mxu0
  %v8284 = vadd.f32 %v7995, %v8283
  %v8285 = vpop.f32.mrb[0].mxu0
  %8286 = vmatprep.mubr.bf16.mxu0 %v6498
  %8287 = vmatmul.mubr.bf16.gmra.mrb[0].mxu0 %v6497
  %v8288 = vpop.f32.mrb[0].mxu0
  %v8289 = vadd.f32 %v8000, %v8288
  %v8290 = vpop.f32.mrb[0].mxu0
  %v8291 = vpop.f32.mrb[0].mxu0
  %v8292 = vadd.f32 %v8003, %v8291
  %v8293 = vpop.f32.mrb[0].mxu0
  %8294 = vmatprep.mubr.bf16.mxu0 %v6506
  %8295 = vmatmul.mubr.bf16.gmra.mrb[0].mxu0 %v6505
  %v8296 = vpop.f32.mrb[0].mxu0
  %v8297 = vadd.f32 %v8008, %v8296
  %v8298 = vpop.f32.mrb[0].mxu0
  %v8299 = vpop.f32.mrb[0].mxu0
  %v8300 = vadd.f32 %v8011, %v8299
  %v8301 = vpop.f32.mrb[0].mxu0
  %8302 = vmatprep.mubr.bf16.mxu0 %v6514
  %8303 = vmatmul.mubr.bf16.gmra.mrb[0].mxu0 %v6513
  %v8304 = vpop.f32.mrb[0].mxu0
  %v8305 = vadd.f32 %v8016, %v8304
  %v8306 = vpop.f32.mrb[0].mxu0
  %v8307 = vpop.f32.mrb[0].mxu0
  %v8308 = vadd.f32 %v8019, %v8307
  %v8309 = vpop.f32.mrb[0].mxu0
  %8310 = vmatprep.mubr.bf16.mxu0 %v6522
  %8311 = vmatmul.mubr.bf16.gmra.mrb[0].mxu0 %v6521
  %v8312 = vpop.f32.mrb[0].mxu0
  %v8313 = vadd.f32 %v8024, %v8312
  %v8314 = vpop.f32.mrb[0].mxu0
  %v8315 = vpop.f32.mrb[0].mxu0
  %v8316 = vadd.f32 %v8027, %v8315
  %v8317 = vpop.f32.mrb[0].mxu0
  %8318 = vmatprep.mubr.bf16.mxu0 %v6530
  %8319 = vmatmul.mubr.bf16.gmra.mrb[0].mxu0 %v6529
  %v8320 = vpop.f32.mrb[0].mxu0
  %v8321 = vadd.f32 %v8032, %v8320
  %v8322 = vpop.f32.mrb[0].mxu0
  %v8323 = vpop.f32.mrb[0].mxu0
  %v8324 = vadd.f32 %v8035, %v8323
  %v8325 = vpop.f32.mrb[0].mxu0
  %8326 = vmatprep.mubr.bf16.mxu0 %v6538
  %8327 = vmatmul.mubr.bf16.gmra.mrb[0].mxu0 %v6537
  %v8328 = vpop.f32.mrb[0].mxu0
  %v8329 = vadd.f32 %v8040, %v8328
  %v8330 = vpop.f32.mrb[0].mxu0
  %v8331 = vpop.f32.mrb[0].mxu0
  %v8332 = vadd.f32 %v8043, %v8331
  %v8333 = vpop.f32.mrb[0].mxu0
  %8334 = vmatprep.mubr.bf16.mxu0 %v6546
  %8335 = vmatmul.mubr.bf16.gmra.mrb[0].mxu0 %v6545
  %v8336 = vpop.f32.mrb[0].mxu0
  %v8337 = vadd.f32 %v8048, %v8336
  %v8338 = vpop.f32.mrb[0].mxu0
  %v8339 = vpop.f32.mrb[0].mxu0
  %v8340 = vadd.f32 %v8051, %v8339
  %v8341 = vpop.f32.mrb[0].mxu0
  %8342 = vmatprep.mubr.bf16.mxu0 %v6554
  %8343 = vmatmul.mubr.bf16.gmra.mrb[0].mxu0 %v6553
  %v8344 = vpop.f32.mrb[0].mxu0
  %v8345 = vadd.f32 %v8056, %v8344
  %v8346 = vpop.f32.mrb[0].mxu0
  %v8347 = vpop.f32.mrb[0].mxu0
  %v8348 = vadd.f32 %v8059, %v8347
  %v8349 = vpop.f32.mrb[0].mxu0
  %8350 = vmatprep.mubr.bf16.mxu0 %v6562
  %8351 = vmatmul.mubr.bf16.gmra.mrb[0].mxu0 %v6561
  %v8352 = vpop.f32.mrb[0].mxu0
  %v8353 = vadd.f32 %v8064, %v8352
  %v8354 = vpop.f32.mrb[0].mxu0
  %v8355 = vpop.f32.mrb[0].mxu0
  %v8356 = vadd.f32 %v8067, %v8355
  %v8357 = vpop.f32.mrb[0].mxu0
  %8358 = vmatprep.mubr.bf16.mxu0 %v6570
  %8359 = vmatmul.mubr.bf16.gmra.mrb[0].mxu0 %v6569
  %v8360 = vpop.f32.mrb[0].mxu0
  %v8361 = vadd.f32 %v8072, %v8360
  %v8362 = vpop.f32.mrb[0].mxu0
  %v8363 = vpop.f32.mrb[0].mxu0
  %v8364 = vadd.f32 %v8075, %v8363
  %v8365 = vpop.f32.mrb[0].mxu0
  %8366 = vmatprep.mubr.bf16.mxu0 %v6578
  %8367 = vmatmul.mubr.bf16.gmra.mrb[0].mxu0 %v6577
  %v8368 = vpop.f32.mrb[0].mxu0
  %v8369 = vadd.f32 %v8080, %v8368
  %v8370 = vpop.f32.mrb[0].mxu0
  %v8371 = vpop.f32.mrb[0].mxu0
  %v8372 = vadd.f32 %v8083, %v8371
  %v8373 = vpop.f32.mrb[0].mxu0
  %8374 = vmatprep.mubr.bf16.mxu0 %v6586
  %8375 = vmatmul.mubr.bf16.gmra.mrb[0].mxu0 %v6585
  %v8376 = vpop.f32.mrb[0].mxu0
  %v8377 = vadd.f32 %v8088, %v8376
  %v8378 = vpop.f32.mrb[0].mxu0
  %v8379 = vpop.f32.mrb[0].mxu0
  %v8380 = vadd.f32 %v8091, %v8379
  %v8381 = vpop.f32.mrb[0].mxu0
  %8382 = vmatprep.mubr.bf16.mxu0 %v6594
  %8383 = vmatmul.mubr.bf16.gmra.mrb[0].mxu0 %v6593
  %v8384 = vpop.f32.mrb[0].mxu0
  %v8385 = vadd.f32 %v8096, %v8384
  %v8386 = vpop.f32.mrb[0].mxu0
  %v8387 = vpop.f32.mrb[0].mxu0
  %v8388 = vadd.f32 %v8099, %v8387
  %v8389 = vpop.f32.mrb[0].mxu0
  %8390 = vmatprep.mubr.bf16.mxu0 %v6602
  %8391 = vmatmul.mubr.bf16.gmra.mrb[0].mxu0 %v6601
  %v8392 = vpop.f32.mrb[0].mxu0
  %v8393 = vadd.f32 %v8104, %v8392
  %v8394 = vpop.f32.mrb[0].mxu0
  %v8395 = vpop.f32.mrb[0].mxu0
  %v8396 = vadd.f32 %v8107, %v8395
  %v8397 = vpop.f32.mrb[0].mxu0
  %8398 = vdwg.mxu0
  %v8399 = vld [vmem:[%s2] sm:$0x1]
  %v8401 = vlaneseq
  %v8402 = vshrl.u32 %v8401, 7
  %v8403 = vsub.s32 0, %v8402
  %v8404 = vrot.slane %v8399, %v8403
  %v8406 = vmul.f32 %v8145, %v8404
  %v8407 = vmul.f32 %v8148, %v8404
  %v8408 = vmul.f32 %v8153, %v8404
  %v8409 = vmul.f32 %v8156, %v8404
  %v8410 = vmul.f32 %v8161, %v8404
  %v8411 = vmul.f32 %v8164, %v8404
  %v8412 = vmul.f32 %v8169, %v8404
  %v8413 = vmul.f32 %v8172, %v8404
  %v8414 = vmul.f32 %v8177, %v8404
  %v8415 = vmul.f32 %v8180, %v8404
  %v8416 = vmul.f32 %v8185, %v8404
  %v8417 = vmul.f32 %v8188, %v8404
  %v8418 = vmul.f32 %v8193, %v8404
  %v8419 = vmul.f32 %v8196, %v8404
  %v8420 = vmul.f32 %v8201, %v8404
  %v8421 = vmul.f32 %v8204, %v8404
  %v8422 = vmul.f32 %v8209, %v8404
  %v8423 = vmul.f32 %v8212, %v8404
  %v8424 = vmul.f32 %v8217, %v8404
  %v8425 = vmul.f32 %v8220, %v8404
  %v8426 = vmul.f32 %v8225, %v8404
  %v8427 = vmul.f32 %v8228, %v8404
  %v8428 = vmul.f32 %v8233, %v8404
  %v8429 = vmul.f32 %v8236, %v8404
  %v8430 = vmul.f32 %v8241, %v8404
  %v8431 = vmul.f32 %v8244, %v8404
  %v8432 = vmul.f32 %v8249, %v8404
  %v8433 = vmul.f32 %v8252, %v8404
  %v8434 = vmul.f32 %v8257, %v8404
  %v8435 = vmul.f32 %v8260, %v8404
  %v8436 = vmul.f32 %v8265, %v8404
  %v8437 = vmul.f32 %v8268, %v8404
  %v8438 = vmul.f32 %v8273, %v8404
  %v8439 = vmul.f32 %v8276, %v8404
  %v8440 = vmul.f32 %v8281, %v8404
  %v8441 = vmul.f32 %v8284, %v8404
  %v8442 = vmul.f32 %v8289, %v8404
  %v8443 = vmul.f32 %v8292, %v8404
  %v8444 = vmul.f32 %v8297, %v8404
  %v8445 = vmul.f32 %v8300, %v8404
  %v8446 = vmul.f32 %v8305, %v8404
  %v8447 = vmul.f32 %v8308, %v8404
  %v8448 = vmul.f32 %v8313, %v8404
  %v8449 = vmul.f32 %v8316, %v8404
  %v8450 = vmul.f32 %v8321, %v8404
  %v8451 = vmul.f32 %v8324, %v8404
  %v8452 = vmul.f32 %v8329, %v8404
  %v8453 = vmul.f32 %v8332, %v8404
  %v8454 = vmul.f32 %v8337, %v8404
  %v8455 = vmul.f32 %v8340, %v8404
  %v8456 = vmul.f32 %v8345, %v8404
  %v8457 = vmul.f32 %v8348, %v8404
  %v8458 = vmul.f32 %v8353, %v8404
  %v8459 = vmul.f32 %v8356, %v8404
  %v8460 = vmul.f32 %v8361, %v8404
  %v8461 = vmul.f32 %v8364, %v8404
  %v8462 = vmul.f32 %v8369, %v8404
  %v8463 = vmul.f32 %v8372, %v8404
  %v8464 = vmul.f32 %v8377, %v8404
  %v8465 = vmul.f32 %v8380, %v8404
  %v8466 = vmul.f32 %v8385, %v8404
  %v8467 = vmul.f32 %v8388, %v8404
  %v8468 = vmul.f32 %v8393, %v8404
  %v8469 = vmul.f32 %v8396, %v8404
  %v8470 = vld [vmem:[%s3] sm:$0x1]
  %v8472 = vlaneseq
  %v8473 = vshrl.u32 %v8472, 7
  %v8474 = vsub.s32 0, %v8473
  %v8475 = vrot.slane %v8470, %v8474
  %v8477 = vadd.f32 %v8406, %v8475
  %v8478 = vadd.f32 %v8407, %v8475
  %v8479 = vadd.f32 %v8408, %v8475
  %v8480 = vadd.f32 %v8409, %v8475
  %v8481 = vadd.f32 %v8410, %v8475
  %v8482 = vadd.f32 %v8411, %v8475
  %v8483 = vadd.f32 %v8412, %v8475
  %v8484 = vadd.f32 %v8413, %v8475
  %v8485 = vadd.f32 %v8414, %v8475
  %v8486 = vadd.f32 %v8415, %v8475
  %v8487 = vadd.f32 %v8416, %v8475
  %v8488 = vadd.f32 %v8417, %v8475
  %v8489 = vadd.f32 %v8418, %v8475
  %v8490 = vadd.f32 %v8419, %v8475
  %v8491 = vadd.f32 %v8420, %v8475
  %v8492 = vadd.f32 %v8421, %v8475
  %v8493 = vadd.f32 %v8422, %v8475
  %v8494 = vadd.f32 %v8423, %v8475
  %v8495 = vadd.f32 %v8424, %v8475
  %v8496 = vadd.f32 %v8425, %v8475
  %v8497 = vadd.f32 %v8426, %v8475
  %v8498 = vadd.f32 %v8427, %v8475
  %v8499 = vadd.f32 %v8428, %v8475
  %v8500 = vadd.f32 %v8429, %v8475
  %v8501 = vadd.f32 %v8430, %v8475
  %v8502 = vadd.f32 %v8431, %v8475
  %v8503 = vadd.f32 %v8432, %v8475
  %v8504 = vadd.f32 %v8433, %v8475
  %v8505 = vadd.f32 %v8434, %v8475
  %v8506 = vadd.f32 %v8435, %v8475
  %v8507 = vadd.f32 %v8436, %v8475
  %v8508 = vadd.f32 %v8437, %v8475
  %v8509 = vadd.f32 %v8438, %v8475
  %v8510 = vadd.f32 %v8439, %v8475
  %v8511 = vadd.f32 %v8440, %v8475
  %v8512 = vadd.f32 %v8441, %v8475
  %v8513 = vadd.f32 %v8442, %v8475
  %v8514 = vadd.f32 %v8443, %v8475
  %v8515 = vadd.f32 %v8444, %v8475
  %v8516 = vadd.f32 %v8445, %v8475
  %v8517 = vadd.f32 %v8446, %v8475
  %v8518 = vadd.f32 %v8447, %v8475
  %v8519 = vadd.f32 %v8448, %v8475
  %v8520 = vadd.f32 %v8449, %v8475
  %v8521 = vadd.f32 %v8450, %v8475
  %v8522 = vadd.f32 %v8451, %v8475
  %v8523 = vadd.f32 %v8452, %v8475
  %v8524 = vadd.f32 %v8453, %v8475
  %v8525 = vadd.f32 %v8454, %v8475
  %v8526 = vadd.f32 %v8455, %v8475
  %v8527 = vadd.f32 %v8456, %v8475
  %v8528 = vadd.f32 %v8457, %v8475
  %v8529 = vadd.f32 %v8458, %v8475
  %v8530 = vadd.f32 %v8459, %v8475
  %v8531 = vadd.f32 %v8460, %v8475
  %v8532 = vadd.f32 %v8461, %v8475
  %v8533 = vadd.f32 %v8462, %v8475
  %v8534 = vadd.f32 %v8463, %v8475
  %v8535 = vadd.f32 %v8464, %v8475
  %v8536 = vadd.f32 %v8465, %v8475
  %v8537 = vadd.f32 %v8466, %v8475
  %v8538 = vadd.f32 %v8467, %v8475
  %v8539 = vadd.f32 %v8468, %v8475
  %v8540 = vadd.f32 %v8469, %v8475
  %vm8541 = vcmp.ge.f32.partialorder %v8477, 0.0
  %vm8542 = vcmp.ge.f32.partialorder %v8478, 0.0
  %vm8543 = vcmp.ge.f32.partialorder %v8479, 0.0
  %vm8544 = vcmp.ge.f32.partialorder %v8480, 0.0
  %vm8545 = vcmp.ge.f32.partialorder %v8481, 0.0
  %vm8546 = vcmp.ge.f32.partialorder %v8482, 0.0
  %vm8547 = vcmp.ge.f32.partialorder %v8483, 0.0
  %vm8548 = vcmp.ge.f32.partialorder %v8484, 0.0
  %vm8549 = vcmp.ge.f32.partialorder %v8485, 0.0
  %vm8550 = vcmp.ge.f32.partialorder %v8486, 0.0
  %vm8551 = vcmp.ge.f32.partialorder %v8487, 0.0
  %vm8552 = vcmp.ge.f32.partialorder %v8488, 0.0
  %vm8553 = vcmp.ge.f32.partialorder %v8489, 0.0
  %vm8554 = vcmp.ge.f32.partialorder %v8490, 0.0
  %vm8555 = vcmp.ge.f32.partialorder %v8491, 0.0
  %vm8556 = vcmp.ge.f32.partialorder %v8492, 0.0
  %vm8557 = vcmp.ge.f32.partialorder %v8493, 0.0
  %vm8558 = vcmp.ge.f32.partialorder %v8494, 0.0
  %vm8559 = vcmp.ge.f32.partialorder %v8495, 0.0
  %vm8560 = vcmp.ge.f32.partialorder %v8496, 0.0
  %vm8561 = vcmp.ge.f32.partialorder %v8497, 0.0
  %vm8562 = vcmp.ge.f32.partialorder %v8498, 0.0
  %vm8563 = vcmp.ge.f32.partialorder %v8499, 0.0
  %vm8564 = vcmp.ge.f32.partialorder %v8500, 0.0
  %vm8565 = vcmp.ge.f32.partialorder %v8501, 0.0
  %vm8566 = vcmp.ge.f32.partialorder %v8502, 0.0
  %vm8567 = vcmp.ge.f32.partialorder %v8503, 0.0
  %vm8568 = vcmp.ge.f32.partialorder %v8504, 0.0
  %vm8569 = vcmp.ge.f32.partialorder %v8505, 0.0
  %vm8570 = vcmp.ge.f32.partialorder %v8506, 0.0
  %vm8571 = vcmp.ge.f32.partialorder %v8507, 0.0
  %vm8572 = vcmp.ge.f32.partialorder %v8508, 0.0
  %vm8573 = vcmp.ge.f32.partialorder %v8509, 0.0
  %vm8574 = vcmp.ge.f32.partialorder %v8510, 0.0
  %vm8575 = vcmp.ge.f32.partialorder %v8511, 0.0
  %vm8576 = vcmp.ge.f32.partialorder %v8512, 0.0
  %vm8577 = vcmp.ge.f32.partialorder %v8513, 0.0
  %vm8578 = vcmp.ge.f32.partialorder %v8514, 0.0
  %vm8579 = vcmp.ge.f32.partialorder %v8515, 0.0
  %vm8580 = vcmp.ge.f32.partialorder %v8516, 0.0
  %vm8581 = vcmp.ge.f32.partialorder %v8517, 0.0
  %vm8582 = vcmp.ge.f32.partialorder %v8518, 0.0
  %vm8583 = vcmp.ge.f32.partialorder %v8519, 0.0
  %vm8584 = vcmp.ge.f32.partialorder %v8520, 0.0
  %vm8585 = vcmp.ge.f32.partialorder %v8521, 0.0
  %vm8586 = vcmp.ge.f32.partialorder %v8522, 0.0
  %vm8587 = vcmp.ge.f32.partialorder %v8523, 0.0
  %vm8588 = vcmp.ge.f32.partialorder %v8524, 0.0
  %vm8589 = vcmp.ge.f32.partialorder %v8525, 0.0
  %vm8590 = vcmp.ge.f32.partialorder %v8526, 0.0
  %vm8591 = vcmp.ge.f32.partialorder %v8527, 0.0
  %vm8592 = vcmp.ge.f32.partialorder %v8528, 0.0
  %vm8593 = vcmp.ge.f32.partialorder %v8529, 0.0
  %vm8594 = vcmp.ge.f32.partialorder %v8530, 0.0
  %vm8595 = vcmp.ge.f32.partialorder %v8531, 0.0
  %vm8596 = vcmp.ge.f32.partialorder %v8532, 0.0
  %vm8597 = vcmp.ge.f32.partialorder %v8533, 0.0
  %vm8598 = vcmp.ge.f32.partialorder %v8534, 0.0
  %vm8599 = vcmp.ge.f32.partialorder %v8535, 0.0
  %vm8600 = vcmp.ge.f32.partialorder %v8536, 0.0
  %vm8601 = vcmp.ge.f32.partialorder %v8537, 0.0
  %vm8602 = vcmp.ge.f32.partialorder %v8538, 0.0
  %vm8603 = vcmp.ge.f32.partialorder %v8539, 0.0
  %vm8604 = vcmp.ge.f32.partialorder %v8540, 0.0
  %v8605 = vmul.f32 %v8477, 0.2
  %v8606 = vmul.f32 %v8478, 0.2
  %v8607 = vmul.f32 %v8479, 0.2
  %v8608 = vmul.f32 %v8480, 0.2
  %v8609 = vmul.f32 %v8481, 0.2
  %v8610 = vmul.f32 %v8482, 0.2
  %v8611 = vmul.f32 %v8483, 0.2
  %v8612 = vmul.f32 %v8484, 0.2
  %v8613 = vmul.f32 %v8485, 0.2
  %v8614 = vmul.f32 %v8486, 0.2
  %v8615 = vmul.f32 %v8487, 0.2
  %v8616 = vmul.f32 %v8488, 0.2
  %v8617 = vmul.f32 %v8489, 0.2
  %v8618 = vmul.f32 %v8490, 0.2
  %v8619 = vmul.f32 %v8491, 0.2
  %v8620 = vmul.f32 %v8492, 0.2
  %v8621 = vmul.f32 %v8493, 0.2
  %v8622 = vmul.f32 %v8494, 0.2
  %v8623 = vmul.f32 %v8495, 0.2
  %v8624 = vmul.f32 %v8496, 0.2
  %v8625 = vmul.f32 %v8497, 0.2
  %v8626 = vmul.f32 %v8498, 0.2
  %v8627 = vmul.f32 %v8499, 0.2
  %v8628 = vmul.f32 %v8500, 0.2
  %v8629 = vmul.f32 %v8501, 0.2
  %v8630 = vmul.f32 %v8502, 0.2
  %v8631 = vmul.f32 %v8503, 0.2
  %v8632 = vmul.f32 %v8504, 0.2
  %v8633 = vmul.f32 %v8505, 0.2
  %v8634 = vmul.f32 %v8506, 0.2
  %v8635 = vmul.f32 %v8507, 0.2
  %v8636 = vmul.f32 %v8508, 0.2
  %v8637 = vmul.f32 %v8509, 0.2
  %v8638 = vmul.f32 %v8510, 0.2
  %v8639 = vmul.f32 %v8511, 0.2
  %v8640 = vmul.f32 %v8512, 0.2
  %v8641 = vmul.f32 %v8513, 0.2
  %v8642 = vmul.f32 %v8514, 0.2
  %v8643 = vmul.f32 %v8515, 0.2
  %v8644 = vmul.f32 %v8516, 0.2
  %v8645 = vmul.f32 %v8517, 0.2
  %v8646 = vmul.f32 %v8518, 0.2
  %v8647 = vmul.f32 %v8519, 0.2
  %v8648 = vmul.f32 %v8520, 0.2
  %v8649 = vmul.f32 %v8521, 0.2
  %v8650 = vmul.f32 %v8522, 0.2
  %v8651 = vmul.f32 %v8523, 0.2
  %v8652 = vmul.f32 %v8524, 0.2
  %v8653 = vmul.f32 %v8525, 0.2
  %v8654 = vmul.f32 %v8526, 0.2
  %v8655 = vmul.f32 %v8527, 0.2
  %v8656 = vmul.f32 %v8528, 0.2
  %v8657 = vmul.f32 %v8529, 0.2
  %v8658 = vmul.f32 %v8530, 0.2
  %v8659 = vmul.f32 %v8531, 0.2
  %v8660 = vmul.f32 %v8532, 0.2
  %v8661 = vmul.f32 %v8533, 0.2
  %v8662 = vmul.f32 %v8534, 0.2
  %v8663 = vmul.f32 %v8535, 0.2
  %v8664 = vmul.f32 %v8536, 0.2
  %v8665 = vmul.f32 %v8537, 0.2
  %v8666 = vmul.f32 %v8538, 0.2
  %v8667 = vmul.f32 %v8539, 0.2
  %v8668 = vmul.f32 %v8540, 0.2
  %v8669 = vsel %vm8541, %v8477, %v8605
  %v8670 = vsel %vm8542, %v8478, %v8606
  %v8671 = vsel %vm8543, %v8479, %v8607
  %v8672 = vsel %vm8544, %v8480, %v8608
  %v8673 = vsel %vm8545, %v8481, %v8609
  %v8674 = vsel %vm8546, %v8482, %v8610
  %v8675 = vsel %vm8547, %v8483, %v8611
  %v8676 = vsel %vm8548, %v8484, %v8612
  %v8677 = vsel %vm8549, %v8485, %v8613
  %v8678 = vsel %vm8550, %v8486, %v8614
  %v8679 = vsel %vm8551, %v8487, %v8615
  %v8680 = vsel %vm8552, %v8488, %v8616
  %v8681 = vsel %vm8553, %v8489, %v8617
  %v8682 = vsel %vm8554, %v8490, %v8618
  %v8683 = vsel %vm8555, %v8491, %v8619
  %v8684 = vsel %vm8556, %v8492, %v8620
  %v8685 = vsel %vm8557, %v8493, %v8621
  %v8686 = vsel %vm8558, %v8494, %v8622
  %v8687 = vsel %vm8559, %v8495, %v8623
  %v8688 = vsel %vm8560, %v8496, %v8624
  %v8689 = vsel %vm8561, %v8497, %v8625
  %v8690 = vsel %vm8562, %v8498, %v8626
  %v8691 = vsel %vm8563, %v8499, %v8627
  %v8692 = vsel %vm8564, %v8500, %v8628
  %v8693 = vsel %vm8565, %v8501, %v8629
  %v8694 = vsel %vm8566, %v8502, %v8630
  %v8695 = vsel %vm8567, %v8503, %v8631
  %v8696 = vsel %vm8568, %v8504, %v8632
  %v8697 = vsel %vm8569, %v8505, %v8633
  %v8698 = vsel %vm8570, %v8506, %v8634
  %v8699 = vsel %vm8571, %v8507, %v8635
  %v8700 = vsel %vm8572, %v8508, %v8636
  %v8701 = vsel %vm8573, %v8509, %v8637
  %v8702 = vsel %vm8574, %v8510, %v8638
  %v8703 = vsel %vm8575, %v8511, %v8639
  %v8704 = vsel %vm8576, %v8512, %v8640
  %v8705 = vsel %vm8577, %v8513, %v8641
  %v8706 = vsel %vm8578, %v8514, %v8642
  %v8707 = vsel %vm8579, %v8515, %v8643
  %v8708 = vsel %vm8580, %v8516, %v8644
  %v8709 = vsel %vm8581, %v8517, %v8645
  %v8710 = vsel %vm8582, %v8518, %v8646
  %v8711 = vsel %vm8583, %v8519, %v8647
  %v8712 = vsel %vm8584, %v8520, %v8648
  %v8713 = vsel %vm8585, %v8521, %v8649
  %v8714 = vsel %vm8586, %v8522, %v8650
  %v8715 = vsel %vm8587, %v8523, %v8651
  %v8716 = vsel %vm8588, %v8524, %v8652
  %v8717 = vsel %vm8589, %v8525, %v8653
  %v8718 = vsel %vm8590, %v8526, %v8654
  %v8719 = vsel %vm8591, %v8527, %v8655
  %v8720 = vsel %vm8592, %v8528, %v8656
  %v8721 = vsel %vm8593, %v8529, %v8657
  %v8722 = vsel %vm8594, %v8530, %v8658
  %v8723 = vsel %vm8595, %v8531, %v8659
  %v8724 = vsel %vm8596, %v8532, %v8660
  %v8725 = vsel %vm8597, %v8533, %v8661
  %v8726 = vsel %vm8598, %v8534, %v8662
  %v8727 = vsel %vm8599, %v8535, %v8663
  %v8728 = vsel %vm8600, %v8536, %v8664
  %v8729 = vsel %vm8601, %v8537, %v8665
  %v8730 = vsel %vm8602, %v8538, %v8666
  %v8731 = vsel %vm8603, %v8539, %v8667
  %v8732 = vsel %vm8604, %v8540, %v8668
  %v8733 = vld [vmem:[%s4] sm:$0xff]
  %v8734 = vld [vmem:[%s4 + $0x8] sm:$0xff]
  %v8735 = vld [vmem:[%s4 + $0x10] sm:$0xff]
  %v8736 = vld [vmem:[%s4 + $0x18] sm:$0xff]
  %v8737 = vld [vmem:[%s4 + $0x20] sm:$0xff]
  %v8738 = vld [vmem:[%s4 + $0x28] sm:$0xff]
  %v8739 = vld [vmem:[%s4 + $0x30] sm:$0xff]
  %v8740 = vld [vmem:[%s4 + $0x38] sm:$0xff]
  %v8741 = vmul.f32 %v8669, %v8733
  %v8742 = vmul.f32 %v8670, %v8734
  %v8743 = vmul.f32 %v8671, %v8735
  %v8744 = vmul.f32 %v8672, %v8736
  %v8745 = vmul.f32 %v8673, %v8737
  %v8746 = vmul.f32 %v8674, %v8738
  %v8747 = vmul.f32 %v8675, %v8739
  %v8748 = vmul.f32 %v8676, %v8740
  %v8749 = vmul.f32 %v8677, %v8733
  %v8750 = vmul.f32 %v8678, %v8734
  %v8751 = vmul.f32 %v8679, %v8735
  %v8752 = vmul.f32 %v8680, %v8736
  %v8753 = vmul.f32 %v8681, %v8737
  %v8754 = vmul.f32 %v8682, %v8738
  %v8755 = vmul.f32 %v8683, %v8739
  %v8756 = vmul.f32 %v8684, %v8740
  %v8757 = vmul.f32 %v8685, %v8733
  %v8758 = vmul.f32 %v8686, %v8734
  %v8759 = vmul.f32 %v8687, %v8735
  %v8760 = vmul.f32 %v8688, %v8736
  %v8761 = vmul.f32 %v8689, %v8737
  %v8762 = vmul.f32 %v8690, %v8738
  %v8763 = vmul.f32 %v8691, %v8739
  %v8764 = vmul.f32 %v8692, %v8740
  %v8765 = vmul.f32 %v8693, %v8733
  %v8766 = vmul.f32 %v8694, %v8734
  %v8767 = vmul.f32 %v8695, %v8735
  %v8768 = vmul.f32 %v8696, %v8736
  %v8769 = vmul.f32 %v8697, %v8737
  %v8770 = vmul.f32 %v8698, %v8738
  %v8771 = vmul.f32 %v8699, %v8739
  %v8772 = vmul.f32 %v8700, %v8740
  %v8773 = vmul.f32 %v8701, %v8733
  %v8774 = vmul.f32 %v8702, %v8734
  %v8775 = vmul.f32 %v8703, %v8735
  %v8776 = vmul.f32 %v8704, %v8736
  %v8777 = vmul.f32 %v8705, %v8737
  %v8778 = vmul.f32 %v8706, %v8738
  %v8779 = vmul.f32 %v8707, %v8739
  %v8780 = vmul.f32 %v8708, %v8740
  %v8781 = vmul.f32 %v8709, %v8733
  %v8782 = vmul.f32 %v8710, %v8734
  %v8783 = vmul.f32 %v8711, %v8735
  %v8784 = vmul.f32 %v8712, %v8736
  %v8785 = vmul.f32 %v8713, %v8737
  %v8786 = vmul.f32 %v8714, %v8738
  %v8787 = vmul.f32 %v8715, %v8739
  %v8788 = vmul.f32 %v8716, %v8740
  %v8789 = vmul.f32 %v8717, %v8733
  %v8790 = vmul.f32 %v8718, %v8734
  %v8791 = vmul.f32 %v8719, %v8735
  %v8792 = vmul.f32 %v8720, %v8736
  %v8793 = vmul.f32 %v8721, %v8737
  %v8794 = vmul.f32 %v8722, %v8738
  %v8795 = vmul.f32 %v8723, %v8739
  %v8796 = vmul.f32 %v8724, %v8740
  %v8797 = vmul.f32 %v8725, %v8733
  %v8798 = vmul.f32 %v8726, %v8734
  %v8799 = vmul.f32 %v8727, %v8735
  %v8800 = vmul.f32 %v8728, %v8736
  %v8801 = vmul.f32 %v8729, %v8737
  %v8802 = vmul.f32 %v8730, %v8738
  %v8803 = vmul.f32 %v8731, %v8739
  %v8804 = vmul.f32 %v8732, %v8740
  %8805 = vadd.xlane.f32.xlu0 %v8741
  %v8806 = vpop.xlane.xlu0 %8805
  %8807 = vadd.xlane.f32.xlu0 %v8742
  %v8808 = vpop.xlane.xlu0 %8807
  %8809 = vadd.xlane.f32.xlu0 %v8743
  %v8810 = vpop.xlane.xlu0 %8809
  %8811 = vadd.xlane.f32.xlu0 %v8744
  %v8812 = vpop.xlane.xlu0 %8811
  %8813 = vadd.xlane.f32.xlu0 %v8745
  %v8814 = vpop.xlane.xlu0 %8813
  %8815 = vadd.xlane.f32.xlu0 %v8746
  %v8816 = vpop.xlane.xlu0 %8815
  %8817 = vadd.xlane.f32.xlu0 %v8747
  %v8818 = vpop.xlane.xlu0 %8817
  %8819 = vadd.xlane.f32.xlu0 %v8748
  %v8820 = vpop.xlane.xlu0 %8819
  %8821 = vadd.xlane.f32.xlu0 %v8749
  %v8822 = vpop.xlane.xlu0 %8821
  %8823 = vadd.xlane.f32.xlu0 %v8750
  %v8824 = vpop.xlane.xlu0 %8823
  %8825 = vadd.xlane.f32.xlu0 %v8751
  %v8826 = vpop.xlane.xlu0 %8825
  %8827 = vadd.xlane.f32.xlu0 %v8752
  %v8828 = vpop.xlane.xlu0 %8827
  %8829 = vadd.xlane.f32.xlu0 %v8753
  %v8830 = vpop.xlane.xlu0 %8829
  %8831 = vadd.xlane.f32.xlu0 %v8754
  %v8832 = vpop.xlane.xlu0 %8831
  %8833 = vadd.xlane.f32.xlu0 %v8755
  %v8834 = vpop.xlane.xlu0 %8833
  %8835 = vadd.xlane.f32.xlu0 %v8756
  %v8836 = vpop.xlane.xlu0 %8835
  %8837 = vadd.xlane.f32.xlu0 %v8757
  %v8838 = vpop.xlane.xlu0 %8837
  %8839 = vadd.xlane.f32.xlu0 %v8758
  %v8840 = vpop.xlane.xlu0 %8839
  %8841 = vadd.xlane.f32.xlu0 %v8759
  %v8842 = vpop.xlane.xlu0 %8841
  %8843 = vadd.xlane.f32.xlu0 %v8760
  %v8844 = vpop.xlane.xlu0 %8843
  %8845 = vadd.xlane.f32.xlu0 %v8761
  %v8846 = vpop.xlane.xlu0 %8845
  %8847 = vadd.xlane.f32.xlu0 %v8762
  %v8848 = vpop.xlane.xlu0 %8847
  %8849 = vadd.xlane.f32.xlu0 %v8763
  %v8850 = vpop.xlane.xlu0 %8849
  %8851 = vadd.xlane.f32.xlu0 %v8764
  %v8852 = vpop.xlane.xlu0 %8851
  %8853 = vadd.xlane.f32.xlu0 %v8765
  %v8854 = vpop.xlane.xlu0 %8853
  %8855 = vadd.xlane.f32.xlu0 %v8766
  %v8856 = vpop.xlane.xlu0 %8855
  %8857 = vadd.xlane.f32.xlu0 %v8767
  %v8858 = vpop.xlane.xlu0 %8857
  %8859 = vadd.xlane.f32.xlu0 %v8768
  %v8860 = vpop.xlane.xlu0 %8859
  %8861 = vadd.xlane.f32.xlu0 %v8769
  %v8862 = vpop.xlane.xlu0 %8861
  %8863 = vadd.xlane.f32.xlu0 %v8770
  %v8864 = vpop.xlane.xlu0 %8863
  %8865 = vadd.xlane.f32.xlu0 %v8771
  %v8866 = vpop.xlane.xlu0 %8865
  %8867 = vadd.xlane.f32.xlu0 %v8772
  %v8868 = vpop.xlane.xlu0 %8867
  %8869 = vadd.xlane.f32.xlu0 %v8773
  %v8870 = vpop.xlane.xlu0 %8869
  %8871 = vadd.xlane.f32.xlu0 %v8774
  %v8872 = vpop.xlane.xlu0 %8871
  %8873 = vadd.xlane.f32.xlu0 %v8775
  %v8874 = vpop.xlane.xlu0 %8873
  %8875 = vadd.xlane.f32.xlu0 %v8776
  %v8876 = vpop.xlane.xlu0 %8875
  %8877 = vadd.xlane.f32.xlu0 %v8777
  %v8878 = vpop.xlane.xlu0 %8877
  %8879 = vadd.xlane.f32.xlu0 %v8778
  %v8880 = vpop.xlane.xlu0 %8879
  %8881 = vadd.xlane.f32.xlu0 %v8779
  %v8882 = vpop.xlane.xlu0 %8881
  %8883 = vadd.xlane.f32.xlu0 %v8780
  %v8884 = vpop.xlane.xlu0 %8883
  %8885 = vadd.xlane.f32.xlu0 %v8781
  %v8886 = vpop.xlane.xlu0 %8885
  %8887 = vadd.xlane.f32.xlu0 %v8782
  %v8888 = vpop.xlane.xlu0 %8887
  %8889 = vadd.xlane.f32.xlu0 %v8783
  %v8890 = vpop.xlane.xlu0 %8889
  %8891 = vadd.xlane.f32.xlu0 %v8784
  %v8892 = vpop.xlane.xlu0 %8891
  %8893 = vadd.xlane.f32.xlu0 %v8785
  %v8894 = vpop.xlane.xlu0 %8893
  %8895 = vadd.xlane.f32.xlu0 %v8786
  %v8896 = vpop.xlane.xlu0 %8895
  %8897 = vadd.xlane.f32.xlu0 %v8787
  %v8898 = vpop.xlane.xlu0 %8897
  %8899 = vadd.xlane.f32.xlu0 %v8788
  %v8900 = vpop.xlane.xlu0 %8899
  %8901 = vadd.xlane.f32.xlu0 %v8789
  %v8902 = vpop.xlane.xlu0 %8901
  %8903 = vadd.xlane.f32.xlu0 %v8790
  %v8904 = vpop.xlane.xlu0 %8903
  %8905 = vadd.xlane.f32.xlu0 %v8791
  %v8906 = vpop.xlane.xlu0 %8905
  %8907 = vadd.xlane.f32.xlu0 %v8792
  %v8908 = vpop.xlane.xlu0 %8907
  %8909 = vadd.xlane.f32.xlu0 %v8793
  %v8910 = vpop.xlane.xlu0 %8909
  %8911 = vadd.xlane.f32.xlu0 %v8794
  %v8912 = vpop.xlane.xlu0 %8911
  %8913 = vadd.xlane.f32.xlu0 %v8795
  %v8914 = vpop.xlane.xlu0 %8913
  %8915 = vadd.xlane.f32.xlu0 %v8796
  %v8916 = vpop.xlane.xlu0 %8915
  %8917 = vadd.xlane.f32.xlu0 %v8797
  %v8918 = vpop.xlane.xlu0 %8917
  %8919 = vadd.xlane.f32.xlu0 %v8798
  %v8920 = vpop.xlane.xlu0 %8919
  %8921 = vadd.xlane.f32.xlu0 %v8799
  %v8922 = vpop.xlane.xlu0 %8921
  %8923 = vadd.xlane.f32.xlu0 %v8800
  %v8924 = vpop.xlane.xlu0 %8923
  %8925 = vadd.xlane.f32.xlu0 %v8801
  %v8926 = vpop.xlane.xlu0 %8925
  %8927 = vadd.xlane.f32.xlu0 %v8802
  %v8928 = vpop.xlane.xlu0 %8927
  %8929 = vadd.xlane.f32.xlu0 %v8803
  %v8930 = vpop.xlane.xlu0 %8929
  %8931 = vadd.xlane.f32.xlu0 %v8804
  %v8932 = vpop.xlane.xlu0 %8931
  %v8997 = vlaneseq
  %v8998 = vand.u32 %v8997, 127
  %v8999 = vlaneseq
  %v9000 = vshrl.u32 %v8999, 7
  %v9001 = vsub.s32 %v8998, %v9000
  %v9002 = vrot.slane %v8806, %v9001
  %v9003 = vadd.s32 %v8998, 4294967288
  %v9004 = vlaneseq
  %v9005 = vshrl.u32 %v9004, 7
  %v9006 = vsub.s32 %v9003, %v9005
  %v9007 = vrot.slane %v8808, %v9006
  %vm9008 = vcmask 130112
  %v9009 = vsel %vm9008, %v9007, %v9002
  %v9010 = vadd.s32 %v8998, 4294967280
  %v9011 = vlaneseq
  %v9012 = vshrl.u32 %v9011, 7
  %v9013 = vsub.s32 %v9010, %v9012
  %v9014 = vrot.slane %v8810, %v9013
  %vm9015 = vcmask 195712
  %v9016 = vsel %vm9015, %v9014, %v9009
  %v9017 = vadd.s32 %v8998, 4294967272
  %v9018 = vlaneseq
  %v9019 = vshrl.u32 %v9018, 7
  %v9020 = vsub.s32 %v9017, %v9019
  %v9021 = vrot.slane %v8812, %v9020
  %vm9022 = vcmask 261312
  %v9023 = vsel %vm9022, %v9021, %v9016
  %v9024 = vadd.s32 %v8998, 4294967264
  %v9025 = vlaneseq
  %v9026 = vshrl.u32 %v9025, 7
  %v9027 = vsub.s32 %v9024, %v9026
  %v9028 = vrot.slane %v8814, %v9027
  %vm9029 = vcmask 326912
  %v9030 = vsel %vm9029, %v9028, %v9023
  %v9031 = vadd.s32 %v8998, 4294967256
  %v9032 = vlaneseq
  %v9033 = vshrl.u32 %v9032, 7
  %v9034 = vsub.s32 %v9031, %v9033
  %v9035 = vrot.slane %v8816, %v9034
  %vm9036 = vcmask 392512
  %v9037 = vsel %vm9036, %v9035, %v9030
  %v9038 = vadd.s32 %v8998, 4294967248
  %v9039 = vlaneseq
  %v9040 = vshrl.u32 %v9039, 7
  %v9041 = vsub.s32 %v9038, %v9040
  %v9042 = vrot.slane %v8818, %v9041
  %vm9043 = vcmask 458112
  %v9044 = vsel %vm9043, %v9042, %v9037
  %v9045 = vadd.s32 %v8998, 4294967240
  %v9046 = vlaneseq
  %v9047 = vshrl.u32 %v9046, 7
  %v9048 = vsub.s32 %v9045, %v9047
  %v9049 = vrot.slane %v8820, %v9048
  %vm9050 = vcmask 523712
  %v9051 = vsel %vm9050, %v9049, %v9044
  %v9052 = vlaneseq
  %v9053 = vshrl.u32 %v9052, 7
  %v9054 = vsub.s32 %v8998, %v9053
  %v9055 = vrot.slane %v8822, %v9054
  %v9056 = vlaneseq
  %v9057 = vshrl.u32 %v9056, 7
  %v9058 = vsub.s32 %v9003, %v9057
  %v9059 = vrot.slane %v8824, %v9058
  %v9060 = vsel %vm9008, %v9059, %v9055
  %v9061 = vlaneseq
  %v9062 = vshrl.u32 %v9061, 7
  %v9063 = vsub.s32 %v9010, %v9062
  %v9064 = vrot.slane %v8826, %v9063
  %v9065 = vsel %vm9015, %v9064, %v9060
  %v9066 = vlaneseq
  %v9067 = vshrl.u32 %v9066, 7
  %v9068 = vsub.s32 %v9017, %v9067
  %v9069 = vrot.slane %v8828, %v9068
  %v9070 = vsel %vm9022, %v9069, %v9065
  %v9071 = vlaneseq
  %v9072 = vshrl.u32 %v9071, 7
  %v9073 = vsub.s32 %v9024, %v9072
  %v9074 = vrot.slane %v8830, %v9073
  %v9075 = vsel %vm9029, %v9074, %v9070
  %v9076 = vlaneseq
  %v9077 = vshrl.u32 %v9076, 7
  %v9078 = vsub.s32 %v9031, %v9077
  %v9079 = vrot.slane %v8832, %v9078
  %v9080 = vsel %vm9036, %v9079, %v9075
  %v9081 = vlaneseq
  %v9082 = vshrl.u32 %v9081, 7
  %v9083 = vsub.s32 %v9038, %v9082
  %v9084 = vrot.slane %v8834, %v9083
  %v9085 = vsel %vm9043, %v9084, %v9080
  %v9086 = vlaneseq
  %v9087 = vshrl.u32 %v9086, 7
  %v9088 = vsub.s32 %v9045, %v9087
  %v9089 = vrot.slane %v8836, %v9088
  %v9090 = vsel %vm9050, %v9089, %v9085
  %v9091 = vlaneseq
  %v9092 = vshrl.u32 %v9091, 7
  %v9093 = vsub.s32 %v8998, %v9092
  %v9094 = vrot.slane %v8838, %v9093
  %v9095 = vlaneseq
  %v9096 = vshrl.u32 %v9095, 7
  %v9097 = vsub.s32 %v9003, %v9096
  %v9098 = vrot.slane %v8840, %v9097
  %v9099 = vsel %vm9008, %v9098, %v9094
  %v9100 = vlaneseq
  %v9101 = vshrl.u32 %v9100, 7
  %v9102 = vsub.s32 %v9010, %v9101
  %v9103 = vrot.slane %v8842, %v9102
  %v9104 = vsel %vm9015, %v9103, %v9099
  %v9105 = vlaneseq
  %v9106 = vshrl.u32 %v9105, 7
  %v9107 = vsub.s32 %v9017, %v9106
  %v9108 = vrot.slane %v8844, %v9107
  %v9109 = vsel %vm9022, %v9108, %v9104
  %v9110 = vlaneseq
  %v9111 = vshrl.u32 %v9110, 7
  %v9112 = vsub.s32 %v9024, %v9111
  %v9113 = vrot.slane %v8846, %v9112
  %v9114 = vsel %vm9029, %v9113, %v9109
  %v9115 = vlaneseq
  %v9116 = vshrl.u32 %v9115, 7
  %v9117 = vsub.s32 %v9031, %v9116
  %v9118 = vrot.slane %v8848, %v9117
  %v9119 = vsel %vm9036, %v9118, %v9114
  %v9120 = vlaneseq
  %v9121 = vshrl.u32 %v9120, 7
  %v9122 = vsub.s32 %v9038, %v9121
  %v9123 = vrot.slane %v8850, %v9122
  %v9124 = vsel %vm9043, %v9123, %v9119
  %v9125 = vlaneseq
  %v9126 = vshrl.u32 %v9125, 7
  %v9127 = vsub.s32 %v9045, %v9126
  %v9128 = vrot.slane %v8852, %v9127
  %v9129 = vsel %vm9050, %v9128, %v9124
  %v9130 = vlaneseq
  %v9131 = vshrl.u32 %v9130, 7
  %v9132 = vsub.s32 %v8998, %v9131
  %v9133 = vrot.slane %v8854, %v9132
  %v9134 = vlaneseq
  %v9135 = vshrl.u32 %v9134, 7
  %v9136 = vsub.s32 %v9003, %v9135
  %v9137 = vrot.slane %v8856, %v9136
  %v9138 = vsel %vm9008, %v9137, %v9133
  %v9139 = vlaneseq
  %v9140 = vshrl.u32 %v9139, 7
  %v9141 = vsub.s32 %v9010, %v9140
  %v9142 = vrot.slane %v8858, %v9141
  %v9143 = vsel %vm9015, %v9142, %v9138
  %v9144 = vlaneseq
  %v9145 = vshrl.u32 %v9144, 7
  %v9146 = vsub.s32 %v9017, %v9145
  %v9147 = vrot.slane %v8860, %v9146
  %v9148 = vsel %vm9022, %v9147, %v9143
  %v9149 = vlaneseq
  %v9150 = vshrl.u32 %v9149, 7
  %v9151 = vsub.s32 %v9024, %v9150
  %v9152 = vrot.slane %v8862, %v9151
  %v9153 = vsel %vm9029, %v9152, %v9148
  %v9154 = vlaneseq
  %v9155 = vshrl.u32 %v9154, 7
  %v9156 = vsub.s32 %v9031, %v9155
  %v9157 = vrot.slane %v8864, %v9156
  %v9158 = vsel %vm9036, %v9157, %v9153
  %v9159 = vlaneseq
  %v9160 = vshrl.u32 %v9159, 7
  %v9161 = vsub.s32 %v9038, %v9160
  %v9162 = vrot.slane %v8866, %v9161
  %v9163 = vsel %vm9043, %v9162, %v9158
  %v9164 = vlaneseq
  %v9165 = vshrl.u32 %v9164, 7
  %v9166 = vsub.s32 %v9045, %v9165
  %v9167 = vrot.slane %v8868, %v9166
  %v9168 = vsel %vm9050, %v9167, %v9163
  %v9169 = vlaneseq
  %v9170 = vshrl.u32 %v9169, 7
  %v9171 = vsub.s32 %v8998, %v9170
  %v9172 = vrot.slane %v8870, %v9171
  %v9173 = vlaneseq
  %v9174 = vshrl.u32 %v9173, 7
  %v9175 = vsub.s32 %v9003, %v9174
  %v9176 = vrot.slane %v8872, %v9175
  %v9177 = vsel %vm9008, %v9176, %v9172
  %v9178 = vlaneseq
  %v9179 = vshrl.u32 %v9178, 7
  %v9180 = vsub.s32 %v9010, %v9179
  %v9181 = vrot.slane %v8874, %v9180
  %v9182 = vsel %vm9015, %v9181, %v9177
  %v9183 = vlaneseq
  %v9184 = vshrl.u32 %v9183, 7
  %v9185 = vsub.s32 %v9017, %v9184
  %v9186 = vrot.slane %v8876, %v9185
  %v9187 = vsel %vm9022, %v9186, %v9182
  %v9188 = vlaneseq
  %v9189 = vshrl.u32 %v9188, 7
  %v9190 = vsub.s32 %v9024, %v9189
  %v9191 = vrot.slane %v8878, %v9190
  %v9192 = vsel %vm9029, %v9191, %v9187
  %v9193 = vlaneseq
  %v9194 = vshrl.u32 %v9193, 7
  %v9195 = vsub.s32 %v9031, %v9194
  %v9196 = vrot.slane %v8880, %v9195
  %v9197 = vsel %vm9036, %v9196, %v9192
  %v9198 = vlaneseq
  %v9199 = vshrl.u32 %v9198, 7
  %v9200 = vsub.s32 %v9038, %v9199
  %v9201 = vrot.slane %v8882, %v9200
  %v9202 = vsel %vm9043, %v9201, %v9197
  %v9203 = vlaneseq
  %v9204 = vshrl.u32 %v9203, 7
  %v9205 = vsub.s32 %v9045, %v9204
  %v9206 = vrot.slane %v8884, %v9205
  %v9207 = vsel %vm9050, %v9206, %v9202
  %v9208 = vlaneseq
  %v9209 = vshrl.u32 %v9208, 7
  %v9210 = vsub.s32 %v8998, %v9209
  %v9211 = vrot.slane %v8886, %v9210
  %v9212 = vlaneseq
  %v9213 = vshrl.u32 %v9212, 7
  %v9214 = vsub.s32 %v9003, %v9213
  %v9215 = vrot.slane %v8888, %v9214
  %v9216 = vsel %vm9008, %v9215, %v9211
  %v9217 = vlaneseq
  %v9218 = vshrl.u32 %v9217, 7
  %v9219 = vsub.s32 %v9010, %v9218
  %v9220 = vrot.slane %v8890, %v9219
  %v9221 = vsel %vm9015, %v9220, %v9216
  %v9222 = vlaneseq
  %v9223 = vshrl.u32 %v9222, 7
  %v9224 = vsub.s32 %v9017, %v9223
  %v9225 = vrot.slane %v8892, %v9224
  %v9226 = vsel %vm9022, %v9225, %v9221
  %v9227 = vlaneseq
  %v9228 = vshrl.u32 %v9227, 7
  %v9229 = vsub.s32 %v9024, %v9228
  %v9230 = vrot.slane %v8894, %v9229
  %v9231 = vsel %vm9029, %v9230, %v9226
  %v9232 = vlaneseq
  %v9233 = vshrl.u32 %v9232, 7
  %v9234 = vsub.s32 %v9031, %v9233
  %v9235 = vrot.slane %v8896, %v9234
  %v9236 = vsel %vm9036, %v9235, %v9231
  %v9237 = vlaneseq
  %v9238 = vshrl.u32 %v9237, 7
  %v9239 = vsub.s32 %v9038, %v9238
  %v9240 = vrot.slane %v8898, %v9239
  %v9241 = vsel %vm9043, %v9240, %v9236
  %v9242 = vlaneseq
  %v9243 = vshrl.u32 %v9242, 7
  %v9244 = vsub.s32 %v9045, %v9243
  %v9245 = vrot.slane %v8900, %v9244
  %v9246 = vsel %vm9050, %v9245, %v9241
  %v9247 = vlaneseq
  %v9248 = vshrl.u32 %v9247, 7
  %v9249 = vsub.s32 %v8998, %v9248
  %v9250 = vrot.slane %v8902, %v9249
  %v9251 = vlaneseq
  %v9252 = vshrl.u32 %v9251, 7
  %v9253 = vsub.s32 %v9003, %v9252
  %v9254 = vrot.slane %v8904, %v9253
  %v9255 = vsel %vm9008, %v9254, %v9250
  %v9256 = vlaneseq
  %v9257 = vshrl.u32 %v9256, 7
  %v9258 = vsub.s32 %v9010, %v9257
  %v9259 = vrot.slane %v8906, %v9258
  %v9260 = vsel %vm9015, %v9259, %v9255
  %v9261 = vlaneseq
  %v9262 = vshrl.u32 %v9261, 7
  %v9263 = vsub.s32 %v9017, %v9262
  %v9264 = vrot.slane %v8908, %v9263
  %v9265 = vsel %vm9022, %v9264, %v9260
  %v9266 = vlaneseq
  %v9267 = vshrl.u32 %v9266, 7
  %v9268 = vsub.s32 %v9024, %v9267
  %v9269 = vrot.slane %v8910, %v9268
  %v9270 = vsel %vm9029, %v9269, %v9265
  %v9271 = vlaneseq
  %v9272 = vshrl.u32 %v9271, 7
  %v9273 = vsub.s32 %v9031, %v9272
  %v9274 = vrot.slane %v8912, %v9273
  %v9275 = vsel %vm9036, %v9274, %v9270
  %v9276 = vlaneseq
  %v9277 = vshrl.u32 %v9276, 7
  %v9278 = vsub.s32 %v9038, %v9277
  %v9279 = vrot.slane %v8914, %v9278
  %v9280 = vsel %vm9043, %v9279, %v9275
  %v9281 = vlaneseq
  %v9282 = vshrl.u32 %v9281, 7
  %v9283 = vsub.s32 %v9045, %v9282
  %v9284 = vrot.slane %v8916, %v9283
  %v9285 = vsel %vm9050, %v9284, %v9280
  %v9286 = vlaneseq
  %v9287 = vshrl.u32 %v9286, 7
  %v9288 = vsub.s32 %v8998, %v9287
  %v9289 = vrot.slane %v8918, %v9288
  %v9290 = vlaneseq
  %v9291 = vshrl.u32 %v9290, 7
  %v9292 = vsub.s32 %v9003, %v9291
  %v9293 = vrot.slane %v8920, %v9292
  %v9294 = vsel %vm9008, %v9293, %v9289
  %v9295 = vlaneseq
  %v9296 = vshrl.u32 %v9295, 7
  %v9297 = vsub.s32 %v9010, %v9296
  %v9298 = vrot.slane %v8922, %v9297
  %v9299 = vsel %vm9015, %v9298, %v9294
  %v9300 = vlaneseq
  %v9301 = vshrl.u32 %v9300, 7
  %v9302 = vsub.s32 %v9017, %v9301
  %v9303 = vrot.slane %v8924, %v9302
  %v9304 = vsel %vm9022, %v9303, %v9299
  %v9305 = vlaneseq
  %v9306 = vshrl.u32 %v9305, 7
  %v9307 = vsub.s32 %v9024, %v9306
  %v9308 = vrot.slane %v8926, %v9307
  %v9309 = vsel %vm9029, %v9308, %v9304
  %v9310 = vlaneseq
  %v9311 = vshrl.u32 %v9310, 7
  %v9312 = vsub.s32 %v9031, %v9311
  %v9313 = vrot.slane %v8928, %v9312
  %v9314 = vsel %vm9036, %v9313, %v9309
  %v9315 = vlaneseq
  %v9316 = vshrl.u32 %v9315, 7
  %v9317 = vsub.s32 %v9038, %v9316
  %v9318 = vrot.slane %v8930, %v9317
  %v9319 = vsel %vm9043, %v9318, %v9314
  %v9320 = vlaneseq
  %v9321 = vshrl.u32 %v9320, 7
  %v9322 = vsub.s32 %v9045, %v9321
  %v9323 = vrot.slane %v8932, %v9322
  %v9324 = vsel %vm9050, %v9323, %v9319
  %vm9325 = vcmask 1041409
  %v9326 = vsel %vm9325, %v9090, %v9051
  %vm9327 = vcmask 1042434
  %v9328 = vsel %vm9327, %v9129, %v9326
  %vm9329 = vcmask 1043459
  %v9330 = vsel %vm9329, %v9168, %v9328
  %vm9331 = vcmask 1044484
  %v9332 = vsel %vm9331, %v9207, %v9330
  %vm9333 = vcmask 1045509
  %v9334 = vsel %vm9333, %v9246, %v9332
  %vm9335 = vcmask 1046534
  %v9336 = vsel %vm9335, %v9285, %v9334
  %vm9337 = vcmask 1047559
  %v9338 = vsel %vm9337, %v9324, %v9336
  %v9340 = vsel %vm4778, %v9338, 0.0
  %9341 = vadd.xlane.f32.xlu0 %v9340
  %v9342 = vpop.xlane.xlu0 %9341
  %v9343 = vld [vmem:[#allocation2] sm:$0x1]
  %v9345 = vlaneseq
  %v9346 = vshrl.u32 %v9345, 7
  %v9347 = vsub.s32 0, %v9346
  %v9348 = vrot.slane %v9343, %v9347
  %v9350 = vadd.f32 %v9342, %v9348
  %v9351 = vsub.f32 0.0, %v9350
  %v9352 = vmul.f32 %v9351, 1.442695
  %v9353 = vpow.pop %v9352
  %v9354 = vadd.f32 %v9353, 1.0
  %v9355 = vrcp.pop %v9354
  %v9356 = vmul.f32 1.0, %v9355
  %vm9357 = vcmask 7168
  %9358 = vst.msk [vmem:[%s6] sm:$0xff] %vm9357, %v9356
  // Predicated region
  $region26: #{d_mnist_forward.3} parent=0 // pred_check
    _
  $region27: #{d_mnist_forward.3} parent=0 // pred_check_branch
    %9360 = sbr.rel (0) target = $region29
  $region28: #{d_mnist_forward.3} parent=0 // pred_region
    _
  $region29: #{d_mnist_forward.3} parent=0 // pred_fallthru
    _
  // Predicated region
  $region30: #{d_mnist_forward.3} parent=0 // pred_check
    _
  $region31: #{d_mnist_forward.3} parent=0 // pred_check_branch
    %9362 = sbr.rel (0) target = $region33
  $region32: #{d_mnist_forward.3} parent=0 // pred_region
    _
  $region33: #{d_mnist_forward.3} parent=0 // pred_fallthru
    _

</llo_original>
